<compile_context>
chip_gen: v7x
topology: tpu7x:2x2x1
jax: 0.10.0
libtpu: 0.0.40
codegen_flags: <defaults>
</compile_context>

<pallas_src>
import functools

import jax
import jax.numpy as jnp
import numpy as np
from jax import lax
from jax.experimental import pallas as pl
from jax.experimental.pallas import tpu as pltpu


def _cca_kernel(gamma_ref, x_ref, xt_ref, wqkv_ref, bqkv_ref, *out_refs, with_attn):
    if with_attn:
        out_ref, outh_ref, attw_ref, atth_ref = out_refs
    else:
        out_ref, outh_ref = out_refs
        attw_ref = atth_ref = None

    x = x_ref[0]          # (H, W, C) f32   row-major view
    xt = xt_ref[0]        # (W, H, C) f32   column-major view
    H, W, C = x.shape
    wqkv = wqkv_ref[...]  # (C, 2*C8 + C) bf16  fused [q|k|v] weights (pre-transposed)
    bqkv = bqkv_ref[...]  # (1, 2*C8 + C) f32
    C8 = (wqkv.shape[1] - C) // 2
    g = gamma_ref[0]      # scalar f32 (SMEM)

    def project(inp):
        r, s, c = inp.shape
        flat = inp.reshape(r * s, c).astype(jnp.bfloat16)
        y = jnp.dot(flat, wqkv, preferred_element_type=jnp.float32) + bqkv
        return y.astype(jnp.bfloat16)          # (r*s, 2*C8 + C)

    # Fused 1x1-conv (== channel matmul) QKV projection, one per spatial layout.
    y = project(x)                              # (H*W, 2*C8 + C)
    yt = project(xt)                            # (W*H, 2*C8 + C)
    q = y[:, :C8].reshape(H, W, C8)
    k = y[:, C8:2 * C8].reshape(H, W, C8)
    v = y[:, 2 * C8:].reshape(H, W, C)
    qt = yt[:, :C8].reshape(W, H, C8)
    kt = yt[:, C8:2 * C8].reshape(W, H, C8)
    vt = yt[:, 2 * C8:].reshape(W, H, C)

    # Energies: bf16 operands, f32 accumulation on the MXU, leading-batch dots.
    e_w = lax.dot_general(q, k, (((2,), (2,)), ((0,), (0,))),
                          preferred_element_type=jnp.float32)        # (H, Wq, Wk)
    e_h = lax.dot_general(qt, kt, (((2,), (2,)), ((0,), (0,))),
                          preferred_element_type=jnp.float32)        # (W, Hq, Hk)
    hq = lax.broadcasted_iota(jnp.int32, e_h.shape, 1)
    hk = lax.broadcasted_iota(jnp.int32, e_h.shape, 2)
    e_h = jnp.where(hq == hk, -jnp.inf, e_h)    # -inf diagonal mask (H branch)

    # Joint softmax over concat([energy_H, energy_W]) along the key axis (f32 stats).
    m = jnp.maximum(jnp.max(e_w, axis=-1), jnp.max(e_h, axis=-1).T)  # (H, W)
    m_t = m.T                                                        # (W, H)
    s_w = jnp.sum(jnp.exp(e_w - m[:, :, None]), axis=-1)             # (H, W)
    s_h = jnp.sum(jnp.exp(e_h - m_t[:, :, None]), axis=-1)           # (W, H)
    denom = s_w + s_h.T                                              # (H, W)
    if hasattr(pl, "reciprocal"):
        inv = pl.reciprocal(denom, approx=True)
    else:  # older JAX fallback
        inv = 1.0 / denom

    # --- W (row) branch end-to-end (reduces peak live intermediates) ---
    att_w = jnp.exp(e_w - m[:, :, None]) * inv[:, :, None]           # (H, Wq, Wk)
    out_w = lax.dot_general(att_w.astype(jnp.bfloat16), v,
                            (((2,), (1,)), ((0,), (0,))),
                            preferred_element_type=jnp.float32)      # (H, W, C)
    out_ref[0] = x + g * out_w            # fused residual, row-major half
    if attw_ref is not None:
        attw_ref[0] = att_w

    # --- H (column) branch end-to-end ---
    att_h = jnp.exp(e_h - m_t[:, :, None]) * inv.T[:, :, None]       # (W, Hq, Hk)
    out_h = lax.dot_general(att_h.astype(jnp.bfloat16), vt,
                            (((2,), (1,)), ((0,), (0,))),
                            preferred_element_type=jnp.float32)      # (W, H, C)
    outh_ref[0] = g * out_h               # gamma-scaled column-major half
    if atth_ref is not None:
        atth_ref[0] = att_h


def criss_cross_attention(x_nchw, params, *, return_attention=True):
    wq, bq = params["wq"], params["bq"]
    wk, bk = params["wk"], params["bk"]
    wv, bv = params["wv"], params["bv"]
    gamma = jnp.asarray(params["gamma"], jnp.float32).reshape(1)

    B, C, H, W = x_nchw.shape
    C8 = wq.shape[0]
    Ct = 2 * C8 + C

    x_hwc = jnp.transpose(x_nchw, (0, 2, 3, 1)).astype(jnp.float32)   # (B, H, W, C)
    x_whc = jnp.transpose(x_nchw, (0, 3, 2, 1)).astype(jnp.float32)   # (B, W, H, C)

    # Fused [q|k|v] projection weights (C, 2*C8+C) in bf16, biases in f32.
    wqkv = jnp.concatenate([wq.T, wk.T, wv.T], axis=1).astype(jnp.bfloat16)
    bqkv = jnp.concatenate([bq, bk, bv]).reshape(1, Ct).astype(jnp.float32)

    bmap = lambda b: (b, 0, 0, 0)
    wmap = lambda b: (0, 0)

    out_shapes = [
        jax.ShapeDtypeStruct((B, H, W, C), jnp.float32),   # x + gamma*out_W (row-major)
        jax.ShapeDtypeStruct((B, W, H, C), jnp.float32),   # gamma*out_H (column-major)
    ]
    out_specs = [
        pl.BlockSpec((1, H, W, C), bmap),
        pl.BlockSpec((1, W, H, C), bmap),
    ]
    if return_attention:
        out_shapes += [
            jax.ShapeDtypeStruct((B, H, W, W), jnp.float32),   # att_W [b, h, wq, wk]
            jax.ShapeDtypeStruct((B, W, H, H), jnp.float32),   # att_H [b, w, hq, hk]
        ]
        out_specs += [
            pl.BlockSpec((1, H, W, W), bmap),
            pl.BlockSpec((1, W, H, H), bmap),
        ]

    in_specs = [
        pl.BlockSpec(memory_space=pltpu.MemorySpace.SMEM),   # gamma (scalar)
        pl.BlockSpec((1, H, W, C), bmap),
        pl.BlockSpec((1, W, H, C), bmap),
        pl.BlockSpec((C, Ct), wmap),
        pl.BlockSpec((1, Ct), wmap),
    ]

    # Rough per-step working-set estimate (inputs/outputs double-buffered + f32
    # energies/probs + bf16 qkv), used to size the scoped-VMEM limit explicitly.
    est = 4 * (4 * H * W * C + 3 * (H * W * W + W * H * H)) + 2 * (6 * H * W * Ct)
    vmem_limit = int(min(64 * 1024 * 1024, max(32 * 1024 * 1024, 2 * est)))

    outs = pl.pallas_call(
        functools.partial(_cca_kernel, with_attn=return_attention),
        out_shape=tuple(out_shapes),
        grid=(B,),
        in_specs=in_specs,
        out_specs=tuple(out_specs),
        compiler_params=pltpu.CompilerParams(
            dimension_semantics=("parallel",),
            vmem_limit_bytes=vmem_limit),
    )(gamma, x_hwc, x_whc, wqkv, bqkv)

    if return_attention:
        out_w_res, out_h_g, att_w, att_h = outs
    else:
        out_w_res, out_h_g = outs

    # Residual is already folded in-kernel; only the NCHW layout plumbing remains.
    out = (jnp.transpose(out_w_res, (0, 3, 1, 2))
           + jnp.transpose(out_h_g, (0, 3, 2, 1))).astype(x_nchw.dtype)

    if not return_attention:
        return out, None

    # return_attn = stack([att_H.view(B,W,H,H).permute(0,3,2,1),
    #                      att_W.view(B,H,W,W).permute(0,3,1,2)], dim=1)
    ra0 = jnp.transpose(att_h, (0, 3, 2, 1))   # (B, Hk, Hq, W)
    ra1 = jnp.transpose(att_w, (0, 3, 1, 2))   # (B, Wk, H, Wq)
    return out, jnp.stack([ra0, ra1], axis=1)


def reference(x, params):
    # Pure-JAX transliteration of the PyTorch forward, for validation only.
    wq, bq = params["wq"], params["bq"]
    wk, bk = params["wk"], params["bk"]
    wv, bv = params["wv"], params["bv"]
    gamma = params["gamma"]
    B, C, H, W = x.shape

    def conv1x1(inp, w, b):
        return jnp.einsum("bchw,oc->bohw", inp, w) + b[None, :, None, None]

    pq, pk, pv = conv1x1(x, wq, bq), conv1x1(x, wk, bk), conv1x1(x, wv, bv)

    q_H = jnp.transpose(pq, (0, 3, 1, 2)).reshape(B * W, -1, H).transpose(0, 2, 1)
    k_H = jnp.transpose(pk, (0, 3, 1, 2)).reshape(B * W, -1, H)
    v_H = jnp.transpose(pv, (0, 3, 1, 2)).reshape(B * W, -1, H)
    q_W = jnp.transpose(pq, (0, 2, 1, 3)).reshape(B * H, -1, W).transpose(0, 2, 1)
    k_W = jnp.transpose(pk, (0, 2, 1, 3)).reshape(B * H, -1, W)
    v_W = jnp.transpose(pv, (0, 2, 1, 3)).reshape(B * H, -1, W)

    inf_mask = jnp.where(jnp.eye(H, dtype=bool), -jnp.inf, 0.0)[None]
    energy_H = (jnp.matmul(q_H, k_H) + inf_mask).reshape(B, W, H, H).transpose(0, 2, 1, 3)
    energy_W = jnp.matmul(q_W, k_W).reshape(B, H, W, W)
    concate = jax.nn.softmax(jnp.concatenate([energy_H, energy_W], axis=3), axis=3)

    att_H = concate[:, :, :, :H].transpose(0, 2, 1, 3).reshape(B * W, H, H)
    att_W = concate[:, :, :, H:H + W].reshape(B * H, W, W)
    out_H = jnp.matmul(v_H, att_H.transpose(0, 2, 1)).reshape(B, W, C, H).transpose(0, 2, 3, 1)
    out_W = jnp.matmul(v_W, att_W.transpose(0, 2, 1)).reshape(B, H, C, W).transpose(0, 2, 1, 3)

    out = gamma * (out_H + out_W) + x
    return_attn = jnp.stack([att_H.reshape(B, W, H, H).transpose(0, 3, 2, 1),
                             att_W.reshape(B, H, W, W).transpose(0, 3, 1, 2)], axis=1)
    return out, return_attn


if __name__ == "__main__":
    key = jax.random.PRNGKey(0)
    B, C, H, W = 2, 16, 16, 16          # in_dim=16 -> query/key channels = 2
    C8 = C // 8

    k_x, k_wq, k_bq, k_wk, k_bk, k_wv, k_bv = jax.random.split(key, 7)
    x = jax.random.normal(k_x, (B, C, H, W), jnp.float32)
    params = dict(
        wq=jax.random.normal(k_wq, (C8, C), jnp.float32) * 0.1,
        bq=jax.random.normal(k_bq, (C8,), jnp.float32) * 0.1,
        wk=jax.random.normal(k_wk, (C8, C), jnp.float32) * 0.1,
        bk=jax.random.normal(k_bk, (C8,), jnp.float32) * 0.1,
        wv=jax.random.normal(k_wv, (C, C), jnp.float32) * 0.1,
        bv=jax.random.normal(k_bv, (C,), jnp.float32) * 0.1,
        gamma=jnp.zeros((1,), jnp.float32),   # nn.Parameter(torch.zeros(1))
    )

    # Faithful forward (gamma == 0 as in the module's __init__).
    out, attn = jax.block_until_ready(criss_cross_attention(x, params))

    # Numerical check against the pure-JAX f32 reference; bf16 MXU operands ->
    # bf16-level tolerance. Use a nonzero gamma so the value path is exercised.
    params_chk = dict(params, gamma=jnp.full((1,), 0.5, jnp.float32))
    out_k, attn_k = jax.block_until_ready(criss_cross_attention(x, params_chk))
    out_r, attn_r = reference(x, params_chk)
    np.testing.assert_allclose(np.asarray(out_k), np.asarray(out_r), atol=2e-2, rtol=2e-2)
    np.testing.assert_allclose(np.asarray(attn_k), np.asarray(attn_r), atol=2e-2, rtol=2e-2)

    print("KERNEL_OK")
</pallas_src>

<mosaic_0001>
module attributes {stable_mosaic.version = 11 : i64} {
  func.func @_cca_kernel(%arg0: i32, %arg1: memref<1xf32, #tpu.memory_space<smem>>, %arg2: memref<1x16x16x16xf32, #tpu.memory_space<vmem>>, %arg3: memref<1x16x16x16xf32, #tpu.memory_space<vmem>>, %arg4: memref<16x20xbf16, #tpu.memory_space<vmem>>, %arg5: memref<1x20xf32, #tpu.memory_space<vmem>>, %arg6: memref<1x16x16x16xf32, #tpu.memory_space<vmem>>, %arg7: memref<1x16x16x16xf32, #tpu.memory_space<vmem>>, %arg8: memref<1x16x16x16xf32, #tpu.memory_space<vmem>>, %arg9: memref<1x16x16x16xf32, #tpu.memory_space<vmem>>) attributes {dimension_semantics = [#tpu.dimension_semantics<parallel>], iteration_bounds = array<i64: 2>, scalar_prefetch = 0 : i64, scratch_operands = 0 : i64, tpu.core_type = #tpu.core_type<tc>, window_params = [{transform_indices = @transform_0, window_bounds = array<i64: 1>}, {transform_indices = @transform_1, window_bounds = array<i64: 1, 16, 16, 16>}, {transform_indices = @transform_2, window_bounds = array<i64: 1, 16, 16, 16>}, {pipeline_mode = #tpu.pipeline_mode<synchronous>, transform_indices = @transform_3, window_bounds = array<i64: 16, 20>}, {pipeline_mode = #tpu.pipeline_mode<synchronous>, transform_indices = @transform_4, window_bounds = array<i64: 1, 20>}, {transform_indices = @transform_5, window_bounds = array<i64: 1, 16, 16, 16>}, {transform_indices = @transform_6, window_bounds = array<i64: 1, 16, 16, 16>}, {transform_indices = @transform_7, window_bounds = array<i64: 1, 16, 16, 16>}, {transform_indices = @transform_8, window_bounds = array<i64: 1, 16, 16, 16>}]} {
    %c0 = arith.constant 0 : index
    %c0_0 = arith.constant 0 : index
    %c0_1 = arith.constant 0 : index
    %c0_2 = arith.constant 0 : index
    %0 = vector.load %arg2[%c0, %c0_0, %c0_1, %c0_2] : memref<1x16x16x16xf32, #tpu.memory_space<vmem>>, vector<1x16x16x16xf32>
    %1 = vector.shape_cast %0 : vector<1x16x16x16xf32> to vector<16x16x16xf32>
    %c0_3 = arith.constant 0 : index
    %c0_4 = arith.constant 0 : index
    %c0_5 = arith.constant 0 : index
    %c0_6 = arith.constant 0 : index
    %2 = vector.load %arg3[%c0_3, %c0_4, %c0_5, %c0_6] : memref<1x16x16x16xf32, #tpu.memory_space<vmem>>, vector<1x16x16x16xf32>
    %3 = vector.shape_cast %2 : vector<1x16x16x16xf32> to vector<16x16x16xf32>
    %c0_7 = arith.constant 0 : index
    %c0_8 = arith.constant 0 : index
    %4 = vector.load %arg4[%c0_7, %c0_8] : memref<16x20xbf16, #tpu.memory_space<vmem>>, vector<16x20xbf16>
    %c0_9 = arith.constant 0 : index
    %c0_10 = arith.constant 0 : index
    %5 = vector.load %arg5[%c0_9, %c0_10] : memref<1x20xf32, #tpu.memory_space<vmem>>, vector<1x20xf32>
    %c0_11 = arith.constant 0 : index
    %6 = memref.load %arg1[%c0_11] : memref<1xf32, #tpu.memory_space<smem>>
    %7 = vector.shape_cast %1 : vector<16x16x16xf32> to vector<256x16xf32>
    %8 = arith.truncf %7 : vector<256x16xf32> to vector<256x16xbf16>
    %cst = arith.constant dense<0.000000e+00> : vector<256x20xf32>
    %9 = tpu.matmul %8, %4, %cst {dimension_numbers = #tpu.dot_dimension_numbers<[1], [0], [0], [1], [0, 0, 1, 1], [], []>} : vector<256x16xbf16>, vector<16x20xbf16>, vector<256x20xf32> -> vector<256x20xf32>
    %10 = vector.broadcast %5 : vector<1x20xf32> to vector<256x20xf32>
    %11 = arith.addf %9, %10 : vector<256x20xf32>
    %12 = arith.truncf %11 : vector<256x20xf32> to vector<256x20xbf16>
    %13 = vector.shape_cast %3 : vector<16x16x16xf32> to vector<256x16xf32>
    %14 = arith.truncf %13 : vector<256x16xf32> to vector<256x16xbf16>
    %cst_12 = arith.constant dense<0.000000e+00> : vector<256x20xf32>
    %15 = tpu.matmul %14, %4, %cst_12 {dimension_numbers = #tpu.dot_dimension_numbers<[1], [0], [0], [1], [0, 0, 1, 1], [], []>} : vector<256x16xbf16>, vector<16x20xbf16>, vector<256x20xf32> -> vector<256x20xf32>
    %16 = vector.broadcast %5 : vector<1x20xf32> to vector<256x20xf32>
    %17 = arith.addf %15, %16 : vector<256x20xf32>
    %18 = arith.truncf %17 : vector<256x20xf32> to vector<256x20xbf16>
    %19 = vector.extract_strided_slice %12 {offsets = [0, 0], sizes = [256, 2], strides = [1, 1]} : vector<256x20xbf16> to vector<256x2xbf16>
    %20 = vector.shape_cast %19 : vector<256x2xbf16> to vector<16x16x2xbf16>
    %21 = vector.extract_strided_slice %12 {offsets = [0, 2], sizes = [256, 2], strides = [1, 1]} : vector<256x20xbf16> to vector<256x2xbf16>
    %22 = vector.shape_cast %21 : vector<256x2xbf16> to vector<16x16x2xbf16>
    %23 = vector.extract_strided_slice %12 {offsets = [0, 4], sizes = [256, 16], strides = [1, 1]} : vector<256x20xbf16> to vector<256x16xbf16>
    %24 = vector.shape_cast %23 : vector<256x16xbf16> to vector<16x16x16xbf16>
    %25 = vector.extract_strided_slice %18 {offsets = [0, 0], sizes = [256, 2], strides = [1, 1]} : vector<256x20xbf16> to vector<256x2xbf16>
    %26 = vector.shape_cast %25 : vector<256x2xbf16> to vector<16x16x2xbf16>
    %27 = vector.extract_strided_slice %18 {offsets = [0, 2], sizes = [256, 2], strides = [1, 1]} : vector<256x20xbf16> to vector<256x2xbf16>
    %28 = vector.shape_cast %27 : vector<256x2xbf16> to vector<16x16x2xbf16>
    %29 = vector.extract_strided_slice %18 {offsets = [0, 4], sizes = [256, 16], strides = [1, 1]} : vector<256x20xbf16> to vector<256x16xbf16>
    %30 = vector.shape_cast %29 : vector<256x16xbf16> to vector<16x16x16xbf16>
    %cst_13 = arith.constant dense<0.000000e+00> : vector<16x16x16xf32>
    %31 = tpu.matmul %20, %22, %cst_13 {dimension_numbers = #tpu.dot_dimension_numbers<[2], [2], [1], [1], [0, 0, 0, 1, 1, 1], [0], [0]>} : vector<16x16x2xbf16>, vector<16x16x2xbf16>, vector<16x16x16xf32> -> vector<16x16x16xf32>
    %cst_14 = arith.constant dense<0.000000e+00> : vector<16x16x16xf32>
    %32 = tpu.matmul %26, %28, %cst_14 {dimension_numbers = #tpu.dot_dimension_numbers<[2], [2], [1], [1], [0, 0, 0, 1, 1, 1], [0], [0]>} : vector<16x16x2xbf16>, vector<16x16x2xbf16>, vector<16x16x16xf32> -> vector<16x16x16xf32>
    %33 = tpu.iota {dimensions = array<i32: 1>} : vector<16x16x16xi32>
    %34 = tpu.iota {dimensions = array<i32: 2>} : vector<16x16x16xi32>
    %35 = arith.cmpi eq, %33, %34 : vector<16x16x16xi32>
    %cst_15 = arith.constant 0xFF800000 : f32
    %36 = vector.broadcast %cst_15 : f32 to vector<16x16x16xf32>
    %37 = arith.select %35, %36, %32 : vector<16x16x16xi1>, vector<16x16x16xf32>
    %cst_16 = arith.constant dense<0xFF800000> : vector<16x16xf32>
    %38 = vector.multi_reduction <maximumf>, %31, %cst_16 [2] : vector<16x16x16xf32> to vector<16x16xf32>
    %cst_17 = arith.constant dense<0xFF800000> : vector<16x16xf32>
    %39 = vector.multi_reduction <maximumf>, %37, %cst_17 [2] : vector<16x16x16xf32> to vector<16x16xf32>
    %40 = tpu.transpose %39, [1, 0] : vector<16x16xf32> -> vector<16x16xf32>
    %41 = arith.maximumf %38, %40 : vector<16x16xf32>
    %42 = tpu.transpose %41, [1, 0] : vector<16x16xf32> -> vector<16x16xf32>
    %43 = vector.shape_cast %41 : vector<16x16xf32> to vector<16x16x1xf32>
    %44 = vector.broadcast %43 : vector<16x16x1xf32> to vector<16x16x16xf32>
    %45 = arith.subf %31, %44 : vector<16x16x16xf32>
    %46 = math.exp %45 : vector<16x16x16xf32>
    %cst_18 = arith.constant dense<0.000000e+00> : vector<16x16xf32>
    %47 = vector.multi_reduction <add>, %46, %cst_18 [2] : vector<16x16x16xf32> to vector<16x16xf32>
    %48 = vector.shape_cast %42 : vector<16x16xf32> to vector<16x16x1xf32>
    %49 = vector.broadcast %48 : vector<16x16x1xf32> to vector<16x16x16xf32>
    %50 = arith.subf %37, %49 : vector<16x16x16xf32>
    %51 = math.exp %50 : vector<16x16x16xf32>
    %cst_19 = arith.constant dense<0.000000e+00> : vector<16x16xf32>
    %52 = vector.multi_reduction <add>, %51, %cst_19 [2] : vector<16x16x16xf32> to vector<16x16xf32>
    %53 = tpu.transpose %52, [1, 0] : vector<16x16xf32> -> vector<16x16xf32>
    %54 = arith.addf %47, %53 : vector<16x16xf32>
    %55 = tpu.reciprocal %54 {approx = true} : vector<16x16xf32> -> vector<16x16xf32>
    %56 = vector.shape_cast %41 : vector<16x16xf32> to vector<16x16x1xf32>
    %57 = vector.broadcast %56 : vector<16x16x1xf32> to vector<16x16x16xf32>
    %58 = arith.subf %31, %57 : vector<16x16x16xf32>
    %59 = math.exp %58 : vector<16x16x16xf32>
    %60 = vector.shape_cast %55 : vector<16x16xf32> to vector<16x16x1xf32>
    %61 = vector.broadcast %60 : vector<16x16x1xf32> to vector<16x16x16xf32>
    %62 = arith.mulf %59, %61 : vector<16x16x16xf32>
    %63 = arith.truncf %62 : vector<16x16x16xf32> to vector<16x16x16xbf16>
    %cst_20 = arith.constant dense<0.000000e+00> : vector<16x16x16xf32>
    %64 = tpu.matmul %63, %24, %cst_20 {dimension_numbers = #tpu.dot_dimension_numbers<[2], [1], [1], [2], [0, 0, 0, 1, 1, 2], [0], [0]>} : vector<16x16x16xbf16>, vector<16x16x16xbf16>, vector<16x16x16xf32> -> vector<16x16x16xf32>
    %65 = vector.broadcast %6 : f32 to vector<16x16x16xf32>
    %66 = arith.mulf %65, %64 : vector<16x16x16xf32>
    %67 = arith.addf %1, %66 : vector<16x16x16xf32>
    %c0_21 = arith.constant 0 : index
    %c0_22 = arith.constant 0 : index
    %c0_23 = arith.constant 0 : index
    %c0_24 = arith.constant 0 : index
    %68 = vector.load %arg6[%c0_21, %c0_22, %c0_23, %c0_24] : memref<1x16x16x16xf32, #tpu.memory_space<vmem>>, vector<1x16x16x16xf32>
    %69 = vector.shape_cast %68 : vector<1x16x16x16xf32> to vector<16x16x16xf32>
    %70 = vector.shape_cast %67 : vector<16x16x16xf32> to vector<1x16x16x16xf32>
    tpu.vector_store %arg6[%c0_21, %c0_22, %c0_23, %c0_24], %70 {strides = array<i32>} : memref<1x16x16x16xf32, #tpu.memory_space<vmem>>, vector<1x16x16x16xf32>,
    %c0_25 = arith.constant 0 : index
    %c0_26 = arith.constant 0 : index
    %c0_27 = arith.constant 0 : index
    %c0_28 = arith.constant 0 : index
    %71 = vector.load %arg8[%c0_25, %c0_26, %c0_27, %c0_28] : memref<1x16x16x16xf32, #tpu.memory_space<vmem>>, vector<1x16x16x16xf32>
    %72 = vector.shape_cast %71 : vector<1x16x16x16xf32> to vector<16x16x16xf32>
    %73 = vector.shape_cast %62 : vector<16x16x16xf32> to vector<1x16x16x16xf32>
    tpu.vector_store %arg8[%c0_25, %c0_26, %c0_27, %c0_28], %73 {strides = array<i32>} : memref<1x16x16x16xf32, #tpu.memory_space<vmem>>, vector<1x16x16x16xf32>,
    %74 = vector.shape_cast %42 : vector<16x16xf32> to vector<16x16x1xf32>
    %75 = vector.broadcast %74 : vector<16x16x1xf32> to vector<16x16x16xf32>
    %76 = arith.subf %37, %75 : vector<16x16x16xf32>
    %77 = math.exp %76 : vector<16x16x16xf32>
    %78 = tpu.transpose %55, [1, 0] : vector<16x16xf32> -> vector<16x16xf32>
    %79 = vector.shape_cast %78 : vector<16x16xf32> to vector<16x16x1xf32>
    %80 = vector.broadcast %79 : vector<16x16x1xf32> to vector<16x16x16xf32>
    %81 = arith.mulf %77, %80 : vector<16x16x16xf32>
    %82 = arith.truncf %81 : vector<16x16x16xf32> to vector<16x16x16xbf16>
    %cst_29 = arith.constant dense<0.000000e+00> : vector<16x16x16xf32>
    %83 = tpu.matmul %82, %30, %cst_29 {dimension_numbers = #tpu.dot_dimension_numbers<[2], [1], [1], [2], [0, 0, 0, 1, 1, 2], [0], [0]>} : vector<16x16x16xbf16>, vector<16x16x16xbf16>, vector<16x16x16xf32> -> vector<16x16x16xf32>
    %84 = vector.broadcast %6 : f32 to vector<16x16x16xf32>
    %85 = arith.mulf %84, %83 : vector<16x16x16xf32>
    %c0_30 = arith.constant 0 : index
    %c0_31 = arith.constant 0 : index
    %c0_32 = arith.constant 0 : index
    %c0_33 = arith.constant 0 : index
    %86 = vector.load %arg7[%c0_30, %c0_31, %c0_32, %c0_33] : memref<1x16x16x16xf32, #tpu.memory_space<vmem>>, vector<1x16x16x16xf32>
    %87 = vector.shape_cast %86 : vector<1x16x16x16xf32> to vector<16x16x16xf32>
    %88 = vector.shape_cast %85 : vector<16x16x16xf32> to vector<1x16x16x16xf32>
    tpu.vector_store %arg7[%c0_30, %c0_31, %c0_32, %c0_33], %88 {strides = array<i32>} : memref<1x16x16x16xf32, #tpu.memory_space<vmem>>, vector<1x16x16x16xf32>,
    %c0_34 = arith.constant 0 : index
    %c0_35 = arith.constant 0 : index
    %c0_36 = arith.constant 0 : index
    %c0_37 = arith.constant 0 : index
    %89 = vector.load %arg9[%c0_34, %c0_35, %c0_36, %c0_37] : memref<1x16x16x16xf32, #tpu.memory_space<vmem>>, vector<1x16x16x16xf32>
    %90 = vector.shape_cast %89 : vector<1x16x16x16xf32> to vector<16x16x16xf32>
    %91 = vector.shape_cast %81 : vector<16x16x16xf32> to vector<1x16x16x16xf32>
    tpu.vector_store %arg9[%c0_34, %c0_35, %c0_36, %c0_37], %91 {strides = array<i32>} : memref<1x16x16x16xf32, #tpu.memory_space<vmem>>, vector<1x16x16x16xf32>,
    return
  }
  func.func @transform_0(%arg0: i32) -> i32 {
    %c0_i32 = arith.constant 0 : i32
    %c0_i32_0 = arith.constant 0 : i32
    return %c0_i32 : i32
  }
  func.func @transform_1(%arg0: i32) -> (i32, i32, i32, i32) {
    %c0_i32 = arith.constant 0 : i32
    %c0_i32_0 = arith.constant 0 : i32
    %c0_i32_1 = arith.constant 0 : i32
    %c0_i32_2 = arith.constant 0 : i32
    return %arg0, %c0_i32, %c0_i32_0, %c0_i32_1 : i32, i32, i32, i32
  }
  func.func @transform_2(%arg0: i32) -> (i32, i32, i32, i32) {
    %c0_i32 = arith.constant 0 : i32
    %c0_i32_0 = arith.constant 0 : i32
    %c0_i32_1 = arith.constant 0 : i32
    %c0_i32_2 = arith.constant 0 : i32
    return %arg0, %c0_i32, %c0_i32_0, %c0_i32_1 : i32, i32, i32, i32
  }
  func.func @transform_3(%arg0: i32) -> (i32, i32) {
    %c0_i32 = arith.constant 0 : i32
    %c0_i32_0 = arith.constant 0 : i32
    %c0_i32_1 = arith.constant 0 : i32
    return %c0_i32, %c0_i32_0 : i32, i32
  }
  func.func @transform_4(%arg0: i32) -> (i32, i32) {
    %c0_i32 = arith.constant 0 : i32
    %c0_i32_0 = arith.constant 0 : i32
    %c0_i32_1 = arith.constant 0 : i32
    return %c0_i32, %c0_i32_0 : i32, i32
  }
  func.func @transform_5(%arg0: i32) -> (i32, i32, i32, i32) {
    %c0_i32 = arith.constant 0 : i32
    %c0_i32_0 = arith.constant 0 : i32
    %c0_i32_1 = arith.constant 0 : i32
    %c0_i32_2 = arith.constant 0 : i32
    return %arg0, %c0_i32, %c0_i32_0, %c0_i32_1 : i32, i32, i32, i32
  }
  func.func @transform_6(%arg0: i32) -> (i32, i32, i32, i32) {
    %c0_i32 = arith.constant 0 : i32
    %c0_i32_0 = arith.constant 0 : i32
    %c0_i32_1 = arith.constant 0 : i32
    %c0_i32_2 = arith.constant 0 : i32
    return %arg0, %c0_i32, %c0_i32_0, %c0_i32_1 : i32, i32, i32, i32
  }
  func.func @transform_7(%arg0: i32) -> (i32, i32, i32, i32) {
    %c0_i32 = arith.constant 0 : i32
    %c0_i32_0 = arith.constant 0 : i32
    %c0_i32_1 = arith.constant 0 : i32
    %c0_i32_2 = arith.constant 0 : i32
    return %arg0, %c0_i32, %c0_i32_0, %c0_i32_1 : i32, i32, i32, i32
  }
  func.func @transform_8(%arg0: i32) -> (i32, i32, i32, i32) {
    %c0_i32 = arith.constant 0 : i32
    %c0_i32_0 = arith.constant 0 : i32
    %c0_i32_1 = arith.constant 0 : i32
    %c0_i32_2 = arith.constant 0 : i32
    return %arg0, %c0_i32, %c0_i32_0, %c0_i32_1 : i32, i32, i32, i32
  }
}

</mosaic_0001>

<llo_original>
// kernel: tpu_custom_call.1
$region0: #{tpu_custom_call.1}
  #allocation0 [shape = 'u32[]', space=smem, size = 0x4, offset = 0x4, fixed_abs, tag = 'smem constant byte address 0x4 - core index']
  #allocation1 [shape = 'u32[144,128]{1,0:T(1,128)}', space=vmem, size = 0x12000, scoped, tag = 'internal scratch']
  #allocation2 [shape = 'f32[1]{0:T(128)S(6)}', space=smem, size = 0x200, scoped, tag = 'scoped memory for tpu_custom_call.1']
  %s0 = inlined_call_operand.<no memory space> [shape: f32[1], index: 0, kind: input, shape index: {}]
  %s1 = inlined_call_operand.hbm [shape: f32[2,16,16,16], index: 1, kind: input, shape index: {}]
  %s2 = inlined_call_operand.hbm [shape: f32[2,16,16,16], index: 2, kind: input, shape index: {}]
  %s3 = inlined_call_operand.vmem [shape: bf16[16,20], index: 3, kind: input, shape index: {}]
  %s4 = inlined_call_operand.vmem [shape: f32[1,20], index: 4, kind: input, shape index: {}]
  %s5 = inlined_call_operand.hbm [shape: f32[2,16,16,16], index: 5, kind: output, shape index: {0}]
  %s6 = inlined_call_operand.hbm [shape: f32[2,16,16,16], index: 6, kind: output, shape index: {1}]
  %s7 = inlined_call_operand.hbm [shape: f32[2,16,16,16], index: 7, kind: output, shape index: {2}]
  %s8 = inlined_call_operand.hbm [shape: f32[2,16,16,16], index: 8, kind: output, shape index: {3}]
  %9 = xla_tuple %s5, %s6, %s7, %s8
  %s10 = sld [smem:[#allocation0]]
  $region85: #{tpu_custom_call.1} parent=0
    _
  %s12 = ssub.s32 1, %s10
  %s13 = scalar_select 0, %s12, %s10
  %14 = sst [smem:[#allocation2]] %s0
  $region1: #{tpu_custom_call.1} parent=0
    #allocation3 [shape = 'u8[262144]{0}', space=vmem, size = 0x40000, scoped, tag = 'input window, operand 1']
    #allocation4 [shape = 's32[2]{0}', space=sflag, size = 0x8, scoped, tag = 'scoped memory for tpu_custom_call.1']
    #allocation5 [shape = 's32[2]{0}', space=sflag, size = 0x8, scoped, tag = 'scoped memory for tpu_custom_call.1']
    #allocation6 [shape = 'u8[262144]{0}', space=vmem, size = 0x40000, scoped, tag = 'input window, operand 2']
    #allocation7 [shape = 's32[2]{0}', space=sflag, size = 0x8, scoped, tag = 'scoped memory for tpu_custom_call.1']
    #allocation8 [shape = 'u8[262144]{0}', space=vmem, size = 0x40000, scoped, tag = 'output window, operand 0']
    #allocation9 [shape = 'u8[262144]{0}', space=vmem, size = 0x40000, scoped, tag = 'output window, operand 1']
    #allocation10 [shape = 's32[2]{0}', space=sflag, size = 0x8, scoped, tag = 'scoped memory for tpu_custom_call.1']
    #allocation11 [shape = 'u8[262144]{0}', space=vmem, size = 0x40000, scoped, tag = 'output window, operand 2']
    #allocation12 [shape = 'u8[262144]{0}', space=vmem, size = 0x40000, scoped, tag = 'output window, operand 3']
    #allocation13 [shape = 's32[2]{0}', space=sflag, size = 0x8, scoped, tag = 'scoped memory for tpu_custom_call.1']
    %15 = vsyncpa [#allocation4], 0
    %s16 = scalar_lea.sflag [#allocation4], 1
    %17 = vsyncpa %s16, 0
    %18 = vsyncpa [#allocation7], 0
    %s19 = scalar_lea.sflag [#allocation7], 1
    %20 = vsyncpa %s19, 0
    %21 = vsyncpa [#allocation5], 0
    %s22 = scalar_lea.sflag [#allocation5], 1
    %23 = vsyncpa %s22, 0
    %24 = vsyncpa [#allocation10], 0
    %s25 = scalar_lea.sflag [#allocation10], 1
    %26 = vsyncpa %s25, 0
    %27 = vsyncpa [#allocation13], 0
    %s28 = scalar_lea.sflag [#allocation13], 1
    %29 = vsyncpa %s28, 0
    loop: start=0, step=1, limit=4
    $region2: #{tpu_custom_call.1} parent=1 // loop_pre_header
      _
    $region3: #{tpu_custom_call.1} parent=1 // loop_header
      %s31 = sphi 0, %s35
      %p32 = scmp.ge.s32.totalorder %s31, 4
      %s39 = sphi 0, %s39
      %s41 = sphi 0, %s39
      %s42 = sphi 0, %s41
      %s56 = sphi 0, %s42
      %s62 = sphi 0, %s64
      %s65 = sphi 0, %s62
      %s66 = sphi 0, %s65
      %s82 = sphi 0, %s66
      %s88 = sphi 0, %s90
      %s91 = sphi 0, %s88
      %s92 = sphi 0, %s91
      %s108 = sphi 0, %s92
      %s112 = sphi 0, %s112
      %s114 = sphi 0, %s112
      %s115 = sphi 0, %s114
      %s129 = sphi 0, %s115
      %s133 = sphi 0, %s133
      %s135 = sphi 0, %s133
      %s136 = sphi 0, %s135
      %s150 = sphi 0, %s136
      %s156 = sphi 0, %s158
      %s159 = sphi 0, %s156
      %s160 = sphi 0, %s159
      %s176 = sphi 0, %s160
      %s182 = sphi 0, %s184
      %s185 = sphi 0, %s182
      %s186 = sphi 0, %s185
      %s202 = sphi 0, %s186
      %s208 = sphi 0, %s210
      %s211 = sphi 0, %s208
      %s212 = sphi 0, %s211
      %s228 = sphi 0, %s212
      %s234 = sphi 0, %s236
      %s237 = sphi 0, %s234
      %s238 = sphi 0, %s237
      %s254 = sphi 0, %s238
    $region4: #{tpu_custom_call.1} parent=1 // loop_header_branch
      %34 = sbr.rel (%p32) target = $region8
    $region5: #{tpu_custom_call.1} parent=1 // loop_body
      %s36 = ssub.s32 %s31, 1
      %s37 = ssub.s32 %s31, 2
      %s38 = sadd.s32 %s31, 1
      %s40 = sadd.s32 %s39, 1
      %p43 = scmp.eq.s32.totalorder %s31, 1
      %p44 = scmp.ne.s32.totalorder %s39, %s41
      %p45 = scmp.eq.s32.totalorder %s31, 0
      %p46 = por %p44, %p45
      %p47 = scmp.ne.s32.totalorder %s39, %s41
      %p48 = scmp.eq.s32.totalorder %s36, 1
      %p49 = por %p47, %p48
      %p50 = scmp.ne.s32.totalorder %s41, %s42
      %p51 = scmp.eq.s32.totalorder %s36, 0
      %p52 = por %p50, %p51
      %p53 = scmp.ne.s32.totalorder %s41, %s42
      %p54 = scmp.eq.s32.totalorder %s37, 1
      %p55 = por %p53, %p54
      %p57 = scmp.ne.s32.totalorder %s42, %s56
      %p58 = scmp.eq.s32.totalorder %s37, 0
      %p59 = por %p57, %p58
      %s60 = ssub.s32 %s31, %s38
      %p61 = scmp.eq.s32.totalorder %s60, 0
      %s63 = sadd.s32 %s62, 1
      %s64 = scalar_select %p61, %s62, %s63
      %p67 = pneg %p61
      %p68 = scmp.eq.s32.totalorder %s31, 1
      %p69 = por %p67, %p68
      %p70 = scmp.ne.s32.totalorder %s62, %s65
      %p71 = scmp.eq.s32.totalorder %s31, 0
      %p72 = por %p70, %p71
      %p73 = scmp.ne.s32.totalorder %s62, %s65
      %p74 = scmp.eq.s32.totalorder %s36, 1
      %p75 = por %p73, %p74
      %p76 = scmp.ne.s32.totalorder %s65, %s66
      %p77 = scmp.eq.s32.totalorder %s36, 0
      %p78 = por %p76, %p77
      %p79 = scmp.ne.s32.totalorder %s65, %s66
      %p80 = scmp.eq.s32.totalorder %s37, 1
      %p81 = por %p79, %p80
      %p83 = scmp.ne.s32.totalorder %s66, %s82
      %p84 = scmp.eq.s32.totalorder %s37, 0
      %p85 = por %p83, %p84
      %s86 = ssub.s32 %s31, %s38
      %p87 = scmp.eq.s32.totalorder %s86, 0
      %s89 = sadd.s32 %s88, 1
      %s90 = scalar_select %p87, %s88, %s89
      %p93 = pneg %p87
      %p94 = scmp.eq.s32.totalorder %s31, 1
      %p95 = por %p93, %p94
      %p96 = scmp.ne.s32.totalorder %s88, %s91
      %p97 = scmp.eq.s32.totalorder %s31, 0
      %p98 = por %p96, %p97
      %p99 = scmp.ne.s32.totalorder %s88, %s91
      %p100 = scmp.eq.s32.totalorder %s36, 1
      %p101 = por %p99, %p100
      %p102 = scmp.ne.s32.totalorder %s91, %s92
      %p103 = scmp.eq.s32.totalorder %s36, 0
      %p104 = por %p102, %p103
      %p105 = scmp.ne.s32.totalorder %s91, %s92
      %p106 = scmp.eq.s32.totalorder %s37, 1
      %p107 = por %p105, %p106
      %p109 = scmp.ne.s32.totalorder %s92, %s108
      %p110 = scmp.eq.s32.totalorder %s37, 0
      %p111 = por %p109, %p110
      %s113 = sadd.s32 %s112, 1
      %p116 = scmp.eq.s32.totalorder %s31, 1
      %p117 = scmp.ne.s32.totalorder %s112, %s114
      %p118 = scmp.eq.s32.totalorder %s31, 0
      %p119 = por %p117, %p118
      %p120 = scmp.ne.s32.totalorder %s112, %s114
      %p121 = scmp.eq.s32.totalorder %s36, 1
      %p122 = por %p120, %p121
      %p123 = scmp.ne.s32.totalorder %s114, %s115
      %p124 = scmp.eq.s32.totalorder %s36, 0
      %p125 = por %p123, %p124
      %p126 = scmp.ne.s32.totalorder %s114, %s115
      %p127 = scmp.eq.s32.totalorder %s37, 1
      %p128 = por %p126, %p127
      %p130 = scmp.ne.s32.totalorder %s115, %s129
      %p131 = scmp.eq.s32.totalorder %s37, 0
      %p132 = por %p130, %p131
      %s134 = sadd.s32 %s133, 1
      %p137 = scmp.eq.s32.totalorder %s31, 1
      %p138 = scmp.ne.s32.totalorder %s133, %s135
      %p139 = scmp.eq.s32.totalorder %s31, 0
      %p140 = por %p138, %p139
      %p141 = scmp.ne.s32.totalorder %s133, %s135
      %p142 = scmp.eq.s32.totalorder %s36, 1
      %p143 = por %p141, %p142
      %p144 = scmp.ne.s32.totalorder %s135, %s136
      %p145 = scmp.eq.s32.totalorder %s36, 0
      %p146 = por %p144, %p145
      %p147 = scmp.ne.s32.totalorder %s135, %s136
      %p148 = scmp.eq.s32.totalorder %s37, 1
      %p149 = por %p147, %p148
      %p151 = scmp.ne.s32.totalorder %s136, %s150
      %p152 = scmp.eq.s32.totalorder %s37, 0
      %p153 = por %p151, %p152
      %s154 = ssub.s32 %s31, %s38
      %p155 = scmp.eq.s32.totalorder %s154, 0
      %s157 = sadd.s32 %s156, 1
      %s158 = scalar_select %p155, %s156, %s157
      %p161 = pneg %p155
      %p162 = scmp.eq.s32.totalorder %s31, 1
      %p163 = por %p161, %p162
      %p164 = scmp.ne.s32.totalorder %s156, %s159
      %p165 = scmp.eq.s32.totalorder %s31, 0
      %p166 = por %p164, %p165
      %p167 = scmp.ne.s32.totalorder %s156, %s159
      %p168 = scmp.eq.s32.totalorder %s36, 1
      %p169 = por %p167, %p168
      %p170 = scmp.ne.s32.totalorder %s159, %s160
      %p171 = scmp.eq.s32.totalorder %s36, 0
      %p172 = por %p170, %p171
      %p173 = scmp.ne.s32.totalorder %s159, %s160
      %p174 = scmp.eq.s32.totalorder %s37, 1
      %p175 = por %p173, %p174
      %p177 = scmp.ne.s32.totalorder %s160, %s176
      %p178 = scmp.eq.s32.totalorder %s37, 0
      %p179 = por %p177, %p178
      %s180 = ssub.s32 %s31, %s38
      %p181 = scmp.eq.s32.totalorder %s180, 0
      %s183 = sadd.s32 %s182, 1
      %s184 = scalar_select %p181, %s182, %s183
      %p187 = pneg %p181
      %p188 = scmp.eq.s32.totalorder %s31, 1
      %p189 = por %p187, %p188
      %p190 = scmp.ne.s32.totalorder %s182, %s185
      %p191 = scmp.eq.s32.totalorder %s31, 0
      %p192 = por %p190, %p191
      %p193 = scmp.ne.s32.totalorder %s182, %s185
      %p194 = scmp.eq.s32.totalorder %s36, 1
      %p195 = por %p193, %p194
      %p196 = scmp.ne.s32.totalorder %s185, %s186
      %p197 = scmp.eq.s32.totalorder %s36, 0
      %p198 = por %p196, %p197
      %p199 = scmp.ne.s32.totalorder %s185, %s186
      %p200 = scmp.eq.s32.totalorder %s37, 1
      %p201 = por %p199, %p200
      %p203 = scmp.ne.s32.totalorder %s186, %s202
      %p204 = scmp.eq.s32.totalorder %s37, 0
      %p205 = por %p203, %p204
      %s206 = ssub.s32 %s31, %s38
      %p207 = scmp.eq.s32.totalorder %s206, 0
      %s209 = sadd.s32 %s208, 1
      %s210 = scalar_select %p207, %s208, %s209
      %p213 = pneg %p207
      %p214 = scmp.eq.s32.totalorder %s31, 1
      %p215 = por %p213, %p214
      %p216 = scmp.ne.s32.totalorder %s208, %s211
      %p217 = scmp.eq.s32.totalorder %s31, 0
      %p218 = por %p216, %p217
      %p219 = scmp.ne.s32.totalorder %s208, %s211
      %p220 = scmp.eq.s32.totalorder %s36, 1
      %p221 = por %p219, %p220
      %p222 = scmp.ne.s32.totalorder %s211, %s212
      %p223 = scmp.eq.s32.totalorder %s36, 0
      %p224 = por %p222, %p223
      %p225 = scmp.ne.s32.totalorder %s211, %s212
      %p226 = scmp.eq.s32.totalorder %s37, 1
      %p227 = por %p225, %p226
      %p229 = scmp.ne.s32.totalorder %s212, %s228
      %p230 = scmp.eq.s32.totalorder %s37, 0
      %p231 = por %p229, %p230
      %s232 = ssub.s32 %s31, %s38
      %p233 = scmp.eq.s32.totalorder %s232, 0
      %s235 = sadd.s32 %s234, 1
      %s236 = scalar_select %p233, %s234, %s235
      %p239 = pneg %p233
      %p240 = scmp.eq.s32.totalorder %s31, 1
      %p241 = por %p239, %p240
      %p242 = scmp.ne.s32.totalorder %s234, %s237
      %p243 = scmp.eq.s32.totalorder %s31, 0
      %p244 = por %p242, %p243
      %p245 = scmp.ne.s32.totalorder %s234, %s237
      %p246 = scmp.eq.s32.totalorder %s36, 1
      %p247 = por %p245, %p246
      %p248 = scmp.ne.s32.totalorder %s237, %s238
      %p249 = scmp.eq.s32.totalorder %s36, 0
      %p250 = por %p248, %p249
      %p251 = scmp.ne.s32.totalorder %s237, %s238
      %p252 = scmp.eq.s32.totalorder %s37, 1
      %p253 = por %p251, %p252
      %p255 = scmp.ne.s32.totalorder %s238, %s254
      %p256 = scmp.eq.s32.totalorder %s37, 0
      %p257 = por %p255, %p256
      %p258 = scmp.le.s32.totalorder 1, %s31
      %p259 = scmp.lt.s32.totalorder %s31, 3
      %p260 = pnand %p258, %p259
      %p261 = pneg %p260
      // Predicated region
      $region9: #{tpu_custom_call.1} parent=5 // pred_check
        _
      $region10: #{tpu_custom_call.1} parent=5 // pred_check_branch
        %263 = sbr.rel (%p260) target = $region12
      $region11: #{tpu_custom_call.1} parent=5 // pred_region
        %s264 = ssub.s32 %s31, 1
        // Predicated region
        $region13: #{tpu_custom_call.1} parent=11 // pred_check
          %p265 = pneg %p52
        $region14: #{tpu_custom_call.1} parent=11 // pred_check_branch
          %267 = sbr.rel (%p265) target = $region16
        $region15: #{tpu_custom_call.1} parent=11 // pred_region
          _
        $region16: #{tpu_custom_call.1} parent=11 // pred_fallthru
          _
        // Predicated region
        $region17: #{tpu_custom_call.1} parent=11 // pred_check
          %p268 = pneg %p125
        $region18: #{tpu_custom_call.1} parent=11 // pred_check_branch
          %270 = sbr.rel (%p268) target = $region20
        $region19: #{tpu_custom_call.1} parent=11 // pred_region
          _
        $region20: #{tpu_custom_call.1} parent=11 // pred_fallthru
          _
        // Predicated region
        $region21: #{tpu_custom_call.1} parent=11 // pred_check
          %p271 = pneg %p146
        $region22: #{tpu_custom_call.1} parent=11 // pred_check_branch
          %273 = sbr.rel (%p271) target = $region24
        $region23: #{tpu_custom_call.1} parent=11 // pred_region
          _
        $region24: #{tpu_custom_call.1} parent=11 // pred_fallthru
          _
      $region12: #{tpu_custom_call.1} parent=5 // pred_fallthru
        _
      %p274 = scmp.lt.s32.totalorder %s31, 2
      // Predicated region
      $region25: #{tpu_custom_call.1} parent=5 // pred_check
        %p275 = pneg %p274
      $region26: #{tpu_custom_call.1} parent=5 // pred_check_branch
        %277 = sbr.rel (%p275) target = $region28
      $region27: #{tpu_custom_call.1} parent=5 // pred_region
        // Predicated region
        $region29: #{tpu_custom_call.1} parent=27 // pred_check
          %p278 = pneg %p72
        $region30: #{tpu_custom_call.1} parent=27 // pred_check_branch
          %280 = sbr.rel (%p278) target = $region32
        $region31: #{tpu_custom_call.1} parent=27 // pred_region
          %s281 = sand.u32 %s62, 1
          %s282 = scalar_lea.sflag [#allocation4], %s281
          %s283 = sand.u32 %s62, 1
          %s284 = smul.addr %s283, 256
          %s285 = scalar_lea.vmem [#allocation3], %s284
          %s287 = ssub.s32 4096, 4096
          %288 = vsyncadd %s282, %s287
          %s289 = smul.addr %s31, 32
          %s290 = smul.addr %s289, 128
          %s291 = scalar_lea.hbm %s1, %s290
          %s292 = sshll.u32 %s285, 4
          %s293 = int_to_ptr.vmem [resolvable:$true] %s292
          %298 = dma.hbm_to_vmem [thread:$0]  %s291, 4096, %s293, %s282, 128, 128, 8
        $region32: #{tpu_custom_call.1} parent=27 // pred_fallthru
          _
        // Predicated region
        $region33: #{tpu_custom_call.1} parent=27 // pred_check
          %p299 = pneg %p98
        $region34: #{tpu_custom_call.1} parent=27 // pred_check_branch
          %301 = sbr.rel (%p299) target = $region36
        $region35: #{tpu_custom_call.1} parent=27 // pred_region
          %s302 = sand.u32 %s88, 1
          %s303 = scalar_lea.sflag [#allocation7], %s302
          %s304 = sand.u32 %s88, 1
          %s305 = smul.addr %s304, 256
          %s306 = scalar_lea.vmem [#allocation6], %s305
          %s308 = ssub.s32 4096, 4096
          %309 = vsyncadd %s303, %s308
          %s310 = smul.addr %s31, 32
          %s311 = smul.addr %s310, 128
          %s312 = scalar_lea.hbm %s2, %s311
          %s313 = sshll.u32 %s306, 4
          %s314 = int_to_ptr.vmem [resolvable:$true] %s313
          %319 = dma.hbm_to_vmem [thread:$0]  %s312, 4096, %s314, %s303, 128, 128, 8
        $region36: #{tpu_custom_call.1} parent=27 // pred_fallthru
          _
      $region28: #{tpu_custom_call.1} parent=5 // pred_fallthru
        _
      %p320 = scmp.le.s32.totalorder 1, %s31
      %p321 = scmp.lt.s32.totalorder %s31, 3
      %p322 = pnand %p320, %p321
      %p323 = pneg %p322
      // Predicated region
      $region37: #{tpu_custom_call.1} parent=5 // pred_check
        _
      $region38: #{tpu_custom_call.1} parent=5 // pred_check_branch
        %325 = sbr.rel (%p322) target = $region40
      $region39: #{tpu_custom_call.1} parent=5 // pred_region
        %s326 = ssub.s32 %s31, 1
        %s327 = sand.u32 %s65, 1
        %s328 = scalar_lea.sflag [#allocation4], %s327
        %s329 = sand.u32 %s65, 1
        %s330 = smul.addr %s329, 256
        %s331 = scalar_lea.vmem [#allocation3], %s330
        // Predicated region
        $region41: #{tpu_custom_call.1} parent=39 // pred_check
          %p332 = pneg %p78
        $region42: #{tpu_custom_call.1} parent=39 // pred_check_branch
          %334 = sbr.rel (%p332) target = $region44
        $region43: #{tpu_custom_call.1} parent=39 // pred_region
          %335 = dma.done %s328, 4096
        $region44: #{tpu_custom_call.1} parent=39 // pred_fallthru
          _
        %s336 = sand.u32 %s91, 1
        %s337 = scalar_lea.sflag [#allocation7], %s336
        %s338 = sand.u32 %s91, 1
        %s339 = smul.addr %s338, 256
        %s340 = scalar_lea.vmem [#allocation6], %s339
        // Predicated region
        $region45: #{tpu_custom_call.1} parent=39 // pred_check
          %p341 = pneg %p104
        $region46: #{tpu_custom_call.1} parent=39 // pred_check_branch
          %343 = sbr.rel (%p341) target = $region48
        $region47: #{tpu_custom_call.1} parent=39 // pred_region
          %344 = dma.done %s337, 4096
        $region48: #{tpu_custom_call.1} parent=39 // pred_fallthru
          _
        %p345 = pneg %p52
        %p346 = pneg %p49
        %s347 = sand.u32 %s65, 1
        %s348 = scalar_lea.sflag [#allocation4], %s347
        %s349 = sand.u32 %s65, 1
        %s350 = smul.addr %s349, 256
        %s351 = scalar_lea.vmem [#allocation3], %s350
        %p352 = pneg %p78
        %p353 = pneg %p75
        %s354 = sand.u32 %s91, 1
        %s355 = scalar_lea.sflag [#allocation7], %s354
        %s356 = sand.u32 %s91, 1
        %s357 = smul.addr %s356, 256
        %s358 = scalar_lea.vmem [#allocation6], %s357
        %p359 = pneg %p104
        %p360 = pneg %p101
        %p361 = pneg %p125
        %p362 = pneg %p122
        %p363 = pneg %p146
        %p364 = pneg %p143
        %p365 = pneg %p172
        %p366 = pneg %p169
        %s367 = sand.u32 %s159, 1
        %s368 = scalar_lea.sflag [#allocation5], %s367
        %s369 = sand.u32 %s159, 1
        %s370 = smul.addr %s369, 256
        %s371 = scalar_lea.vmem [#allocation8], %s370
        %p372 = pneg %p198
        %p373 = pneg %p195
        %s374 = sand.u32 %s36, 1
        %s375 = scalar_lea.sflag [#allocation10], %s374
        %s376 = sand.u32 %s185, 1
        %s377 = smul.addr %s376, 256
        %s378 = scalar_lea.vmem [#allocation9], %s377
        %p379 = pneg %p224
        %p380 = pneg %p221
        %s381 = sand.u32 %s36, 1
        %s382 = scalar_lea.sflag [#allocation10], %s381
        %s383 = sand.u32 %s211, 1
        %s384 = smul.addr %s383, 256
        %s385 = scalar_lea.vmem [#allocation11], %s384
        %p386 = pneg %p250
        %p387 = pneg %p247
        %s388 = sand.u32 %s237, 1
        %s389 = scalar_lea.sflag [#allocation13], %s388
        %s390 = sand.u32 %s237, 1
        %s391 = smul.addr %s390, 256
        %s392 = scalar_lea.vmem [#allocation12], %s391
        %v394 = vld [vmem:[%s331] sm:$0xff]
        %v395 = vld [vmem:[%s331 + $0x8] sm:$0xff]
        %v396 = vld [vmem:[%s331 + $0x10] sm:$0xff]
        %v397 = vld [vmem:[%s331 + $0x18] sm:$0xff]
        %v398 = vld [vmem:[%s331 + $0x20] sm:$0xff]
        %v399 = vld [vmem:[%s331 + $0x28] sm:$0xff]
        %v400 = vld [vmem:[%s331 + $0x30] sm:$0xff]
        %v401 = vld [vmem:[%s331 + $0x38] sm:$0xff]
        %v402 = vld [vmem:[%s331 + $0x40] sm:$0xff]
        %v403 = vld [vmem:[%s331 + $0x48] sm:$0xff]
        %v404 = vld [vmem:[%s331 + $0x50] sm:$0xff]
        %v405 = vld [vmem:[%s331 + $0x58] sm:$0xff]
        %v406 = vld [vmem:[%s331 + $0x60] sm:$0xff]
        %v407 = vld [vmem:[%s331 + $0x68] sm:$0xff]
        %v408 = vld [vmem:[%s331 + $0x70] sm:$0xff]
        %v409 = vld [vmem:[%s331 + $0x78] sm:$0xff]
        %v410 = vld [vmem:[%s331 + $0x80] sm:$0xff]
        %v411 = vld [vmem:[%s331 + $0x88] sm:$0xff]
        %v412 = vld [vmem:[%s331 + $0x90] sm:$0xff]
        %v413 = vld [vmem:[%s331 + $0x98] sm:$0xff]
        %v414 = vld [vmem:[%s331 + $0xa0] sm:$0xff]
        %v415 = vld [vmem:[%s331 + $0xa8] sm:$0xff]
        %v416 = vld [vmem:[%s331 + $0xb0] sm:$0xff]
        %v417 = vld [vmem:[%s331 + $0xb8] sm:$0xff]
        %v418 = vld [vmem:[%s331 + $0xc0] sm:$0xff]
        %v419 = vld [vmem:[%s331 + $0xc8] sm:$0xff]
        %v420 = vld [vmem:[%s331 + $0xd0] sm:$0xff]
        %v421 = vld [vmem:[%s331 + $0xd8] sm:$0xff]
        %v422 = vld [vmem:[%s331 + $0xe0] sm:$0xff]
        %v423 = vld [vmem:[%s331 + $0xe8] sm:$0xff]
        %v424 = vld [vmem:[%s331 + $0xf0] sm:$0xff]
        %v425 = vld [vmem:[%s331 + $0xf8] sm:$0xff]
        %v426 = vld [vmem:[%s340] sm:$0xff]
        %v427 = vld [vmem:[%s340 + $0x8] sm:$0xff]
        %v428 = vld [vmem:[%s340 + $0x10] sm:$0xff]
        %v429 = vld [vmem:[%s340 + $0x18] sm:$0xff]
        %v430 = vld [vmem:[%s340 + $0x20] sm:$0xff]
        %v431 = vld [vmem:[%s340 + $0x28] sm:$0xff]
        %v432 = vld [vmem:[%s340 + $0x30] sm:$0xff]
        %v433 = vld [vmem:[%s340 + $0x38] sm:$0xff]
        %v434 = vld [vmem:[%s340 + $0x40] sm:$0xff]
        %v435 = vld [vmem:[%s340 + $0x48] sm:$0xff]
        %v436 = vld [vmem:[%s340 + $0x50] sm:$0xff]
        %v437 = vld [vmem:[%s340 + $0x58] sm:$0xff]
        %v438 = vld [vmem:[%s340 + $0x60] sm:$0xff]
        %v439 = vld [vmem:[%s340 + $0x68] sm:$0xff]
        %v440 = vld [vmem:[%s340 + $0x70] sm:$0xff]
        %v441 = vld [vmem:[%s340 + $0x78] sm:$0xff]
        %v442 = vld [vmem:[%s340 + $0x80] sm:$0xff]
        %v443 = vld [vmem:[%s340 + $0x88] sm:$0xff]
        %v444 = vld [vmem:[%s340 + $0x90] sm:$0xff]
        %v445 = vld [vmem:[%s340 + $0x98] sm:$0xff]
        %v446 = vld [vmem:[%s340 + $0xa0] sm:$0xff]
        %v447 = vld [vmem:[%s340 + $0xa8] sm:$0xff]
        %v448 = vld [vmem:[%s340 + $0xb0] sm:$0xff]
        %v449 = vld [vmem:[%s340 + $0xb8] sm:$0xff]
        %v450 = vld [vmem:[%s340 + $0xc0] sm:$0xff]
        %v451 = vld [vmem:[%s340 + $0xc8] sm:$0xff]
        %v452 = vld [vmem:[%s340 + $0xd0] sm:$0xff]
        %v453 = vld [vmem:[%s340 + $0xd8] sm:$0xff]
        %v454 = vld [vmem:[%s340 + $0xe0] sm:$0xff]
        %v455 = vld [vmem:[%s340 + $0xe8] sm:$0xff]
        %v456 = vld [vmem:[%s340 + $0xf0] sm:$0xff]
        %v457 = vld [vmem:[%s340 + $0xf8] sm:$0xff]
        %v458 = vld [vmem:[%s3] sm:$0xf]
        %v459 = vld [vmem:[%s3 + $0x4] sm:$0xf]
        %v460 = vld [vmem:[%s4] sm:$0x1]
        %s461 = sld [smem:[#allocation2]]
        %v462 = vpack.c.bf16 %v395, %v394
        %v463 = vpack.c.bf16 %v397, %v396
        %v464 = vpack.c.bf16 %v399, %v398
        %v465 = vpack.c.bf16 %v401, %v400
        %v466 = vpack.c.bf16 %v403, %v402
        %v467 = vpack.c.bf16 %v405, %v404
        %v468 = vpack.c.bf16 %v407, %v406
        %v469 = vpack.c.bf16 %v409, %v408
        %v470 = vpack.c.bf16 %v411, %v410
        %v471 = vpack.c.bf16 %v413, %v412
        %v472 = vpack.c.bf16 %v415, %v414
        %v473 = vpack.c.bf16 %v417, %v416
        %v474 = vpack.c.bf16 %v419, %v418
        %v475 = vpack.c.bf16 %v421, %v420
        %v476 = vpack.c.bf16 %v423, %v422
        %v477 = vpack.c.bf16 %v425, %v424
        %v479 = vlaneseq
        %v480 = vshrl.u32 %v479, 7
        %v481 = vsub.s32 0, %v480
        %v482 = vrot.slane %v460, %v481
        %v486 = vunpack.c.l.b16 %v458
        %v487 = vunpack.c.l.b16 %v459
        %v488 = vpack.c.b16 %v487, %v486
        %vm490 = vcmask 130048
        %v492 = vsel %vm490, %v462, 0
        %v495 = vsel %vm490, %v463, 0
        %v498 = vsel %vm490, %v464, 0
        %v501 = vsel %vm490, %v465, 0
        %v504 = vsel %vm490, %v466, 0
        %v507 = vsel %vm490, %v467, 0
        %v510 = vsel %vm490, %v468, 0
        %v513 = vsel %vm490, %v469, 0
        %v516 = vsel %vm490, %v470, 0
        %v519 = vsel %vm490, %v471, 0
        %v522 = vsel %vm490, %v472, 0
        %v525 = vsel %vm490, %v473, 0
        %v528 = vsel %vm490, %v474, 0
        %v531 = vsel %vm490, %v475, 0
        %v534 = vsel %vm490, %v476, 0
        %v537 = vsel %vm490, %v477, 0
        %539 = vmatprep.subr.bf16.mxu0 0
        %540 = vmatpush1.bf16.msra.mxu0 %v488
        %541 = vmatprep.subr.bf16.mxu0 0
        %542 = vmatpush1.bf16.msra.mxu0 0
        %543 = vmatprep.subr.bf16.mxu0 0
        %544 = vmatpush1.bf16.msra.mxu0 0
        %545 = vmatprep.subr.bf16.mxu0 0
        %546 = vmatpush1.bf16.msra.mxu0 0
        %547 = vmatprep.subr.bf16.mxu0 0
        %548 = vmatpush1.bf16.msra.mxu0 0
        %549 = vmatprep.subr.bf16.mxu0 0
        %550 = vmatpush1.bf16.msra.mxu0 0
        %551 = vmatprep.subr.bf16.mxu0 0
        %552 = vmatpush1.bf16.msra.mxu0 0
        %553 = vmatprep.subr.bf16.mxu0 0
        %554 = vmatpush1.bf16.msra.mxu0 0
        %555 = vmatprep.subr.bf16.mxu0 0
        %556 = vmatpush1.bf16.msra.mxu0 0
        %557 = vmatprep.subr.bf16.mxu0 0
        %558 = vmatpush1.bf16.msra.mxu0 0
        %559 = vmatprep.subr.bf16.mxu0 0
        %560 = vmatpush1.bf16.msra.mxu0 0
        %561 = vmatprep.subr.bf16.mxu0 0
        %562 = vmatpush1.bf16.msra.mxu0 0
        %563 = vmatprep.subr.bf16.mxu0 0
        %564 = vmatpush1.bf16.msra.mxu0 0
        %565 = vmatprep.subr.bf16.mxu0 0
        %566 = vmatpush1.bf16.msra.mxu0 0
        %567 = vmatprep.subr.bf16.mxu0 0
        %568 = vmatpush1.bf16.msra.mxu0 0
        %569 = vmatprep.subr.bf16.mxu0 0
        %570 = vmatpush1.bf16.msra.mxu0 0
        %571 = vmatprep.mubr.bf16.mxu0 0
        %572 = vmatmul.mubr.bf16.gmra.mrb[0].mxu0 %v492
        %v573 = vpop.f32.mrb[0].mxu0
        %v574 = vadd.f32 %v482, %v573
        %v575 = vpop.f32.mrb[0].mxu0
        %v576 = vpop.f32.mrb[0].mxu0
        %v577 = vadd.f32 %v482, %v576
        %v578 = vpop.f32.mrb[0].mxu0
        %579 = vmatprep.mubr.bf16.mxu0 0
        %580 = vmatmul.mubr.bf16.gmra.mrb[0].mxu0 %v495
        %v581 = vpop.f32.mrb[0].mxu0
        %v582 = vadd.f32 %v482, %v581
        %v583 = vpop.f32.mrb[0].mxu0
        %v584 = vpop.f32.mrb[0].mxu0
        %v585 = vadd.f32 %v482, %v584
        %v586 = vpop.f32.mrb[0].mxu0
        %587 = vmatprep.mubr.bf16.mxu0 0
        %588 = vmatmul.mubr.bf16.gmra.mrb[0].mxu0 %v498
        %v589 = vpop.f32.mrb[0].mxu0
        %v590 = vadd.f32 %v482, %v589
        %v591 = vpop.f32.mrb[0].mxu0
        %v592 = vpop.f32.mrb[0].mxu0
        %v593 = vadd.f32 %v482, %v592
        %v594 = vpop.f32.mrb[0].mxu0
        %595 = vmatprep.mubr.bf16.mxu0 0
        %596 = vmatmul.mubr.bf16.gmra.mrb[0].mxu0 %v501
        %v597 = vpop.f32.mrb[0].mxu0
        %v598 = vadd.f32 %v482, %v597
        %v599 = vpop.f32.mrb[0].mxu0
        %v600 = vpop.f32.mrb[0].mxu0
        %v601 = vadd.f32 %v482, %v600
        %v602 = vpop.f32.mrb[0].mxu0
        %603 = vmatprep.mubr.bf16.mxu0 0
        %604 = vmatmul.mubr.bf16.gmra.mrb[0].mxu0 %v504
        %v605 = vpop.f32.mrb[0].mxu0
        %v606 = vadd.f32 %v482, %v605
        %v607 = vpop.f32.mrb[0].mxu0
        %v608 = vpop.f32.mrb[0].mxu0
        %v609 = vadd.f32 %v482, %v608
        %v610 = vpop.f32.mrb[0].mxu0
        %611 = vmatprep.mubr.bf16.mxu0 0
        %612 = vmatmul.mubr.bf16.gmra.mrb[0].mxu0 %v507
        %v613 = vpop.f32.mrb[0].mxu0
        %v614 = vadd.f32 %v482, %v613
        %v615 = vpop.f32.mrb[0].mxu0
        %v616 = vpop.f32.mrb[0].mxu0
        %v617 = vadd.f32 %v482, %v616
        %v618 = vpop.f32.mrb[0].mxu0
        %619 = vmatprep.mubr.bf16.mxu0 0
        %620 = vmatmul.mubr.bf16.gmra.mrb[0].mxu0 %v510
        %v621 = vpop.f32.mrb[0].mxu0
        %v622 = vadd.f32 %v482, %v621
        %v623 = vpop.f32.mrb[0].mxu0
        %v624 = vpop.f32.mrb[0].mxu0
        %v625 = vadd.f32 %v482, %v624
        %v626 = vpop.f32.mrb[0].mxu0
        %627 = vmatprep.mubr.bf16.mxu0 0
        %628 = vmatmul.mubr.bf16.gmra.mrb[0].mxu0 %v513
        %v629 = vpop.f32.mrb[0].mxu0
        %v630 = vadd.f32 %v482, %v629
        %v631 = vpop.f32.mrb[0].mxu0
        %v632 = vpop.f32.mrb[0].mxu0
        %v633 = vadd.f32 %v482, %v632
        %v634 = vpop.f32.mrb[0].mxu0
        %635 = vmatprep.mubr.bf16.mxu0 0
        %636 = vmatmul.mubr.bf16.gmra.mrb[0].mxu0 %v516
        %v637 = vpop.f32.mrb[0].mxu0
        %v638 = vadd.f32 %v482, %v637
        %v639 = vpop.f32.mrb[0].mxu0
        %v640 = vpop.f32.mrb[0].mxu0
        %v641 = vadd.f32 %v482, %v640
        %v642 = vpop.f32.mrb[0].mxu0
        %643 = vmatprep.mubr.bf16.mxu0 0
        %644 = vmatmul.mubr.bf16.gmra.mrb[0].mxu0 %v519
        %v645 = vpop.f32.mrb[0].mxu0
        %v646 = vadd.f32 %v482, %v645
        %v647 = vpop.f32.mrb[0].mxu0
        %v648 = vpop.f32.mrb[0].mxu0
        %v649 = vadd.f32 %v482, %v648
        %v650 = vpop.f32.mrb[0].mxu0
        %651 = vmatprep.mubr.bf16.mxu0 0
        %652 = vmatmul.mubr.bf16.gmra.mrb[0].mxu0 %v522
        %v653 = vpop.f32.mrb[0].mxu0
        %v654 = vadd.f32 %v482, %v653
        %v655 = vpop.f32.mrb[0].mxu0
        %v656 = vpop.f32.mrb[0].mxu0
        %v657 = vadd.f32 %v482, %v656
        %v658 = vpop.f32.mrb[0].mxu0
        %659 = vmatprep.mubr.bf16.mxu0 0
        %660 = vmatmul.mubr.bf16.gmra.mrb[0].mxu0 %v525
        %v661 = vpop.f32.mrb[0].mxu0
        %v662 = vadd.f32 %v482, %v661
        %v663 = vpop.f32.mrb[0].mxu0
        %v664 = vpop.f32.mrb[0].mxu0
        %v665 = vadd.f32 %v482, %v664
        %v666 = vpop.f32.mrb[0].mxu0
        %667 = vmatprep.mubr.bf16.mxu0 0
        %668 = vmatmul.mubr.bf16.gmra.mrb[0].mxu0 %v528
        %v669 = vpop.f32.mrb[0].mxu0
        %v670 = vadd.f32 %v482, %v669
        %v671 = vpop.f32.mrb[0].mxu0
        %v672 = vpop.f32.mrb[0].mxu0
        %v673 = vadd.f32 %v482, %v672
        %v674 = vpop.f32.mrb[0].mxu0
        %675 = vmatprep.mubr.bf16.mxu0 0
        %676 = vmatmul.mubr.bf16.gmra.mrb[0].mxu0 %v531
        %v677 = vpop.f32.mrb[0].mxu0
        %v678 = vadd.f32 %v482, %v677
        %v679 = vpop.f32.mrb[0].mxu0
        %v680 = vpop.f32.mrb[0].mxu0
        %v681 = vadd.f32 %v482, %v680
        %v682 = vpop.f32.mrb[0].mxu0
        %683 = vmatprep.mubr.bf16.mxu0 0
        %684 = vmatmul.mubr.bf16.gmra.mrb[0].mxu0 %v534
        %v685 = vpop.f32.mrb[0].mxu0
        %v686 = vadd.f32 %v482, %v685
        %v687 = vpop.f32.mrb[0].mxu0
        %v688 = vpop.f32.mrb[0].mxu0
        %v689 = vadd.f32 %v482, %v688
        %v690 = vpop.f32.mrb[0].mxu0
        %691 = vmatprep.mubr.bf16.mxu0 0
        %692 = vmatmul.mubr.bf16.gmra.mrb[0].mxu0 %v537
        %v693 = vpop.f32.mrb[0].mxu0
        %v694 = vadd.f32 %v482, %v693
        %v695 = vpop.f32.mrb[0].mxu0
        %v696 = vpop.f32.mrb[0].mxu0
        %v697 = vadd.f32 %v482, %v696
        %v698 = vpop.f32.mrb[0].mxu0
        %699 = vdwg.mxu0
        %v700 = vpack.c.bf16 %v577, %v574
        %v701 = vpack.c.bf16 %v585, %v582
        %v702 = vpack.c.bf16 %v593, %v590
        %v703 = vpack.c.bf16 %v601, %v598
        %v704 = vpack.c.bf16 %v609, %v606
        %v705 = vpack.c.bf16 %v617, %v614
        %v706 = vpack.c.bf16 %v625, %v622
        %v707 = vpack.c.bf16 %v633, %v630
        %v708 = vpack.c.bf16 %v641, %v638
        %v709 = vpack.c.bf16 %v649, %v646
        %v710 = vpack.c.bf16 %v657, %v654
        %v711 = vpack.c.bf16 %v665, %v662
        %v712 = vpack.c.bf16 %v673, %v670
        %v713 = vpack.c.bf16 %v681, %v678
        %v714 = vpack.c.bf16 %v689, %v686
        %v715 = vpack.c.bf16 %v697, %v694
        %v716 = vpack.c.bf16 %v427, %v426
        %v717 = vpack.c.bf16 %v429, %v428
        %v718 = vpack.c.bf16 %v431, %v430
        %v719 = vpack.c.bf16 %v433, %v432
        %v720 = vpack.c.bf16 %v435, %v434
        %v721 = vpack.c.bf16 %v437, %v436
        %v722 = vpack.c.bf16 %v439, %v438
        %v723 = vpack.c.bf16 %v441, %v440
        %v724 = vpack.c.bf16 %v443, %v442
        %v725 = vpack.c.bf16 %v445, %v444
        %v726 = vpack.c.bf16 %v447, %v446
        %v727 = vpack.c.bf16 %v449, %v448
        %v728 = vpack.c.bf16 %v451, %v450
        %v729 = vpack.c.bf16 %v453, %v452
        %v730 = vpack.c.bf16 %v455, %v454
        %v731 = vpack.c.bf16 %v457, %v456
        %v733 = vsel %vm490, %v716, 0
        %v736 = vsel %vm490, %v717, 0
        %v739 = vsel %vm490, %v718, 0
        %v742 = vsel %vm490, %v719, 0
        %v745 = vsel %vm490, %v720, 0
        %v748 = vsel %vm490, %v721, 0
        %v751 = vsel %vm490, %v722, 0
        %v754 = vsel %vm490, %v723, 0
        %v757 = vsel %vm490, %v724, 0
        %v760 = vsel %vm490, %v725, 0
        %v763 = vsel %vm490, %v726, 0
        %v766 = vsel %vm490, %v727, 0
        %v769 = vsel %vm490, %v728, 0
        %v772 = vsel %vm490, %v729, 0
        %v775 = vsel %vm490, %v730, 0
        %v778 = vsel %vm490, %v731, 0
        %780 = vmatprep.subr.bf16.mxu0 0
        %781 = vmatpush1.bf16.msra.mxu0 %v488
        %782 = vmatprep.subr.bf16.mxu0 0
        %783 = vmatpush1.bf16.msra.mxu0 0
        %784 = vmatprep.subr.bf16.mxu0 0
        %785 = vmatpush1.bf16.msra.mxu0 0
        %786 = vmatprep.subr.bf16.mxu0 0
        %787 = vmatpush1.bf16.msra.mxu0 0
        %788 = vmatprep.subr.bf16.mxu0 0
        %789 = vmatpush1.bf16.msra.mxu0 0
        %790 = vmatprep.subr.bf16.mxu0 0
        %791 = vmatpush1.bf16.msra.mxu0 0
        %792 = vmatprep.subr.bf16.mxu0 0
        %793 = vmatpush1.bf16.msra.mxu0 0
        %794 = vmatprep.subr.bf16.mxu0 0
        %795 = vmatpush1.bf16.msra.mxu0 0
        %796 = vmatprep.subr.bf16.mxu0 0
        %797 = vmatpush1.bf16.msra.mxu0 0
        %798 = vmatprep.subr.bf16.mxu0 0
        %799 = vmatpush1.bf16.msra.mxu0 0
        %800 = vmatprep.subr.bf16.mxu0 0
        %801 = vmatpush1.bf16.msra.mxu0 0
        %802 = vmatprep.subr.bf16.mxu0 0
        %803 = vmatpush1.bf16.msra.mxu0 0
        %804 = vmatprep.subr.bf16.mxu0 0
        %805 = vmatpush1.bf16.msra.mxu0 0
        %806 = vmatprep.subr.bf16.mxu0 0
        %807 = vmatpush1.bf16.msra.mxu0 0
        %808 = vmatprep.subr.bf16.mxu0 0
        %809 = vmatpush1.bf16.msra.mxu0 0
        %810 = vmatprep.subr.bf16.mxu0 0
        %811 = vmatpush1.bf16.msra.mxu0 0
        %812 = vmatprep.mubr.bf16.mxu0 0
        %813 = vmatmul.mubr.bf16.gmra.mrb[0].mxu0 %v733
        %v814 = vpop.f32.mrb[0].mxu0
        %v815 = vadd.f32 %v482, %v814
        %v816 = vpop.f32.mrb[0].mxu0
        %v817 = vpop.f32.mrb[0].mxu0
        %v818 = vadd.f32 %v482, %v817
        %v819 = vpop.f32.mrb[0].mxu0
        %820 = vmatprep.mubr.bf16.mxu0 0
        %821 = vmatmul.mubr.bf16.gmra.mrb[0].mxu0 %v736
        %v822 = vpop.f32.mrb[0].mxu0
        %v823 = vadd.f32 %v482, %v822
        %v824 = vpop.f32.mrb[0].mxu0
        %v825 = vpop.f32.mrb[0].mxu0
        %v826 = vadd.f32 %v482, %v825
        %v827 = vpop.f32.mrb[0].mxu0
        %828 = vmatprep.mubr.bf16.mxu0 0
        %829 = vmatmul.mubr.bf16.gmra.mrb[0].mxu0 %v739
        %v830 = vpop.f32.mrb[0].mxu0
        %v831 = vadd.f32 %v482, %v830
        %v832 = vpop.f32.mrb[0].mxu0
        %v833 = vpop.f32.mrb[0].mxu0
        %v834 = vadd.f32 %v482, %v833
        %v835 = vpop.f32.mrb[0].mxu0
        %836 = vmatprep.mubr.bf16.mxu0 0
        %837 = vmatmul.mubr.bf16.gmra.mrb[0].mxu0 %v742
        %v838 = vpop.f32.mrb[0].mxu0
        %v839 = vadd.f32 %v482, %v838
        %v840 = vpop.f32.mrb[0].mxu0
        %v841 = vpop.f32.mrb[0].mxu0
        %v842 = vadd.f32 %v482, %v841
        %v843 = vpop.f32.mrb[0].mxu0
        %844 = vmatprep.mubr.bf16.mxu0 0
        %845 = vmatmul.mubr.bf16.gmra.mrb[0].mxu0 %v745
        %v846 = vpop.f32.mrb[0].mxu0
        %v847 = vadd.f32 %v482, %v846
        %v848 = vpop.f32.mrb[0].mxu0
        %v849 = vpop.f32.mrb[0].mxu0
        %v850 = vadd.f32 %v482, %v849
        %v851 = vpop.f32.mrb[0].mxu0
        %852 = vmatprep.mubr.bf16.mxu0 0
        %853 = vmatmul.mubr.bf16.gmra.mrb[0].mxu0 %v748
        %v854 = vpop.f32.mrb[0].mxu0
        %v855 = vadd.f32 %v482, %v854
        %v856 = vpop.f32.mrb[0].mxu0
        %v857 = vpop.f32.mrb[0].mxu0
        %v858 = vadd.f32 %v482, %v857
        %v859 = vpop.f32.mrb[0].mxu0
        %860 = vmatprep.mubr.bf16.mxu0 0
        %861 = vmatmul.mubr.bf16.gmra.mrb[0].mxu0 %v751
        %v862 = vpop.f32.mrb[0].mxu0
        %v863 = vadd.f32 %v482, %v862
        %v864 = vpop.f32.mrb[0].mxu0
        %v865 = vpop.f32.mrb[0].mxu0
        %v866 = vadd.f32 %v482, %v865
        %v867 = vpop.f32.mrb[0].mxu0
        %868 = vmatprep.mubr.bf16.mxu0 0
        %869 = vmatmul.mubr.bf16.gmra.mrb[0].mxu0 %v754
        %v870 = vpop.f32.mrb[0].mxu0
        %v871 = vadd.f32 %v482, %v870
        %v872 = vpop.f32.mrb[0].mxu0
        %v873 = vpop.f32.mrb[0].mxu0
        %v874 = vadd.f32 %v482, %v873
        %v875 = vpop.f32.mrb[0].mxu0
        %876 = vmatprep.mubr.bf16.mxu0 0
        %877 = vmatmul.mubr.bf16.gmra.mrb[0].mxu0 %v757
        %v878 = vpop.f32.mrb[0].mxu0
        %v879 = vadd.f32 %v482, %v878
        %v880 = vpop.f32.mrb[0].mxu0
        %v881 = vpop.f32.mrb[0].mxu0
        %v882 = vadd.f32 %v482, %v881
        %v883 = vpop.f32.mrb[0].mxu0
        %884 = vmatprep.mubr.bf16.mxu0 0
        %885 = vmatmul.mubr.bf16.gmra.mrb[0].mxu0 %v760
        %v886 = vpop.f32.mrb[0].mxu0
        %v887 = vadd.f32 %v482, %v886
        %v888 = vpop.f32.mrb[0].mxu0
        %v889 = vpop.f32.mrb[0].mxu0
        %v890 = vadd.f32 %v482, %v889
        %v891 = vpop.f32.mrb[0].mxu0
        %892 = vmatprep.mubr.bf16.mxu0 0
        %893 = vmatmul.mubr.bf16.gmra.mrb[0].mxu0 %v763
        %v894 = vpop.f32.mrb[0].mxu0
        %v895 = vadd.f32 %v482, %v894
        %v896 = vpop.f32.mrb[0].mxu0
        %v897 = vpop.f32.mrb[0].mxu0
        %v898 = vadd.f32 %v482, %v897
        %v899 = vpop.f32.mrb[0].mxu0
        %900 = vmatprep.mubr.bf16.mxu0 0
        %901 = vmatmul.mubr.bf16.gmra.mrb[0].mxu0 %v766
        %v902 = vpop.f32.mrb[0].mxu0
        %v903 = vadd.f32 %v482, %v902
        %v904 = vpop.f32.mrb[0].mxu0
        %v905 = vpop.f32.mrb[0].mxu0
        %v906 = vadd.f32 %v482, %v905
        %v907 = vpop.f32.mrb[0].mxu0
        %908 = vmatprep.mubr.bf16.mxu0 0
        %909 = vmatmul.mubr.bf16.gmra.mrb[0].mxu0 %v769
        %v910 = vpop.f32.mrb[0].mxu0
        %v911 = vadd.f32 %v482, %v910
        %v912 = vpop.f32.mrb[0].mxu0
        %v913 = vpop.f32.mrb[0].mxu0
        %v914 = vadd.f32 %v482, %v913
        %v915 = vpop.f32.mrb[0].mxu0
        %916 = vmatprep.mubr.bf16.mxu0 0
        %917 = vmatmul.mubr.bf16.gmra.mrb[0].mxu0 %v772
        %v918 = vpop.f32.mrb[0].mxu0
        %v919 = vadd.f32 %v482, %v918
        %v920 = vpop.f32.mrb[0].mxu0
        %v921 = vpop.f32.mrb[0].mxu0
        %v922 = vadd.f32 %v482, %v921
        %v923 = vpop.f32.mrb[0].mxu0
        %924 = vmatprep.mubr.bf16.mxu0 0
        %925 = vmatmul.mubr.bf16.gmra.mrb[0].mxu0 %v775
        %v926 = vpop.f32.mrb[0].mxu0
        %v927 = vadd.f32 %v482, %v926
        %v928 = vpop.f32.mrb[0].mxu0
        %v929 = vpop.f32.mrb[0].mxu0
        %v930 = vadd.f32 %v482, %v929
        %v931 = vpop.f32.mrb[0].mxu0
        %932 = vmatprep.mubr.bf16.mxu0 0
        %933 = vmatmul.mubr.bf16.gmra.mrb[0].mxu0 %v778
        %v934 = vpop.f32.mrb[0].mxu0
        %v935 = vadd.f32 %v482, %v934
        %v936 = vpop.f32.mrb[0].mxu0
        %v937 = vpop.f32.mrb[0].mxu0
        %v938 = vadd.f32 %v482, %v937
        %v939 = vpop.f32.mrb[0].mxu0
        %940 = vdwg.mxu0
        %v941 = vpack.c.bf16 %v818, %v815
        %v942 = vpack.c.bf16 %v826, %v823
        %v943 = vpack.c.bf16 %v834, %v831
        %v944 = vpack.c.bf16 %v842, %v839
        %v945 = vpack.c.bf16 %v850, %v847
        %v946 = vpack.c.bf16 %v858, %v855
        %v947 = vpack.c.bf16 %v866, %v863
        %v948 = vpack.c.bf16 %v874, %v871
        %v949 = vpack.c.bf16 %v882, %v879
        %v950 = vpack.c.bf16 %v890, %v887
        %v951 = vpack.c.bf16 %v898, %v895
        %v952 = vpack.c.bf16 %v906, %v903
        %v953 = vpack.c.bf16 %v914, %v911
        %v954 = vpack.c.bf16 %v922, %v919
        %v955 = vpack.c.bf16 %v930, %v927
        %v956 = vpack.c.bf16 %v938, %v935
        %958 = vrot.lane.b32.xlu0 %v700, 126
        %v959 = vpop.permute.xlu0 %958
        %vm960 = vcmask 15360
        %v962 = vsel %vm960, %v700, 0
        %v965 = vsel %vm960, %v959, 0
        %967 = vmatprep.subr.bf16.mxu0 0
        %968 = vmatpush1.bf16.xpose.msra.mxu0 %v965
        %969 = vmatprep.subr.bf16.mxu0 0
        %970 = vmatpush1.bf16.xpose.msra.mxu0 0
        %971 = vmatprep.subr.bf16.mxu0 0
        %972 = vmatpush1.bf16.xpose.msra.mxu0 0
        %973 = vmatprep.subr.bf16.mxu0 0
        %974 = vmatpush1.bf16.xpose.msra.mxu0 0
        %975 = vmatprep.subr.bf16.mxu0 0
        %976 = vmatpush1.bf16.xpose.msra.mxu0 0
        %977 = vmatprep.subr.bf16.mxu0 0
        %978 = vmatpush1.bf16.xpose.msra.mxu0 0
        %979 = vmatprep.subr.bf16.mxu0 0
        %980 = vmatpush1.bf16.xpose.msra.mxu0 0
        %981 = vmatprep.subr.bf16.mxu0 0
        %982 = vmatpush1.bf16.xpose.msra.mxu0 0
        %983 = vmatprep.subr.bf16.mxu0 0
        %984 = vmatpush1.bf16.xpose.msra.mxu0 0
        %985 = vmatprep.subr.bf16.mxu0 0
        %986 = vmatpush1.bf16.xpose.msra.mxu0 0
        %987 = vmatprep.subr.bf16.mxu0 0
        %988 = vmatpush1.bf16.xpose.msra.mxu0 0
        %989 = vmatprep.subr.bf16.mxu0 0
        %990 = vmatpush1.bf16.xpose.msra.mxu0 0
        %991 = vmatprep.subr.bf16.mxu0 0
        %992 = vmatpush1.bf16.xpose.msra.mxu0 0
        %993 = vmatprep.subr.bf16.mxu0 0
        %994 = vmatpush1.bf16.xpose.msra.mxu0 0
        %995 = vmatprep.subr.bf16.mxu0 0
        %996 = vmatpush1.bf16.xpose.msra.mxu0 0
        %997 = vmatprep.subr.bf16.mxu0 0
        %998 = vmatpush1.bf16.xpose.msra.mxu0 0
        %999 = vmatprep.mubr.bf16.mxu0 0
        %1000 = vmatmul.mubr.bf16.gmra.mrb[0].mxu0 %v962
        %v1001 = vpop.f32.mrb[0].mxu0
        %v1002 = vadd.f32 0.0, %v1001
        %v1003 = vpop.f32.mrb[0].mxu0
        %v1004 = vpop.f32.mrb[0].mxu0
        %v1005 = vadd.f32 0.0, %v1004
        %v1006 = vpop.f32.mrb[0].mxu0
        %1007 = vdwg.mxu0
        %1009 = vrot.lane.b32.xlu0 %v701, 126
        %v1010 = vpop.permute.xlu0 %1009
        %v1012 = vsel %vm960, %v701, 0
        %v1015 = vsel %vm960, %v1010, 0
        %1017 = vmatprep.subr.bf16.mxu0 0
        %1018 = vmatpush1.bf16.xpose.msra.mxu0 %v1015
        %1019 = vmatprep.subr.bf16.mxu0 0
        %1020 = vmatpush1.bf16.xpose.msra.mxu0 0
        %1021 = vmatprep.subr.bf16.mxu0 0
        %1022 = vmatpush1.bf16.xpose.msra.mxu0 0
        %1023 = vmatprep.subr.bf16.mxu0 0
        %1024 = vmatpush1.bf16.xpose.msra.mxu0 0
        %1025 = vmatprep.subr.bf16.mxu0 0
        %1026 = vmatpush1.bf16.xpose.msra.mxu0 0
        %1027 = vmatprep.subr.bf16.mxu0 0
        %1028 = vmatpush1.bf16.xpose.msra.mxu0 0
        %1029 = vmatprep.subr.bf16.mxu0 0
        %1030 = vmatpush1.bf16.xpose.msra.mxu0 0
        %1031 = vmatprep.subr.bf16.mxu0 0
        %1032 = vmatpush1.bf16.xpose.msra.mxu0 0
        %1033 = vmatprep.subr.bf16.mxu0 0
        %1034 = vmatpush1.bf16.xpose.msra.mxu0 0
        %1035 = vmatprep.subr.bf16.mxu0 0
        %1036 = vmatpush1.bf16.xpose.msra.mxu0 0
        %1037 = vmatprep.subr.bf16.mxu0 0
        %1038 = vmatpush1.bf16.xpose.msra.mxu0 0
        %1039 = vmatprep.subr.bf16.mxu0 0
        %1040 = vmatpush1.bf16.xpose.msra.mxu0 0
        %1041 = vmatprep.subr.bf16.mxu0 0
        %1042 = vmatpush1.bf16.xpose.msra.mxu0 0
        %1043 = vmatprep.subr.bf16.mxu0 0
        %1044 = vmatpush1.bf16.xpose.msra.mxu0 0
        %1045 = vmatprep.subr.bf16.mxu0 0
        %1046 = vmatpush1.bf16.xpose.msra.mxu0 0
        %1047 = vmatprep.subr.bf16.mxu0 0
        %1048 = vmatpush1.bf16.xpose.msra.mxu0 0
        %1049 = vmatprep.mubr.bf16.mxu0 0
        %1050 = vmatmul.mubr.bf16.gmra.mrb[0].mxu0 %v1012
        %v1051 = vpop.f32.mrb[0].mxu0
        %v1052 = vadd.f32 0.0, %v1051
        %v1053 = vpop.f32.mrb[0].mxu0
        %v1054 = vpop.f32.mrb[0].mxu0
        %v1055 = vadd.f32 0.0, %v1054
        %v1056 = vpop.f32.mrb[0].mxu0
        %1057 = vdwg.mxu0
        %1059 = vrot.lane.b32.xlu0 %v702, 126
        %v1060 = vpop.permute.xlu0 %1059
        %v1062 = vsel %vm960, %v702, 0
        %v1065 = vsel %vm960, %v1060, 0
        %1067 = vmatprep.subr.bf16.mxu0 0
        %1068 = vmatpush1.bf16.xpose.msra.mxu0 %v1065
        %1069 = vmatprep.subr.bf16.mxu0 0
        %1070 = vmatpush1.bf16.xpose.msra.mxu0 0
        %1071 = vmatprep.subr.bf16.mxu0 0
        %1072 = vmatpush1.bf16.xpose.msra.mxu0 0
        %1073 = vmatprep.subr.bf16.mxu0 0
        %1074 = vmatpush1.bf16.xpose.msra.mxu0 0
        %1075 = vmatprep.subr.bf16.mxu0 0
        %1076 = vmatpush1.bf16.xpose.msra.mxu0 0
        %1077 = vmatprep.subr.bf16.mxu0 0
        %1078 = vmatpush1.bf16.xpose.msra.mxu0 0
        %1079 = vmatprep.subr.bf16.mxu0 0
        %1080 = vmatpush1.bf16.xpose.msra.mxu0 0
        %1081 = vmatprep.subr.bf16.mxu0 0
        %1082 = vmatpush1.bf16.xpose.msra.mxu0 0
        %1083 = vmatprep.subr.bf16.mxu0 0
        %1084 = vmatpush1.bf16.xpose.msra.mxu0 0
        %1085 = vmatprep.subr.bf16.mxu0 0
        %1086 = vmatpush1.bf16.xpose.msra.mxu0 0
        %1087 = vmatprep.subr.bf16.mxu0 0
        %1088 = vmatpush1.bf16.xpose.msra.mxu0 0
        %1089 = vmatprep.subr.bf16.mxu0 0
        %1090 = vmatpush1.bf16.xpose.msra.mxu0 0
        %1091 = vmatprep.subr.bf16.mxu0 0
        %1092 = vmatpush1.bf16.xpose.msra.mxu0 0
        %1093 = vmatprep.subr.bf16.mxu0 0
        %1094 = vmatpush1.bf16.xpose.msra.mxu0 0
        %1095 = vmatprep.subr.bf16.mxu0 0
        %1096 = vmatpush1.bf16.xpose.msra.mxu0 0
        %1097 = vmatprep.subr.bf16.mxu0 0
        %1098 = vmatpush1.bf16.xpose.msra.mxu0 0
        %1099 = vmatprep.mubr.bf16.mxu0 0
        %1100 = vmatmul.mubr.bf16.gmra.mrb[0].mxu0 %v1062
        %v1101 = vpop.f32.mrb[0].mxu0
        %v1102 = vadd.f32 0.0, %v1101
        %v1103 = vpop.f32.mrb[0].mxu0
        %v1104 = vpop.f32.mrb[0].mxu0
        %v1105 = vadd.f32 0.0, %v1104
        %v1106 = vpop.f32.mrb[0].mxu0
        %1107 = vdwg.mxu0
        %1109 = vrot.lane.b32.xlu0 %v703, 126
        %v1110 = vpop.permute.xlu0 %1109
        %v1112 = vsel %vm960, %v703, 0
        %v1115 = vsel %vm960, %v1110, 0
        %1117 = vmatprep.subr.bf16.mxu0 0
        %1118 = vmatpush1.bf16.xpose.msra.mxu0 %v1115
        %1119 = vmatprep.subr.bf16.mxu0 0
        %1120 = vmatpush1.bf16.xpose.msra.mxu0 0
        %1121 = vmatprep.subr.bf16.mxu0 0
        %1122 = vmatpush1.bf16.xpose.msra.mxu0 0
        %1123 = vmatprep.subr.bf16.mxu0 0
        %1124 = vmatpush1.bf16.xpose.msra.mxu0 0
        %1125 = vmatprep.subr.bf16.mxu0 0
        %1126 = vmatpush1.bf16.xpose.msra.mxu0 0
        %1127 = vmatprep.subr.bf16.mxu0 0
        %1128 = vmatpush1.bf16.xpose.msra.mxu0 0
        %1129 = vmatprep.subr.bf16.mxu0 0
        %1130 = vmatpush1.bf16.xpose.msra.mxu0 0
        %1131 = vmatprep.subr.bf16.mxu0 0
        %1132 = vmatpush1.bf16.xpose.msra.mxu0 0
        %1133 = vmatprep.subr.bf16.mxu0 0
        %1134 = vmatpush1.bf16.xpose.msra.mxu0 0
        %1135 = vmatprep.subr.bf16.mxu0 0
        %1136 = vmatpush1.bf16.xpose.msra.mxu0 0
        %1137 = vmatprep.subr.bf16.mxu0 0
        %1138 = vmatpush1.bf16.xpose.msra.mxu0 0
        %1139 = vmatprep.subr.bf16.mxu0 0
        %1140 = vmatpush1.bf16.xpose.msra.mxu0 0
        %1141 = vmatprep.subr.bf16.mxu0 0
        %1142 = vmatpush1.bf16.xpose.msra.mxu0 0
        %1143 = vmatprep.subr.bf16.mxu0 0
        %1144 = vmatpush1.bf16.xpose.msra.mxu0 0
        %1145 = vmatprep.subr.bf16.mxu0 0
        %1146 = vmatpush1.bf16.xpose.msra.mxu0 0
        %1147 = vmatprep.subr.bf16.mxu0 0
        %1148 = vmatpush1.bf16.xpose.msra.mxu0 0
        %1149 = vmatprep.mubr.bf16.mxu0 0
        %1150 = vmatmul.mubr.bf16.gmra.mrb[0].mxu0 %v1112
        %v1151 = vpop.f32.mrb[0].mxu0
        %v1152 = vadd.f32 0.0, %v1151
        %v1153 = vpop.f32.mrb[0].mxu0
        %v1154 = vpop.f32.mrb[0].mxu0
        %v1155 = vadd.f32 0.0, %v1154
        %v1156 = vpop.f32.mrb[0].mxu0
        %1157 = vdwg.mxu0
        %1159 = vrot.lane.b32.xlu0 %v704, 126
        %v1160 = vpop.permute.xlu0 %1159
        %v1162 = vsel %vm960, %v704, 0
        %v1165 = vsel %vm960, %v1160, 0
        %1167 = vmatprep.subr.bf16.mxu0 0
        %1168 = vmatpush1.bf16.xpose.msra.mxu0 %v1165
        %1169 = vmatprep.subr.bf16.mxu0 0
        %1170 = vmatpush1.bf16.xpose.msra.mxu0 0
        %1171 = vmatprep.subr.bf16.mxu0 0
        %1172 = vmatpush1.bf16.xpose.msra.mxu0 0
        %1173 = vmatprep.subr.bf16.mxu0 0
        %1174 = vmatpush1.bf16.xpose.msra.mxu0 0
        %1175 = vmatprep.subr.bf16.mxu0 0
        %1176 = vmatpush1.bf16.xpose.msra.mxu0 0
        %1177 = vmatprep.subr.bf16.mxu0 0
        %1178 = vmatpush1.bf16.xpose.msra.mxu0 0
        %1179 = vmatprep.subr.bf16.mxu0 0
        %1180 = vmatpush1.bf16.xpose.msra.mxu0 0
        %1181 = vmatprep.subr.bf16.mxu0 0
        %1182 = vmatpush1.bf16.xpose.msra.mxu0 0
        %1183 = vmatprep.subr.bf16.mxu0 0
        %1184 = vmatpush1.bf16.xpose.msra.mxu0 0
        %1185 = vmatprep.subr.bf16.mxu0 0
        %1186 = vmatpush1.bf16.xpose.msra.mxu0 0
        %1187 = vmatprep.subr.bf16.mxu0 0
        %1188 = vmatpush1.bf16.xpose.msra.mxu0 0
        %1189 = vmatprep.subr.bf16.mxu0 0
        %1190 = vmatpush1.bf16.xpose.msra.mxu0 0
        %1191 = vmatprep.subr.bf16.mxu0 0
        %1192 = vmatpush1.bf16.xpose.msra.mxu0 0
        %1193 = vmatprep.subr.bf16.mxu0 0
        %1194 = vmatpush1.bf16.xpose.msra.mxu0 0
        %1195 = vmatprep.subr.bf16.mxu0 0
        %1196 = vmatpush1.bf16.xpose.msra.mxu0 0
        %1197 = vmatprep.subr.bf16.mxu0 0
        %1198 = vmatpush1.bf16.xpose.msra.mxu0 0
        %1199 = vmatprep.mubr.bf16.mxu0 0
        %1200 = vmatmul.mubr.bf16.gmra.mrb[0].mxu0 %v1162
        %v1201 = vpop.f32.mrb[0].mxu0
        %v1202 = vadd.f32 0.0, %v1201
        %v1203 = vpop.f32.mrb[0].mxu0
        %v1204 = vpop.f32.mrb[0].mxu0
        %v1205 = vadd.f32 0.0, %v1204
        %v1206 = vpop.f32.mrb[0].mxu0
        %1207 = vdwg.mxu0
        %1209 = vrot.lane.b32.xlu0 %v705, 126
        %v1210 = vpop.permute.xlu0 %1209
        %v1212 = vsel %vm960, %v705, 0
        %v1215 = vsel %vm960, %v1210, 0
        %1217 = vmatprep.subr.bf16.mxu0 0
        %1218 = vmatpush1.bf16.xpose.msra.mxu0 %v1215
        %1219 = vmatprep.subr.bf16.mxu0 0
        %1220 = vmatpush1.bf16.xpose.msra.mxu0 0
        %1221 = vmatprep.subr.bf16.mxu0 0
        %1222 = vmatpush1.bf16.xpose.msra.mxu0 0
        %1223 = vmatprep.subr.bf16.mxu0 0
        %1224 = vmatpush1.bf16.xpose.msra.mxu0 0
        %1225 = vmatprep.subr.bf16.mxu0 0
        %1226 = vmatpush1.bf16.xpose.msra.mxu0 0
        %1227 = vmatprep.subr.bf16.mxu0 0
        %1228 = vmatpush1.bf16.xpose.msra.mxu0 0
        %1229 = vmatprep.subr.bf16.mxu0 0
        %1230 = vmatpush1.bf16.xpose.msra.mxu0 0
        %1231 = vmatprep.subr.bf16.mxu0 0
        %1232 = vmatpush1.bf16.xpose.msra.mxu0 0
        %1233 = vmatprep.subr.bf16.mxu0 0
        %1234 = vmatpush1.bf16.xpose.msra.mxu0 0
        %1235 = vmatprep.subr.bf16.mxu0 0
        %1236 = vmatpush1.bf16.xpose.msra.mxu0 0
        %1237 = vmatprep.subr.bf16.mxu0 0
        %1238 = vmatpush1.bf16.xpose.msra.mxu0 0
        %1239 = vmatprep.subr.bf16.mxu0 0
        %1240 = vmatpush1.bf16.xpose.msra.mxu0 0
        %1241 = vmatprep.subr.bf16.mxu0 0
        %1242 = vmatpush1.bf16.xpose.msra.mxu0 0
        %1243 = vmatprep.subr.bf16.mxu0 0
        %1244 = vmatpush1.bf16.xpose.msra.mxu0 0
        %1245 = vmatprep.subr.bf16.mxu0 0
        %1246 = vmatpush1.bf16.xpose.msra.mxu0 0
        %1247 = vmatprep.subr.bf16.mxu0 0
        %1248 = vmatpush1.bf16.xpose.msra.mxu0 0
        %1249 = vmatprep.mubr.bf16.mxu0 0
        %1250 = vmatmul.mubr.bf16.gmra.mrb[0].mxu0 %v1212
        %v1251 = vpop.f32.mrb[0].mxu0
        %v1252 = vadd.f32 0.0, %v1251
        %v1253 = vpop.f32.mrb[0].mxu0
        %v1254 = vpop.f32.mrb[0].mxu0
        %v1255 = vadd.f32 0.0, %v1254
        %v1256 = vpop.f32.mrb[0].mxu0
        %1257 = vdwg.mxu0
        %1259 = vrot.lane.b32.xlu0 %v706, 126
        %v1260 = vpop.permute.xlu0 %1259
        %v1262 = vsel %vm960, %v706, 0
        %v1265 = vsel %vm960, %v1260, 0
        %1267 = vmatprep.subr.bf16.mxu0 0
        %1268 = vmatpush1.bf16.xpose.msra.mxu0 %v1265
        %1269 = vmatprep.subr.bf16.mxu0 0
        %1270 = vmatpush1.bf16.xpose.msra.mxu0 0
        %1271 = vmatprep.subr.bf16.mxu0 0
        %1272 = vmatpush1.bf16.xpose.msra.mxu0 0
        %1273 = vmatprep.subr.bf16.mxu0 0
        %1274 = vmatpush1.bf16.xpose.msra.mxu0 0
        %1275 = vmatprep.subr.bf16.mxu0 0
        %1276 = vmatpush1.bf16.xpose.msra.mxu0 0
        %1277 = vmatprep.subr.bf16.mxu0 0
        %1278 = vmatpush1.bf16.xpose.msra.mxu0 0
        %1279 = vmatprep.subr.bf16.mxu0 0
        %1280 = vmatpush1.bf16.xpose.msra.mxu0 0
        %1281 = vmatprep.subr.bf16.mxu0 0
        %1282 = vmatpush1.bf16.xpose.msra.mxu0 0
        %1283 = vmatprep.subr.bf16.mxu0 0
        %1284 = vmatpush1.bf16.xpose.msra.mxu0 0
        %1285 = vmatprep.subr.bf16.mxu0 0
        %1286 = vmatpush1.bf16.xpose.msra.mxu0 0
        %1287 = vmatprep.subr.bf16.mxu0 0
        %1288 = vmatpush1.bf16.xpose.msra.mxu0 0
        %1289 = vmatprep.subr.bf16.mxu0 0
        %1290 = vmatpush1.bf16.xpose.msra.mxu0 0
        %1291 = vmatprep.subr.bf16.mxu0 0
        %1292 = vmatpush1.bf16.xpose.msra.mxu0 0
        %1293 = vmatprep.subr.bf16.mxu0 0
        %1294 = vmatpush1.bf16.xpose.msra.mxu0 0
        %1295 = vmatprep.subr.bf16.mxu0 0
        %1296 = vmatpush1.bf16.xpose.msra.mxu0 0
        %1297 = vmatprep.subr.bf16.mxu0 0
        %1298 = vmatpush1.bf16.xpose.msra.mxu0 0
        %1299 = vmatprep.mubr.bf16.mxu0 0
        %1300 = vmatmul.mubr.bf16.gmra.mrb[0].mxu0 %v1262
        %v1301 = vpop.f32.mrb[0].mxu0
        %v1302 = vadd.f32 0.0, %v1301
        %v1303 = vpop.f32.mrb[0].mxu0
        %v1304 = vpop.f32.mrb[0].mxu0
        %v1305 = vadd.f32 0.0, %v1304
        %v1306 = vpop.f32.mrb[0].mxu0
        %1307 = vdwg.mxu0
        %1309 = vrot.lane.b32.xlu0 %v707, 126
        %v1310 = vpop.permute.xlu0 %1309
        %v1312 = vsel %vm960, %v707, 0
        %v1315 = vsel %vm960, %v1310, 0
        %1317 = vmatprep.subr.bf16.mxu0 0
        %1318 = vmatpush1.bf16.xpose.msra.mxu0 %v1315
        %1319 = vmatprep.subr.bf16.mxu0 0
        %1320 = vmatpush1.bf16.xpose.msra.mxu0 0
        %1321 = vmatprep.subr.bf16.mxu0 0
        %1322 = vmatpush1.bf16.xpose.msra.mxu0 0
        %1323 = vmatprep.subr.bf16.mxu0 0
        %1324 = vmatpush1.bf16.xpose.msra.mxu0 0
        %1325 = vmatprep.subr.bf16.mxu0 0
        %1326 = vmatpush1.bf16.xpose.msra.mxu0 0
        %1327 = vmatprep.subr.bf16.mxu0 0
        %1328 = vmatpush1.bf16.xpose.msra.mxu0 0
        %1329 = vmatprep.subr.bf16.mxu0 0
        %1330 = vmatpush1.bf16.xpose.msra.mxu0 0
        %1331 = vmatprep.subr.bf16.mxu0 0
        %1332 = vmatpush1.bf16.xpose.msra.mxu0 0
        %1333 = vmatprep.subr.bf16.mxu0 0
        %1334 = vmatpush1.bf16.xpose.msra.mxu0 0
        %1335 = vmatprep.subr.bf16.mxu0 0
        %1336 = vmatpush1.bf16.xpose.msra.mxu0 0
        %1337 = vmatprep.subr.bf16.mxu0 0
        %1338 = vmatpush1.bf16.xpose.msra.mxu0 0
        %1339 = vmatprep.subr.bf16.mxu0 0
        %1340 = vmatpush1.bf16.xpose.msra.mxu0 0
        %1341 = vmatprep.subr.bf16.mxu0 0
        %1342 = vmatpush1.bf16.xpose.msra.mxu0 0
        %1343 = vmatprep.subr.bf16.mxu0 0
        %1344 = vmatpush1.bf16.xpose.msra.mxu0 0
        %1345 = vmatprep.subr.bf16.mxu0 0
        %1346 = vmatpush1.bf16.xpose.msra.mxu0 0
        %1347 = vmatprep.subr.bf16.mxu0 0
        %1348 = vmatpush1.bf16.xpose.msra.mxu0 0
        %1349 = vmatprep.mubr.bf16.mxu0 0
        %1350 = vmatmul.mubr.bf16.gmra.mrb[0].mxu0 %v1312
        %v1351 = vpop.f32.mrb[0].mxu0
        %v1352 = vadd.f32 0.0, %v1351
        %v1353 = vpop.f32.mrb[0].mxu0
        %v1354 = vpop.f32.mrb[0].mxu0
        %v1355 = vadd.f32 0.0, %v1354
        %v1356 = vpop.f32.mrb[0].mxu0
        %1357 = vdwg.mxu0
        %1359 = vrot.lane.b32.xlu0 %v708, 126
        %v1360 = vpop.permute.xlu0 %1359
        %v1362 = vsel %vm960, %v708, 0
        %v1365 = vsel %vm960, %v1360, 0
        %1367 = vmatprep.subr.bf16.mxu0 0
        %1368 = vmatpush1.bf16.xpose.msra.mxu0 %v1365
        %1369 = vmatprep.subr.bf16.mxu0 0
        %1370 = vmatpush1.bf16.xpose.msra.mxu0 0
        %1371 = vmatprep.subr.bf16.mxu0 0
        %1372 = vmatpush1.bf16.xpose.msra.mxu0 0
        %1373 = vmatprep.subr.bf16.mxu0 0
        %1374 = vmatpush1.bf16.xpose.msra.mxu0 0
        %1375 = vmatprep.subr.bf16.mxu0 0
        %1376 = vmatpush1.bf16.xpose.msra.mxu0 0
        %1377 = vmatprep.subr.bf16.mxu0 0
        %1378 = vmatpush1.bf16.xpose.msra.mxu0 0
        %1379 = vmatprep.subr.bf16.mxu0 0
        %1380 = vmatpush1.bf16.xpose.msra.mxu0 0
        %1381 = vmatprep.subr.bf16.mxu0 0
        %1382 = vmatpush1.bf16.xpose.msra.mxu0 0
        %1383 = vmatprep.subr.bf16.mxu0 0
        %1384 = vmatpush1.bf16.xpose.msra.mxu0 0
        %1385 = vmatprep.subr.bf16.mxu0 0
        %1386 = vmatpush1.bf16.xpose.msra.mxu0 0
        %1387 = vmatprep.subr.bf16.mxu0 0
        %1388 = vmatpush1.bf16.xpose.msra.mxu0 0
        %1389 = vmatprep.subr.bf16.mxu0 0
        %1390 = vmatpush1.bf16.xpose.msra.mxu0 0
        %1391 = vmatprep.subr.bf16.mxu0 0
        %1392 = vmatpush1.bf16.xpose.msra.mxu0 0
        %1393 = vmatprep.subr.bf16.mxu0 0
        %1394 = vmatpush1.bf16.xpose.msra.mxu0 0
        %1395 = vmatprep.subr.bf16.mxu0 0
        %1396 = vmatpush1.bf16.xpose.msra.mxu0 0
        %1397 = vmatprep.subr.bf16.mxu0 0
        %1398 = vmatpush1.bf16.xpose.msra.mxu0 0
        %1399 = vmatprep.mubr.bf16.mxu0 0
        %1400 = vmatmul.mubr.bf16.gmra.mrb[0].mxu0 %v1362
        %v1401 = vpop.f32.mrb[0].mxu0
        %v1402 = vadd.f32 0.0, %v1401
        %v1403 = vpop.f32.mrb[0].mxu0
        %v1404 = vpop.f32.mrb[0].mxu0
        %v1405 = vadd.f32 0.0, %v1404
        %v1406 = vpop.f32.mrb[0].mxu0
        %1407 = vdwg.mxu0
        %1409 = vrot.lane.b32.xlu0 %v709, 126
        %v1410 = vpop.permute.xlu0 %1409
        %v1412 = vsel %vm960, %v709, 0
        %v1415 = vsel %vm960, %v1410, 0
        %1417 = vmatprep.subr.bf16.mxu0 0
        %1418 = vmatpush1.bf16.xpose.msra.mxu0 %v1415
        %1419 = vmatprep.subr.bf16.mxu0 0
        %1420 = vmatpush1.bf16.xpose.msra.mxu0 0
        %1421 = vmatprep.subr.bf16.mxu0 0
        %1422 = vmatpush1.bf16.xpose.msra.mxu0 0
        %1423 = vmatprep.subr.bf16.mxu0 0
        %1424 = vmatpush1.bf16.xpose.msra.mxu0 0
        %1425 = vmatprep.subr.bf16.mxu0 0
        %1426 = vmatpush1.bf16.xpose.msra.mxu0 0
        %1427 = vmatprep.subr.bf16.mxu0 0
        %1428 = vmatpush1.bf16.xpose.msra.mxu0 0
        %1429 = vmatprep.subr.bf16.mxu0 0
        %1430 = vmatpush1.bf16.xpose.msra.mxu0 0
        %1431 = vmatprep.subr.bf16.mxu0 0
        %1432 = vmatpush1.bf16.xpose.msra.mxu0 0
        %1433 = vmatprep.subr.bf16.mxu0 0
        %1434 = vmatpush1.bf16.xpose.msra.mxu0 0
        %1435 = vmatprep.subr.bf16.mxu0 0
        %1436 = vmatpush1.bf16.xpose.msra.mxu0 0
        %1437 = vmatprep.subr.bf16.mxu0 0
        %1438 = vmatpush1.bf16.xpose.msra.mxu0 0
        %1439 = vmatprep.subr.bf16.mxu0 0
        %1440 = vmatpush1.bf16.xpose.msra.mxu0 0
        %1441 = vmatprep.subr.bf16.mxu0 0
        %1442 = vmatpush1.bf16.xpose.msra.mxu0 0
        %1443 = vmatprep.subr.bf16.mxu0 0
        %1444 = vmatpush1.bf16.xpose.msra.mxu0 0
        %1445 = vmatprep.subr.bf16.mxu0 0
        %1446 = vmatpush1.bf16.xpose.msra.mxu0 0
        %1447 = vmatprep.subr.bf16.mxu0 0
        %1448 = vmatpush1.bf16.xpose.msra.mxu0 0
        %1449 = vmatprep.mubr.bf16.mxu0 0
        %1450 = vmatmul.mubr.bf16.gmra.mrb[0].mxu0 %v1412
        %v1451 = vpop.f32.mrb[0].mxu0
        %v1452 = vadd.f32 0.0, %v1451
        %v1453 = vpop.f32.mrb[0].mxu0
        %v1454 = vpop.f32.mrb[0].mxu0
        %v1455 = vadd.f32 0.0, %v1454
        %v1456 = vpop.f32.mrb[0].mxu0
        %1457 = vdwg.mxu0
        %1459 = vrot.lane.b32.xlu0 %v710, 126
        %v1460 = vpop.permute.xlu0 %1459
        %v1462 = vsel %vm960, %v710, 0
        %v1465 = vsel %vm960, %v1460, 0
        %1467 = vmatprep.subr.bf16.mxu0 0
        %1468 = vmatpush1.bf16.xpose.msra.mxu0 %v1465
        %1469 = vmatprep.subr.bf16.mxu0 0
        %1470 = vmatpush1.bf16.xpose.msra.mxu0 0
        %1471 = vmatprep.subr.bf16.mxu0 0
        %1472 = vmatpush1.bf16.xpose.msra.mxu0 0
        %1473 = vmatprep.subr.bf16.mxu0 0
        %1474 = vmatpush1.bf16.xpose.msra.mxu0 0
        %1475 = vmatprep.subr.bf16.mxu0 0
        %1476 = vmatpush1.bf16.xpose.msra.mxu0 0
        %1477 = vmatprep.subr.bf16.mxu0 0
        %1478 = vmatpush1.bf16.xpose.msra.mxu0 0
        %1479 = vmatprep.subr.bf16.mxu0 0
        %1480 = vmatpush1.bf16.xpose.msra.mxu0 0
        %1481 = vmatprep.subr.bf16.mxu0 0
        %1482 = vmatpush1.bf16.xpose.msra.mxu0 0
        %1483 = vmatprep.subr.bf16.mxu0 0
        %1484 = vmatpush1.bf16.xpose.msra.mxu0 0
        %1485 = vmatprep.subr.bf16.mxu0 0
        %1486 = vmatpush1.bf16.xpose.msra.mxu0 0
        %1487 = vmatprep.subr.bf16.mxu0 0
        %1488 = vmatpush1.bf16.xpose.msra.mxu0 0
        %1489 = vmatprep.subr.bf16.mxu0 0
        %1490 = vmatpush1.bf16.xpose.msra.mxu0 0
        %1491 = vmatprep.subr.bf16.mxu0 0
        %1492 = vmatpush1.bf16.xpose.msra.mxu0 0
        %1493 = vmatprep.subr.bf16.mxu0 0
        %1494 = vmatpush1.bf16.xpose.msra.mxu0 0
        %1495 = vmatprep.subr.bf16.mxu0 0
        %1496 = vmatpush1.bf16.xpose.msra.mxu0 0
        %1497 = vmatprep.subr.bf16.mxu0 0
        %1498 = vmatpush1.bf16.xpose.msra.mxu0 0
        %1499 = vmatprep.mubr.bf16.mxu0 0
        %1500 = vmatmul.mubr.bf16.gmra.mrb[0].mxu0 %v1462
        %v1501 = vpop.f32.mrb[0].mxu0
        %v1502 = vadd.f32 0.0, %v1501
        %v1503 = vpop.f32.mrb[0].mxu0
        %v1504 = vpop.f32.mrb[0].mxu0
        %v1505 = vadd.f32 0.0, %v1504
        %v1506 = vpop.f32.mrb[0].mxu0
        %1507 = vdwg.mxu0
        %1509 = vrot.lane.b32.xlu0 %v711, 126
        %v1510 = vpop.permute.xlu0 %1509
        %v1512 = vsel %vm960, %v711, 0
        %v1515 = vsel %vm960, %v1510, 0
        %1517 = vmatprep.subr.bf16.mxu0 0
        %1518 = vmatpush1.bf16.xpose.msra.mxu0 %v1515
        %1519 = vmatprep.subr.bf16.mxu0 0
        %1520 = vmatpush1.bf16.xpose.msra.mxu0 0
        %1521 = vmatprep.subr.bf16.mxu0 0
        %1522 = vmatpush1.bf16.xpose.msra.mxu0 0
        %1523 = vmatprep.subr.bf16.mxu0 0
        %1524 = vmatpush1.bf16.xpose.msra.mxu0 0
        %1525 = vmatprep.subr.bf16.mxu0 0
        %1526 = vmatpush1.bf16.xpose.msra.mxu0 0
        %1527 = vmatprep.subr.bf16.mxu0 0
        %1528 = vmatpush1.bf16.xpose.msra.mxu0 0
        %1529 = vmatprep.subr.bf16.mxu0 0
        %1530 = vmatpush1.bf16.xpose.msra.mxu0 0
        %1531 = vmatprep.subr.bf16.mxu0 0
        %1532 = vmatpush1.bf16.xpose.msra.mxu0 0
        %1533 = vmatprep.subr.bf16.mxu0 0
        %1534 = vmatpush1.bf16.xpose.msra.mxu0 0
        %1535 = vmatprep.subr.bf16.mxu0 0
        %1536 = vmatpush1.bf16.xpose.msra.mxu0 0
        %1537 = vmatprep.subr.bf16.mxu0 0
        %1538 = vmatpush1.bf16.xpose.msra.mxu0 0
        %1539 = vmatprep.subr.bf16.mxu0 0
        %1540 = vmatpush1.bf16.xpose.msra.mxu0 0
        %1541 = vmatprep.subr.bf16.mxu0 0
        %1542 = vmatpush1.bf16.xpose.msra.mxu0 0
        %1543 = vmatprep.subr.bf16.mxu0 0
        %1544 = vmatpush1.bf16.xpose.msra.mxu0 0
        %1545 = vmatprep.subr.bf16.mxu0 0
        %1546 = vmatpush1.bf16.xpose.msra.mxu0 0
        %1547 = vmatprep.subr.bf16.mxu0 0
        %1548 = vmatpush1.bf16.xpose.msra.mxu0 0
        %1549 = vmatprep.mubr.bf16.mxu0 0
        %1550 = vmatmul.mubr.bf16.gmra.mrb[0].mxu0 %v1512
        %v1551 = vpop.f32.mrb[0].mxu0
        %v1552 = vadd.f32 0.0, %v1551
        %v1553 = vpop.f32.mrb[0].mxu0
        %v1554 = vpop.f32.mrb[0].mxu0
        %v1555 = vadd.f32 0.0, %v1554
        %v1556 = vpop.f32.mrb[0].mxu0
        %1557 = vdwg.mxu0
        %1559 = vrot.lane.b32.xlu0 %v712, 126
        %v1560 = vpop.permute.xlu0 %1559
        %v1562 = vsel %vm960, %v712, 0
        %v1565 = vsel %vm960, %v1560, 0
        %1567 = vmatprep.subr.bf16.mxu0 0
        %1568 = vmatpush1.bf16.xpose.msra.mxu0 %v1565
        %1569 = vmatprep.subr.bf16.mxu0 0
        %1570 = vmatpush1.bf16.xpose.msra.mxu0 0
        %1571 = vmatprep.subr.bf16.mxu0 0
        %1572 = vmatpush1.bf16.xpose.msra.mxu0 0
        %1573 = vmatprep.subr.bf16.mxu0 0
        %1574 = vmatpush1.bf16.xpose.msra.mxu0 0
        %1575 = vmatprep.subr.bf16.mxu0 0
        %1576 = vmatpush1.bf16.xpose.msra.mxu0 0
        %1577 = vmatprep.subr.bf16.mxu0 0
        %1578 = vmatpush1.bf16.xpose.msra.mxu0 0
        %1579 = vmatprep.subr.bf16.mxu0 0
        %1580 = vmatpush1.bf16.xpose.msra.mxu0 0
        %1581 = vmatprep.subr.bf16.mxu0 0
        %1582 = vmatpush1.bf16.xpose.msra.mxu0 0
        %1583 = vmatprep.subr.bf16.mxu0 0
        %1584 = vmatpush1.bf16.xpose.msra.mxu0 0
        %1585 = vmatprep.subr.bf16.mxu0 0
        %1586 = vmatpush1.bf16.xpose.msra.mxu0 0
        %1587 = vmatprep.subr.bf16.mxu0 0
        %1588 = vmatpush1.bf16.xpose.msra.mxu0 0
        %1589 = vmatprep.subr.bf16.mxu0 0
        %1590 = vmatpush1.bf16.xpose.msra.mxu0 0
        %1591 = vmatprep.subr.bf16.mxu0 0
        %1592 = vmatpush1.bf16.xpose.msra.mxu0 0
        %1593 = vmatprep.subr.bf16.mxu0 0
        %1594 = vmatpush1.bf16.xpose.msra.mxu0 0
        %1595 = vmatprep.subr.bf16.mxu0 0
        %1596 = vmatpush1.bf16.xpose.msra.mxu0 0
        %1597 = vmatprep.subr.bf16.mxu0 0
        %1598 = vmatpush1.bf16.xpose.msra.mxu0 0
        %1599 = vmatprep.mubr.bf16.mxu0 0
        %1600 = vmatmul.mubr.bf16.gmra.mrb[0].mxu0 %v1562
        %v1601 = vpop.f32.mrb[0].mxu0
        %v1602 = vadd.f32 0.0, %v1601
        %v1603 = vpop.f32.mrb[0].mxu0
        %v1604 = vpop.f32.mrb[0].mxu0
        %v1605 = vadd.f32 0.0, %v1604
        %v1606 = vpop.f32.mrb[0].mxu0
        %1607 = vdwg.mxu0
        %1609 = vrot.lane.b32.xlu0 %v713, 126
        %v1610 = vpop.permute.xlu0 %1609
        %v1612 = vsel %vm960, %v713, 0
        %v1615 = vsel %vm960, %v1610, 0
        %1617 = vmatprep.subr.bf16.mxu0 0
        %1618 = vmatpush1.bf16.xpose.msra.mxu0 %v1615
        %1619 = vmatprep.subr.bf16.mxu0 0
        %1620 = vmatpush1.bf16.xpose.msra.mxu0 0
        %1621 = vmatprep.subr.bf16.mxu0 0
        %1622 = vmatpush1.bf16.xpose.msra.mxu0 0
        %1623 = vmatprep.subr.bf16.mxu0 0
        %1624 = vmatpush1.bf16.xpose.msra.mxu0 0
        %1625 = vmatprep.subr.bf16.mxu0 0
        %1626 = vmatpush1.bf16.xpose.msra.mxu0 0
        %1627 = vmatprep.subr.bf16.mxu0 0
        %1628 = vmatpush1.bf16.xpose.msra.mxu0 0
        %1629 = vmatprep.subr.bf16.mxu0 0
        %1630 = vmatpush1.bf16.xpose.msra.mxu0 0
        %1631 = vmatprep.subr.bf16.mxu0 0
        %1632 = vmatpush1.bf16.xpose.msra.mxu0 0
        %1633 = vmatprep.subr.bf16.mxu0 0
        %1634 = vmatpush1.bf16.xpose.msra.mxu0 0
        %1635 = vmatprep.subr.bf16.mxu0 0
        %1636 = vmatpush1.bf16.xpose.msra.mxu0 0
        %1637 = vmatprep.subr.bf16.mxu0 0
        %1638 = vmatpush1.bf16.xpose.msra.mxu0 0
        %1639 = vmatprep.subr.bf16.mxu0 0
        %1640 = vmatpush1.bf16.xpose.msra.mxu0 0
        %1641 = vmatprep.subr.bf16.mxu0 0
        %1642 = vmatpush1.bf16.xpose.msra.mxu0 0
        %1643 = vmatprep.subr.bf16.mxu0 0
        %1644 = vmatpush1.bf16.xpose.msra.mxu0 0
        %1645 = vmatprep.subr.bf16.mxu0 0
        %1646 = vmatpush1.bf16.xpose.msra.mxu0 0
        %1647 = vmatprep.subr.bf16.mxu0 0
        %1648 = vmatpush1.bf16.xpose.msra.mxu0 0
        %1649 = vmatprep.mubr.bf16.mxu0 0
        %1650 = vmatmul.mubr.bf16.gmra.mrb[0].mxu0 %v1612
        %v1651 = vpop.f32.mrb[0].mxu0
        %v1652 = vadd.f32 0.0, %v1651
        %v1653 = vpop.f32.mrb[0].mxu0
        %v1654 = vpop.f32.mrb[0].mxu0
        %v1655 = vadd.f32 0.0, %v1654
        %v1656 = vpop.f32.mrb[0].mxu0
        %1657 = vdwg.mxu0
        %1659 = vrot.lane.b32.xlu0 %v714, 126
        %v1660 = vpop.permute.xlu0 %1659
        %v1662 = vsel %vm960, %v714, 0
        %v1665 = vsel %vm960, %v1660, 0
        %1667 = vmatprep.subr.bf16.mxu0 0
        %1668 = vmatpush1.bf16.xpose.msra.mxu0 %v1665
        %1669 = vmatprep.subr.bf16.mxu0 0
        %1670 = vmatpush1.bf16.xpose.msra.mxu0 0
        %1671 = vmatprep.subr.bf16.mxu0 0
        %1672 = vmatpush1.bf16.xpose.msra.mxu0 0
        %1673 = vmatprep.subr.bf16.mxu0 0
        %1674 = vmatpush1.bf16.xpose.msra.mxu0 0
        %1675 = vmatprep.subr.bf16.mxu0 0
        %1676 = vmatpush1.bf16.xpose.msra.mxu0 0
        %1677 = vmatprep.subr.bf16.mxu0 0
        %1678 = vmatpush1.bf16.xpose.msra.mxu0 0
        %1679 = vmatprep.subr.bf16.mxu0 0
        %1680 = vmatpush1.bf16.xpose.msra.mxu0 0
        %1681 = vmatprep.subr.bf16.mxu0 0
        %1682 = vmatpush1.bf16.xpose.msra.mxu0 0
        %1683 = vmatprep.subr.bf16.mxu0 0
        %1684 = vmatpush1.bf16.xpose.msra.mxu0 0
        %1685 = vmatprep.subr.bf16.mxu0 0
        %1686 = vmatpush1.bf16.xpose.msra.mxu0 0
        %1687 = vmatprep.subr.bf16.mxu0 0
        %1688 = vmatpush1.bf16.xpose.msra.mxu0 0
        %1689 = vmatprep.subr.bf16.mxu0 0
        %1690 = vmatpush1.bf16.xpose.msra.mxu0 0
        %1691 = vmatprep.subr.bf16.mxu0 0
        %1692 = vmatpush1.bf16.xpose.msra.mxu0 0
        %1693 = vmatprep.subr.bf16.mxu0 0
        %1694 = vmatpush1.bf16.xpose.msra.mxu0 0
        %1695 = vmatprep.subr.bf16.mxu0 0
        %1696 = vmatpush1.bf16.xpose.msra.mxu0 0
        %1697 = vmatprep.subr.bf16.mxu0 0
        %1698 = vmatpush1.bf16.xpose.msra.mxu0 0
        %1699 = vmatprep.mubr.bf16.mxu0 0
        %1700 = vmatmul.mubr.bf16.gmra.mrb[0].mxu0 %v1662
        %v1701 = vpop.f32.mrb[0].mxu0
        %v1702 = vadd.f32 0.0, %v1701
        %v1703 = vpop.f32.mrb[0].mxu0
        %v1704 = vpop.f32.mrb[0].mxu0
        %v1705 = vadd.f32 0.0, %v1704
        %v1706 = vpop.f32.mrb[0].mxu0
        %1707 = vdwg.mxu0
        %1709 = vrot.lane.b32.xlu0 %v715, 126
        %v1710 = vpop.permute.xlu0 %1709
        %v1712 = vsel %vm960, %v715, 0
        %v1715 = vsel %vm960, %v1710, 0
        %1717 = vmatprep.subr.bf16.mxu0 0
        %1718 = vmatpush1.bf16.xpose.msra.mxu0 %v1715
        %1719 = vmatprep.subr.bf16.mxu0 0
        %1720 = vmatpush1.bf16.xpose.msra.mxu0 0
        %1721 = vmatprep.subr.bf16.mxu0 0
        %1722 = vmatpush1.bf16.xpose.msra.mxu0 0
        %1723 = vmatprep.subr.bf16.mxu0 0
        %1724 = vmatpush1.bf16.xpose.msra.mxu0 0
        %1725 = vmatprep.subr.bf16.mxu0 0
        %1726 = vmatpush1.bf16.xpose.msra.mxu0 0
        %1727 = vmatprep.subr.bf16.mxu0 0
        %1728 = vmatpush1.bf16.xpose.msra.mxu0 0
        %1729 = vmatprep.subr.bf16.mxu0 0
        %1730 = vmatpush1.bf16.xpose.msra.mxu0 0
        %1731 = vmatprep.subr.bf16.mxu0 0
        %1732 = vmatpush1.bf16.xpose.msra.mxu0 0
        %1733 = vmatprep.subr.bf16.mxu0 0
        %1734 = vmatpush1.bf16.xpose.msra.mxu0 0
        %1735 = vmatprep.subr.bf16.mxu0 0
        %1736 = vmatpush1.bf16.xpose.msra.mxu0 0
        %1737 = vmatprep.subr.bf16.mxu0 0
        %1738 = vmatpush1.bf16.xpose.msra.mxu0 0
        %1739 = vmatprep.subr.bf16.mxu0 0
        %1740 = vmatpush1.bf16.xpose.msra.mxu0 0
        %1741 = vmatprep.subr.bf16.mxu0 0
        %1742 = vmatpush1.bf16.xpose.msra.mxu0 0
        %1743 = vmatprep.subr.bf16.mxu0 0
        %1744 = vmatpush1.bf16.xpose.msra.mxu0 0
        %1745 = vmatprep.subr.bf16.mxu0 0
        %1746 = vmatpush1.bf16.xpose.msra.mxu0 0
        %1747 = vmatprep.subr.bf16.mxu0 0
        %1748 = vmatpush1.bf16.xpose.msra.mxu0 0
        %1749 = vmatprep.mubr.bf16.mxu0 0
        %1750 = vmatmul.mubr.bf16.gmra.mrb[0].mxu0 %v1712
        %v1751 = vpop.f32.mrb[0].mxu0
        %v1752 = vadd.f32 0.0, %v1751
        %v1753 = vpop.f32.mrb[0].mxu0
        %v1754 = vpop.f32.mrb[0].mxu0
        %v1755 = vadd.f32 0.0, %v1754
        %v1756 = vpop.f32.mrb[0].mxu0
        %1757 = vdwg.mxu0
        %1759 = vrot.lane.b32.xlu0 %v941, 126
        %v1760 = vpop.permute.xlu0 %1759
        %v1762 = vsel %vm960, %v941, 0
        %v1765 = vsel %vm960, %v1760, 0
        %1767 = vmatprep.subr.bf16.mxu0 0
        %1768 = vmatpush1.bf16.xpose.msra.mxu0 %v1765
        %1769 = vmatprep.subr.bf16.mxu0 0
        %1770 = vmatpush1.bf16.xpose.msra.mxu0 0
        %1771 = vmatprep.subr.bf16.mxu0 0
        %1772 = vmatpush1.bf16.xpose.msra.mxu0 0
        %1773 = vmatprep.subr.bf16.mxu0 0
        %1774 = vmatpush1.bf16.xpose.msra.mxu0 0
        %1775 = vmatprep.subr.bf16.mxu0 0
        %1776 = vmatpush1.bf16.xpose.msra.mxu0 0
        %1777 = vmatprep.subr.bf16.mxu0 0
        %1778 = vmatpush1.bf16.xpose.msra.mxu0 0
        %1779 = vmatprep.subr.bf16.mxu0 0
        %1780 = vmatpush1.bf16.xpose.msra.mxu0 0
        %1781 = vmatprep.subr.bf16.mxu0 0
        %1782 = vmatpush1.bf16.xpose.msra.mxu0 0
        %1783 = vmatprep.subr.bf16.mxu0 0
        %1784 = vmatpush1.bf16.xpose.msra.mxu0 0
        %1785 = vmatprep.subr.bf16.mxu0 0
        %1786 = vmatpush1.bf16.xpose.msra.mxu0 0
        %1787 = vmatprep.subr.bf16.mxu0 0
        %1788 = vmatpush1.bf16.xpose.msra.mxu0 0
        %1789 = vmatprep.subr.bf16.mxu0 0
        %1790 = vmatpush1.bf16.xpose.msra.mxu0 0
        %1791 = vmatprep.subr.bf16.mxu0 0
        %1792 = vmatpush1.bf16.xpose.msra.mxu0 0
        %1793 = vmatprep.subr.bf16.mxu0 0
        %1794 = vmatpush1.bf16.xpose.msra.mxu0 0
        %1795 = vmatprep.subr.bf16.mxu0 0
        %1796 = vmatpush1.bf16.xpose.msra.mxu0 0
        %1797 = vmatprep.subr.bf16.mxu0 0
        %1798 = vmatpush1.bf16.xpose.msra.mxu0 0
        %1799 = vmatprep.mubr.bf16.mxu0 0
        %1800 = vmatmul.mubr.bf16.gmra.mrb[0].mxu0 %v1762
        %v1801 = vpop.f32.mrb[0].mxu0
        %v1802 = vadd.f32 0.0, %v1801
        %v1803 = vpop.f32.mrb[0].mxu0
        %v1804 = vpop.f32.mrb[0].mxu0
        %v1805 = vadd.f32 0.0, %v1804
        %v1806 = vpop.f32.mrb[0].mxu0
        %1807 = vdwg.mxu0
        %1809 = vrot.lane.b32.xlu0 %v942, 126
        %v1810 = vpop.permute.xlu0 %1809
        %v1812 = vsel %vm960, %v942, 0
        %v1815 = vsel %vm960, %v1810, 0
        %1817 = vmatprep.subr.bf16.mxu0 0
        %1818 = vmatpush1.bf16.xpose.msra.mxu0 %v1815
        %1819 = vmatprep.subr.bf16.mxu0 0
        %1820 = vmatpush1.bf16.xpose.msra.mxu0 0
        %1821 = vmatprep.subr.bf16.mxu0 0
        %1822 = vmatpush1.bf16.xpose.msra.mxu0 0
        %1823 = vmatprep.subr.bf16.mxu0 0
        %1824 = vmatpush1.bf16.xpose.msra.mxu0 0
        %1825 = vmatprep.subr.bf16.mxu0 0
        %1826 = vmatpush1.bf16.xpose.msra.mxu0 0
        %1827 = vmatprep.subr.bf16.mxu0 0
        %1828 = vmatpush1.bf16.xpose.msra.mxu0 0
        %1829 = vmatprep.subr.bf16.mxu0 0
        %1830 = vmatpush1.bf16.xpose.msra.mxu0 0
        %1831 = vmatprep.subr.bf16.mxu0 0
        %1832 = vmatpush1.bf16.xpose.msra.mxu0 0
        %1833 = vmatprep.subr.bf16.mxu0 0
        %1834 = vmatpush1.bf16.xpose.msra.mxu0 0
        %1835 = vmatprep.subr.bf16.mxu0 0
        %1836 = vmatpush1.bf16.xpose.msra.mxu0 0
        %1837 = vmatprep.subr.bf16.mxu0 0
        %1838 = vmatpush1.bf16.xpose.msra.mxu0 0
        %1839 = vmatprep.subr.bf16.mxu0 0
        %1840 = vmatpush1.bf16.xpose.msra.mxu0 0
        %1841 = vmatprep.subr.bf16.mxu0 0
        %1842 = vmatpush1.bf16.xpose.msra.mxu0 0
        %1843 = vmatprep.subr.bf16.mxu0 0
        %1844 = vmatpush1.bf16.xpose.msra.mxu0 0
        %1845 = vmatprep.subr.bf16.mxu0 0
        %1846 = vmatpush1.bf16.xpose.msra.mxu0 0
        %1847 = vmatprep.subr.bf16.mxu0 0
        %1848 = vmatpush1.bf16.xpose.msra.mxu0 0
        %1849 = vmatprep.mubr.bf16.mxu0 0
        %1850 = vmatmul.mubr.bf16.gmra.mrb[0].mxu0 %v1812
        %v1851 = vpop.f32.mrb[0].mxu0
        %v1852 = vadd.f32 0.0, %v1851
        %v1853 = vpop.f32.mrb[0].mxu0
        %v1854 = vpop.f32.mrb[0].mxu0
        %v1855 = vadd.f32 0.0, %v1854
        %v1856 = vpop.f32.mrb[0].mxu0
        %1857 = vdwg.mxu0
        %1859 = vrot.lane.b32.xlu0 %v943, 126
        %v1860 = vpop.permute.xlu0 %1859
        %v1862 = vsel %vm960, %v943, 0
        %v1865 = vsel %vm960, %v1860, 0
        %1867 = vmatprep.subr.bf16.mxu0 0
        %1868 = vmatpush1.bf16.xpose.msra.mxu0 %v1865
        %1869 = vmatprep.subr.bf16.mxu0 0
        %1870 = vmatpush1.bf16.xpose.msra.mxu0 0
        %1871 = vmatprep.subr.bf16.mxu0 0
        %1872 = vmatpush1.bf16.xpose.msra.mxu0 0
        %1873 = vmatprep.subr.bf16.mxu0 0
        %1874 = vmatpush1.bf16.xpose.msra.mxu0 0
        %1875 = vmatprep.subr.bf16.mxu0 0
        %1876 = vmatpush1.bf16.xpose.msra.mxu0 0
        %1877 = vmatprep.subr.bf16.mxu0 0
        %1878 = vmatpush1.bf16.xpose.msra.mxu0 0
        %1879 = vmatprep.subr.bf16.mxu0 0
        %1880 = vmatpush1.bf16.xpose.msra.mxu0 0
        %1881 = vmatprep.subr.bf16.mxu0 0
        %1882 = vmatpush1.bf16.xpose.msra.mxu0 0
        %1883 = vmatprep.subr.bf16.mxu0 0
        %1884 = vmatpush1.bf16.xpose.msra.mxu0 0
        %1885 = vmatprep.subr.bf16.mxu0 0
        %1886 = vmatpush1.bf16.xpose.msra.mxu0 0
        %1887 = vmatprep.subr.bf16.mxu0 0
        %1888 = vmatpush1.bf16.xpose.msra.mxu0 0
        %1889 = vmatprep.subr.bf16.mxu0 0
        %1890 = vmatpush1.bf16.xpose.msra.mxu0 0
        %1891 = vmatprep.subr.bf16.mxu0 0
        %1892 = vmatpush1.bf16.xpose.msra.mxu0 0
        %1893 = vmatprep.subr.bf16.mxu0 0
        %1894 = vmatpush1.bf16.xpose.msra.mxu0 0
        %1895 = vmatprep.subr.bf16.mxu0 0
        %1896 = vmatpush1.bf16.xpose.msra.mxu0 0
        %1897 = vmatprep.subr.bf16.mxu0 0
        %1898 = vmatpush1.bf16.xpose.msra.mxu0 0
        %1899 = vmatprep.mubr.bf16.mxu0 0
        %1900 = vmatmul.mubr.bf16.gmra.mrb[0].mxu0 %v1862
        %v1901 = vpop.f32.mrb[0].mxu0
        %v1902 = vadd.f32 0.0, %v1901
        %v1903 = vpop.f32.mrb[0].mxu0
        %v1904 = vpop.f32.mrb[0].mxu0
        %v1905 = vadd.f32 0.0, %v1904
        %v1906 = vpop.f32.mrb[0].mxu0
        %1907 = vdwg.mxu0
        %1909 = vrot.lane.b32.xlu0 %v944, 126
        %v1910 = vpop.permute.xlu0 %1909
        %v1912 = vsel %vm960, %v944, 0
        %v1915 = vsel %vm960, %v1910, 0
        %1917 = vmatprep.subr.bf16.mxu0 0
        %1918 = vmatpush1.bf16.xpose.msra.mxu0 %v1915
        %1919 = vmatprep.subr.bf16.mxu0 0
        %1920 = vmatpush1.bf16.xpose.msra.mxu0 0
        %1921 = vmatprep.subr.bf16.mxu0 0
        %1922 = vmatpush1.bf16.xpose.msra.mxu0 0
        %1923 = vmatprep.subr.bf16.mxu0 0
        %1924 = vmatpush1.bf16.xpose.msra.mxu0 0
        %1925 = vmatprep.subr.bf16.mxu0 0
        %1926 = vmatpush1.bf16.xpose.msra.mxu0 0
        %1927 = vmatprep.subr.bf16.mxu0 0
        %1928 = vmatpush1.bf16.xpose.msra.mxu0 0
        %1929 = vmatprep.subr.bf16.mxu0 0
        %1930 = vmatpush1.bf16.xpose.msra.mxu0 0
        %1931 = vmatprep.subr.bf16.mxu0 0
        %1932 = vmatpush1.bf16.xpose.msra.mxu0 0
        %1933 = vmatprep.subr.bf16.mxu0 0
        %1934 = vmatpush1.bf16.xpose.msra.mxu0 0
        %1935 = vmatprep.subr.bf16.mxu0 0
        %1936 = vmatpush1.bf16.xpose.msra.mxu0 0
        %1937 = vmatprep.subr.bf16.mxu0 0
        %1938 = vmatpush1.bf16.xpose.msra.mxu0 0
        %1939 = vmatprep.subr.bf16.mxu0 0
        %1940 = vmatpush1.bf16.xpose.msra.mxu0 0
        %1941 = vmatprep.subr.bf16.mxu0 0
        %1942 = vmatpush1.bf16.xpose.msra.mxu0 0
        %1943 = vmatprep.subr.bf16.mxu0 0
        %1944 = vmatpush1.bf16.xpose.msra.mxu0 0
        %1945 = vmatprep.subr.bf16.mxu0 0
        %1946 = vmatpush1.bf16.xpose.msra.mxu0 0
        %1947 = vmatprep.subr.bf16.mxu0 0
        %1948 = vmatpush1.bf16.xpose.msra.mxu0 0
        %1949 = vmatprep.mubr.bf16.mxu0 0
        %1950 = vmatmul.mubr.bf16.gmra.mrb[0].mxu0 %v1912
        %v1951 = vpop.f32.mrb[0].mxu0
        %v1952 = vadd.f32 0.0, %v1951
        %v1953 = vpop.f32.mrb[0].mxu0
        %v1954 = vpop.f32.mrb[0].mxu0
        %v1955 = vadd.f32 0.0, %v1954
        %v1956 = vpop.f32.mrb[0].mxu0
        %1957 = vdwg.mxu0
        %1959 = vrot.lane.b32.xlu0 %v945, 126
        %v1960 = vpop.permute.xlu0 %1959
        %v1962 = vsel %vm960, %v945, 0
        %v1965 = vsel %vm960, %v1960, 0
        %1967 = vmatprep.subr.bf16.mxu0 0
        %1968 = vmatpush1.bf16.xpose.msra.mxu0 %v1965
        %1969 = vmatprep.subr.bf16.mxu0 0
        %1970 = vmatpush1.bf16.xpose.msra.mxu0 0
        %1971 = vmatprep.subr.bf16.mxu0 0
        %1972 = vmatpush1.bf16.xpose.msra.mxu0 0
        %1973 = vmatprep.subr.bf16.mxu0 0
        %1974 = vmatpush1.bf16.xpose.msra.mxu0 0
        %1975 = vmatprep.subr.bf16.mxu0 0
        %1976 = vmatpush1.bf16.xpose.msra.mxu0 0
        %1977 = vmatprep.subr.bf16.mxu0 0
        %1978 = vmatpush1.bf16.xpose.msra.mxu0 0
        %1979 = vmatprep.subr.bf16.mxu0 0
        %1980 = vmatpush1.bf16.xpose.msra.mxu0 0
        %1981 = vmatprep.subr.bf16.mxu0 0
        %1982 = vmatpush1.bf16.xpose.msra.mxu0 0
        %1983 = vmatprep.subr.bf16.mxu0 0
        %1984 = vmatpush1.bf16.xpose.msra.mxu0 0
        %1985 = vmatprep.subr.bf16.mxu0 0
        %1986 = vmatpush1.bf16.xpose.msra.mxu0 0
        %1987 = vmatprep.subr.bf16.mxu0 0
        %1988 = vmatpush1.bf16.xpose.msra.mxu0 0
        %1989 = vmatprep.subr.bf16.mxu0 0
        %1990 = vmatpush1.bf16.xpose.msra.mxu0 0
        %1991 = vmatprep.subr.bf16.mxu0 0
        %1992 = vmatpush1.bf16.xpose.msra.mxu0 0
        %1993 = vmatprep.subr.bf16.mxu0 0
        %1994 = vmatpush1.bf16.xpose.msra.mxu0 0
        %1995 = vmatprep.subr.bf16.mxu0 0
        %1996 = vmatpush1.bf16.xpose.msra.mxu0 0
        %1997 = vmatprep.subr.bf16.mxu0 0
        %1998 = vmatpush1.bf16.xpose.msra.mxu0 0
        %1999 = vmatprep.mubr.bf16.mxu0 0
        %2000 = vmatmul.mubr.bf16.gmra.mrb[0].mxu0 %v1962
        %v2001 = vpop.f32.mrb[0].mxu0
        %v2002 = vadd.f32 0.0, %v2001
        %v2003 = vpop.f32.mrb[0].mxu0
        %v2004 = vpop.f32.mrb[0].mxu0
        %v2005 = vadd.f32 0.0, %v2004
        %v2006 = vpop.f32.mrb[0].mxu0
        %2007 = vdwg.mxu0
        %2009 = vrot.lane.b32.xlu0 %v946, 126
        %v2010 = vpop.permute.xlu0 %2009
        %v2012 = vsel %vm960, %v946, 0
        %v2015 = vsel %vm960, %v2010, 0
        %2017 = vmatprep.subr.bf16.mxu0 0
        %2018 = vmatpush1.bf16.xpose.msra.mxu0 %v2015
        %2019 = vmatprep.subr.bf16.mxu0 0
        %2020 = vmatpush1.bf16.xpose.msra.mxu0 0
        %2021 = vmatprep.subr.bf16.mxu0 0
        %2022 = vmatpush1.bf16.xpose.msra.mxu0 0
        %2023 = vmatprep.subr.bf16.mxu0 0
        %2024 = vmatpush1.bf16.xpose.msra.mxu0 0
        %2025 = vmatprep.subr.bf16.mxu0 0
        %2026 = vmatpush1.bf16.xpose.msra.mxu0 0
        %2027 = vmatprep.subr.bf16.mxu0 0
        %2028 = vmatpush1.bf16.xpose.msra.mxu0 0
        %2029 = vmatprep.subr.bf16.mxu0 0
        %2030 = vmatpush1.bf16.xpose.msra.mxu0 0
        %2031 = vmatprep.subr.bf16.mxu0 0
        %2032 = vmatpush1.bf16.xpose.msra.mxu0 0
        %2033 = vmatprep.subr.bf16.mxu0 0
        %2034 = vmatpush1.bf16.xpose.msra.mxu0 0
        %2035 = vmatprep.subr.bf16.mxu0 0
        %2036 = vmatpush1.bf16.xpose.msra.mxu0 0
        %2037 = vmatprep.subr.bf16.mxu0 0
        %2038 = vmatpush1.bf16.xpose.msra.mxu0 0
        %2039 = vmatprep.subr.bf16.mxu0 0
        %2040 = vmatpush1.bf16.xpose.msra.mxu0 0
        %2041 = vmatprep.subr.bf16.mxu0 0
        %2042 = vmatpush1.bf16.xpose.msra.mxu0 0
        %2043 = vmatprep.subr.bf16.mxu0 0
        %2044 = vmatpush1.bf16.xpose.msra.mxu0 0
        %2045 = vmatprep.subr.bf16.mxu0 0
        %2046 = vmatpush1.bf16.xpose.msra.mxu0 0
        %2047 = vmatprep.subr.bf16.mxu0 0
        %2048 = vmatpush1.bf16.xpose.msra.mxu0 0
        %2049 = vmatprep.mubr.bf16.mxu0 0
        %2050 = vmatmul.mubr.bf16.gmra.mrb[0].mxu0 %v2012
        %v2051 = vpop.f32.mrb[0].mxu0
        %v2052 = vadd.f32 0.0, %v2051
        %v2053 = vpop.f32.mrb[0].mxu0
        %v2054 = vpop.f32.mrb[0].mxu0
        %v2055 = vadd.f32 0.0, %v2054
        %v2056 = vpop.f32.mrb[0].mxu0
        %2057 = vdwg.mxu0
        %2059 = vrot.lane.b32.xlu0 %v947, 126
        %v2060 = vpop.permute.xlu0 %2059
        %v2062 = vsel %vm960, %v947, 0
        %v2065 = vsel %vm960, %v2060, 0
        %2067 = vmatprep.subr.bf16.mxu0 0
        %2068 = vmatpush1.bf16.xpose.msra.mxu0 %v2065
        %2069 = vmatprep.subr.bf16.mxu0 0
        %2070 = vmatpush1.bf16.xpose.msra.mxu0 0
        %2071 = vmatprep.subr.bf16.mxu0 0
        %2072 = vmatpush1.bf16.xpose.msra.mxu0 0
        %2073 = vmatprep.subr.bf16.mxu0 0
        %2074 = vmatpush1.bf16.xpose.msra.mxu0 0
        %2075 = vmatprep.subr.bf16.mxu0 0
        %2076 = vmatpush1.bf16.xpose.msra.mxu0 0
        %2077 = vmatprep.subr.bf16.mxu0 0
        %2078 = vmatpush1.bf16.xpose.msra.mxu0 0
        %2079 = vmatprep.subr.bf16.mxu0 0
        %2080 = vmatpush1.bf16.xpose.msra.mxu0 0
        %2081 = vmatprep.subr.bf16.mxu0 0
        %2082 = vmatpush1.bf16.xpose.msra.mxu0 0
        %2083 = vmatprep.subr.bf16.mxu0 0
        %2084 = vmatpush1.bf16.xpose.msra.mxu0 0
        %2085 = vmatprep.subr.bf16.mxu0 0
        %2086 = vmatpush1.bf16.xpose.msra.mxu0 0
        %2087 = vmatprep.subr.bf16.mxu0 0
        %2088 = vmatpush1.bf16.xpose.msra.mxu0 0
        %2089 = vmatprep.subr.bf16.mxu0 0
        %2090 = vmatpush1.bf16.xpose.msra.mxu0 0
        %2091 = vmatprep.subr.bf16.mxu0 0
        %2092 = vmatpush1.bf16.xpose.msra.mxu0 0
        %2093 = vmatprep.subr.bf16.mxu0 0
        %2094 = vmatpush1.bf16.xpose.msra.mxu0 0
        %2095 = vmatprep.subr.bf16.mxu0 0
        %2096 = vmatpush1.bf16.xpose.msra.mxu0 0
        %2097 = vmatprep.subr.bf16.mxu0 0
        %2098 = vmatpush1.bf16.xpose.msra.mxu0 0
        %2099 = vmatprep.mubr.bf16.mxu0 0
        %2100 = vmatmul.mubr.bf16.gmra.mrb[0].mxu0 %v2062
        %v2101 = vpop.f32.mrb[0].mxu0
        %v2102 = vadd.f32 0.0, %v2101
        %v2103 = vpop.f32.mrb[0].mxu0
        %v2104 = vpop.f32.mrb[0].mxu0
        %v2105 = vadd.f32 0.0, %v2104
        %v2106 = vpop.f32.mrb[0].mxu0
        %2107 = vdwg.mxu0
        %2109 = vrot.lane.b32.xlu0 %v948, 126
        %v2110 = vpop.permute.xlu0 %2109
        %v2112 = vsel %vm960, %v948, 0
        %v2115 = vsel %vm960, %v2110, 0
        %2117 = vmatprep.subr.bf16.mxu0 0
        %2118 = vmatpush1.bf16.xpose.msra.mxu0 %v2115
        %2119 = vmatprep.subr.bf16.mxu0 0
        %2120 = vmatpush1.bf16.xpose.msra.mxu0 0
        %2121 = vmatprep.subr.bf16.mxu0 0
        %2122 = vmatpush1.bf16.xpose.msra.mxu0 0
        %2123 = vmatprep.subr.bf16.mxu0 0
        %2124 = vmatpush1.bf16.xpose.msra.mxu0 0
        %2125 = vmatprep.subr.bf16.mxu0 0
        %2126 = vmatpush1.bf16.xpose.msra.mxu0 0
        %2127 = vmatprep.subr.bf16.mxu0 0
        %2128 = vmatpush1.bf16.xpose.msra.mxu0 0
        %2129 = vmatprep.subr.bf16.mxu0 0
        %2130 = vmatpush1.bf16.xpose.msra.mxu0 0
        %2131 = vmatprep.subr.bf16.mxu0 0
        %2132 = vmatpush1.bf16.xpose.msra.mxu0 0
        %2133 = vmatprep.subr.bf16.mxu0 0
        %2134 = vmatpush1.bf16.xpose.msra.mxu0 0
        %2135 = vmatprep.subr.bf16.mxu0 0
        %2136 = vmatpush1.bf16.xpose.msra.mxu0 0
        %2137 = vmatprep.subr.bf16.mxu0 0
        %2138 = vmatpush1.bf16.xpose.msra.mxu0 0
        %2139 = vmatprep.subr.bf16.mxu0 0
        %2140 = vmatpush1.bf16.xpose.msra.mxu0 0
        %2141 = vmatprep.subr.bf16.mxu0 0
        %2142 = vmatpush1.bf16.xpose.msra.mxu0 0
        %2143 = vmatprep.subr.bf16.mxu0 0
        %2144 = vmatpush1.bf16.xpose.msra.mxu0 0
        %2145 = vmatprep.subr.bf16.mxu0 0
        %2146 = vmatpush1.bf16.xpose.msra.mxu0 0
        %2147 = vmatprep.subr.bf16.mxu0 0
        %2148 = vmatpush1.bf16.xpose.msra.mxu0 0
        %2149 = vmatprep.mubr.bf16.mxu0 0
        %2150 = vmatmul.mubr.bf16.gmra.mrb[0].mxu0 %v2112
        %v2151 = vpop.f32.mrb[0].mxu0
        %v2152 = vadd.f32 0.0, %v2151
        %v2153 = vpop.f32.mrb[0].mxu0
        %v2154 = vpop.f32.mrb[0].mxu0
        %v2155 = vadd.f32 0.0, %v2154
        %v2156 = vpop.f32.mrb[0].mxu0
        %2157 = vdwg.mxu0
        %2159 = vrot.lane.b32.xlu0 %v949, 126
        %v2160 = vpop.permute.xlu0 %2159
        %v2162 = vsel %vm960, %v949, 0
        %v2165 = vsel %vm960, %v2160, 0
        %2167 = vmatprep.subr.bf16.mxu0 0
        %2168 = vmatpush1.bf16.xpose.msra.mxu0 %v2165
        %2169 = vmatprep.subr.bf16.mxu0 0
        %2170 = vmatpush1.bf16.xpose.msra.mxu0 0
        %2171 = vmatprep.subr.bf16.mxu0 0
        %2172 = vmatpush1.bf16.xpose.msra.mxu0 0
        %2173 = vmatprep.subr.bf16.mxu0 0
        %2174 = vmatpush1.bf16.xpose.msra.mxu0 0
        %2175 = vmatprep.subr.bf16.mxu0 0
        %2176 = vmatpush1.bf16.xpose.msra.mxu0 0
        %2177 = vmatprep.subr.bf16.mxu0 0
        %2178 = vmatpush1.bf16.xpose.msra.mxu0 0
        %2179 = vmatprep.subr.bf16.mxu0 0
        %2180 = vmatpush1.bf16.xpose.msra.mxu0 0
        %2181 = vmatprep.subr.bf16.mxu0 0
        %2182 = vmatpush1.bf16.xpose.msra.mxu0 0
        %2183 = vmatprep.subr.bf16.mxu0 0
        %2184 = vmatpush1.bf16.xpose.msra.mxu0 0
        %2185 = vmatprep.subr.bf16.mxu0 0
        %2186 = vmatpush1.bf16.xpose.msra.mxu0 0
        %2187 = vmatprep.subr.bf16.mxu0 0
        %2188 = vmatpush1.bf16.xpose.msra.mxu0 0
        %2189 = vmatprep.subr.bf16.mxu0 0
        %2190 = vmatpush1.bf16.xpose.msra.mxu0 0
        %2191 = vmatprep.subr.bf16.mxu0 0
        %2192 = vmatpush1.bf16.xpose.msra.mxu0 0
        %2193 = vmatprep.subr.bf16.mxu0 0
        %2194 = vmatpush1.bf16.xpose.msra.mxu0 0
        %2195 = vmatprep.subr.bf16.mxu0 0
        %2196 = vmatpush1.bf16.xpose.msra.mxu0 0
        %2197 = vmatprep.subr.bf16.mxu0 0
        %2198 = vmatpush1.bf16.xpose.msra.mxu0 0
        %2199 = vmatprep.mubr.bf16.mxu0 0
        %2200 = vmatmul.mubr.bf16.gmra.mrb[0].mxu0 %v2162
        %v2201 = vpop.f32.mrb[0].mxu0
        %v2202 = vadd.f32 0.0, %v2201
        %v2203 = vpop.f32.mrb[0].mxu0
        %v2204 = vpop.f32.mrb[0].mxu0
        %v2205 = vadd.f32 0.0, %v2204
        %v2206 = vpop.f32.mrb[0].mxu0
        %2207 = vdwg.mxu0
        %2209 = vrot.lane.b32.xlu0 %v950, 126
        %v2210 = vpop.permute.xlu0 %2209
        %v2212 = vsel %vm960, %v950, 0
        %v2215 = vsel %vm960, %v2210, 0
        %2217 = vmatprep.subr.bf16.mxu0 0
        %2218 = vmatpush1.bf16.xpose.msra.mxu0 %v2215
        %2219 = vmatprep.subr.bf16.mxu0 0
        %2220 = vmatpush1.bf16.xpose.msra.mxu0 0
        %2221 = vmatprep.subr.bf16.mxu0 0
        %2222 = vmatpush1.bf16.xpose.msra.mxu0 0
        %2223 = vmatprep.subr.bf16.mxu0 0
        %2224 = vmatpush1.bf16.xpose.msra.mxu0 0
        %2225 = vmatprep.subr.bf16.mxu0 0
        %2226 = vmatpush1.bf16.xpose.msra.mxu0 0
        %2227 = vmatprep.subr.bf16.mxu0 0
        %2228 = vmatpush1.bf16.xpose.msra.mxu0 0
        %2229 = vmatprep.subr.bf16.mxu0 0
        %2230 = vmatpush1.bf16.xpose.msra.mxu0 0
        %2231 = vmatprep.subr.bf16.mxu0 0
        %2232 = vmatpush1.bf16.xpose.msra.mxu0 0
        %2233 = vmatprep.subr.bf16.mxu0 0
        %2234 = vmatpush1.bf16.xpose.msra.mxu0 0
        %2235 = vmatprep.subr.bf16.mxu0 0
        %2236 = vmatpush1.bf16.xpose.msra.mxu0 0
        %2237 = vmatprep.subr.bf16.mxu0 0
        %2238 = vmatpush1.bf16.xpose.msra.mxu0 0
        %2239 = vmatprep.subr.bf16.mxu0 0
        %2240 = vmatpush1.bf16.xpose.msra.mxu0 0
        %2241 = vmatprep.subr.bf16.mxu0 0
        %2242 = vmatpush1.bf16.xpose.msra.mxu0 0
        %2243 = vmatprep.subr.bf16.mxu0 0
        %2244 = vmatpush1.bf16.xpose.msra.mxu0 0
        %2245 = vmatprep.subr.bf16.mxu0 0
        %2246 = vmatpush1.bf16.xpose.msra.mxu0 0
        %2247 = vmatprep.subr.bf16.mxu0 0
        %2248 = vmatpush1.bf16.xpose.msra.mxu0 0
        %2249 = vmatprep.mubr.bf16.mxu0 0
        %2250 = vmatmul.mubr.bf16.gmra.mrb[0].mxu0 %v2212
        %v2251 = vpop.f32.mrb[0].mxu0
        %v2252 = vadd.f32 0.0, %v2251
        %v2253 = vpop.f32.mrb[0].mxu0
        %v2254 = vpop.f32.mrb[0].mxu0
        %v2255 = vadd.f32 0.0, %v2254
        %v2256 = vpop.f32.mrb[0].mxu0
        %2257 = vdwg.mxu0
        %2259 = vrot.lane.b32.xlu0 %v951, 126
        %v2260 = vpop.permute.xlu0 %2259
        %v2262 = vsel %vm960, %v951, 0
        %v2265 = vsel %vm960, %v2260, 0
        %2267 = vmatprep.subr.bf16.mxu0 0
        %2268 = vmatpush1.bf16.xpose.msra.mxu0 %v2265
        %2269 = vmatprep.subr.bf16.mxu0 0
        %2270 = vmatpush1.bf16.xpose.msra.mxu0 0
        %2271 = vmatprep.subr.bf16.mxu0 0
        %2272 = vmatpush1.bf16.xpose.msra.mxu0 0
        %2273 = vmatprep.subr.bf16.mxu0 0
        %2274 = vmatpush1.bf16.xpose.msra.mxu0 0
        %2275 = vmatprep.subr.bf16.mxu0 0
        %2276 = vmatpush1.bf16.xpose.msra.mxu0 0
        %2277 = vmatprep.subr.bf16.mxu0 0
        %2278 = vmatpush1.bf16.xpose.msra.mxu0 0
        %2279 = vmatprep.subr.bf16.mxu0 0
        %2280 = vmatpush1.bf16.xpose.msra.mxu0 0
        %2281 = vmatprep.subr.bf16.mxu0 0
        %2282 = vmatpush1.bf16.xpose.msra.mxu0 0
        %2283 = vmatprep.subr.bf16.mxu0 0
        %2284 = vmatpush1.bf16.xpose.msra.mxu0 0
        %2285 = vmatprep.subr.bf16.mxu0 0
        %2286 = vmatpush1.bf16.xpose.msra.mxu0 0
        %2287 = vmatprep.subr.bf16.mxu0 0
        %2288 = vmatpush1.bf16.xpose.msra.mxu0 0
        %2289 = vmatprep.subr.bf16.mxu0 0
        %2290 = vmatpush1.bf16.xpose.msra.mxu0 0
        %2291 = vmatprep.subr.bf16.mxu0 0
        %2292 = vmatpush1.bf16.xpose.msra.mxu0 0
        %2293 = vmatprep.subr.bf16.mxu0 0
        %2294 = vmatpush1.bf16.xpose.msra.mxu0 0
        %2295 = vmatprep.subr.bf16.mxu0 0
        %2296 = vmatpush1.bf16.xpose.msra.mxu0 0
        %2297 = vmatprep.subr.bf16.mxu0 0
        %2298 = vmatpush1.bf16.xpose.msra.mxu0 0
        %2299 = vmatprep.mubr.bf16.mxu0 0
        %2300 = vmatmul.mubr.bf16.gmra.mrb[0].mxu0 %v2262
        %v2301 = vpop.f32.mrb[0].mxu0
        %v2302 = vadd.f32 0.0, %v2301
        %v2303 = vpop.f32.mrb[0].mxu0
        %v2304 = vpop.f32.mrb[0].mxu0
        %v2305 = vadd.f32 0.0, %v2304
        %v2306 = vpop.f32.mrb[0].mxu0
        %2307 = vdwg.mxu0
        %2309 = vrot.lane.b32.xlu0 %v952, 126
        %v2310 = vpop.permute.xlu0 %2309
        %v2312 = vsel %vm960, %v952, 0
        %v2315 = vsel %vm960, %v2310, 0
        %2317 = vmatprep.subr.bf16.mxu0 0
        %2318 = vmatpush1.bf16.xpose.msra.mxu0 %v2315
        %2319 = vmatprep.subr.bf16.mxu0 0
        %2320 = vmatpush1.bf16.xpose.msra.mxu0 0
        %2321 = vmatprep.subr.bf16.mxu0 0
        %2322 = vmatpush1.bf16.xpose.msra.mxu0 0
        %2323 = vmatprep.subr.bf16.mxu0 0
        %2324 = vmatpush1.bf16.xpose.msra.mxu0 0
        %2325 = vmatprep.subr.bf16.mxu0 0
        %2326 = vmatpush1.bf16.xpose.msra.mxu0 0
        %2327 = vmatprep.subr.bf16.mxu0 0
        %2328 = vmatpush1.bf16.xpose.msra.mxu0 0
        %2329 = vmatprep.subr.bf16.mxu0 0
        %2330 = vmatpush1.bf16.xpose.msra.mxu0 0
        %2331 = vmatprep.subr.bf16.mxu0 0
        %2332 = vmatpush1.bf16.xpose.msra.mxu0 0
        %2333 = vmatprep.subr.bf16.mxu0 0
        %2334 = vmatpush1.bf16.xpose.msra.mxu0 0
        %2335 = vmatprep.subr.bf16.mxu0 0
        %2336 = vmatpush1.bf16.xpose.msra.mxu0 0
        %2337 = vmatprep.subr.bf16.mxu0 0
        %2338 = vmatpush1.bf16.xpose.msra.mxu0 0
        %2339 = vmatprep.subr.bf16.mxu0 0
        %2340 = vmatpush1.bf16.xpose.msra.mxu0 0
        %2341 = vmatprep.subr.bf16.mxu0 0
        %2342 = vmatpush1.bf16.xpose.msra.mxu0 0
        %2343 = vmatprep.subr.bf16.mxu0 0
        %2344 = vmatpush1.bf16.xpose.msra.mxu0 0
        %2345 = vmatprep.subr.bf16.mxu0 0
        %2346 = vmatpush1.bf16.xpose.msra.mxu0 0
        %2347 = vmatprep.subr.bf16.mxu0 0
        %2348 = vmatpush1.bf16.xpose.msra.mxu0 0
        %2349 = vmatprep.mubr.bf16.mxu0 0
        %2350 = vmatmul.mubr.bf16.gmra.mrb[0].mxu0 %v2312
        %v2351 = vpop.f32.mrb[0].mxu0
        %v2352 = vadd.f32 0.0, %v2351
        %v2353 = vpop.f32.mrb[0].mxu0
        %v2354 = vpop.f32.mrb[0].mxu0
        %v2355 = vadd.f32 0.0, %v2354
        %v2356 = vpop.f32.mrb[0].mxu0
        %2357 = vdwg.mxu0
        %2359 = vrot.lane.b32.xlu0 %v953, 126
        %v2360 = vpop.permute.xlu0 %2359
        %v2362 = vsel %vm960, %v953, 0
        %v2365 = vsel %vm960, %v2360, 0
        %2367 = vmatprep.subr.bf16.mxu0 0
        %2368 = vmatpush1.bf16.xpose.msra.mxu0 %v2365
        %2369 = vmatprep.subr.bf16.mxu0 0
        %2370 = vmatpush1.bf16.xpose.msra.mxu0 0
        %2371 = vmatprep.subr.bf16.mxu0 0
        %2372 = vmatpush1.bf16.xpose.msra.mxu0 0
        %2373 = vmatprep.subr.bf16.mxu0 0
        %2374 = vmatpush1.bf16.xpose.msra.mxu0 0
        %2375 = vmatprep.subr.bf16.mxu0 0
        %2376 = vmatpush1.bf16.xpose.msra.mxu0 0
        %2377 = vmatprep.subr.bf16.mxu0 0
        %2378 = vmatpush1.bf16.xpose.msra.mxu0 0
        %2379 = vmatprep.subr.bf16.mxu0 0
        %2380 = vmatpush1.bf16.xpose.msra.mxu0 0
        %2381 = vmatprep.subr.bf16.mxu0 0
        %2382 = vmatpush1.bf16.xpose.msra.mxu0 0
        %2383 = vmatprep.subr.bf16.mxu0 0
        %2384 = vmatpush1.bf16.xpose.msra.mxu0 0
        %2385 = vmatprep.subr.bf16.mxu0 0
        %2386 = vmatpush1.bf16.xpose.msra.mxu0 0
        %2387 = vmatprep.subr.bf16.mxu0 0
        %2388 = vmatpush1.bf16.xpose.msra.mxu0 0
        %2389 = vmatprep.subr.bf16.mxu0 0
        %2390 = vmatpush1.bf16.xpose.msra.mxu0 0
        %2391 = vmatprep.subr.bf16.mxu0 0
        %2392 = vmatpush1.bf16.xpose.msra.mxu0 0
        %2393 = vmatprep.subr.bf16.mxu0 0
        %2394 = vmatpush1.bf16.xpose.msra.mxu0 0
        %2395 = vmatprep.subr.bf16.mxu0 0
        %2396 = vmatpush1.bf16.xpose.msra.mxu0 0
        %2397 = vmatprep.subr.bf16.mxu0 0
        %2398 = vmatpush1.bf16.xpose.msra.mxu0 0
        %2399 = vmatprep.mubr.bf16.mxu0 0
        %2400 = vmatmul.mubr.bf16.gmra.mrb[0].mxu0 %v2362
        %v2401 = vpop.f32.mrb[0].mxu0
        %v2402 = vadd.f32 0.0, %v2401
        %v2403 = vpop.f32.mrb[0].mxu0
        %v2404 = vpop.f32.mrb[0].mxu0
        %v2405 = vadd.f32 0.0, %v2404
        %v2406 = vpop.f32.mrb[0].mxu0
        %2407 = vdwg.mxu0
        %2409 = vrot.lane.b32.xlu0 %v954, 126
        %v2410 = vpop.permute.xlu0 %2409
        %v2412 = vsel %vm960, %v954, 0
        %v2415 = vsel %vm960, %v2410, 0
        %2417 = vmatprep.subr.bf16.mxu0 0
        %2418 = vmatpush1.bf16.xpose.msra.mxu0 %v2415
        %2419 = vmatprep.subr.bf16.mxu0 0
        %2420 = vmatpush1.bf16.xpose.msra.mxu0 0
        %2421 = vmatprep.subr.bf16.mxu0 0
        %2422 = vmatpush1.bf16.xpose.msra.mxu0 0
        %2423 = vmatprep.subr.bf16.mxu0 0
        %2424 = vmatpush1.bf16.xpose.msra.mxu0 0
        %2425 = vmatprep.subr.bf16.mxu0 0
        %2426 = vmatpush1.bf16.xpose.msra.mxu0 0
        %2427 = vmatprep.subr.bf16.mxu0 0
        %2428 = vmatpush1.bf16.xpose.msra.mxu0 0
        %2429 = vmatprep.subr.bf16.mxu0 0
        %2430 = vmatpush1.bf16.xpose.msra.mxu0 0
        %2431 = vmatprep.subr.bf16.mxu0 0
        %2432 = vmatpush1.bf16.xpose.msra.mxu0 0
        %2433 = vmatprep.subr.bf16.mxu0 0
        %2434 = vmatpush1.bf16.xpose.msra.mxu0 0
        %2435 = vmatprep.subr.bf16.mxu0 0
        %2436 = vmatpush1.bf16.xpose.msra.mxu0 0
        %2437 = vmatprep.subr.bf16.mxu0 0
        %2438 = vmatpush1.bf16.xpose.msra.mxu0 0
        %2439 = vmatprep.subr.bf16.mxu0 0
        %2440 = vmatpush1.bf16.xpose.msra.mxu0 0
        %2441 = vmatprep.subr.bf16.mxu0 0
        %2442 = vmatpush1.bf16.xpose.msra.mxu0 0
        %2443 = vmatprep.subr.bf16.mxu0 0
        %2444 = vmatpush1.bf16.xpose.msra.mxu0 0
        %2445 = vmatprep.subr.bf16.mxu0 0
        %2446 = vmatpush1.bf16.xpose.msra.mxu0 0
        %2447 = vmatprep.subr.bf16.mxu0 0
        %2448 = vmatpush1.bf16.xpose.msra.mxu0 0
        %2449 = vmatprep.mubr.bf16.mxu0 0
        %2450 = vmatmul.mubr.bf16.gmra.mrb[0].mxu0 %v2412
        %v2451 = vpop.f32.mrb[0].mxu0
        %v2452 = vadd.f32 0.0, %v2451
        %v2453 = vpop.f32.mrb[0].mxu0
        %v2454 = vpop.f32.mrb[0].mxu0
        %v2455 = vadd.f32 0.0, %v2454
        %v2456 = vpop.f32.mrb[0].mxu0
        %2457 = vdwg.mxu0
        %2459 = vrot.lane.b32.xlu0 %v955, 126
        %v2460 = vpop.permute.xlu0 %2459
        %v2462 = vsel %vm960, %v955, 0
        %v2465 = vsel %vm960, %v2460, 0
        %2467 = vmatprep.subr.bf16.mxu0 0
        %2468 = vmatpush1.bf16.xpose.msra.mxu0 %v2465
        %2469 = vmatprep.subr.bf16.mxu0 0
        %2470 = vmatpush1.bf16.xpose.msra.mxu0 0
        %2471 = vmatprep.subr.bf16.mxu0 0
        %2472 = vmatpush1.bf16.xpose.msra.mxu0 0
        %2473 = vmatprep.subr.bf16.mxu0 0
        %2474 = vmatpush1.bf16.xpose.msra.mxu0 0
        %2475 = vmatprep.subr.bf16.mxu0 0
        %2476 = vmatpush1.bf16.xpose.msra.mxu0 0
        %2477 = vmatprep.subr.bf16.mxu0 0
        %2478 = vmatpush1.bf16.xpose.msra.mxu0 0
        %2479 = vmatprep.subr.bf16.mxu0 0
        %2480 = vmatpush1.bf16.xpose.msra.mxu0 0
        %2481 = vmatprep.subr.bf16.mxu0 0
        %2482 = vmatpush1.bf16.xpose.msra.mxu0 0
        %2483 = vmatprep.subr.bf16.mxu0 0
        %2484 = vmatpush1.bf16.xpose.msra.mxu0 0
        %2485 = vmatprep.subr.bf16.mxu0 0
        %2486 = vmatpush1.bf16.xpose.msra.mxu0 0
        %2487 = vmatprep.subr.bf16.mxu0 0
        %2488 = vmatpush1.bf16.xpose.msra.mxu0 0
        %2489 = vmatprep.subr.bf16.mxu0 0
        %2490 = vmatpush1.bf16.xpose.msra.mxu0 0
        %2491 = vmatprep.subr.bf16.mxu0 0
        %2492 = vmatpush1.bf16.xpose.msra.mxu0 0
        %2493 = vmatprep.subr.bf16.mxu0 0
        %2494 = vmatpush1.bf16.xpose.msra.mxu0 0
        %2495 = vmatprep.subr.bf16.mxu0 0
        %2496 = vmatpush1.bf16.xpose.msra.mxu0 0
        %2497 = vmatprep.subr.bf16.mxu0 0
        %2498 = vmatpush1.bf16.xpose.msra.mxu0 0
        %2499 = vmatprep.mubr.bf16.mxu0 0
        %2500 = vmatmul.mubr.bf16.gmra.mrb[0].mxu0 %v2462
        %v2501 = vpop.f32.mrb[0].mxu0
        %v2502 = vadd.f32 0.0, %v2501
        %v2503 = vpop.f32.mrb[0].mxu0
        %v2504 = vpop.f32.mrb[0].mxu0
        %v2505 = vadd.f32 0.0, %v2504
        %v2506 = vpop.f32.mrb[0].mxu0
        %2507 = vdwg.mxu0
        %2509 = vrot.lane.b32.xlu0 %v956, 126
        %v2510 = vpop.permute.xlu0 %2509
        %v2512 = vsel %vm960, %v956, 0
        %v2515 = vsel %vm960, %v2510, 0
        %2517 = vmatprep.subr.bf16.mxu0 0
        %2518 = vmatpush1.bf16.xpose.msra.mxu0 %v2515
        %2519 = vmatprep.subr.bf16.mxu0 0
        %2520 = vmatpush1.bf16.xpose.msra.mxu0 0
        %2521 = vmatprep.subr.bf16.mxu0 0
        %2522 = vmatpush1.bf16.xpose.msra.mxu0 0
        %2523 = vmatprep.subr.bf16.mxu0 0
        %2524 = vmatpush1.bf16.xpose.msra.mxu0 0
        %2525 = vmatprep.subr.bf16.mxu0 0
        %2526 = vmatpush1.bf16.xpose.msra.mxu0 0
        %2527 = vmatprep.subr.bf16.mxu0 0
        %2528 = vmatpush1.bf16.xpose.msra.mxu0 0
        %2529 = vmatprep.subr.bf16.mxu0 0
        %2530 = vmatpush1.bf16.xpose.msra.mxu0 0
        %2531 = vmatprep.subr.bf16.mxu0 0
        %2532 = vmatpush1.bf16.xpose.msra.mxu0 0
        %2533 = vmatprep.subr.bf16.mxu0 0
        %2534 = vmatpush1.bf16.xpose.msra.mxu0 0
        %2535 = vmatprep.subr.bf16.mxu0 0
        %2536 = vmatpush1.bf16.xpose.msra.mxu0 0
        %2537 = vmatprep.subr.bf16.mxu0 0
        %2538 = vmatpush1.bf16.xpose.msra.mxu0 0
        %2539 = vmatprep.subr.bf16.mxu0 0
        %2540 = vmatpush1.bf16.xpose.msra.mxu0 0
        %2541 = vmatprep.subr.bf16.mxu0 0
        %2542 = vmatpush1.bf16.xpose.msra.mxu0 0
        %2543 = vmatprep.subr.bf16.mxu0 0
        %2544 = vmatpush1.bf16.xpose.msra.mxu0 0
        %2545 = vmatprep.subr.bf16.mxu0 0
        %2546 = vmatpush1.bf16.xpose.msra.mxu0 0
        %2547 = vmatprep.subr.bf16.mxu0 0
        %2548 = vmatpush1.bf16.xpose.msra.mxu0 0
        %2549 = vmatprep.mubr.bf16.mxu0 0
        %2550 = vmatmul.mubr.bf16.gmra.mrb[0].mxu0 %v2512
        %v2551 = vpop.f32.mrb[0].mxu0
        %v2552 = vadd.f32 0.0, %v2551
        %v2553 = vpop.f32.mrb[0].mxu0
        %v2554 = vpop.f32.mrb[0].mxu0
        %v2555 = vadd.f32 0.0, %v2554
        %v2556 = vpop.f32.mrb[0].mxu0
        %2557 = vdwg.mxu0
        %v2558 = vlaneseq
        %v2559 = vshrl.u32 %v2558, 7
        %v2560 = vadd.s32 %v2559, 8
        %v2561 = vlaneseq
        %v2562 = vand.u32 %v2561, 127
        %vm2563 = vcmp.eq.s32.totalorder %v2559, %v2562
        %vm2564 = vcmp.eq.s32.totalorder %v2560, %v2562
        %v2565 = vsel %vm2563, -inf, %v1802
        %v2566 = vsel %vm2564, -inf, %v1805
        %v2567 = vsel %vm2563, -inf, %v1852
        %v2568 = vsel %vm2564, -inf, %v1855
        %v2569 = vsel %vm2563, -inf, %v1902
        %v2570 = vsel %vm2564, -inf, %v1905
        %v2571 = vsel %vm2563, -inf, %v1952
        %v2572 = vsel %vm2564, -inf, %v1955
        %v2573 = vsel %vm2563, -inf, %v2002
        %v2574 = vsel %vm2564, -inf, %v2005
        %v2575 = vsel %vm2563, -inf, %v2052
        %v2576 = vsel %vm2564, -inf, %v2055
        %v2577 = vsel %vm2563, -inf, %v2102
        %v2578 = vsel %vm2564, -inf, %v2105
        %v2579 = vsel %vm2563, -inf, %v2152
        %v2580 = vsel %vm2564, -inf, %v2155
        %v2581 = vsel %vm2563, -inf, %v2202
        %v2582 = vsel %vm2564, -inf, %v2205
        %v2583 = vsel %vm2563, -inf, %v2252
        %v2584 = vsel %vm2564, -inf, %v2255
        %v2585 = vsel %vm2563, -inf, %v2302
        %v2586 = vsel %vm2564, -inf, %v2305
        %v2587 = vsel %vm2563, -inf, %v2352
        %v2588 = vsel %vm2564, -inf, %v2355
        %v2589 = vsel %vm2563, -inf, %v2402
        %v2590 = vsel %vm2564, -inf, %v2405
        %v2591 = vsel %vm2563, -inf, %v2452
        %v2592 = vsel %vm2564, -inf, %v2455
        %v2593 = vsel %vm2563, -inf, %v2502
        %v2594 = vsel %vm2564, -inf, %v2505
        %v2595 = vsel %vm2563, -inf, %v2552
        %v2596 = vsel %vm2564, -inf, %v2555
        %v2597 = vsel %vm490, %v1002, -inf
        %2598 = vmax.xlane.f32.xlu0 %v2597
        %v2599 = vpop.xlane.xlu0 %2598
        %v2600 = vsel %vm490, %v1005, -inf
        %2601 = vmax.xlane.f32.xlu0 %v2600
        %v2602 = vpop.xlane.xlu0 %2601
        %v2603 = vsel %vm490, %v1052, -inf
        %2604 = vmax.xlane.f32.xlu0 %v2603
        %v2605 = vpop.xlane.xlu0 %2604
        %v2606 = vsel %vm490, %v1055, -inf
        %2607 = vmax.xlane.f32.xlu0 %v2606
        %v2608 = vpop.xlane.xlu0 %2607
        %v2609 = vsel %vm490, %v1102, -inf
        %2610 = vmax.xlane.f32.xlu0 %v2609
        %v2611 = vpop.xlane.xlu0 %2610
        %v2612 = vsel %vm490, %v1105, -inf
        %2613 = vmax.xlane.f32.xlu0 %v2612
        %v2614 = vpop.xlane.xlu0 %2613
        %v2615 = vsel %vm490, %v1152, -inf
        %2616 = vmax.xlane.f32.xlu0 %v2615
        %v2617 = vpop.xlane.xlu0 %2616
        %v2618 = vsel %vm490, %v1155, -inf
        %2619 = vmax.xlane.f32.xlu0 %v2618
        %v2620 = vpop.xlane.xlu0 %2619
        %v2621 = vsel %vm490, %v1202, -inf
        %2622 = vmax.xlane.f32.xlu0 %v2621
        %v2623 = vpop.xlane.xlu0 %2622
        %v2624 = vsel %vm490, %v1205, -inf
        %2625 = vmax.xlane.f32.xlu0 %v2624
        %v2626 = vpop.xlane.xlu0 %2625
        %v2627 = vsel %vm490, %v1252, -inf
        %2628 = vmax.xlane.f32.xlu0 %v2627
        %v2629 = vpop.xlane.xlu0 %2628
        %v2630 = vsel %vm490, %v1255, -inf
        %2631 = vmax.xlane.f32.xlu0 %v2630
        %v2632 = vpop.xlane.xlu0 %2631
        %v2633 = vsel %vm490, %v1302, -inf
        %2634 = vmax.xlane.f32.xlu0 %v2633
        %v2635 = vpop.xlane.xlu0 %2634
        %v2636 = vsel %vm490, %v1305, -inf
        %2637 = vmax.xlane.f32.xlu0 %v2636
        %v2638 = vpop.xlane.xlu0 %2637
        %v2639 = vsel %vm490, %v1352, -inf
        %2640 = vmax.xlane.f32.xlu0 %v2639
        %v2641 = vpop.xlane.xlu0 %2640
        %v2642 = vsel %vm490, %v1355, -inf
        %2643 = vmax.xlane.f32.xlu0 %v2642
        %v2644 = vpop.xlane.xlu0 %2643
        %v2645 = vsel %vm490, %v1402, -inf
        %2646 = vmax.xlane.f32.xlu0 %v2645
        %v2647 = vpop.xlane.xlu0 %2646
        %v2648 = vsel %vm490, %v1405, -inf
        %2649 = vmax.xlane.f32.xlu0 %v2648
        %v2650 = vpop.xlane.xlu0 %2649
        %v2651 = vsel %vm490, %v1452, -inf
        %2652 = vmax.xlane.f32.xlu0 %v2651
        %v2653 = vpop.xlane.xlu0 %2652
        %v2654 = vsel %vm490, %v1455, -inf
        %2655 = vmax.xlane.f32.xlu0 %v2654
        %v2656 = vpop.xlane.xlu0 %2655
        %v2657 = vsel %vm490, %v1502, -inf
        %2658 = vmax.xlane.f32.xlu0 %v2657
        %v2659 = vpop.xlane.xlu0 %2658
        %v2660 = vsel %vm490, %v1505, -inf
        %2661 = vmax.xlane.f32.xlu0 %v2660
        %v2662 = vpop.xlane.xlu0 %2661
        %v2663 = vsel %vm490, %v1552, -inf
        %2664 = vmax.xlane.f32.xlu0 %v2663
        %v2665 = vpop.xlane.xlu0 %2664
        %v2666 = vsel %vm490, %v1555, -inf
        %2667 = vmax.xlane.f32.xlu0 %v2666
        %v2668 = vpop.xlane.xlu0 %2667
        %v2669 = vsel %vm490, %v1602, -inf
        %2670 = vmax.xlane.f32.xlu0 %v2669
        %v2671 = vpop.xlane.xlu0 %2670
        %v2672 = vsel %vm490, %v1605, -inf
        %2673 = vmax.xlane.f32.xlu0 %v2672
        %v2674 = vpop.xlane.xlu0 %2673
        %v2675 = vsel %vm490, %v1652, -inf
        %2676 = vmax.xlane.f32.xlu0 %v2675
        %v2677 = vpop.xlane.xlu0 %2676
        %v2678 = vsel %vm490, %v1655, -inf
        %2679 = vmax.xlane.f32.xlu0 %v2678
        %v2680 = vpop.xlane.xlu0 %2679
        %v2681 = vsel %vm490, %v1702, -inf
        %2682 = vmax.xlane.f32.xlu0 %v2681
        %v2683 = vpop.xlane.xlu0 %2682
        %v2684 = vsel %vm490, %v1705, -inf
        %2685 = vmax.xlane.f32.xlu0 %v2684
        %v2686 = vpop.xlane.xlu0 %2685
        %v2687 = vsel %vm490, %v1752, -inf
        %2688 = vmax.xlane.f32.xlu0 %v2687
        %v2689 = vpop.xlane.xlu0 %2688
        %v2690 = vsel %vm490, %v1755, -inf
        %2691 = vmax.xlane.f32.xlu0 %v2690
        %v2692 = vpop.xlane.xlu0 %2691
        %v2693 = vsel %vm490, %v2565, -inf
        %2694 = vmax.xlane.f32.xlu0 %v2693
        %v2695 = vpop.xlane.xlu0 %2694
        %v2696 = vsel %vm490, %v2566, -inf
        %2697 = vmax.xlane.f32.xlu0 %v2696
        %v2698 = vpop.xlane.xlu0 %2697
        %v2699 = vsel %vm490, %v2567, -inf
        %2700 = vmax.xlane.f32.xlu0 %v2699
        %v2701 = vpop.xlane.xlu0 %2700
        %v2702 = vsel %vm490, %v2568, -inf
        %2703 = vmax.xlane.f32.xlu0 %v2702
        %v2704 = vpop.xlane.xlu0 %2703
        %v2705 = vsel %vm490, %v2569, -inf
        %2706 = vmax.xlane.f32.xlu0 %v2705
        %v2707 = vpop.xlane.xlu0 %2706
        %v2708 = vsel %vm490, %v2570, -inf
        %2709 = vmax.xlane.f32.xlu0 %v2708
        %v2710 = vpop.xlane.xlu0 %2709
        %v2711 = vsel %vm490, %v2571, -inf
        %2712 = vmax.xlane.f32.xlu0 %v2711
        %v2713 = vpop.xlane.xlu0 %2712
        %v2714 = vsel %vm490, %v2572, -inf
        %2715 = vmax.xlane.f32.xlu0 %v2714
        %v2716 = vpop.xlane.xlu0 %2715
        %v2717 = vsel %vm490, %v2573, -inf
        %2718 = vmax.xlane.f32.xlu0 %v2717
        %v2719 = vpop.xlane.xlu0 %2718
        %v2720 = vsel %vm490, %v2574, -inf
        %2721 = vmax.xlane.f32.xlu0 %v2720
        %v2722 = vpop.xlane.xlu0 %2721
        %v2723 = vsel %vm490, %v2575, -inf
        %2724 = vmax.xlane.f32.xlu0 %v2723
        %v2725 = vpop.xlane.xlu0 %2724
        %v2726 = vsel %vm490, %v2576, -inf
        %2727 = vmax.xlane.f32.xlu0 %v2726
        %v2728 = vpop.xlane.xlu0 %2727
        %v2729 = vsel %vm490, %v2577, -inf
        %2730 = vmax.xlane.f32.xlu0 %v2729
        %v2731 = vpop.xlane.xlu0 %2730
        %v2732 = vsel %vm490, %v2578, -inf
        %2733 = vmax.xlane.f32.xlu0 %v2732
        %v2734 = vpop.xlane.xlu0 %2733
        %v2735 = vsel %vm490, %v2579, -inf
        %2736 = vmax.xlane.f32.xlu0 %v2735
        %v2737 = vpop.xlane.xlu0 %2736
        %v2738 = vsel %vm490, %v2580, -inf
        %2739 = vmax.xlane.f32.xlu0 %v2738
        %v2740 = vpop.xlane.xlu0 %2739
        %v2741 = vsel %vm490, %v2581, -inf
        %2742 = vmax.xlane.f32.xlu0 %v2741
        %v2743 = vpop.xlane.xlu0 %2742
        %v2744 = vsel %vm490, %v2582, -inf
        %2745 = vmax.xlane.f32.xlu0 %v2744
        %v2746 = vpop.xlane.xlu0 %2745
        %v2747 = vsel %vm490, %v2583, -inf
        %2748 = vmax.xlane.f32.xlu0 %v2747
        %v2749 = vpop.xlane.xlu0 %2748
        %v2750 = vsel %vm490, %v2584, -inf
        %2751 = vmax.xlane.f32.xlu0 %v2750
        %v2752 = vpop.xlane.xlu0 %2751
        %v2753 = vsel %vm490, %v2585, -inf
        %2754 = vmax.xlane.f32.xlu0 %v2753
        %v2755 = vpop.xlane.xlu0 %2754
        %v2756 = vsel %vm490, %v2586, -inf
        %2757 = vmax.xlane.f32.xlu0 %v2756
        %v2758 = vpop.xlane.xlu0 %2757
        %v2759 = vsel %vm490, %v2587, -inf
        %2760 = vmax.xlane.f32.xlu0 %v2759
        %v2761 = vpop.xlane.xlu0 %2760
        %v2762 = vsel %vm490, %v2588, -inf
        %2763 = vmax.xlane.f32.xlu0 %v2762
        %v2764 = vpop.xlane.xlu0 %2763
        %v2765 = vsel %vm490, %v2589, -inf
        %2766 = vmax.xlane.f32.xlu0 %v2765
        %v2767 = vpop.xlane.xlu0 %2766
        %v2768 = vsel %vm490, %v2590, -inf
        %2769 = vmax.xlane.f32.xlu0 %v2768
        %v2770 = vpop.xlane.xlu0 %2769
        %v2771 = vsel %vm490, %v2591, -inf
        %2772 = vmax.xlane.f32.xlu0 %v2771
        %v2773 = vpop.xlane.xlu0 %2772
        %v2774 = vsel %vm490, %v2592, -inf
        %2775 = vmax.xlane.f32.xlu0 %v2774
        %v2776 = vpop.xlane.xlu0 %2775
        %v2777 = vsel %vm490, %v2593, -inf
        %2778 = vmax.xlane.f32.xlu0 %v2777
        %v2779 = vpop.xlane.xlu0 %2778
        %v2780 = vsel %vm490, %v2594, -inf
        %2781 = vmax.xlane.f32.xlu0 %v2780
        %v2782 = vpop.xlane.xlu0 %2781
        %v2783 = vsel %vm490, %v2595, -inf
        %2784 = vmax.xlane.f32.xlu0 %v2783
        %v2785 = vpop.xlane.xlu0 %2784
        %v2786 = vsel %vm490, %v2596, -inf
        %2787 = vmax.xlane.f32.xlu0 %v2786
        %v2788 = vpop.xlane.xlu0 %2787
        %v2821 = vlaneseq
        %v2822 = vshrl.u32 %v2821, 7
        %v2823 = vsub.s32 %v2562, %v2822
        %v2824 = vrot.slane %v2695, %v2823
        %v2825 = vadd.s32 %v2562, 4294967288
        %v2826 = vlaneseq
        %v2827 = vshrl.u32 %v2826, 7
        %v2828 = vsub.s32 %v2825, %v2827
        %v2829 = vrot.slane %v2698, %v2828
        %vm2830 = vcmask 130112
        %v2831 = vsel %vm2830, %v2829, %v2824
        %v2832 = vlaneseq
        %v2833 = vshrl.u32 %v2832, 7
        %v2834 = vsub.s32 %v2562, %v2833
        %v2835 = vrot.slane %v2701, %v2834
        %v2836 = vlaneseq
        %v2837 = vshrl.u32 %v2836, 7
        %v2838 = vsub.s32 %v2825, %v2837
        %v2839 = vrot.slane %v2704, %v2838
        %v2840 = vsel %vm2830, %v2839, %v2835
        %v2841 = vlaneseq
        %v2842 = vshrl.u32 %v2841, 7
        %v2843 = vsub.s32 %v2562, %v2842
        %v2844 = vrot.slane %v2707, %v2843
        %v2845 = vlaneseq
        %v2846 = vshrl.u32 %v2845, 7
        %v2847 = vsub.s32 %v2825, %v2846
        %v2848 = vrot.slane %v2710, %v2847
        %v2849 = vsel %vm2830, %v2848, %v2844
        %v2850 = vlaneseq
        %v2851 = vshrl.u32 %v2850, 7
        %v2852 = vsub.s32 %v2562, %v2851
        %v2853 = vrot.slane %v2713, %v2852
        %v2854 = vlaneseq
        %v2855 = vshrl.u32 %v2854, 7
        %v2856 = vsub.s32 %v2825, %v2855
        %v2857 = vrot.slane %v2716, %v2856
        %v2858 = vsel %vm2830, %v2857, %v2853
        %v2859 = vlaneseq
        %v2860 = vshrl.u32 %v2859, 7
        %v2861 = vsub.s32 %v2562, %v2860
        %v2862 = vrot.slane %v2719, %v2861
        %v2863 = vlaneseq
        %v2864 = vshrl.u32 %v2863, 7
        %v2865 = vsub.s32 %v2825, %v2864
        %v2866 = vrot.slane %v2722, %v2865
        %v2867 = vsel %vm2830, %v2866, %v2862
        %v2868 = vlaneseq
        %v2869 = vshrl.u32 %v2868, 7
        %v2870 = vsub.s32 %v2562, %v2869
        %v2871 = vrot.slane %v2725, %v2870
        %v2872 = vlaneseq
        %v2873 = vshrl.u32 %v2872, 7
        %v2874 = vsub.s32 %v2825, %v2873
        %v2875 = vrot.slane %v2728, %v2874
        %v2876 = vsel %vm2830, %v2875, %v2871
        %v2877 = vlaneseq
        %v2878 = vshrl.u32 %v2877, 7
        %v2879 = vsub.s32 %v2562, %v2878
        %v2880 = vrot.slane %v2731, %v2879
        %v2881 = vlaneseq
        %v2882 = vshrl.u32 %v2881, 7
        %v2883 = vsub.s32 %v2825, %v2882
        %v2884 = vrot.slane %v2734, %v2883
        %v2885 = vsel %vm2830, %v2884, %v2880
        %v2886 = vlaneseq
        %v2887 = vshrl.u32 %v2886, 7
        %v2888 = vsub.s32 %v2562, %v2887
        %v2889 = vrot.slane %v2737, %v2888
        %v2890 = vlaneseq
        %v2891 = vshrl.u32 %v2890, 7
        %v2892 = vsub.s32 %v2825, %v2891
        %v2893 = vrot.slane %v2740, %v2892
        %v2894 = vsel %vm2830, %v2893, %v2889
        %v2895 = vlaneseq
        %v2896 = vshrl.u32 %v2895, 7
        %v2897 = vsub.s32 %v2562, %v2896
        %v2898 = vrot.slane %v2743, %v2897
        %v2899 = vlaneseq
        %v2900 = vshrl.u32 %v2899, 7
        %v2901 = vsub.s32 %v2825, %v2900
        %v2902 = vrot.slane %v2746, %v2901
        %v2903 = vsel %vm2830, %v2902, %v2898
        %v2904 = vlaneseq
        %v2905 = vshrl.u32 %v2904, 7
        %v2906 = vsub.s32 %v2562, %v2905
        %v2907 = vrot.slane %v2749, %v2906
        %v2908 = vlaneseq
        %v2909 = vshrl.u32 %v2908, 7
        %v2910 = vsub.s32 %v2825, %v2909
        %v2911 = vrot.slane %v2752, %v2910
        %v2912 = vsel %vm2830, %v2911, %v2907
        %v2913 = vlaneseq
        %v2914 = vshrl.u32 %v2913, 7
        %v2915 = vsub.s32 %v2562, %v2914
        %v2916 = vrot.slane %v2755, %v2915
        %v2917 = vlaneseq
        %v2918 = vshrl.u32 %v2917, 7
        %v2919 = vsub.s32 %v2825, %v2918
        %v2920 = vrot.slane %v2758, %v2919
        %v2921 = vsel %vm2830, %v2920, %v2916
        %v2922 = vlaneseq
        %v2923 = vshrl.u32 %v2922, 7
        %v2924 = vsub.s32 %v2562, %v2923
        %v2925 = vrot.slane %v2761, %v2924
        %v2926 = vlaneseq
        %v2927 = vshrl.u32 %v2926, 7
        %v2928 = vsub.s32 %v2825, %v2927
        %v2929 = vrot.slane %v2764, %v2928
        %v2930 = vsel %vm2830, %v2929, %v2925
        %v2931 = vlaneseq
        %v2932 = vshrl.u32 %v2931, 7
        %v2933 = vsub.s32 %v2562, %v2932
        %v2934 = vrot.slane %v2767, %v2933
        %v2935 = vlaneseq
        %v2936 = vshrl.u32 %v2935, 7
        %v2937 = vsub.s32 %v2825, %v2936
        %v2938 = vrot.slane %v2770, %v2937
        %v2939 = vsel %vm2830, %v2938, %v2934
        %v2940 = vlaneseq
        %v2941 = vshrl.u32 %v2940, 7
        %v2942 = vsub.s32 %v2562, %v2941
        %v2943 = vrot.slane %v2773, %v2942
        %v2944 = vlaneseq
        %v2945 = vshrl.u32 %v2944, 7
        %v2946 = vsub.s32 %v2825, %v2945
        %v2947 = vrot.slane %v2776, %v2946
        %v2948 = vsel %vm2830, %v2947, %v2943
        %v2949 = vlaneseq
        %v2950 = vshrl.u32 %v2949, 7
        %v2951 = vsub.s32 %v2562, %v2950
        %v2952 = vrot.slane %v2779, %v2951
        %v2953 = vlaneseq
        %v2954 = vshrl.u32 %v2953, 7
        %v2955 = vsub.s32 %v2825, %v2954
        %v2956 = vrot.slane %v2782, %v2955
        %v2957 = vsel %vm2830, %v2956, %v2952
        %v2958 = vlaneseq
        %v2959 = vshrl.u32 %v2958, 7
        %v2960 = vsub.s32 %v2562, %v2959
        %v2961 = vrot.slane %v2785, %v2960
        %v2962 = vlaneseq
        %v2963 = vshrl.u32 %v2962, 7
        %v2964 = vsub.s32 %v2825, %v2963
        %v2965 = vrot.slane %v2788, %v2964
        %v2966 = vsel %vm2830, %v2965, %v2961
        %vm2967 = vcmask 1041409
        %v2968 = vsel %vm2967, %v2840, %v2831
        %vm2969 = vcmask 1042434
        %v2970 = vsel %vm2969, %v2849, %v2968
        %vm2971 = vcmask 1043459
        %v2972 = vsel %vm2971, %v2858, %v2970
        %vm2973 = vcmask 1044484
        %v2974 = vsel %vm2973, %v2867, %v2972
        %vm2975 = vcmask 1045509
        %v2976 = vsel %vm2975, %v2876, %v2974
        %vm2977 = vcmask 1046534
        %v2978 = vsel %vm2977, %v2885, %v2976
        %vm2979 = vcmask 1047559
        %v2980 = vsel %vm2979, %v2894, %v2978
        %v2981 = vsel %vm2967, %v2912, %v2903
        %v2982 = vsel %vm2969, %v2921, %v2981
        %v2983 = vsel %vm2971, %v2930, %v2982
        %v2984 = vsel %vm2973, %v2939, %v2983
        %v2985 = vsel %vm2975, %v2948, %v2984
        %v2986 = vsel %vm2977, %v2957, %v2985
        %v2987 = vsel %vm2979, %v2966, %v2986
        %2990 = vxpose.xlu0.b32.start [1/16] %v2980, 128
        %2991 = vxpose.xlu0.b32.cont [2/16] %v2987, 128
        %2992 = vxpose.xlu0.b32.cont [3/16] 0.0, 128
        %2993 = vxpose.xlu0.b32.cont [4/16] 0.0, 128
        %2994 = vxpose.xlu0.b32.cont [5/16] 0.0, 128
        %2995 = vxpose.xlu0.b32.cont [6/16] 0.0, 128
        %2996 = vxpose.xlu0.b32.cont [7/16] 0.0, 128
        %2997 = vxpose.xlu0.b32.cont [8/16] 0.0, 128
        %2998 = vxpose.xlu0.b32.cont [9/16] 0.0, 128
        %2999 = vxpose.xlu0.b32.cont [10/16] 0.0, 128
        %3000 = vxpose.xlu0.b32.cont [11/16] 0.0, 128
        %3001 = vxpose.xlu0.b32.cont [12/16] 0.0, 128
        %3002 = vxpose.xlu0.b32.cont [13/16] 0.0, 128
        %3003 = vxpose.xlu0.b32.cont [14/16] 0.0, 128
        %3004 = vxpose.xlu0.b32.cont [15/16] 0.0, 128
        %3005 = vxpose.xlu0.b32.end [16/16] 0.0, 128
        %v3006 = vpop.trf.xlu0
        %v3007 = vpop.trf.xlu0
        %v3008 = vpop.trf.xlu0
        %v3009 = vpop.trf.xlu0
        %v3010 = vpop.trf.xlu0
        %v3011 = vpop.trf.xlu0
        %v3012 = vpop.trf.xlu0
        %v3013 = vpop.trf.xlu0
        %v3014 = vpop.trf.xlu0
        %v3015 = vpop.trf.xlu0
        %v3016 = vpop.trf.xlu0
        %v3017 = vpop.trf.xlu0
        %v3018 = vpop.trf.xlu0
        %v3019 = vpop.trf.xlu0
        %v3020 = vpop.trf.xlu0
        %v3021 = vpop.trf.xlu0
        %v3024 = vlaneseq
        %v3025 = vshrl.u32 %v3024, 7
        %v3026 = vsub.s32 0, %v3025
        %v3027 = vrot.slane %v3006, %v3026
        %3029 = vbcast.lane.b32.xlu0 %v3027, 256
        %v3030 = vpop.permute.xlu0 %3029
        %s3032 = sor.u32 256, 8
        %3033 = vbcast.lane.b32.xlu0 %v3027, %s3032
        %v3034 = vpop.permute.xlu0 %3033
        %v3035 = vlaneseq
        %v3036 = vshrl.u32 %v3035, 7
        %v3037 = vsub.s32 1, %v3036
        %v3038 = vrot.slane %v3006, %v3037
        %3040 = vbcast.lane.b32.xlu0 %v3038, 256
        %v3041 = vpop.permute.xlu0 %3040
        %s3043 = sor.u32 256, 8
        %3044 = vbcast.lane.b32.xlu0 %v3038, %s3043
        %v3045 = vpop.permute.xlu0 %3044
        %v3046 = vlaneseq
        %v3047 = vshrl.u32 %v3046, 7
        %v3048 = vsub.s32 2, %v3047
        %v3049 = vrot.slane %v3006, %v3048
        %3051 = vbcast.lane.b32.xlu0 %v3049, 256
        %v3052 = vpop.permute.xlu0 %3051
        %s3054 = sor.u32 256, 8
        %3055 = vbcast.lane.b32.xlu0 %v3049, %s3054
        %v3056 = vpop.permute.xlu0 %3055
        %v3057 = vlaneseq
        %v3058 = vshrl.u32 %v3057, 7
        %v3059 = vsub.s32 3, %v3058
        %v3060 = vrot.slane %v3006, %v3059
        %3062 = vbcast.lane.b32.xlu0 %v3060, 256
        %v3063 = vpop.permute.xlu0 %3062
        %s3065 = sor.u32 256, 8
        %3066 = vbcast.lane.b32.xlu0 %v3060, %s3065
        %v3067 = vpop.permute.xlu0 %3066
        %v3068 = vlaneseq
        %v3069 = vshrl.u32 %v3068, 7
        %v3070 = vsub.s32 4, %v3069
        %v3071 = vrot.slane %v3006, %v3070
        %3073 = vbcast.lane.b32.xlu0 %v3071, 256
        %v3074 = vpop.permute.xlu0 %3073
        %s3076 = sor.u32 256, 8
        %3077 = vbcast.lane.b32.xlu0 %v3071, %s3076
        %v3078 = vpop.permute.xlu0 %3077
        %v3079 = vlaneseq
        %v3080 = vshrl.u32 %v3079, 7
        %v3081 = vsub.s32 5, %v3080
        %v3082 = vrot.slane %v3006, %v3081
        %3084 = vbcast.lane.b32.xlu0 %v3082, 256
        %v3085 = vpop.permute.xlu0 %3084
        %s3087 = sor.u32 256, 8
        %3088 = vbcast.lane.b32.xlu0 %v3082, %s3087
        %v3089 = vpop.permute.xlu0 %3088
        %v3090 = vlaneseq
        %v3091 = vshrl.u32 %v3090, 7
        %v3092 = vsub.s32 6, %v3091
        %v3093 = vrot.slane %v3006, %v3092
        %3095 = vbcast.lane.b32.xlu0 %v3093, 256
        %v3096 = vpop.permute.xlu0 %3095
        %s3098 = sor.u32 256, 8
        %3099 = vbcast.lane.b32.xlu0 %v3093, %s3098
        %v3100 = vpop.permute.xlu0 %3099
        %v3101 = vlaneseq
        %v3102 = vshrl.u32 %v3101, 7
        %v3103 = vsub.s32 7, %v3102
        %v3104 = vrot.slane %v3006, %v3103
        %3106 = vbcast.lane.b32.xlu0 %v3104, 256
        %v3107 = vpop.permute.xlu0 %3106
        %s3109 = sor.u32 256, 8
        %3110 = vbcast.lane.b32.xlu0 %v3104, %s3109
        %v3111 = vpop.permute.xlu0 %3110
        %v3112 = vlaneseq
        %v3113 = vshrl.u32 %v3112, 7
        %v3114 = vsub.s32 0, %v3113
        %v3115 = vrot.slane %v3007, %v3114
        %3117 = vbcast.lane.b32.xlu0 %v3115, 256
        %v3118 = vpop.permute.xlu0 %3117
        %s3120 = sor.u32 256, 8
        %3121 = vbcast.lane.b32.xlu0 %v3115, %s3120
        %v3122 = vpop.permute.xlu0 %3121
        %v3123 = vlaneseq
        %v3124 = vshrl.u32 %v3123, 7
        %v3125 = vsub.s32 1, %v3124
        %v3126 = vrot.slane %v3007, %v3125
        %3128 = vbcast.lane.b32.xlu0 %v3126, 256
        %v3129 = vpop.permute.xlu0 %3128
        %s3131 = sor.u32 256, 8
        %3132 = vbcast.lane.b32.xlu0 %v3126, %s3131
        %v3133 = vpop.permute.xlu0 %3132
        %v3134 = vlaneseq
        %v3135 = vshrl.u32 %v3134, 7
        %v3136 = vsub.s32 2, %v3135
        %v3137 = vrot.slane %v3007, %v3136
        %3139 = vbcast.lane.b32.xlu0 %v3137, 256
        %v3140 = vpop.permute.xlu0 %3139
        %s3142 = sor.u32 256, 8
        %3143 = vbcast.lane.b32.xlu0 %v3137, %s3142
        %v3144 = vpop.permute.xlu0 %3143
        %v3145 = vlaneseq
        %v3146 = vshrl.u32 %v3145, 7
        %v3147 = vsub.s32 3, %v3146
        %v3148 = vrot.slane %v3007, %v3147
        %3150 = vbcast.lane.b32.xlu0 %v3148, 256
        %v3151 = vpop.permute.xlu0 %3150
        %s3153 = sor.u32 256, 8
        %3154 = vbcast.lane.b32.xlu0 %v3148, %s3153
        %v3155 = vpop.permute.xlu0 %3154
        %v3156 = vlaneseq
        %v3157 = vshrl.u32 %v3156, 7
        %v3158 = vsub.s32 4, %v3157
        %v3159 = vrot.slane %v3007, %v3158
        %3161 = vbcast.lane.b32.xlu0 %v3159, 256
        %v3162 = vpop.permute.xlu0 %3161
        %s3164 = sor.u32 256, 8
        %3165 = vbcast.lane.b32.xlu0 %v3159, %s3164
        %v3166 = vpop.permute.xlu0 %3165
        %v3167 = vlaneseq
        %v3168 = vshrl.u32 %v3167, 7
        %v3169 = vsub.s32 5, %v3168
        %v3170 = vrot.slane %v3007, %v3169
        %3172 = vbcast.lane.b32.xlu0 %v3170, 256
        %v3173 = vpop.permute.xlu0 %3172
        %s3175 = sor.u32 256, 8
        %3176 = vbcast.lane.b32.xlu0 %v3170, %s3175
        %v3177 = vpop.permute.xlu0 %3176
        %v3178 = vlaneseq
        %v3179 = vshrl.u32 %v3178, 7
        %v3180 = vsub.s32 6, %v3179
        %v3181 = vrot.slane %v3007, %v3180
        %3183 = vbcast.lane.b32.xlu0 %v3181, 256
        %v3184 = vpop.permute.xlu0 %3183
        %s3186 = sor.u32 256, 8
        %3187 = vbcast.lane.b32.xlu0 %v3181, %s3186
        %v3188 = vpop.permute.xlu0 %3187
        %v3189 = vlaneseq
        %v3190 = vshrl.u32 %v3189, 7
        %v3191 = vsub.s32 7, %v3190
        %v3192 = vrot.slane %v3007, %v3191
        %3194 = vbcast.lane.b32.xlu0 %v3192, 256
        %v3195 = vpop.permute.xlu0 %3194
        %s3197 = sor.u32 256, 8
        %3198 = vbcast.lane.b32.xlu0 %v3192, %s3197
        %v3199 = vpop.permute.xlu0 %3198
        %v3232 = vmax.f32 %v2599, %v3030
        %v3233 = vmax.f32 %v2602, %v3034
        %v3234 = vmax.f32 %v2605, %v3041
        %v3235 = vmax.f32 %v2608, %v3045
        %v3236 = vmax.f32 %v2611, %v3052
        %v3237 = vmax.f32 %v2614, %v3056
        %v3238 = vmax.f32 %v2617, %v3063
        %v3239 = vmax.f32 %v2620, %v3067
        %v3240 = vmax.f32 %v2623, %v3074
        %v3241 = vmax.f32 %v2626, %v3078
        %v3242 = vmax.f32 %v2629, %v3085
        %v3243 = vmax.f32 %v2632, %v3089
        %v3244 = vmax.f32 %v2635, %v3096
        %v3245 = vmax.f32 %v2638, %v3100
        %v3246 = vmax.f32 %v2641, %v3107
        %v3247 = vmax.f32 %v2644, %v3111
        %v3248 = vmax.f32 %v2647, %v3118
        %v3249 = vmax.f32 %v2650, %v3122
        %v3250 = vmax.f32 %v2653, %v3129
        %v3251 = vmax.f32 %v2656, %v3133
        %v3252 = vmax.f32 %v2659, %v3140
        %v3253 = vmax.f32 %v2662, %v3144
        %v3254 = vmax.f32 %v2665, %v3151
        %v3255 = vmax.f32 %v2668, %v3155
        %v3256 = vmax.f32 %v2671, %v3162
        %v3257 = vmax.f32 %v2674, %v3166
        %v3258 = vmax.f32 %v2677, %v3173
        %v3259 = vmax.f32 %v2680, %v3177
        %v3260 = vmax.f32 %v2683, %v3184
        %v3261 = vmax.f32 %v2686, %v3188
        %v3262 = vmax.f32 %v2689, %v3195
        %v3263 = vmax.f32 %v2692, %v3199
        %3296 = vset.pattern.permute.xlu0 0
        %3297 = vperm.xlu0 %3296, %v3232
        %v3298 = vpop.permute.xlu0 %3297
        %3299 = vset.pattern.permute.xlu0 0
        %3300 = vperm.xlu0 %3299, %v3233
        %v3301 = vpop.permute.xlu0 %3300
        %3302 = vset.pattern.permute.xlu0 0
        %3303 = vperm.xlu0 %3302, %v3234
        %v3304 = vpop.permute.xlu0 %3303
        %3305 = vset.pattern.permute.xlu0 0
        %3306 = vperm.xlu0 %3305, %v3235
        %v3307 = vpop.permute.xlu0 %3306
        %3308 = vset.pattern.permute.xlu0 0
        %3309 = vperm.xlu0 %3308, %v3236
        %v3310 = vpop.permute.xlu0 %3309
        %3311 = vset.pattern.permute.xlu0 0
        %3312 = vperm.xlu0 %3311, %v3237
        %v3313 = vpop.permute.xlu0 %3312
        %3314 = vset.pattern.permute.xlu0 0
        %3315 = vperm.xlu0 %3314, %v3238
        %v3316 = vpop.permute.xlu0 %3315
        %3317 = vset.pattern.permute.xlu0 0
        %3318 = vperm.xlu0 %3317, %v3239
        %v3319 = vpop.permute.xlu0 %3318
        %3320 = vset.pattern.permute.xlu0 0
        %3321 = vperm.xlu0 %3320, %v3240
        %v3322 = vpop.permute.xlu0 %3321
        %3323 = vset.pattern.permute.xlu0 0
        %3324 = vperm.xlu0 %3323, %v3241
        %v3325 = vpop.permute.xlu0 %3324
        %3326 = vset.pattern.permute.xlu0 0
        %3327 = vperm.xlu0 %3326, %v3242
        %v3328 = vpop.permute.xlu0 %3327
        %3329 = vset.pattern.permute.xlu0 0
        %3330 = vperm.xlu0 %3329, %v3243
        %v3331 = vpop.permute.xlu0 %3330
        %3332 = vset.pattern.permute.xlu0 0
        %3333 = vperm.xlu0 %3332, %v3244
        %v3334 = vpop.permute.xlu0 %3333
        %3335 = vset.pattern.permute.xlu0 0
        %3336 = vperm.xlu0 %3335, %v3245
        %v3337 = vpop.permute.xlu0 %3336
        %3338 = vset.pattern.permute.xlu0 0
        %3339 = vperm.xlu0 %3338, %v3246
        %v3340 = vpop.permute.xlu0 %3339
        %3341 = vset.pattern.permute.xlu0 0
        %3342 = vperm.xlu0 %3341, %v3247
        %v3343 = vpop.permute.xlu0 %3342
        %3344 = vset.pattern.permute.xlu0 0
        %3345 = vperm.xlu0 %3344, %v3248
        %v3346 = vpop.permute.xlu0 %3345
        %3347 = vset.pattern.permute.xlu0 0
        %3348 = vperm.xlu0 %3347, %v3249
        %v3349 = vpop.permute.xlu0 %3348
        %3350 = vset.pattern.permute.xlu0 0
        %3351 = vperm.xlu0 %3350, %v3250
        %v3352 = vpop.permute.xlu0 %3351
        %3353 = vset.pattern.permute.xlu0 0
        %3354 = vperm.xlu0 %3353, %v3251
        %v3355 = vpop.permute.xlu0 %3354
        %3356 = vset.pattern.permute.xlu0 0
        %3357 = vperm.xlu0 %3356, %v3252
        %v3358 = vpop.permute.xlu0 %3357
        %3359 = vset.pattern.permute.xlu0 0
        %3360 = vperm.xlu0 %3359, %v3253
        %v3361 = vpop.permute.xlu0 %3360
        %3362 = vset.pattern.permute.xlu0 0
        %3363 = vperm.xlu0 %3362, %v3254
        %v3364 = vpop.permute.xlu0 %3363
        %3365 = vset.pattern.permute.xlu0 0
        %3366 = vperm.xlu0 %3365, %v3255
        %v3367 = vpop.permute.xlu0 %3366
        %3368 = vset.pattern.permute.xlu0 0
        %3369 = vperm.xlu0 %3368, %v3256
        %v3370 = vpop.permute.xlu0 %3369
        %3371 = vset.pattern.permute.xlu0 0
        %3372 = vperm.xlu0 %3371, %v3257
        %v3373 = vpop.permute.xlu0 %3372
        %3374 = vset.pattern.permute.xlu0 0
        %3375 = vperm.xlu0 %3374, %v3258
        %v3376 = vpop.permute.xlu0 %3375
        %3377 = vset.pattern.permute.xlu0 0
        %3378 = vperm.xlu0 %3377, %v3259
        %v3379 = vpop.permute.xlu0 %3378
        %3380 = vset.pattern.permute.xlu0 0
        %3381 = vperm.xlu0 %3380, %v3260
        %v3382 = vpop.permute.xlu0 %3381
        %3383 = vset.pattern.permute.xlu0 0
        %3384 = vperm.xlu0 %3383, %v3261
        %v3385 = vpop.permute.xlu0 %3384
        %3386 = vset.pattern.permute.xlu0 0
        %3387 = vperm.xlu0 %3386, %v3262
        %v3388 = vpop.permute.xlu0 %3387
        %3389 = vset.pattern.permute.xlu0 0
        %3390 = vperm.xlu0 %3389, %v3263
        %v3391 = vpop.permute.xlu0 %3390
        %v3392 = vlaneseq
        %v3393 = vshrl.u32 %v3392, 7
        %v3394 = vsub.s32 %v2562, %v3393
        %v3395 = vrot.slane %v3298, %v3394
        %v3396 = vlaneseq
        %v3397 = vshrl.u32 %v3396, 7
        %v3398 = vsub.s32 %v2825, %v3397
        %v3399 = vrot.slane %v3301, %v3398
        %v3400 = vsel %vm2830, %v3399, %v3395
        %v3401 = vlaneseq
        %v3402 = vshrl.u32 %v3401, 7
        %v3403 = vsub.s32 %v2562, %v3402
        %v3404 = vrot.slane %v3304, %v3403
        %v3405 = vlaneseq
        %v3406 = vshrl.u32 %v3405, 7
        %v3407 = vsub.s32 %v2825, %v3406
        %v3408 = vrot.slane %v3307, %v3407
        %v3409 = vsel %vm2830, %v3408, %v3404
        %v3410 = vlaneseq
        %v3411 = vshrl.u32 %v3410, 7
        %v3412 = vsub.s32 %v2562, %v3411
        %v3413 = vrot.slane %v3310, %v3412
        %v3414 = vlaneseq
        %v3415 = vshrl.u32 %v3414, 7
        %v3416 = vsub.s32 %v2825, %v3415
        %v3417 = vrot.slane %v3313, %v3416
        %v3418 = vsel %vm2830, %v3417, %v3413
        %v3419 = vlaneseq
        %v3420 = vshrl.u32 %v3419, 7
        %v3421 = vsub.s32 %v2562, %v3420
        %v3422 = vrot.slane %v3316, %v3421
        %v3423 = vlaneseq
        %v3424 = vshrl.u32 %v3423, 7
        %v3425 = vsub.s32 %v2825, %v3424
        %v3426 = vrot.slane %v3319, %v3425
        %v3427 = vsel %vm2830, %v3426, %v3422
        %v3428 = vlaneseq
        %v3429 = vshrl.u32 %v3428, 7
        %v3430 = vsub.s32 %v2562, %v3429
        %v3431 = vrot.slane %v3322, %v3430
        %v3432 = vlaneseq
        %v3433 = vshrl.u32 %v3432, 7
        %v3434 = vsub.s32 %v2825, %v3433
        %v3435 = vrot.slane %v3325, %v3434
        %v3436 = vsel %vm2830, %v3435, %v3431
        %v3437 = vlaneseq
        %v3438 = vshrl.u32 %v3437, 7
        %v3439 = vsub.s32 %v2562, %v3438
        %v3440 = vrot.slane %v3328, %v3439
        %v3441 = vlaneseq
        %v3442 = vshrl.u32 %v3441, 7
        %v3443 = vsub.s32 %v2825, %v3442
        %v3444 = vrot.slane %v3331, %v3443
        %v3445 = vsel %vm2830, %v3444, %v3440
        %v3446 = vlaneseq
        %v3447 = vshrl.u32 %v3446, 7
        %v3448 = vsub.s32 %v2562, %v3447
        %v3449 = vrot.slane %v3334, %v3448
        %v3450 = vlaneseq
        %v3451 = vshrl.u32 %v3450, 7
        %v3452 = vsub.s32 %v2825, %v3451
        %v3453 = vrot.slane %v3337, %v3452
        %v3454 = vsel %vm2830, %v3453, %v3449
        %v3455 = vlaneseq
        %v3456 = vshrl.u32 %v3455, 7
        %v3457 = vsub.s32 %v2562, %v3456
        %v3458 = vrot.slane %v3340, %v3457
        %v3459 = vlaneseq
        %v3460 = vshrl.u32 %v3459, 7
        %v3461 = vsub.s32 %v2825, %v3460
        %v3462 = vrot.slane %v3343, %v3461
        %v3463 = vsel %vm2830, %v3462, %v3458
        %v3464 = vlaneseq
        %v3465 = vshrl.u32 %v3464, 7
        %v3466 = vsub.s32 %v2562, %v3465
        %v3467 = vrot.slane %v3346, %v3466
        %v3468 = vlaneseq
        %v3469 = vshrl.u32 %v3468, 7
        %v3470 = vsub.s32 %v2825, %v3469
        %v3471 = vrot.slane %v3349, %v3470
        %v3472 = vsel %vm2830, %v3471, %v3467
        %v3473 = vlaneseq
        %v3474 = vshrl.u32 %v3473, 7
        %v3475 = vsub.s32 %v2562, %v3474
        %v3476 = vrot.slane %v3352, %v3475
        %v3477 = vlaneseq
        %v3478 = vshrl.u32 %v3477, 7
        %v3479 = vsub.s32 %v2825, %v3478
        %v3480 = vrot.slane %v3355, %v3479
        %v3481 = vsel %vm2830, %v3480, %v3476
        %v3482 = vlaneseq
        %v3483 = vshrl.u32 %v3482, 7
        %v3484 = vsub.s32 %v2562, %v3483
        %v3485 = vrot.slane %v3358, %v3484
        %v3486 = vlaneseq
        %v3487 = vshrl.u32 %v3486, 7
        %v3488 = vsub.s32 %v2825, %v3487
        %v3489 = vrot.slane %v3361, %v3488
        %v3490 = vsel %vm2830, %v3489, %v3485
        %v3491 = vlaneseq
        %v3492 = vshrl.u32 %v3491, 7
        %v3493 = vsub.s32 %v2562, %v3492
        %v3494 = vrot.slane %v3364, %v3493
        %v3495 = vlaneseq
        %v3496 = vshrl.u32 %v3495, 7
        %v3497 = vsub.s32 %v2825, %v3496
        %v3498 = vrot.slane %v3367, %v3497
        %v3499 = vsel %vm2830, %v3498, %v3494
        %v3500 = vlaneseq
        %v3501 = vshrl.u32 %v3500, 7
        %v3502 = vsub.s32 %v2562, %v3501
        %v3503 = vrot.slane %v3370, %v3502
        %v3504 = vlaneseq
        %v3505 = vshrl.u32 %v3504, 7
        %v3506 = vsub.s32 %v2825, %v3505
        %v3507 = vrot.slane %v3373, %v3506
        %v3508 = vsel %vm2830, %v3507, %v3503
        %v3509 = vlaneseq
        %v3510 = vshrl.u32 %v3509, 7
        %v3511 = vsub.s32 %v2562, %v3510
        %v3512 = vrot.slane %v3376, %v3511
        %v3513 = vlaneseq
        %v3514 = vshrl.u32 %v3513, 7
        %v3515 = vsub.s32 %v2825, %v3514
        %v3516 = vrot.slane %v3379, %v3515
        %v3517 = vsel %vm2830, %v3516, %v3512
        %v3518 = vlaneseq
        %v3519 = vshrl.u32 %v3518, 7
        %v3520 = vsub.s32 %v2562, %v3519
        %v3521 = vrot.slane %v3382, %v3520
        %v3522 = vlaneseq
        %v3523 = vshrl.u32 %v3522, 7
        %v3524 = vsub.s32 %v2825, %v3523
        %v3525 = vrot.slane %v3385, %v3524
        %v3526 = vsel %vm2830, %v3525, %v3521
        %v3527 = vlaneseq
        %v3528 = vshrl.u32 %v3527, 7
        %v3529 = vsub.s32 %v2562, %v3528
        %v3530 = vrot.slane %v3388, %v3529
        %v3531 = vlaneseq
        %v3532 = vshrl.u32 %v3531, 7
        %v3533 = vsub.s32 %v2825, %v3532
        %v3534 = vrot.slane %v3391, %v3533
        %v3535 = vsel %vm2830, %v3534, %v3530
        %v3536 = vsel %vm2967, %v3409, %v3400
        %v3537 = vsel %vm2969, %v3418, %v3536
        %v3538 = vsel %vm2971, %v3427, %v3537
        %v3539 = vsel %vm2973, %v3436, %v3538
        %v3540 = vsel %vm2975, %v3445, %v3539
        %v3541 = vsel %vm2977, %v3454, %v3540
        %v3542 = vsel %vm2979, %v3463, %v3541
        %v3543 = vsel %vm2967, %v3481, %v3472
        %v3544 = vsel %vm2969, %v3490, %v3543
        %v3545 = vsel %vm2971, %v3499, %v3544
        %v3546 = vsel %vm2973, %v3508, %v3545
        %v3547 = vsel %vm2975, %v3517, %v3546
        %v3548 = vsel %vm2977, %v3526, %v3547
        %v3549 = vsel %vm2979, %v3535, %v3548
        %3552 = vxpose.xlu0.b32.start [1/16] %v3542, 128
        %3553 = vxpose.xlu0.b32.cont [2/16] %v3549, 128
        %3554 = vxpose.xlu0.b32.cont [3/16] 0.0, 128
        %3555 = vxpose.xlu0.b32.cont [4/16] 0.0, 128
        %3556 = vxpose.xlu0.b32.cont [5/16] 0.0, 128
        %3557 = vxpose.xlu0.b32.cont [6/16] 0.0, 128
        %3558 = vxpose.xlu0.b32.cont [7/16] 0.0, 128
        %3559 = vxpose.xlu0.b32.cont [8/16] 0.0, 128
        %3560 = vxpose.xlu0.b32.cont [9/16] 0.0, 128
        %3561 = vxpose.xlu0.b32.cont [10/16] 0.0, 128
        %3562 = vxpose.xlu0.b32.cont [11/16] 0.0, 128
        %3563 = vxpose.xlu0.b32.cont [12/16] 0.0, 128
        %3564 = vxpose.xlu0.b32.cont [13/16] 0.0, 128
        %3565 = vxpose.xlu0.b32.cont [14/16] 0.0, 128
        %3566 = vxpose.xlu0.b32.cont [15/16] 0.0, 128
        %3567 = vxpose.xlu0.b32.end [16/16] 0.0, 128
        %v3568 = vpop.trf.xlu0
        %v3569 = vpop.trf.xlu0
        %v3570 = vpop.trf.xlu0
        %v3571 = vpop.trf.xlu0
        %v3572 = vpop.trf.xlu0
        %v3573 = vpop.trf.xlu0
        %v3574 = vpop.trf.xlu0
        %v3575 = vpop.trf.xlu0
        %v3576 = vpop.trf.xlu0
        %v3577 = vpop.trf.xlu0
        %v3578 = vpop.trf.xlu0
        %v3579 = vpop.trf.xlu0
        %v3580 = vpop.trf.xlu0
        %v3581 = vpop.trf.xlu0
        %v3582 = vpop.trf.xlu0
        %v3583 = vpop.trf.xlu0
        %v3616 = vsub.f32 %v1002, %v3298
        %v3617 = vsub.f32 %v1005, %v3301
        %v3618 = vsub.f32 %v1052, %v3304
        %v3619 = vsub.f32 %v1055, %v3307
        %v3620 = vsub.f32 %v1102, %v3310
        %v3621 = vsub.f32 %v1105, %v3313
        %v3622 = vsub.f32 %v1152, %v3316
        %v3623 = vsub.f32 %v1155, %v3319
        %v3624 = vsub.f32 %v1202, %v3322
        %v3625 = vsub.f32 %v1205, %v3325
        %v3626 = vsub.f32 %v1252, %v3328
        %v3627 = vsub.f32 %v1255, %v3331
        %v3628 = vsub.f32 %v1302, %v3334
        %v3629 = vsub.f32 %v1305, %v3337
        %v3630 = vsub.f32 %v1352, %v3340
        %v3631 = vsub.f32 %v1355, %v3343
        %v3632 = vsub.f32 %v1402, %v3346
        %v3633 = vsub.f32 %v1405, %v3349
        %v3634 = vsub.f32 %v1452, %v3352
        %v3635 = vsub.f32 %v1455, %v3355
        %v3636 = vsub.f32 %v1502, %v3358
        %v3637 = vsub.f32 %v1505, %v3361
        %v3638 = vsub.f32 %v1552, %v3364
        %v3639 = vsub.f32 %v1555, %v3367
        %v3640 = vsub.f32 %v1602, %v3370
        %v3641 = vsub.f32 %v1605, %v3373
        %v3642 = vsub.f32 %v1652, %v3376
        %v3643 = vsub.f32 %v1655, %v3379
        %v3644 = vsub.f32 %v1702, %v3382
        %v3645 = vsub.f32 %v1705, %v3385
        %v3646 = vsub.f32 %v1752, %v3388
        %v3647 = vsub.f32 %v1755, %v3391
        %v3648 = vmul.f32 %v3616, 1.442695
        %v3649 = vpow.pop %v3648
        %v3650 = vmul.f32 %v3617, 1.442695
        %v3651 = vpow.pop %v3650
        %v3652 = vmul.f32 %v3618, 1.442695
        %v3653 = vpow.pop %v3652
        %v3654 = vmul.f32 %v3619, 1.442695
        %v3655 = vpow.pop %v3654
        %v3656 = vmul.f32 %v3620, 1.442695
        %v3657 = vpow.pop %v3656
        %v3658 = vmul.f32 %v3621, 1.442695
        %v3659 = vpow.pop %v3658
        %v3660 = vmul.f32 %v3622, 1.442695
        %v3661 = vpow.pop %v3660
        %v3662 = vmul.f32 %v3623, 1.442695
        %v3663 = vpow.pop %v3662
        %v3664 = vmul.f32 %v3624, 1.442695
        %v3665 = vpow.pop %v3664
        %v3666 = vmul.f32 %v3625, 1.442695
        %v3667 = vpow.pop %v3666
        %v3668 = vmul.f32 %v3626, 1.442695
        %v3669 = vpow.pop %v3668
        %v3670 = vmul.f32 %v3627, 1.442695
        %v3671 = vpow.pop %v3670
        %v3672 = vmul.f32 %v3628, 1.442695
        %v3673 = vpow.pop %v3672
        %v3674 = vmul.f32 %v3629, 1.442695
        %v3675 = vpow.pop %v3674
        %v3676 = vmul.f32 %v3630, 1.442695
        %v3677 = vpow.pop %v3676
        %v3678 = vmul.f32 %v3631, 1.442695
        %v3679 = vpow.pop %v3678
        %v3680 = vmul.f32 %v3632, 1.442695
        %v3681 = vpow.pop %v3680
        %v3682 = vmul.f32 %v3633, 1.442695
        %v3683 = vpow.pop %v3682
        %v3684 = vmul.f32 %v3634, 1.442695
        %v3685 = vpow.pop %v3684
        %v3686 = vmul.f32 %v3635, 1.442695
        %v3687 = vpow.pop %v3686
        %v3688 = vmul.f32 %v3636, 1.442695
        %v3689 = vpow.pop %v3688
        %v3690 = vmul.f32 %v3637, 1.442695
        %v3691 = vpow.pop %v3690
        %v3692 = vmul.f32 %v3638, 1.442695
        %v3693 = vpow.pop %v3692
        %v3694 = vmul.f32 %v3639, 1.442695
        %v3695 = vpow.pop %v3694
        %v3696 = vmul.f32 %v3640, 1.442695
        %v3697 = vpow.pop %v3696
        %v3698 = vmul.f32 %v3641, 1.442695
        %v3699 = vpow.pop %v3698
        %v3700 = vmul.f32 %v3642, 1.442695
        %v3701 = vpow.pop %v3700
        %v3702 = vmul.f32 %v3643, 1.442695
        %v3703 = vpow.pop %v3702
        %v3704 = vmul.f32 %v3644, 1.442695
        %v3705 = vpow.pop %v3704
        %v3706 = vmul.f32 %v3645, 1.442695
        %v3707 = vpow.pop %v3706
        %v3708 = vmul.f32 %v3646, 1.442695
        %v3709 = vpow.pop %v3708
        %v3710 = vmul.f32 %v3647, 1.442695
        %v3711 = vpow.pop %v3710
        %v3712 = vsel %vm490, %v3649, 0.0
        %3713 = vadd.xlane.f32.xlu0 %v3712
        %v3714 = vpop.xlane.xlu0 %3713
        %v3715 = vsel %vm490, %v3651, 0.0
        %3716 = vadd.xlane.f32.xlu0 %v3715
        %v3717 = vpop.xlane.xlu0 %3716
        %v3718 = vsel %vm490, %v3653, 0.0
        %3719 = vadd.xlane.f32.xlu0 %v3718
        %v3720 = vpop.xlane.xlu0 %3719
        %v3721 = vsel %vm490, %v3655, 0.0
        %3722 = vadd.xlane.f32.xlu0 %v3721
        %v3723 = vpop.xlane.xlu0 %3722
        %v3724 = vsel %vm490, %v3657, 0.0
        %3725 = vadd.xlane.f32.xlu0 %v3724
        %v3726 = vpop.xlane.xlu0 %3725
        %v3727 = vsel %vm490, %v3659, 0.0
        %3728 = vadd.xlane.f32.xlu0 %v3727
        %v3729 = vpop.xlane.xlu0 %3728
        %v3730 = vsel %vm490, %v3661, 0.0
        %3731 = vadd.xlane.f32.xlu0 %v3730
        %v3732 = vpop.xlane.xlu0 %3731
        %v3733 = vsel %vm490, %v3663, 0.0
        %3734 = vadd.xlane.f32.xlu0 %v3733
        %v3735 = vpop.xlane.xlu0 %3734
        %v3736 = vsel %vm490, %v3665, 0.0
        %3737 = vadd.xlane.f32.xlu0 %v3736
        %v3738 = vpop.xlane.xlu0 %3737
        %v3739 = vsel %vm490, %v3667, 0.0
        %3740 = vadd.xlane.f32.xlu0 %v3739
        %v3741 = vpop.xlane.xlu0 %3740
        %v3742 = vsel %vm490, %v3669, 0.0
        %3743 = vadd.xlane.f32.xlu0 %v3742
        %v3744 = vpop.xlane.xlu0 %3743
        %v3745 = vsel %vm490, %v3671, 0.0
        %3746 = vadd.xlane.f32.xlu0 %v3745
        %v3747 = vpop.xlane.xlu0 %3746
        %v3748 = vsel %vm490, %v3673, 0.0
        %3749 = vadd.xlane.f32.xlu0 %v3748
        %v3750 = vpop.xlane.xlu0 %3749
        %v3751 = vsel %vm490, %v3675, 0.0
        %3752 = vadd.xlane.f32.xlu0 %v3751
        %v3753 = vpop.xlane.xlu0 %3752
        %v3754 = vsel %vm490, %v3677, 0.0
        %3755 = vadd.xlane.f32.xlu0 %v3754
        %v3756 = vpop.xlane.xlu0 %3755
        %v3757 = vsel %vm490, %v3679, 0.0
        %3758 = vadd.xlane.f32.xlu0 %v3757
        %v3759 = vpop.xlane.xlu0 %3758
        %v3760 = vsel %vm490, %v3681, 0.0
        %3761 = vadd.xlane.f32.xlu0 %v3760
        %v3762 = vpop.xlane.xlu0 %3761
        %v3763 = vsel %vm490, %v3683, 0.0
        %3764 = vadd.xlane.f32.xlu0 %v3763
        %v3765 = vpop.xlane.xlu0 %3764
        %v3766 = vsel %vm490, %v3685, 0.0
        %3767 = vadd.xlane.f32.xlu0 %v3766
        %v3768 = vpop.xlane.xlu0 %3767
        %v3769 = vsel %vm490, %v3687, 0.0
        %3770 = vadd.xlane.f32.xlu0 %v3769
        %v3771 = vpop.xlane.xlu0 %3770
        %v3772 = vsel %vm490, %v3689, 0.0
        %3773 = vadd.xlane.f32.xlu0 %v3772
        %v3774 = vpop.xlane.xlu0 %3773
        %v3775 = vsel %vm490, %v3691, 0.0
        %3776 = vadd.xlane.f32.xlu0 %v3775
        %v3777 = vpop.xlane.xlu0 %3776
        %v3778 = vsel %vm490, %v3693, 0.0
        %3779 = vadd.xlane.f32.xlu0 %v3778
        %v3780 = vpop.xlane.xlu0 %3779
        %v3781 = vsel %vm490, %v3695, 0.0
        %3782 = vadd.xlane.f32.xlu0 %v3781
        %v3783 = vpop.xlane.xlu0 %3782
        %v3784 = vsel %vm490, %v3697, 0.0
        %3785 = vadd.xlane.f32.xlu0 %v3784
        %v3786 = vpop.xlane.xlu0 %3785
        %v3787 = vsel %vm490, %v3699, 0.0
        %3788 = vadd.xlane.f32.xlu0 %v3787
        %v3789 = vpop.xlane.xlu0 %3788
        %v3790 = vsel %vm490, %v3701, 0.0
        %3791 = vadd.xlane.f32.xlu0 %v3790
        %v3792 = vpop.xlane.xlu0 %3791
        %v3793 = vsel %vm490, %v3703, 0.0
        %3794 = vadd.xlane.f32.xlu0 %v3793
        %v3795 = vpop.xlane.xlu0 %3794
        %v3796 = vsel %vm490, %v3705, 0.0
        %3797 = vadd.xlane.f32.xlu0 %v3796
        %v3798 = vpop.xlane.xlu0 %3797
        %v3799 = vsel %vm490, %v3707, 0.0
        %3800 = vadd.xlane.f32.xlu0 %v3799
        %v3801 = vpop.xlane.xlu0 %3800
        %v3802 = vsel %vm490, %v3709, 0.0
        %3803 = vadd.xlane.f32.xlu0 %v3802
        %v3804 = vpop.xlane.xlu0 %3803
        %v3805 = vsel %vm490, %v3711, 0.0
        %3806 = vadd.xlane.f32.xlu0 %v3805
        %v3807 = vpop.xlane.xlu0 %3806
        %v3808 = vlaneseq
        %v3809 = vshrl.u32 %v3808, 7
        %v3810 = vsub.s32 0, %v3809
        %v3811 = vrot.slane %v3568, %v3810
        %3813 = vbcast.lane.b32.xlu0 %v3811, 256
        %v3814 = vpop.permute.xlu0 %3813
        %s3816 = sor.u32 256, 8
        %3817 = vbcast.lane.b32.xlu0 %v3811, %s3816
        %v3818 = vpop.permute.xlu0 %3817
        %v3819 = vlaneseq
        %v3820 = vshrl.u32 %v3819, 7
        %v3821 = vsub.s32 1, %v3820
        %v3822 = vrot.slane %v3568, %v3821
        %3824 = vbcast.lane.b32.xlu0 %v3822, 256
        %v3825 = vpop.permute.xlu0 %3824
        %s3827 = sor.u32 256, 8
        %3828 = vbcast.lane.b32.xlu0 %v3822, %s3827
        %v3829 = vpop.permute.xlu0 %3828
        %v3830 = vlaneseq
        %v3831 = vshrl.u32 %v3830, 7
        %v3832 = vsub.s32 2, %v3831
        %v3833 = vrot.slane %v3568, %v3832
        %3835 = vbcast.lane.b32.xlu0 %v3833, 256
        %v3836 = vpop.permute.xlu0 %3835
        %s3838 = sor.u32 256, 8
        %3839 = vbcast.lane.b32.xlu0 %v3833, %s3838
        %v3840 = vpop.permute.xlu0 %3839
        %v3841 = vlaneseq
        %v3842 = vshrl.u32 %v3841, 7
        %v3843 = vsub.s32 3, %v3842
        %v3844 = vrot.slane %v3568, %v3843
        %3846 = vbcast.lane.b32.xlu0 %v3844, 256
        %v3847 = vpop.permute.xlu0 %3846
        %s3849 = sor.u32 256, 8
        %3850 = vbcast.lane.b32.xlu0 %v3844, %s3849
        %v3851 = vpop.permute.xlu0 %3850
        %v3852 = vlaneseq
        %v3853 = vshrl.u32 %v3852, 7
        %v3854 = vsub.s32 4, %v3853
        %v3855 = vrot.slane %v3568, %v3854
        %3857 = vbcast.lane.b32.xlu0 %v3855, 256
        %v3858 = vpop.permute.xlu0 %3857
        %s3860 = sor.u32 256, 8
        %3861 = vbcast.lane.b32.xlu0 %v3855, %s3860
        %v3862 = vpop.permute.xlu0 %3861
        %v3863 = vlaneseq
        %v3864 = vshrl.u32 %v3863, 7
        %v3865 = vsub.s32 5, %v3864
        %v3866 = vrot.slane %v3568, %v3865
        %3868 = vbcast.lane.b32.xlu0 %v3866, 256
        %v3869 = vpop.permute.xlu0 %3868
        %s3871 = sor.u32 256, 8
        %3872 = vbcast.lane.b32.xlu0 %v3866, %s3871
        %v3873 = vpop.permute.xlu0 %3872
        %v3874 = vlaneseq
        %v3875 = vshrl.u32 %v3874, 7
        %v3876 = vsub.s32 6, %v3875
        %v3877 = vrot.slane %v3568, %v3876
        %3879 = vbcast.lane.b32.xlu0 %v3877, 256
        %v3880 = vpop.permute.xlu0 %3879
        %s3882 = sor.u32 256, 8
        %3883 = vbcast.lane.b32.xlu0 %v3877, %s3882
        %v3884 = vpop.permute.xlu0 %3883
        %v3885 = vlaneseq
        %v3886 = vshrl.u32 %v3885, 7
        %v3887 = vsub.s32 7, %v3886
        %v3888 = vrot.slane %v3568, %v3887
        %3890 = vbcast.lane.b32.xlu0 %v3888, 256
        %v3891 = vpop.permute.xlu0 %3890
        %s3893 = sor.u32 256, 8
        %3894 = vbcast.lane.b32.xlu0 %v3888, %s3893
        %v3895 = vpop.permute.xlu0 %3894
        %v3896 = vlaneseq
        %v3897 = vshrl.u32 %v3896, 7
        %v3898 = vsub.s32 0, %v3897
        %v3899 = vrot.slane %v3569, %v3898
        %3901 = vbcast.lane.b32.xlu0 %v3899, 256
        %v3902 = vpop.permute.xlu0 %3901
        %s3904 = sor.u32 256, 8
        %3905 = vbcast.lane.b32.xlu0 %v3899, %s3904
        %v3906 = vpop.permute.xlu0 %3905
        %v3907 = vlaneseq
        %v3908 = vshrl.u32 %v3907, 7
        %v3909 = vsub.s32 1, %v3908
        %v3910 = vrot.slane %v3569, %v3909
        %3912 = vbcast.lane.b32.xlu0 %v3910, 256
        %v3913 = vpop.permute.xlu0 %3912
        %s3915 = sor.u32 256, 8
        %3916 = vbcast.lane.b32.xlu0 %v3910, %s3915
        %v3917 = vpop.permute.xlu0 %3916
        %v3918 = vlaneseq
        %v3919 = vshrl.u32 %v3918, 7
        %v3920 = vsub.s32 2, %v3919
        %v3921 = vrot.slane %v3569, %v3920
        %3923 = vbcast.lane.b32.xlu0 %v3921, 256
        %v3924 = vpop.permute.xlu0 %3923
        %s3926 = sor.u32 256, 8
        %3927 = vbcast.lane.b32.xlu0 %v3921, %s3926
        %v3928 = vpop.permute.xlu0 %3927
        %v3929 = vlaneseq
        %v3930 = vshrl.u32 %v3929, 7
        %v3931 = vsub.s32 3, %v3930
        %v3932 = vrot.slane %v3569, %v3931
        %3934 = vbcast.lane.b32.xlu0 %v3932, 256
        %v3935 = vpop.permute.xlu0 %3934
        %s3937 = sor.u32 256, 8
        %3938 = vbcast.lane.b32.xlu0 %v3932, %s3937
        %v3939 = vpop.permute.xlu0 %3938
        %v3940 = vlaneseq
        %v3941 = vshrl.u32 %v3940, 7
        %v3942 = vsub.s32 4, %v3941
        %v3943 = vrot.slane %v3569, %v3942
        %3945 = vbcast.lane.b32.xlu0 %v3943, 256
        %v3946 = vpop.permute.xlu0 %3945
        %s3948 = sor.u32 256, 8
        %3949 = vbcast.lane.b32.xlu0 %v3943, %s3948
        %v3950 = vpop.permute.xlu0 %3949
        %v3951 = vlaneseq
        %v3952 = vshrl.u32 %v3951, 7
        %v3953 = vsub.s32 5, %v3952
        %v3954 = vrot.slane %v3569, %v3953
        %3956 = vbcast.lane.b32.xlu0 %v3954, 256
        %v3957 = vpop.permute.xlu0 %3956
        %s3959 = sor.u32 256, 8
        %3960 = vbcast.lane.b32.xlu0 %v3954, %s3959
        %v3961 = vpop.permute.xlu0 %3960
        %v3962 = vlaneseq
        %v3963 = vshrl.u32 %v3962, 7
        %v3964 = vsub.s32 6, %v3963
        %v3965 = vrot.slane %v3569, %v3964
        %3967 = vbcast.lane.b32.xlu0 %v3965, 256
        %v3968 = vpop.permute.xlu0 %3967
        %s3970 = sor.u32 256, 8
        %3971 = vbcast.lane.b32.xlu0 %v3965, %s3970
        %v3972 = vpop.permute.xlu0 %3971
        %v3973 = vlaneseq
        %v3974 = vshrl.u32 %v3973, 7
        %v3975 = vsub.s32 7, %v3974
        %v3976 = vrot.slane %v3569, %v3975
        %3978 = vbcast.lane.b32.xlu0 %v3976, 256
        %v3979 = vpop.permute.xlu0 %3978
        %s3981 = sor.u32 256, 8
        %3982 = vbcast.lane.b32.xlu0 %v3976, %s3981
        %v3983 = vpop.permute.xlu0 %3982
        %v3984 = vsub.f32 %v2565, %v3814
        %v3985 = vsub.f32 %v2566, %v3818
        %v3986 = vsub.f32 %v2567, %v3825
        %v3987 = vsub.f32 %v2568, %v3829
        %v3988 = vsub.f32 %v2569, %v3836
        %v3989 = vsub.f32 %v2570, %v3840
        %v3990 = vsub.f32 %v2571, %v3847
        %v3991 = vsub.f32 %v2572, %v3851
        %v3992 = vsub.f32 %v2573, %v3858
        %v3993 = vsub.f32 %v2574, %v3862
        %v3994 = vsub.f32 %v2575, %v3869
        %v3995 = vsub.f32 %v2576, %v3873
        %v3996 = vsub.f32 %v2577, %v3880
        %v3997 = vsub.f32 %v2578, %v3884
        %v3998 = vsub.f32 %v2579, %v3891
        %v3999 = vsub.f32 %v2580, %v3895
        %v4000 = vsub.f32 %v2581, %v3902
        %v4001 = vsub.f32 %v2582, %v3906
        %v4002 = vsub.f32 %v2583, %v3913
        %v4003 = vsub.f32 %v2584, %v3917
        %v4004 = vsub.f32 %v2585, %v3924
        %v4005 = vsub.f32 %v2586, %v3928
        %v4006 = vsub.f32 %v2587, %v3935
        %v4007 = vsub.f32 %v2588, %v3939
        %v4008 = vsub.f32 %v2589, %v3946
        %v4009 = vsub.f32 %v2590, %v3950
        %v4010 = vsub.f32 %v2591, %v3957
        %v4011 = vsub.f32 %v2592, %v3961
        %v4012 = vsub.f32 %v2593, %v3968
        %v4013 = vsub.f32 %v2594, %v3972
        %v4014 = vsub.f32 %v2595, %v3979
        %v4015 = vsub.f32 %v2596, %v3983
        %v4016 = vmul.f32 %v3984, 1.442695
        %v4017 = vpow.pop %v4016
        %v4018 = vmul.f32 %v3985, 1.442695
        %v4019 = vpow.pop %v4018
        %v4020 = vmul.f32 %v3986, 1.442695
        %v4021 = vpow.pop %v4020
        %v4022 = vmul.f32 %v3987, 1.442695
        %v4023 = vpow.pop %v4022
        %v4024 = vmul.f32 %v3988, 1.442695
        %v4025 = vpow.pop %v4024
        %v4026 = vmul.f32 %v3989, 1.442695
        %v4027 = vpow.pop %v4026
        %v4028 = vmul.f32 %v3990, 1.442695
        %v4029 = vpow.pop %v4028
        %v4030 = vmul.f32 %v3991, 1.442695
        %v4031 = vpow.pop %v4030
        %v4032 = vmul.f32 %v3992, 1.442695
        %v4033 = vpow.pop %v4032
        %v4034 = vmul.f32 %v3993, 1.442695
        %v4035 = vpow.pop %v4034
        %v4036 = vmul.f32 %v3994, 1.442695
        %v4037 = vpow.pop %v4036
        %v4038 = vmul.f32 %v3995, 1.442695
        %v4039 = vpow.pop %v4038
        %v4040 = vmul.f32 %v3996, 1.442695
        %v4041 = vpow.pop %v4040
        %v4042 = vmul.f32 %v3997, 1.442695
        %v4043 = vpow.pop %v4042
        %v4044 = vmul.f32 %v3998, 1.442695
        %v4045 = vpow.pop %v4044
        %v4046 = vmul.f32 %v3999, 1.442695
        %v4047 = vpow.pop %v4046
        %v4048 = vmul.f32 %v4000, 1.442695
        %v4049 = vpow.pop %v4048
        %v4050 = vmul.f32 %v4001, 1.442695
        %v4051 = vpow.pop %v4050
        %v4052 = vmul.f32 %v4002, 1.442695
        %v4053 = vpow.pop %v4052
        %v4054 = vmul.f32 %v4003, 1.442695
        %v4055 = vpow.pop %v4054
        %v4056 = vmul.f32 %v4004, 1.442695
        %v4057 = vpow.pop %v4056
        %v4058 = vmul.f32 %v4005, 1.442695
        %v4059 = vpow.pop %v4058
        %v4060 = vmul.f32 %v4006, 1.442695
        %v4061 = vpow.pop %v4060
        %v4062 = vmul.f32 %v4007, 1.442695
        %v4063 = vpow.pop %v4062
        %v4064 = vmul.f32 %v4008, 1.442695
        %v4065 = vpow.pop %v4064
        %v4066 = vmul.f32 %v4009, 1.442695
        %v4067 = vpow.pop %v4066
        %v4068 = vmul.f32 %v4010, 1.442695
        %v4069 = vpow.pop %v4068
        %v4070 = vmul.f32 %v4011, 1.442695
        %v4071 = vpow.pop %v4070
        %v4072 = vmul.f32 %v4012, 1.442695
        %v4073 = vpow.pop %v4072
        %v4074 = vmul.f32 %v4013, 1.442695
        %v4075 = vpow.pop %v4074
        %v4076 = vmul.f32 %v4014, 1.442695
        %v4077 = vpow.pop %v4076
        %v4078 = vmul.f32 %v4015, 1.442695
        %v4079 = vpow.pop %v4078
        %v4080 = vsel %vm490, %v4017, 0.0
        %4081 = vadd.xlane.f32.xlu0 %v4080
        %v4082 = vpop.xlane.xlu0 %4081
        %v4083 = vsel %vm490, %v4019, 0.0
        %4084 = vadd.xlane.f32.xlu0 %v4083
        %v4085 = vpop.xlane.xlu0 %4084
        %v4086 = vsel %vm490, %v4021, 0.0
        %4087 = vadd.xlane.f32.xlu0 %v4086
        %v4088 = vpop.xlane.xlu0 %4087
        %v4089 = vsel %vm490, %v4023, 0.0
        %4090 = vadd.xlane.f32.xlu0 %v4089
        %v4091 = vpop.xlane.xlu0 %4090
        %v4092 = vsel %vm490, %v4025, 0.0
        %4093 = vadd.xlane.f32.xlu0 %v4092
        %v4094 = vpop.xlane.xlu0 %4093
        %v4095 = vsel %vm490, %v4027, 0.0
        %4096 = vadd.xlane.f32.xlu0 %v4095
        %v4097 = vpop.xlane.xlu0 %4096
        %v4098 = vsel %vm490, %v4029, 0.0
        %4099 = vadd.xlane.f32.xlu0 %v4098
        %v4100 = vpop.xlane.xlu0 %4099
        %v4101 = vsel %vm490, %v4031, 0.0
        %4102 = vadd.xlane.f32.xlu0 %v4101
        %v4103 = vpop.xlane.xlu0 %4102
        %v4104 = vsel %vm490, %v4033, 0.0
        %4105 = vadd.xlane.f32.xlu0 %v4104
        %v4106 = vpop.xlane.xlu0 %4105
        %v4107 = vsel %vm490, %v4035, 0.0
        %4108 = vadd.xlane.f32.xlu0 %v4107
        %v4109 = vpop.xlane.xlu0 %4108
        %v4110 = vsel %vm490, %v4037, 0.0
        %4111 = vadd.xlane.f32.xlu0 %v4110
        %v4112 = vpop.xlane.xlu0 %4111
        %v4113 = vsel %vm490, %v4039, 0.0
        %4114 = vadd.xlane.f32.xlu0 %v4113
        %v4115 = vpop.xlane.xlu0 %4114
        %v4116 = vsel %vm490, %v4041, 0.0
        %4117 = vadd.xlane.f32.xlu0 %v4116
        %v4118 = vpop.xlane.xlu0 %4117
        %v4119 = vsel %vm490, %v4043, 0.0
        %4120 = vadd.xlane.f32.xlu0 %v4119
        %v4121 = vpop.xlane.xlu0 %4120
        %v4122 = vsel %vm490, %v4045, 0.0
        %4123 = vadd.xlane.f32.xlu0 %v4122
        %v4124 = vpop.xlane.xlu0 %4123
        %v4125 = vsel %vm490, %v4047, 0.0
        %4126 = vadd.xlane.f32.xlu0 %v4125
        %v4127 = vpop.xlane.xlu0 %4126
        %v4128 = vsel %vm490, %v4049, 0.0
        %4129 = vadd.xlane.f32.xlu0 %v4128
        %v4130 = vpop.xlane.xlu0 %4129
        %v4131 = vsel %vm490, %v4051, 0.0
        %4132 = vadd.xlane.f32.xlu0 %v4131
        %v4133 = vpop.xlane.xlu0 %4132
        %v4134 = vsel %vm490, %v4053, 0.0
        %4135 = vadd.xlane.f32.xlu0 %v4134
        %v4136 = vpop.xlane.xlu0 %4135
        %v4137 = vsel %vm490, %v4055, 0.0
        %4138 = vadd.xlane.f32.xlu0 %v4137
        %v4139 = vpop.xlane.xlu0 %4138
        %v4140 = vsel %vm490, %v4057, 0.0
        %4141 = vadd.xlane.f32.xlu0 %v4140
        %v4142 = vpop.xlane.xlu0 %4141
        %v4143 = vsel %vm490, %v4059, 0.0
        %4144 = vadd.xlane.f32.xlu0 %v4143
        %v4145 = vpop.xlane.xlu0 %4144
        %v4146 = vsel %vm490, %v4061, 0.0
        %4147 = vadd.xlane.f32.xlu0 %v4146
        %v4148 = vpop.xlane.xlu0 %4147
        %v4149 = vsel %vm490, %v4063, 0.0
        %4150 = vadd.xlane.f32.xlu0 %v4149
        %v4151 = vpop.xlane.xlu0 %4150
        %v4152 = vsel %vm490, %v4065, 0.0
        %4153 = vadd.xlane.f32.xlu0 %v4152
        %v4154 = vpop.xlane.xlu0 %4153
        %v4155 = vsel %vm490, %v4067, 0.0
        %4156 = vadd.xlane.f32.xlu0 %v4155
        %v4157 = vpop.xlane.xlu0 %4156
        %v4158 = vsel %vm490, %v4069, 0.0
        %4159 = vadd.xlane.f32.xlu0 %v4158
        %v4160 = vpop.xlane.xlu0 %4159
        %v4161 = vsel %vm490, %v4071, 0.0
        %4162 = vadd.xlane.f32.xlu0 %v4161
        %v4163 = vpop.xlane.xlu0 %4162
        %v4164 = vsel %vm490, %v4073, 0.0
        %4165 = vadd.xlane.f32.xlu0 %v4164
        %v4166 = vpop.xlane.xlu0 %4165
        %v4167 = vsel %vm490, %v4075, 0.0
        %4168 = vadd.xlane.f32.xlu0 %v4167
        %v4169 = vpop.xlane.xlu0 %4168
        %v4170 = vsel %vm490, %v4077, 0.0
        %4171 = vadd.xlane.f32.xlu0 %v4170
        %v4172 = vpop.xlane.xlu0 %4171
        %v4173 = vsel %vm490, %v4079, 0.0
        %4174 = vadd.xlane.f32.xlu0 %v4173
        %v4175 = vpop.xlane.xlu0 %4174
        %v4208 = vlaneseq
        %v4209 = vshrl.u32 %v4208, 7
        %v4210 = vsub.s32 %v2562, %v4209
        %v4211 = vrot.slane %v4082, %v4210
        %v4212 = vlaneseq
        %v4213 = vshrl.u32 %v4212, 7
        %v4214 = vsub.s32 %v2825, %v4213
        %v4215 = vrot.slane %v4085, %v4214
        %v4216 = vsel %vm2830, %v4215, %v4211
        %v4217 = vlaneseq
        %v4218 = vshrl.u32 %v4217, 7
        %v4219 = vsub.s32 %v2562, %v4218
        %v4220 = vrot.slane %v4088, %v4219
        %v4221 = vlaneseq
        %v4222 = vshrl.u32 %v4221, 7
        %v4223 = vsub.s32 %v2825, %v4222
        %v4224 = vrot.slane %v4091, %v4223
        %v4225 = vsel %vm2830, %v4224, %v4220
        %v4226 = vlaneseq
        %v4227 = vshrl.u32 %v4226, 7
        %v4228 = vsub.s32 %v2562, %v4227
        %v4229 = vrot.slane %v4094, %v4228
        %v4230 = vlaneseq
        %v4231 = vshrl.u32 %v4230, 7
        %v4232 = vsub.s32 %v2825, %v4231
        %v4233 = vrot.slane %v4097, %v4232
        %v4234 = vsel %vm2830, %v4233, %v4229
        %v4235 = vlaneseq
        %v4236 = vshrl.u32 %v4235, 7
        %v4237 = vsub.s32 %v2562, %v4236
        %v4238 = vrot.slane %v4100, %v4237
        %v4239 = vlaneseq
        %v4240 = vshrl.u32 %v4239, 7
        %v4241 = vsub.s32 %v2825, %v4240
        %v4242 = vrot.slane %v4103, %v4241
        %v4243 = vsel %vm2830, %v4242, %v4238
        %v4244 = vlaneseq
        %v4245 = vshrl.u32 %v4244, 7
        %v4246 = vsub.s32 %v2562, %v4245
        %v4247 = vrot.slane %v4106, %v4246
        %v4248 = vlaneseq
        %v4249 = vshrl.u32 %v4248, 7
        %v4250 = vsub.s32 %v2825, %v4249
        %v4251 = vrot.slane %v4109, %v4250
        %v4252 = vsel %vm2830, %v4251, %v4247
        %v4253 = vlaneseq
        %v4254 = vshrl.u32 %v4253, 7
        %v4255 = vsub.s32 %v2562, %v4254
        %v4256 = vrot.slane %v4112, %v4255
        %v4257 = vlaneseq
        %v4258 = vshrl.u32 %v4257, 7
        %v4259 = vsub.s32 %v2825, %v4258
        %v4260 = vrot.slane %v4115, %v4259
        %v4261 = vsel %vm2830, %v4260, %v4256
        %v4262 = vlaneseq
        %v4263 = vshrl.u32 %v4262, 7
        %v4264 = vsub.s32 %v2562, %v4263
        %v4265 = vrot.slane %v4118, %v4264
        %v4266 = vlaneseq
        %v4267 = vshrl.u32 %v4266, 7
        %v4268 = vsub.s32 %v2825, %v4267
        %v4269 = vrot.slane %v4121, %v4268
        %v4270 = vsel %vm2830, %v4269, %v4265
        %v4271 = vlaneseq
        %v4272 = vshrl.u32 %v4271, 7
        %v4273 = vsub.s32 %v2562, %v4272
        %v4274 = vrot.slane %v4124, %v4273
        %v4275 = vlaneseq
        %v4276 = vshrl.u32 %v4275, 7
        %v4277 = vsub.s32 %v2825, %v4276
        %v4278 = vrot.slane %v4127, %v4277
        %v4279 = vsel %vm2830, %v4278, %v4274
        %v4280 = vlaneseq
        %v4281 = vshrl.u32 %v4280, 7
        %v4282 = vsub.s32 %v2562, %v4281
        %v4283 = vrot.slane %v4130, %v4282
        %v4284 = vlaneseq
        %v4285 = vshrl.u32 %v4284, 7
        %v4286 = vsub.s32 %v2825, %v4285
        %v4287 = vrot.slane %v4133, %v4286
        %v4288 = vsel %vm2830, %v4287, %v4283
        %v4289 = vlaneseq
        %v4290 = vshrl.u32 %v4289, 7
        %v4291 = vsub.s32 %v2562, %v4290
        %v4292 = vrot.slane %v4136, %v4291
        %v4293 = vlaneseq
        %v4294 = vshrl.u32 %v4293, 7
        %v4295 = vsub.s32 %v2825, %v4294
        %v4296 = vrot.slane %v4139, %v4295
        %v4297 = vsel %vm2830, %v4296, %v4292
        %v4298 = vlaneseq
        %v4299 = vshrl.u32 %v4298, 7
        %v4300 = vsub.s32 %v2562, %v4299
        %v4301 = vrot.slane %v4142, %v4300
        %v4302 = vlaneseq
        %v4303 = vshrl.u32 %v4302, 7
        %v4304 = vsub.s32 %v2825, %v4303
        %v4305 = vrot.slane %v4145, %v4304
        %v4306 = vsel %vm2830, %v4305, %v4301
        %v4307 = vlaneseq
        %v4308 = vshrl.u32 %v4307, 7
        %v4309 = vsub.s32 %v2562, %v4308
        %v4310 = vrot.slane %v4148, %v4309
        %v4311 = vlaneseq
        %v4312 = vshrl.u32 %v4311, 7
        %v4313 = vsub.s32 %v2825, %v4312
        %v4314 = vrot.slane %v4151, %v4313
        %v4315 = vsel %vm2830, %v4314, %v4310
        %v4316 = vlaneseq
        %v4317 = vshrl.u32 %v4316, 7
        %v4318 = vsub.s32 %v2562, %v4317
        %v4319 = vrot.slane %v4154, %v4318
        %v4320 = vlaneseq
        %v4321 = vshrl.u32 %v4320, 7
        %v4322 = vsub.s32 %v2825, %v4321
        %v4323 = vrot.slane %v4157, %v4322
        %v4324 = vsel %vm2830, %v4323, %v4319
        %v4325 = vlaneseq
        %v4326 = vshrl.u32 %v4325, 7
        %v4327 = vsub.s32 %v2562, %v4326
        %v4328 = vrot.slane %v4160, %v4327
        %v4329 = vlaneseq
        %v4330 = vshrl.u32 %v4329, 7
        %v4331 = vsub.s32 %v2825, %v4330
        %v4332 = vrot.slane %v4163, %v4331
        %v4333 = vsel %vm2830, %v4332, %v4328
        %v4334 = vlaneseq
        %v4335 = vshrl.u32 %v4334, 7
        %v4336 = vsub.s32 %v2562, %v4335
        %v4337 = vrot.slane %v4166, %v4336
        %v4338 = vlaneseq
        %v4339 = vshrl.u32 %v4338, 7
        %v4340 = vsub.s32 %v2825, %v4339
        %v4341 = vrot.slane %v4169, %v4340
        %v4342 = vsel %vm2830, %v4341, %v4337
        %v4343 = vlaneseq
        %v4344 = vshrl.u32 %v4343, 7
        %v4345 = vsub.s32 %v2562, %v4344
        %v4346 = vrot.slane %v4172, %v4345
        %v4347 = vlaneseq
        %v4348 = vshrl.u32 %v4347, 7
        %v4349 = vsub.s32 %v2825, %v4348
        %v4350 = vrot.slane %v4175, %v4349
        %v4351 = vsel %vm2830, %v4350, %v4346
        %v4352 = vsel %vm2967, %v4225, %v4216
        %v4353 = vsel %vm2969, %v4234, %v4352
        %v4354 = vsel %vm2971, %v4243, %v4353
        %v4355 = vsel %vm2973, %v4252, %v4354
        %v4356 = vsel %vm2975, %v4261, %v4355
        %v4357 = vsel %vm2977, %v4270, %v4356
        %v4358 = vsel %vm2979, %v4279, %v4357
        %v4359 = vsel %vm2967, %v4297, %v4288
        %v4360 = vsel %vm2969, %v4306, %v4359
        %v4361 = vsel %vm2971, %v4315, %v4360
        %v4362 = vsel %vm2973, %v4324, %v4361
        %v4363 = vsel %vm2975, %v4333, %v4362
        %v4364 = vsel %vm2977, %v4342, %v4363
        %v4365 = vsel %vm2979, %v4351, %v4364
        %4368 = vxpose.xlu0.b32.start [1/16] %v4358, 128
        %4369 = vxpose.xlu0.b32.cont [2/16] %v4365, 128
        %4370 = vxpose.xlu0.b32.cont [3/16] 0.0, 128
        %4371 = vxpose.xlu0.b32.cont [4/16] 0.0, 128
        %4372 = vxpose.xlu0.b32.cont [5/16] 0.0, 128
        %4373 = vxpose.xlu0.b32.cont [6/16] 0.0, 128
        %4374 = vxpose.xlu0.b32.cont [7/16] 0.0, 128
        %4375 = vxpose.xlu0.b32.cont [8/16] 0.0, 128
        %4376 = vxpose.xlu0.b32.cont [9/16] 0.0, 128
        %4377 = vxpose.xlu0.b32.cont [10/16] 0.0, 128
        %4378 = vxpose.xlu0.b32.cont [11/16] 0.0, 128
        %4379 = vxpose.xlu0.b32.cont [12/16] 0.0, 128
        %4380 = vxpose.xlu0.b32.cont [13/16] 0.0, 128
        %4381 = vxpose.xlu0.b32.cont [14/16] 0.0, 128
        %4382 = vxpose.xlu0.b32.cont [15/16] 0.0, 128
        %4383 = vxpose.xlu0.b32.end [16/16] 0.0, 128
        %v4384 = vpop.trf.xlu0
        %v4385 = vpop.trf.xlu0
        %v4386 = vpop.trf.xlu0
        %v4387 = vpop.trf.xlu0
        %v4388 = vpop.trf.xlu0
        %v4389 = vpop.trf.xlu0
        %v4390 = vpop.trf.xlu0
        %v4391 = vpop.trf.xlu0
        %v4392 = vpop.trf.xlu0
        %v4393 = vpop.trf.xlu0
        %v4394 = vpop.trf.xlu0
        %v4395 = vpop.trf.xlu0
        %v4396 = vpop.trf.xlu0
        %v4397 = vpop.trf.xlu0
        %v4398 = vpop.trf.xlu0
        %v4399 = vpop.trf.xlu0
        %v4402 = vlaneseq
        %v4403 = vshrl.u32 %v4402, 7
        %v4404 = vsub.s32 0, %v4403
        %v4405 = vrot.slane %v4384, %v4404
        %4407 = vbcast.lane.b32.xlu0 %v4405, 256
        %v4408 = vpop.permute.xlu0 %4407
        %s4410 = sor.u32 256, 8
        %4411 = vbcast.lane.b32.xlu0 %v4405, %s4410
        %v4412 = vpop.permute.xlu0 %4411
        %v4413 = vlaneseq
        %v4414 = vshrl.u32 %v4413, 7
        %v4415 = vsub.s32 1, %v4414
        %v4416 = vrot.slane %v4384, %v4415
        %4418 = vbcast.lane.b32.xlu0 %v4416, 256
        %v4419 = vpop.permute.xlu0 %4418
        %s4421 = sor.u32 256, 8
        %4422 = vbcast.lane.b32.xlu0 %v4416, %s4421
        %v4423 = vpop.permute.xlu0 %4422
        %v4424 = vlaneseq
        %v4425 = vshrl.u32 %v4424, 7
        %v4426 = vsub.s32 2, %v4425
        %v4427 = vrot.slane %v4384, %v4426
        %4429 = vbcast.lane.b32.xlu0 %v4427, 256
        %v4430 = vpop.permute.xlu0 %4429
        %s4432 = sor.u32 256, 8
        %4433 = vbcast.lane.b32.xlu0 %v4427, %s4432
        %v4434 = vpop.permute.xlu0 %4433
        %v4435 = vlaneseq
        %v4436 = vshrl.u32 %v4435, 7
        %v4437 = vsub.s32 3, %v4436
        %v4438 = vrot.slane %v4384, %v4437
        %4440 = vbcast.lane.b32.xlu0 %v4438, 256
        %v4441 = vpop.permute.xlu0 %4440
        %s4443 = sor.u32 256, 8
        %4444 = vbcast.lane.b32.xlu0 %v4438, %s4443
        %v4445 = vpop.permute.xlu0 %4444
        %v4446 = vlaneseq
        %v4447 = vshrl.u32 %v4446, 7
        %v4448 = vsub.s32 4, %v4447
        %v4449 = vrot.slane %v4384, %v4448
        %4451 = vbcast.lane.b32.xlu0 %v4449, 256
        %v4452 = vpop.permute.xlu0 %4451
        %s4454 = sor.u32 256, 8
        %4455 = vbcast.lane.b32.xlu0 %v4449, %s4454
        %v4456 = vpop.permute.xlu0 %4455
        %v4457 = vlaneseq
        %v4458 = vshrl.u32 %v4457, 7
        %v4459 = vsub.s32 5, %v4458
        %v4460 = vrot.slane %v4384, %v4459
        %4462 = vbcast.lane.b32.xlu0 %v4460, 256
        %v4463 = vpop.permute.xlu0 %4462
        %s4465 = sor.u32 256, 8
        %4466 = vbcast.lane.b32.xlu0 %v4460, %s4465
        %v4467 = vpop.permute.xlu0 %4466
        %v4468 = vlaneseq
        %v4469 = vshrl.u32 %v4468, 7
        %v4470 = vsub.s32 6, %v4469
        %v4471 = vrot.slane %v4384, %v4470
        %4473 = vbcast.lane.b32.xlu0 %v4471, 256
        %v4474 = vpop.permute.xlu0 %4473
        %s4476 = sor.u32 256, 8
        %4477 = vbcast.lane.b32.xlu0 %v4471, %s4476
        %v4478 = vpop.permute.xlu0 %4477
        %v4479 = vlaneseq
        %v4480 = vshrl.u32 %v4479, 7
        %v4481 = vsub.s32 7, %v4480
        %v4482 = vrot.slane %v4384, %v4481
        %4484 = vbcast.lane.b32.xlu0 %v4482, 256
        %v4485 = vpop.permute.xlu0 %4484
        %s4487 = sor.u32 256, 8
        %4488 = vbcast.lane.b32.xlu0 %v4482, %s4487
        %v4489 = vpop.permute.xlu0 %4488
        %v4490 = vlaneseq
        %v4491 = vshrl.u32 %v4490, 7
        %v4492 = vsub.s32 0, %v4491
        %v4493 = vrot.slane %v4385, %v4492
        %4495 = vbcast.lane.b32.xlu0 %v4493, 256
        %v4496 = vpop.permute.xlu0 %4495
        %s4498 = sor.u32 256, 8
        %4499 = vbcast.lane.b32.xlu0 %v4493, %s4498
        %v4500 = vpop.permute.xlu0 %4499
        %v4501 = vlaneseq
        %v4502 = vshrl.u32 %v4501, 7
        %v4503 = vsub.s32 1, %v4502
        %v4504 = vrot.slane %v4385, %v4503
        %4506 = vbcast.lane.b32.xlu0 %v4504, 256
        %v4507 = vpop.permute.xlu0 %4506
        %s4509 = sor.u32 256, 8
        %4510 = vbcast.lane.b32.xlu0 %v4504, %s4509
        %v4511 = vpop.permute.xlu0 %4510
        %v4512 = vlaneseq
        %v4513 = vshrl.u32 %v4512, 7
        %v4514 = vsub.s32 2, %v4513
        %v4515 = vrot.slane %v4385, %v4514
        %4517 = vbcast.lane.b32.xlu0 %v4515, 256
        %v4518 = vpop.permute.xlu0 %4517
        %s4520 = sor.u32 256, 8
        %4521 = vbcast.lane.b32.xlu0 %v4515, %s4520
        %v4522 = vpop.permute.xlu0 %4521
        %v4523 = vlaneseq
        %v4524 = vshrl.u32 %v4523, 7
        %v4525 = vsub.s32 3, %v4524
        %v4526 = vrot.slane %v4385, %v4525
        %4528 = vbcast.lane.b32.xlu0 %v4526, 256
        %v4529 = vpop.permute.xlu0 %4528
        %s4531 = sor.u32 256, 8
        %4532 = vbcast.lane.b32.xlu0 %v4526, %s4531
        %v4533 = vpop.permute.xlu0 %4532
        %v4534 = vlaneseq
        %v4535 = vshrl.u32 %v4534, 7
        %v4536 = vsub.s32 4, %v4535
        %v4537 = vrot.slane %v4385, %v4536
        %4539 = vbcast.lane.b32.xlu0 %v4537, 256
        %v4540 = vpop.permute.xlu0 %4539
        %s4542 = sor.u32 256, 8
        %4543 = vbcast.lane.b32.xlu0 %v4537, %s4542
        %v4544 = vpop.permute.xlu0 %4543
        %v4545 = vlaneseq
        %v4546 = vshrl.u32 %v4545, 7
        %v4547 = vsub.s32 5, %v4546
        %v4548 = vrot.slane %v4385, %v4547
        %4550 = vbcast.lane.b32.xlu0 %v4548, 256
        %v4551 = vpop.permute.xlu0 %4550
        %s4553 = sor.u32 256, 8
        %4554 = vbcast.lane.b32.xlu0 %v4548, %s4553
        %v4555 = vpop.permute.xlu0 %4554
        %v4556 = vlaneseq
        %v4557 = vshrl.u32 %v4556, 7
        %v4558 = vsub.s32 6, %v4557
        %v4559 = vrot.slane %v4385, %v4558
        %4561 = vbcast.lane.b32.xlu0 %v4559, 256
        %v4562 = vpop.permute.xlu0 %4561
        %s4564 = sor.u32 256, 8
        %4565 = vbcast.lane.b32.xlu0 %v4559, %s4564
        %v4566 = vpop.permute.xlu0 %4565
        %v4567 = vlaneseq
        %v4568 = vshrl.u32 %v4567, 7
        %v4569 = vsub.s32 7, %v4568
        %v4570 = vrot.slane %v4385, %v4569
        %4572 = vbcast.lane.b32.xlu0 %v4570, 256
        %v4573 = vpop.permute.xlu0 %4572
        %s4575 = sor.u32 256, 8
        %4576 = vbcast.lane.b32.xlu0 %v4570, %s4575
        %v4577 = vpop.permute.xlu0 %4576
        %v4610 = vadd.f32 %v3714, %v4408
        %v4611 = vadd.f32 %v3717, %v4412
        %v4612 = vadd.f32 %v3720, %v4419
        %v4613 = vadd.f32 %v3723, %v4423
        %v4614 = vadd.f32 %v3726, %v4430
        %v4615 = vadd.f32 %v3729, %v4434
        %v4616 = vadd.f32 %v3732, %v4441
        %v4617 = vadd.f32 %v3735, %v4445
        %v4618 = vadd.f32 %v3738, %v4452
        %v4619 = vadd.f32 %v3741, %v4456
        %v4620 = vadd.f32 %v3744, %v4463
        %v4621 = vadd.f32 %v3747, %v4467
        %v4622 = vadd.f32 %v3750, %v4474
        %v4623 = vadd.f32 %v3753, %v4478
        %v4624 = vadd.f32 %v3756, %v4485
        %v4625 = vadd.f32 %v3759, %v4489
        %v4626 = vadd.f32 %v3762, %v4496
        %v4627 = vadd.f32 %v3765, %v4500
        %v4628 = vadd.f32 %v3768, %v4507
        %v4629 = vadd.f32 %v3771, %v4511
        %v4630 = vadd.f32 %v3774, %v4518
        %v4631 = vadd.f32 %v3777, %v4522
        %v4632 = vadd.f32 %v3780, %v4529
        %v4633 = vadd.f32 %v3783, %v4533
        %v4634 = vadd.f32 %v3786, %v4540
        %v4635 = vadd.f32 %v3789, %v4544
        %v4636 = vadd.f32 %v3792, %v4551
        %v4637 = vadd.f32 %v3795, %v4555
        %v4638 = vadd.f32 %v3798, %v4562
        %v4639 = vadd.f32 %v3801, %v4566
        %v4640 = vadd.f32 %v3804, %v4573
        %v4641 = vadd.f32 %v3807, %v4577
        %v4642 = vrcp.pop %v4610
        %v4643 = vrcp.pop %v4611
        %v4644 = vrcp.pop %v4612
        %v4645 = vrcp.pop %v4613
        %v4646 = vrcp.pop %v4614
        %v4647 = vrcp.pop %v4615
        %v4648 = vrcp.pop %v4616
        %v4649 = vrcp.pop %v4617
        %v4650 = vrcp.pop %v4618
        %v4651 = vrcp.pop %v4619
        %v4652 = vrcp.pop %v4620
        %v4653 = vrcp.pop %v4621
        %v4654 = vrcp.pop %v4622
        %v4655 = vrcp.pop %v4623
        %v4656 = vrcp.pop %v4624
        %v4657 = vrcp.pop %v4625
        %v4658 = vrcp.pop %v4626
        %v4659 = vrcp.pop %v4627
        %v4660 = vrcp.pop %v4628
        %v4661 = vrcp.pop %v4629
        %v4662 = vrcp.pop %v4630
        %v4663 = vrcp.pop %v4631
        %v4664 = vrcp.pop %v4632
        %v4665 = vrcp.pop %v4633
        %v4666 = vrcp.pop %v4634
        %v4667 = vrcp.pop %v4635
        %v4668 = vrcp.pop %v4636
        %v4669 = vrcp.pop %v4637
        %v4670 = vrcp.pop %v4638
        %v4671 = vrcp.pop %v4639
        %v4672 = vrcp.pop %v4640
        %v4673 = vrcp.pop %v4641
        %4675 = vset.pattern.permute.xlu0 0
        %4676 = vperm.xlu0 %4675, %v4642
        %v4677 = vpop.permute.xlu0 %4676
        %4680 = vset.pattern.permute.xlu0 0
        %4681 = vperm.xlu0 %4680, %v4643
        %v4682 = vpop.permute.xlu0 %4681
        %4685 = vset.pattern.permute.xlu0 0
        %4686 = vperm.xlu0 %4685, %v4644
        %v4687 = vpop.permute.xlu0 %4686
        %4690 = vset.pattern.permute.xlu0 0
        %4691 = vperm.xlu0 %4690, %v4645
        %v4692 = vpop.permute.xlu0 %4691
        %4695 = vset.pattern.permute.xlu0 0
        %4696 = vperm.xlu0 %4695, %v4646
        %v4697 = vpop.permute.xlu0 %4696
        %4700 = vset.pattern.permute.xlu0 0
        %4701 = vperm.xlu0 %4700, %v4647
        %v4702 = vpop.permute.xlu0 %4701
        %4705 = vset.pattern.permute.xlu0 0
        %4706 = vperm.xlu0 %4705, %v4648
        %v4707 = vpop.permute.xlu0 %4706
        %4710 = vset.pattern.permute.xlu0 0
        %4711 = vperm.xlu0 %4710, %v4649
        %v4712 = vpop.permute.xlu0 %4711
        %4715 = vset.pattern.permute.xlu0 0
        %4716 = vperm.xlu0 %4715, %v4650
        %v4717 = vpop.permute.xlu0 %4716
        %4720 = vset.pattern.permute.xlu0 0
        %4721 = vperm.xlu0 %4720, %v4651
        %v4722 = vpop.permute.xlu0 %4721
        %4725 = vset.pattern.permute.xlu0 0
        %4726 = vperm.xlu0 %4725, %v4652
        %v4727 = vpop.permute.xlu0 %4726
        %4730 = vset.pattern.permute.xlu0 0
        %4731 = vperm.xlu0 %4730, %v4653
        %v4732 = vpop.permute.xlu0 %4731
        %4735 = vset.pattern.permute.xlu0 0
        %4736 = vperm.xlu0 %4735, %v4654
        %v4737 = vpop.permute.xlu0 %4736
        %4740 = vset.pattern.permute.xlu0 0
        %4741 = vperm.xlu0 %4740, %v4655
        %v4742 = vpop.permute.xlu0 %4741
        %4745 = vset.pattern.permute.xlu0 0
        %4746 = vperm.xlu0 %4745, %v4656
        %v4747 = vpop.permute.xlu0 %4746
        %4750 = vset.pattern.permute.xlu0 0
        %4751 = vperm.xlu0 %4750, %v4657
        %v4752 = vpop.permute.xlu0 %4751
        %4755 = vset.pattern.permute.xlu0 0
        %4756 = vperm.xlu0 %4755, %v4658
        %v4757 = vpop.permute.xlu0 %4756
        %4760 = vset.pattern.permute.xlu0 0
        %4761 = vperm.xlu0 %4760, %v4659
        %v4762 = vpop.permute.xlu0 %4761
        %4765 = vset.pattern.permute.xlu0 0
        %4766 = vperm.xlu0 %4765, %v4660
        %v4767 = vpop.permute.xlu0 %4766
        %4770 = vset.pattern.permute.xlu0 0
        %4771 = vperm.xlu0 %4770, %v4661
        %v4772 = vpop.permute.xlu0 %4771
        %4775 = vset.pattern.permute.xlu0 0
        %4776 = vperm.xlu0 %4775, %v4662
        %v4777 = vpop.permute.xlu0 %4776
        %4780 = vset.pattern.permute.xlu0 0
        %4781 = vperm.xlu0 %4780, %v4663
        %v4782 = vpop.permute.xlu0 %4781
        %4785 = vset.pattern.permute.xlu0 0
        %4786 = vperm.xlu0 %4785, %v4664
        %v4787 = vpop.permute.xlu0 %4786
        %4790 = vset.pattern.permute.xlu0 0
        %4791 = vperm.xlu0 %4790, %v4665
        %v4792 = vpop.permute.xlu0 %4791
        %4795 = vset.pattern.permute.xlu0 0
        %4796 = vperm.xlu0 %4795, %v4666
        %v4797 = vpop.permute.xlu0 %4796
        %4800 = vset.pattern.permute.xlu0 0
        %4801 = vperm.xlu0 %4800, %v4667
        %v4802 = vpop.permute.xlu0 %4801
        %4805 = vset.pattern.permute.xlu0 0
        %4806 = vperm.xlu0 %4805, %v4668
        %v4807 = vpop.permute.xlu0 %4806
        %4810 = vset.pattern.permute.xlu0 0
        %4811 = vperm.xlu0 %4810, %v4669
        %v4812 = vpop.permute.xlu0 %4811
        %4815 = vset.pattern.permute.xlu0 0
        %4816 = vperm.xlu0 %4815, %v4670
        %v4817 = vpop.permute.xlu0 %4816
        %4820 = vset.pattern.permute.xlu0 0
        %4821 = vperm.xlu0 %4820, %v4671
        %v4822 = vpop.permute.xlu0 %4821
        %4825 = vset.pattern.permute.xlu0 0
        %4826 = vperm.xlu0 %4825, %v4672
        %v4827 = vpop.permute.xlu0 %4826
        %4830 = vset.pattern.permute.xlu0 0
        %4831 = vperm.xlu0 %4830, %v4673
        %v4832 = vpop.permute.xlu0 %4831
        %v4834 = vmul.f32 %v3649, %v4677
        %v4835 = vmul.f32 %v3651, %v4682
        %v4836 = vmul.f32 %v3653, %v4687
        %v4837 = vmul.f32 %v3655, %v4692
        %v4838 = vmul.f32 %v3657, %v4697
        %v4839 = vmul.f32 %v3659, %v4702
        %v4840 = vmul.f32 %v3661, %v4707
        %v4841 = vmul.f32 %v3663, %v4712
        %v4842 = vmul.f32 %v3665, %v4717
        %v4843 = vmul.f32 %v3667, %v4722
        %v4844 = vmul.f32 %v3669, %v4727
        %v4845 = vmul.f32 %v3671, %v4732
        %v4846 = vmul.f32 %v3673, %v4737
        %v4847 = vmul.f32 %v3675, %v4742
        %v4848 = vmul.f32 %v3677, %v4747
        %v4849 = vmul.f32 %v3679, %v4752
        %v4850 = vmul.f32 %v3681, %v4757
        %v4851 = vmul.f32 %v3683, %v4762
        %v4852 = vmul.f32 %v3685, %v4767
        %v4853 = vmul.f32 %v3687, %v4772
        %v4854 = vmul.f32 %v3689, %v4777
        %v4855 = vmul.f32 %v3691, %v4782
        %v4856 = vmul.f32 %v3693, %v4787
        %v4857 = vmul.f32 %v3695, %v4792
        %v4858 = vmul.f32 %v3697, %v4797
        %v4859 = vmul.f32 %v3699, %v4802
        %v4860 = vmul.f32 %v3701, %v4807
        %v4861 = vmul.f32 %v3703, %v4812
        %v4862 = vmul.f32 %v3705, %v4817
        %v4863 = vmul.f32 %v3707, %v4822
        %v4864 = vmul.f32 %v3709, %v4827
        %v4865 = vmul.f32 %v3711, %v4832
        %v4866 = vpack.c.bf16 %v4835, %v4834
        %v4867 = vpack.c.bf16 %v4837, %v4836
        %v4868 = vpack.c.bf16 %v4839, %v4838
        %v4869 = vpack.c.bf16 %v4841, %v4840
        %v4870 = vpack.c.bf16 %v4843, %v4842
        %v4871 = vpack.c.bf16 %v4845, %v4844
        %v4872 = vpack.c.bf16 %v4847, %v4846
        %v4873 = vpack.c.bf16 %v4849, %v4848
        %v4874 = vpack.c.bf16 %v4851, %v4850
        %v4875 = vpack.c.bf16 %v4853, %v4852
        %v4876 = vpack.c.bf16 %v4855, %v4854
        %v4877 = vpack.c.bf16 %v4857, %v4856
        %v4878 = vpack.c.bf16 %v4859, %v4858
        %v4879 = vpack.c.bf16 %v4861, %v4860
        %v4880 = vpack.c.bf16 %v4863, %v4862
        %v4881 = vpack.c.bf16 %v4865, %v4864
        %4882 = vrot.lane.b32.xlu0 %v700, 124
        %v4883 = vpop.permute.xlu0 %4882
        %v4886 = vsel %vm490, %v4866, 0
        %4888 = vmatprep.subr.bf16.mxu0 0
        %4889 = vmatpush1.bf16.msra.mxu0 %v4883
        %4890 = vmatprep.subr.bf16.mxu0 0
        %4891 = vmatpush1.bf16.msra.mxu0 0
        %4892 = vmatprep.subr.bf16.mxu0 0
        %4893 = vmatpush1.bf16.msra.mxu0 0
        %4894 = vmatprep.subr.bf16.mxu0 0
        %4895 = vmatpush1.bf16.msra.mxu0 0
        %4896 = vmatprep.subr.bf16.mxu0 0
        %4897 = vmatpush1.bf16.msra.mxu0 0
        %4898 = vmatprep.subr.bf16.mxu0 0
        %4899 = vmatpush1.bf16.msra.mxu0 0
        %4900 = vmatprep.subr.bf16.mxu0 0
        %4901 = vmatpush1.bf16.msra.mxu0 0
        %4902 = vmatprep.subr.bf16.mxu0 0
        %4903 = vmatpush1.bf16.msra.mxu0 0
        %4904 = vmatprep.subr.bf16.mxu0 0
        %4905 = vmatpush1.bf16.msra.mxu0 0
        %4906 = vmatprep.subr.bf16.mxu0 0
        %4907 = vmatpush1.bf16.msra.mxu0 0
        %4908 = vmatprep.subr.bf16.mxu0 0
        %4909 = vmatpush1.bf16.msra.mxu0 0
        %4910 = vmatprep.subr.bf16.mxu0 0
        %4911 = vmatpush1.bf16.msra.mxu0 0
        %4912 = vmatprep.subr.bf16.mxu0 0
        %4913 = vmatpush1.bf16.msra.mxu0 0
        %4914 = vmatprep.subr.bf16.mxu0 0
        %4915 = vmatpush1.bf16.msra.mxu0 0
        %4916 = vmatprep.subr.bf16.mxu0 0
        %4917 = vmatpush1.bf16.msra.mxu0 0
        %4918 = vmatprep.subr.bf16.mxu0 0
        %4919 = vmatpush1.bf16.msra.mxu0 0
        %4920 = vmatprep.mubr.bf16.mxu0 0
        %4921 = vmatmul.mubr.bf16.gmra.mrb[0].mxu0 %v4886
        %v4922 = vpop.f32.mrb[0].mxu0
        %v4923 = vadd.f32 0.0, %v4922
        %v4924 = vpop.f32.mrb[0].mxu0
        %v4925 = vpop.f32.mrb[0].mxu0
        %v4926 = vadd.f32 0.0, %v4925
        %v4927 = vpop.f32.mrb[0].mxu0
        %4928 = vdwg.mxu0
        %4929 = vrot.lane.b32.xlu0 %v701, 124
        %v4930 = vpop.permute.xlu0 %4929
        %v4933 = vsel %vm490, %v4867, 0
        %4935 = vmatprep.subr.bf16.mxu0 0
        %4936 = vmatpush1.bf16.msra.mxu0 %v4930
        %4937 = vmatprep.subr.bf16.mxu0 0
        %4938 = vmatpush1.bf16.msra.mxu0 0
        %4939 = vmatprep.subr.bf16.mxu0 0
        %4940 = vmatpush1.bf16.msra.mxu0 0
        %4941 = vmatprep.subr.bf16.mxu0 0
        %4942 = vmatpush1.bf16.msra.mxu0 0
        %4943 = vmatprep.subr.bf16.mxu0 0
        %4944 = vmatpush1.bf16.msra.mxu0 0
        %4945 = vmatprep.subr.bf16.mxu0 0
        %4946 = vmatpush1.bf16.msra.mxu0 0
        %4947 = vmatprep.subr.bf16.mxu0 0
        %4948 = vmatpush1.bf16.msra.mxu0 0
        %4949 = vmatprep.subr.bf16.mxu0 0
        %4950 = vmatpush1.bf16.msra.mxu0 0
        %4951 = vmatprep.subr.bf16.mxu0 0
        %4952 = vmatpush1.bf16.msra.mxu0 0
        %4953 = vmatprep.subr.bf16.mxu0 0
        %4954 = vmatpush1.bf16.msra.mxu0 0
        %4955 = vmatprep.subr.bf16.mxu0 0
        %4956 = vmatpush1.bf16.msra.mxu0 0
        %4957 = vmatprep.subr.bf16.mxu0 0
        %4958 = vmatpush1.bf16.msra.mxu0 0
        %4959 = vmatprep.subr.bf16.mxu0 0
        %4960 = vmatpush1.bf16.msra.mxu0 0
        %4961 = vmatprep.subr.bf16.mxu0 0
        %4962 = vmatpush1.bf16.msra.mxu0 0
        %4963 = vmatprep.subr.bf16.mxu0 0
        %4964 = vmatpush1.bf16.msra.mxu0 0
        %4965 = vmatprep.subr.bf16.mxu0 0
        %4966 = vmatpush1.bf16.msra.mxu0 0
        %4967 = vmatprep.mubr.bf16.mxu0 0
        %4968 = vmatmul.mubr.bf16.gmra.mrb[0].mxu0 %v4933
        %v4969 = vpop.f32.mrb[0].mxu0
        %v4970 = vadd.f32 0.0, %v4969
        %v4971 = vpop.f32.mrb[0].mxu0
        %v4972 = vpop.f32.mrb[0].mxu0
        %v4973 = vadd.f32 0.0, %v4972
        %v4974 = vpop.f32.mrb[0].mxu0
        %4975 = vdwg.mxu0
        %4976 = vrot.lane.b32.xlu0 %v702, 124
        %v4977 = vpop.permute.xlu0 %4976
        %v4980 = vsel %vm490, %v4868, 0
        %4982 = vmatprep.subr.bf16.mxu0 0
        %4983 = vmatpush1.bf16.msra.mxu0 %v4977
        %4984 = vmatprep.subr.bf16.mxu0 0
        %4985 = vmatpush1.bf16.msra.mxu0 0
        %4986 = vmatprep.subr.bf16.mxu0 0
        %4987 = vmatpush1.bf16.msra.mxu0 0
        %4988 = vmatprep.subr.bf16.mxu0 0
        %4989 = vmatpush1.bf16.msra.mxu0 0
        %4990 = vmatprep.subr.bf16.mxu0 0
        %4991 = vmatpush1.bf16.msra.mxu0 0
        %4992 = vmatprep.subr.bf16.mxu0 0
        %4993 = vmatpush1.bf16.msra.mxu0 0
        %4994 = vmatprep.subr.bf16.mxu0 0
        %4995 = vmatpush1.bf16.msra.mxu0 0
        %4996 = vmatprep.subr.bf16.mxu0 0
        %4997 = vmatpush1.bf16.msra.mxu0 0
        %4998 = vmatprep.subr.bf16.mxu0 0
        %4999 = vmatpush1.bf16.msra.mxu0 0
        %5000 = vmatprep.subr.bf16.mxu0 0
        %5001 = vmatpush1.bf16.msra.mxu0 0
        %5002 = vmatprep.subr.bf16.mxu0 0
        %5003 = vmatpush1.bf16.msra.mxu0 0
        %5004 = vmatprep.subr.bf16.mxu0 0
        %5005 = vmatpush1.bf16.msra.mxu0 0
        %5006 = vmatprep.subr.bf16.mxu0 0
        %5007 = vmatpush1.bf16.msra.mxu0 0
        %5008 = vmatprep.subr.bf16.mxu0 0
        %5009 = vmatpush1.bf16.msra.mxu0 0
        %5010 = vmatprep.subr.bf16.mxu0 0
        %5011 = vmatpush1.bf16.msra.mxu0 0
        %5012 = vmatprep.subr.bf16.mxu0 0
        %5013 = vmatpush1.bf16.msra.mxu0 0
        %5014 = vmatprep.mubr.bf16.mxu0 0
        %5015 = vmatmul.mubr.bf16.gmra.mrb[0].mxu0 %v4980
        %v5016 = vpop.f32.mrb[0].mxu0
        %v5017 = vadd.f32 0.0, %v5016
        %v5018 = vpop.f32.mrb[0].mxu0
        %v5019 = vpop.f32.mrb[0].mxu0
        %v5020 = vadd.f32 0.0, %v5019
        %v5021 = vpop.f32.mrb[0].mxu0
        %5022 = vdwg.mxu0
        %5023 = vrot.lane.b32.xlu0 %v703, 124
        %v5024 = vpop.permute.xlu0 %5023
        %v5027 = vsel %vm490, %v4869, 0
        %5029 = vmatprep.subr.bf16.mxu0 0
        %5030 = vmatpush1.bf16.msra.mxu0 %v5024
        %5031 = vmatprep.subr.bf16.mxu0 0
        %5032 = vmatpush1.bf16.msra.mxu0 0
        %5033 = vmatprep.subr.bf16.mxu0 0
        %5034 = vmatpush1.bf16.msra.mxu0 0
        %5035 = vmatprep.subr.bf16.mxu0 0
        %5036 = vmatpush1.bf16.msra.mxu0 0
        %5037 = vmatprep.subr.bf16.mxu0 0
        %5038 = vmatpush1.bf16.msra.mxu0 0
        %5039 = vmatprep.subr.bf16.mxu0 0
        %5040 = vmatpush1.bf16.msra.mxu0 0
        %5041 = vmatprep.subr.bf16.mxu0 0
        %5042 = vmatpush1.bf16.msra.mxu0 0
        %5043 = vmatprep.subr.bf16.mxu0 0
        %5044 = vmatpush1.bf16.msra.mxu0 0
        %5045 = vmatprep.subr.bf16.mxu0 0
        %5046 = vmatpush1.bf16.msra.mxu0 0
        %5047 = vmatprep.subr.bf16.mxu0 0
        %5048 = vmatpush1.bf16.msra.mxu0 0
        %5049 = vmatprep.subr.bf16.mxu0 0
        %5050 = vmatpush1.bf16.msra.mxu0 0
        %5051 = vmatprep.subr.bf16.mxu0 0
        %5052 = vmatpush1.bf16.msra.mxu0 0
        %5053 = vmatprep.subr.bf16.mxu0 0
        %5054 = vmatpush1.bf16.msra.mxu0 0
        %5055 = vmatprep.subr.bf16.mxu0 0
        %5056 = vmatpush1.bf16.msra.mxu0 0
        %5057 = vmatprep.subr.bf16.mxu0 0
        %5058 = vmatpush1.bf16.msra.mxu0 0
        %5059 = vmatprep.subr.bf16.mxu0 0
        %5060 = vmatpush1.bf16.msra.mxu0 0
        %5061 = vmatprep.mubr.bf16.mxu0 0
        %5062 = vmatmul.mubr.bf16.gmra.mrb[0].mxu0 %v5027
        %v5063 = vpop.f32.mrb[0].mxu0
        %v5064 = vadd.f32 0.0, %v5063
        %v5065 = vpop.f32.mrb[0].mxu0
        %v5066 = vpop.f32.mrb[0].mxu0
        %v5067 = vadd.f32 0.0, %v5066
        %v5068 = vpop.f32.mrb[0].mxu0
        %5069 = vdwg.mxu0
        %5070 = vrot.lane.b32.xlu0 %v704, 124
        %v5071 = vpop.permute.xlu0 %5070
        %v5074 = vsel %vm490, %v4870, 0
        %5076 = vmatprep.subr.bf16.mxu0 0
        %5077 = vmatpush1.bf16.msra.mxu0 %v5071
        %5078 = vmatprep.subr.bf16.mxu0 0
        %5079 = vmatpush1.bf16.msra.mxu0 0
        %5080 = vmatprep.subr.bf16.mxu0 0
        %5081 = vmatpush1.bf16.msra.mxu0 0
        %5082 = vmatprep.subr.bf16.mxu0 0
        %5083 = vmatpush1.bf16.msra.mxu0 0
        %5084 = vmatprep.subr.bf16.mxu0 0
        %5085 = vmatpush1.bf16.msra.mxu0 0
        %5086 = vmatprep.subr.bf16.mxu0 0
        %5087 = vmatpush1.bf16.msra.mxu0 0
        %5088 = vmatprep.subr.bf16.mxu0 0
        %5089 = vmatpush1.bf16.msra.mxu0 0
        %5090 = vmatprep.subr.bf16.mxu0 0
        %5091 = vmatpush1.bf16.msra.mxu0 0
        %5092 = vmatprep.subr.bf16.mxu0 0
        %5093 = vmatpush1.bf16.msra.mxu0 0
        %5094 = vmatprep.subr.bf16.mxu0 0
        %5095 = vmatpush1.bf16.msra.mxu0 0
        %5096 = vmatprep.subr.bf16.mxu0 0
        %5097 = vmatpush1.bf16.msra.mxu0 0
        %5098 = vmatprep.subr.bf16.mxu0 0
        %5099 = vmatpush1.bf16.msra.mxu0 0
        %5100 = vmatprep.subr.bf16.mxu0 0
        %5101 = vmatpush1.bf16.msra.mxu0 0
        %5102 = vmatprep.subr.bf16.mxu0 0
        %5103 = vmatpush1.bf16.msra.mxu0 0
        %5104 = vmatprep.subr.bf16.mxu0 0
        %5105 = vmatpush1.bf16.msra.mxu0 0
        %5106 = vmatprep.subr.bf16.mxu0 0
        %5107 = vmatpush1.bf16.msra.mxu0 0
        %5108 = vmatprep.mubr.bf16.mxu0 0
        %5109 = vmatmul.mubr.bf16.gmra.mrb[0].mxu0 %v5074
        %v5110 = vpop.f32.mrb[0].mxu0
        %v5111 = vadd.f32 0.0, %v5110
        %v5112 = vpop.f32.mrb[0].mxu0
        %v5113 = vpop.f32.mrb[0].mxu0
        %v5114 = vadd.f32 0.0, %v5113
        %v5115 = vpop.f32.mrb[0].mxu0
        %5116 = vdwg.mxu0
        %5117 = vrot.lane.b32.xlu0 %v705, 124
        %v5118 = vpop.permute.xlu0 %5117
        %v5121 = vsel %vm490, %v4871, 0
        %5123 = vmatprep.subr.bf16.mxu0 0
        %5124 = vmatpush1.bf16.msra.mxu0 %v5118
        %5125 = vmatprep.subr.bf16.mxu0 0
        %5126 = vmatpush1.bf16.msra.mxu0 0
        %5127 = vmatprep.subr.bf16.mxu0 0
        %5128 = vmatpush1.bf16.msra.mxu0 0
        %5129 = vmatprep.subr.bf16.mxu0 0
        %5130 = vmatpush1.bf16.msra.mxu0 0
        %5131 = vmatprep.subr.bf16.mxu0 0
        %5132 = vmatpush1.bf16.msra.mxu0 0
        %5133 = vmatprep.subr.bf16.mxu0 0
        %5134 = vmatpush1.bf16.msra.mxu0 0
        %5135 = vmatprep.subr.bf16.mxu0 0
        %5136 = vmatpush1.bf16.msra.mxu0 0
        %5137 = vmatprep.subr.bf16.mxu0 0
        %5138 = vmatpush1.bf16.msra.mxu0 0
        %5139 = vmatprep.subr.bf16.mxu0 0
        %5140 = vmatpush1.bf16.msra.mxu0 0
        %5141 = vmatprep.subr.bf16.mxu0 0
        %5142 = vmatpush1.bf16.msra.mxu0 0
        %5143 = vmatprep.subr.bf16.mxu0 0
        %5144 = vmatpush1.bf16.msra.mxu0 0
        %5145 = vmatprep.subr.bf16.mxu0 0
        %5146 = vmatpush1.bf16.msra.mxu0 0
        %5147 = vmatprep.subr.bf16.mxu0 0
        %5148 = vmatpush1.bf16.msra.mxu0 0
        %5149 = vmatprep.subr.bf16.mxu0 0
        %5150 = vmatpush1.bf16.msra.mxu0 0
        %5151 = vmatprep.subr.bf16.mxu0 0
        %5152 = vmatpush1.bf16.msra.mxu0 0
        %5153 = vmatprep.subr.bf16.mxu0 0
        %5154 = vmatpush1.bf16.msra.mxu0 0
        %5155 = vmatprep.mubr.bf16.mxu0 0
        %5156 = vmatmul.mubr.bf16.gmra.mrb[0].mxu0 %v5121
        %v5157 = vpop.f32.mrb[0].mxu0
        %v5158 = vadd.f32 0.0, %v5157
        %v5159 = vpop.f32.mrb[0].mxu0
        %v5160 = vpop.f32.mrb[0].mxu0
        %v5161 = vadd.f32 0.0, %v5160
        %v5162 = vpop.f32.mrb[0].mxu0
        %5163 = vdwg.mxu0
        %5164 = vrot.lane.b32.xlu0 %v706, 124
        %v5165 = vpop.permute.xlu0 %5164
        %v5168 = vsel %vm490, %v4872, 0
        %5170 = vmatprep.subr.bf16.mxu0 0
        %5171 = vmatpush1.bf16.msra.mxu0 %v5165
        %5172 = vmatprep.subr.bf16.mxu0 0
        %5173 = vmatpush1.bf16.msra.mxu0 0
        %5174 = vmatprep.subr.bf16.mxu0 0
        %5175 = vmatpush1.bf16.msra.mxu0 0
        %5176 = vmatprep.subr.bf16.mxu0 0
        %5177 = vmatpush1.bf16.msra.mxu0 0
        %5178 = vmatprep.subr.bf16.mxu0 0
        %5179 = vmatpush1.bf16.msra.mxu0 0
        %5180 = vmatprep.subr.bf16.mxu0 0
        %5181 = vmatpush1.bf16.msra.mxu0 0
        %5182 = vmatprep.subr.bf16.mxu0 0
        %5183 = vmatpush1.bf16.msra.mxu0 0
        %5184 = vmatprep.subr.bf16.mxu0 0
        %5185 = vmatpush1.bf16.msra.mxu0 0
        %5186 = vmatprep.subr.bf16.mxu0 0
        %5187 = vmatpush1.bf16.msra.mxu0 0
        %5188 = vmatprep.subr.bf16.mxu0 0
        %5189 = vmatpush1.bf16.msra.mxu0 0
        %5190 = vmatprep.subr.bf16.mxu0 0
        %5191 = vmatpush1.bf16.msra.mxu0 0
        %5192 = vmatprep.subr.bf16.mxu0 0
        %5193 = vmatpush1.bf16.msra.mxu0 0
        %5194 = vmatprep.subr.bf16.mxu0 0
        %5195 = vmatpush1.bf16.msra.mxu0 0
        %5196 = vmatprep.subr.bf16.mxu0 0
        %5197 = vmatpush1.bf16.msra.mxu0 0
        %5198 = vmatprep.subr.bf16.mxu0 0
        %5199 = vmatpush1.bf16.msra.mxu0 0
        %5200 = vmatprep.subr.bf16.mxu0 0
        %5201 = vmatpush1.bf16.msra.mxu0 0
        %5202 = vmatprep.mubr.bf16.mxu0 0
        %5203 = vmatmul.mubr.bf16.gmra.mrb[0].mxu0 %v5168
        %v5204 = vpop.f32.mrb[0].mxu0
        %v5205 = vadd.f32 0.0, %v5204
        %v5206 = vpop.f32.mrb[0].mxu0
        %v5207 = vpop.f32.mrb[0].mxu0
        %v5208 = vadd.f32 0.0, %v5207
        %v5209 = vpop.f32.mrb[0].mxu0
        %5210 = vdwg.mxu0
        %5211 = vrot.lane.b32.xlu0 %v707, 124
        %v5212 = vpop.permute.xlu0 %5211
        %v5215 = vsel %vm490, %v4873, 0
        %5217 = vmatprep.subr.bf16.mxu0 0
        %5218 = vmatpush1.bf16.msra.mxu0 %v5212
        %5219 = vmatprep.subr.bf16.mxu0 0
        %5220 = vmatpush1.bf16.msra.mxu0 0
        %5221 = vmatprep.subr.bf16.mxu0 0
        %5222 = vmatpush1.bf16.msra.mxu0 0
        %5223 = vmatprep.subr.bf16.mxu0 0
        %5224 = vmatpush1.bf16.msra.mxu0 0
        %5225 = vmatprep.subr.bf16.mxu0 0
        %5226 = vmatpush1.bf16.msra.mxu0 0
        %5227 = vmatprep.subr.bf16.mxu0 0
        %5228 = vmatpush1.bf16.msra.mxu0 0
        %5229 = vmatprep.subr.bf16.mxu0 0
        %5230 = vmatpush1.bf16.msra.mxu0 0
        %5231 = vmatprep.subr.bf16.mxu0 0
        %5232 = vmatpush1.bf16.msra.mxu0 0
        %5233 = vmatprep.subr.bf16.mxu0 0
        %5234 = vmatpush1.bf16.msra.mxu0 0
        %5235 = vmatprep.subr.bf16.mxu0 0
        %5236 = vmatpush1.bf16.msra.mxu0 0
        %5237 = vmatprep.subr.bf16.mxu0 0
        %5238 = vmatpush1.bf16.msra.mxu0 0
        %5239 = vmatprep.subr.bf16.mxu0 0
        %5240 = vmatpush1.bf16.msra.mxu0 0
        %5241 = vmatprep.subr.bf16.mxu0 0
        %5242 = vmatpush1.bf16.msra.mxu0 0
        %5243 = vmatprep.subr.bf16.mxu0 0
        %5244 = vmatpush1.bf16.msra.mxu0 0
        %5245 = vmatprep.subr.bf16.mxu0 0
        %5246 = vmatpush1.bf16.msra.mxu0 0
        %5247 = vmatprep.subr.bf16.mxu0 0
        %5248 = vmatpush1.bf16.msra.mxu0 0
        %5249 = vmatprep.mubr.bf16.mxu0 0
        %5250 = vmatmul.mubr.bf16.gmra.mrb[0].mxu0 %v5215
        %v5251 = vpop.f32.mrb[0].mxu0
        %v5252 = vadd.f32 0.0, %v5251
        %v5253 = vpop.f32.mrb[0].mxu0
        %v5254 = vpop.f32.mrb[0].mxu0
        %v5255 = vadd.f32 0.0, %v5254
        %v5256 = vpop.f32.mrb[0].mxu0
        %5257 = vdwg.mxu0
        %5258 = vrot.lane.b32.xlu0 %v708, 124
        %v5259 = vpop.permute.xlu0 %5258
        %v5262 = vsel %vm490, %v4874, 0
        %5264 = vmatprep.subr.bf16.mxu0 0
        %5265 = vmatpush1.bf16.msra.mxu0 %v5259
        %5266 = vmatprep.subr.bf16.mxu0 0
        %5267 = vmatpush1.bf16.msra.mxu0 0
        %5268 = vmatprep.subr.bf16.mxu0 0
        %5269 = vmatpush1.bf16.msra.mxu0 0
        %5270 = vmatprep.subr.bf16.mxu0 0
        %5271 = vmatpush1.bf16.msra.mxu0 0
        %5272 = vmatprep.subr.bf16.mxu0 0
        %5273 = vmatpush1.bf16.msra.mxu0 0
        %5274 = vmatprep.subr.bf16.mxu0 0
        %5275 = vmatpush1.bf16.msra.mxu0 0
        %5276 = vmatprep.subr.bf16.mxu0 0
        %5277 = vmatpush1.bf16.msra.mxu0 0
        %5278 = vmatprep.subr.bf16.mxu0 0
        %5279 = vmatpush1.bf16.msra.mxu0 0
        %5280 = vmatprep.subr.bf16.mxu0 0
        %5281 = vmatpush1.bf16.msra.mxu0 0
        %5282 = vmatprep.subr.bf16.mxu0 0
        %5283 = vmatpush1.bf16.msra.mxu0 0
        %5284 = vmatprep.subr.bf16.mxu0 0
        %5285 = vmatpush1.bf16.msra.mxu0 0
        %5286 = vmatprep.subr.bf16.mxu0 0
        %5287 = vmatpush1.bf16.msra.mxu0 0
        %5288 = vmatprep.subr.bf16.mxu0 0
        %5289 = vmatpush1.bf16.msra.mxu0 0
        %5290 = vmatprep.subr.bf16.mxu0 0
        %5291 = vmatpush1.bf16.msra.mxu0 0
        %5292 = vmatprep.subr.bf16.mxu0 0
        %5293 = vmatpush1.bf16.msra.mxu0 0
        %5294 = vmatprep.subr.bf16.mxu0 0
        %5295 = vmatpush1.bf16.msra.mxu0 0
        %5296 = vmatprep.mubr.bf16.mxu0 0
        %5297 = vmatmul.mubr.bf16.gmra.mrb[0].mxu0 %v5262
        %v5298 = vpop.f32.mrb[0].mxu0
        %v5299 = vadd.f32 0.0, %v5298
        %v5300 = vpop.f32.mrb[0].mxu0
        %v5301 = vpop.f32.mrb[0].mxu0
        %v5302 = vadd.f32 0.0, %v5301
        %v5303 = vpop.f32.mrb[0].mxu0
        %5304 = vdwg.mxu0
        %5305 = vrot.lane.b32.xlu0 %v709, 124
        %v5306 = vpop.permute.xlu0 %5305
        %v5309 = vsel %vm490, %v4875, 0
        %5311 = vmatprep.subr.bf16.mxu0 0
        %5312 = vmatpush1.bf16.msra.mxu0 %v5306
        %5313 = vmatprep.subr.bf16.mxu0 0
        %5314 = vmatpush1.bf16.msra.mxu0 0
        %5315 = vmatprep.subr.bf16.mxu0 0
        %5316 = vmatpush1.bf16.msra.mxu0 0
        %5317 = vmatprep.subr.bf16.mxu0 0
        %5318 = vmatpush1.bf16.msra.mxu0 0
        %5319 = vmatprep.subr.bf16.mxu0 0
        %5320 = vmatpush1.bf16.msra.mxu0 0
        %5321 = vmatprep.subr.bf16.mxu0 0
        %5322 = vmatpush1.bf16.msra.mxu0 0
        %5323 = vmatprep.subr.bf16.mxu0 0
        %5324 = vmatpush1.bf16.msra.mxu0 0
        %5325 = vmatprep.subr.bf16.mxu0 0
        %5326 = vmatpush1.bf16.msra.mxu0 0
        %5327 = vmatprep.subr.bf16.mxu0 0
        %5328 = vmatpush1.bf16.msra.mxu0 0
        %5329 = vmatprep.subr.bf16.mxu0 0
        %5330 = vmatpush1.bf16.msra.mxu0 0
        %5331 = vmatprep.subr.bf16.mxu0 0
        %5332 = vmatpush1.bf16.msra.mxu0 0
        %5333 = vmatprep.subr.bf16.mxu0 0
        %5334 = vmatpush1.bf16.msra.mxu0 0
        %5335 = vmatprep.subr.bf16.mxu0 0
        %5336 = vmatpush1.bf16.msra.mxu0 0
        %5337 = vmatprep.subr.bf16.mxu0 0
        %5338 = vmatpush1.bf16.msra.mxu0 0
        %5339 = vmatprep.subr.bf16.mxu0 0
        %5340 = vmatpush1.bf16.msra.mxu0 0
        %5341 = vmatprep.subr.bf16.mxu0 0
        %5342 = vmatpush1.bf16.msra.mxu0 0
        %5343 = vmatprep.mubr.bf16.mxu0 0
        %5344 = vmatmul.mubr.bf16.gmra.mrb[0].mxu0 %v5309
        %v5345 = vpop.f32.mrb[0].mxu0
        %v5346 = vadd.f32 0.0, %v5345
        %v5347 = vpop.f32.mrb[0].mxu0
        %v5348 = vpop.f32.mrb[0].mxu0
        %v5349 = vadd.f32 0.0, %v5348
        %v5350 = vpop.f32.mrb[0].mxu0
        %5351 = vdwg.mxu0
        %5352 = vrot.lane.b32.xlu0 %v710, 124
        %v5353 = vpop.permute.xlu0 %5352
        %v5356 = vsel %vm490, %v4876, 0
        %5358 = vmatprep.subr.bf16.mxu0 0
        %5359 = vmatpush1.bf16.msra.mxu0 %v5353
        %5360 = vmatprep.subr.bf16.mxu0 0
        %5361 = vmatpush1.bf16.msra.mxu0 0
        %5362 = vmatprep.subr.bf16.mxu0 0
        %5363 = vmatpush1.bf16.msra.mxu0 0
        %5364 = vmatprep.subr.bf16.mxu0 0
        %5365 = vmatpush1.bf16.msra.mxu0 0
        %5366 = vmatprep.subr.bf16.mxu0 0
        %5367 = vmatpush1.bf16.msra.mxu0 0
        %5368 = vmatprep.subr.bf16.mxu0 0
        %5369 = vmatpush1.bf16.msra.mxu0 0
        %5370 = vmatprep.subr.bf16.mxu0 0
        %5371 = vmatpush1.bf16.msra.mxu0 0
        %5372 = vmatprep.subr.bf16.mxu0 0
        %5373 = vmatpush1.bf16.msra.mxu0 0
        %5374 = vmatprep.subr.bf16.mxu0 0
        %5375 = vmatpush1.bf16.msra.mxu0 0
        %5376 = vmatprep.subr.bf16.mxu0 0
        %5377 = vmatpush1.bf16.msra.mxu0 0
        %5378 = vmatprep.subr.bf16.mxu0 0
        %5379 = vmatpush1.bf16.msra.mxu0 0
        %5380 = vmatprep.subr.bf16.mxu0 0
        %5381 = vmatpush1.bf16.msra.mxu0 0
        %5382 = vmatprep.subr.bf16.mxu0 0
        %5383 = vmatpush1.bf16.msra.mxu0 0
        %5384 = vmatprep.subr.bf16.mxu0 0
        %5385 = vmatpush1.bf16.msra.mxu0 0
        %5386 = vmatprep.subr.bf16.mxu0 0
        %5387 = vmatpush1.bf16.msra.mxu0 0
        %5388 = vmatprep.subr.bf16.mxu0 0
        %5389 = vmatpush1.bf16.msra.mxu0 0
        %5390 = vmatprep.mubr.bf16.mxu0 0
        %5391 = vmatmul.mubr.bf16.gmra.mrb[0].mxu0 %v5356
        %v5392 = vpop.f32.mrb[0].mxu0
        %v5393 = vadd.f32 0.0, %v5392
        %v5394 = vpop.f32.mrb[0].mxu0
        %v5395 = vpop.f32.mrb[0].mxu0
        %v5396 = vadd.f32 0.0, %v5395
        %v5397 = vpop.f32.mrb[0].mxu0
        %5398 = vdwg.mxu0
        %5399 = vrot.lane.b32.xlu0 %v711, 124
        %v5400 = vpop.permute.xlu0 %5399
        %v5403 = vsel %vm490, %v4877, 0
        %5405 = vmatprep.subr.bf16.mxu0 0
        %5406 = vmatpush1.bf16.msra.mxu0 %v5400
        %5407 = vmatprep.subr.bf16.mxu0 0
        %5408 = vmatpush1.bf16.msra.mxu0 0
        %5409 = vmatprep.subr.bf16.mxu0 0
        %5410 = vmatpush1.bf16.msra.mxu0 0
        %5411 = vmatprep.subr.bf16.mxu0 0
        %5412 = vmatpush1.bf16.msra.mxu0 0
        %5413 = vmatprep.subr.bf16.mxu0 0
        %5414 = vmatpush1.bf16.msra.mxu0 0
        %5415 = vmatprep.subr.bf16.mxu0 0
        %5416 = vmatpush1.bf16.msra.mxu0 0
        %5417 = vmatprep.subr.bf16.mxu0 0
        %5418 = vmatpush1.bf16.msra.mxu0 0
        %5419 = vmatprep.subr.bf16.mxu0 0
        %5420 = vmatpush1.bf16.msra.mxu0 0
        %5421 = vmatprep.subr.bf16.mxu0 0
        %5422 = vmatpush1.bf16.msra.mxu0 0
        %5423 = vmatprep.subr.bf16.mxu0 0
        %5424 = vmatpush1.bf16.msra.mxu0 0
        %5425 = vmatprep.subr.bf16.mxu0 0
        %5426 = vmatpush1.bf16.msra.mxu0 0
        %5427 = vmatprep.subr.bf16.mxu0 0
        %5428 = vmatpush1.bf16.msra.mxu0 0
        %5429 = vmatprep.subr.bf16.mxu0 0
        %5430 = vmatpush1.bf16.msra.mxu0 0
        %5431 = vmatprep.subr.bf16.mxu0 0
        %5432 = vmatpush1.bf16.msra.mxu0 0
        %5433 = vmatprep.subr.bf16.mxu0 0
        %5434 = vmatpush1.bf16.msra.mxu0 0
        %5435 = vmatprep.subr.bf16.mxu0 0
        %5436 = vmatpush1.bf16.msra.mxu0 0
        %5437 = vmatprep.mubr.bf16.mxu0 0
        %5438 = vmatmul.mubr.bf16.gmra.mrb[0].mxu0 %v5403
        %v5439 = vpop.f32.mrb[0].mxu0
        %v5440 = vadd.f32 0.0, %v5439
        %v5441 = vpop.f32.mrb[0].mxu0
        %v5442 = vpop.f32.mrb[0].mxu0
        %v5443 = vadd.f32 0.0, %v5442
        %v5444 = vpop.f32.mrb[0].mxu0
        %5445 = vdwg.mxu0
        %5446 = vrot.lane.b32.xlu0 %v712, 124
        %v5447 = vpop.permute.xlu0 %5446
        %v5450 = vsel %vm490, %v4878, 0
        %5452 = vmatprep.subr.bf16.mxu0 0
        %5453 = vmatpush1.bf16.msra.mxu0 %v5447
        %5454 = vmatprep.subr.bf16.mxu0 0
        %5455 = vmatpush1.bf16.msra.mxu0 0
        %5456 = vmatprep.subr.bf16.mxu0 0
        %5457 = vmatpush1.bf16.msra.mxu0 0
        %5458 = vmatprep.subr.bf16.mxu0 0
        %5459 = vmatpush1.bf16.msra.mxu0 0
        %5460 = vmatprep.subr.bf16.mxu0 0
        %5461 = vmatpush1.bf16.msra.mxu0 0
        %5462 = vmatprep.subr.bf16.mxu0 0
        %5463 = vmatpush1.bf16.msra.mxu0 0
        %5464 = vmatprep.subr.bf16.mxu0 0
        %5465 = vmatpush1.bf16.msra.mxu0 0
        %5466 = vmatprep.subr.bf16.mxu0 0
        %5467 = vmatpush1.bf16.msra.mxu0 0
        %5468 = vmatprep.subr.bf16.mxu0 0
        %5469 = vmatpush1.bf16.msra.mxu0 0
        %5470 = vmatprep.subr.bf16.mxu0 0
        %5471 = vmatpush1.bf16.msra.mxu0 0
        %5472 = vmatprep.subr.bf16.mxu0 0
        %5473 = vmatpush1.bf16.msra.mxu0 0
        %5474 = vmatprep.subr.bf16.mxu0 0
        %5475 = vmatpush1.bf16.msra.mxu0 0
        %5476 = vmatprep.subr.bf16.mxu0 0
        %5477 = vmatpush1.bf16.msra.mxu0 0
        %5478 = vmatprep.subr.bf16.mxu0 0
        %5479 = vmatpush1.bf16.msra.mxu0 0
        %5480 = vmatprep.subr.bf16.mxu0 0
        %5481 = vmatpush1.bf16.msra.mxu0 0
        %5482 = vmatprep.subr.bf16.mxu0 0
        %5483 = vmatpush1.bf16.msra.mxu0 0
        %5484 = vmatprep.mubr.bf16.mxu0 0
        %5485 = vmatmul.mubr.bf16.gmra.mrb[0].mxu0 %v5450
        %v5486 = vpop.f32.mrb[0].mxu0
        %v5487 = vadd.f32 0.0, %v5486
        %v5488 = vpop.f32.mrb[0].mxu0
        %v5489 = vpop.f32.mrb[0].mxu0
        %v5490 = vadd.f32 0.0, %v5489
        %v5491 = vpop.f32.mrb[0].mxu0
        %5492 = vdwg.mxu0
        %5493 = vrot.lane.b32.xlu0 %v713, 124
        %v5494 = vpop.permute.xlu0 %5493
        %v5497 = vsel %vm490, %v4879, 0
        %5499 = vmatprep.subr.bf16.mxu0 0
        %5500 = vmatpush1.bf16.msra.mxu0 %v5494
        %5501 = vmatprep.subr.bf16.mxu0 0
        %5502 = vmatpush1.bf16.msra.mxu0 0
        %5503 = vmatprep.subr.bf16.mxu0 0
        %5504 = vmatpush1.bf16.msra.mxu0 0
        %5505 = vmatprep.subr.bf16.mxu0 0
        %5506 = vmatpush1.bf16.msra.mxu0 0
        %5507 = vmatprep.subr.bf16.mxu0 0
        %5508 = vmatpush1.bf16.msra.mxu0 0
        %5509 = vmatprep.subr.bf16.mxu0 0
        %5510 = vmatpush1.bf16.msra.mxu0 0
        %5511 = vmatprep.subr.bf16.mxu0 0
        %5512 = vmatpush1.bf16.msra.mxu0 0
        %5513 = vmatprep.subr.bf16.mxu0 0
        %5514 = vmatpush1.bf16.msra.mxu0 0
        %5515 = vmatprep.subr.bf16.mxu0 0
        %5516 = vmatpush1.bf16.msra.mxu0 0
        %5517 = vmatprep.subr.bf16.mxu0 0
        %5518 = vmatpush1.bf16.msra.mxu0 0
        %5519 = vmatprep.subr.bf16.mxu0 0
        %5520 = vmatpush1.bf16.msra.mxu0 0
        %5521 = vmatprep.subr.bf16.mxu0 0
        %5522 = vmatpush1.bf16.msra.mxu0 0
        %5523 = vmatprep.subr.bf16.mxu0 0
        %5524 = vmatpush1.bf16.msra.mxu0 0
        %5525 = vmatprep.subr.bf16.mxu0 0
        %5526 = vmatpush1.bf16.msra.mxu0 0
        %5527 = vmatprep.subr.bf16.mxu0 0
        %5528 = vmatpush1.bf16.msra.mxu0 0
        %5529 = vmatprep.subr.bf16.mxu0 0
        %5530 = vmatpush1.bf16.msra.mxu0 0
        %5531 = vmatprep.mubr.bf16.mxu0 0
        %5532 = vmatmul.mubr.bf16.gmra.mrb[0].mxu0 %v5497
        %v5533 = vpop.f32.mrb[0].mxu0
        %v5534 = vadd.f32 0.0, %v5533
        %v5535 = vpop.f32.mrb[0].mxu0
        %v5536 = vpop.f32.mrb[0].mxu0
        %v5537 = vadd.f32 0.0, %v5536
        %v5538 = vpop.f32.mrb[0].mxu0
        %5539 = vdwg.mxu0
        %5540 = vrot.lane.b32.xlu0 %v714, 124
        %v5541 = vpop.permute.xlu0 %5540
        %v5544 = vsel %vm490, %v4880, 0
        %5546 = vmatprep.subr.bf16.mxu0 0
        %5547 = vmatpush1.bf16.msra.mxu0 %v5541
        %5548 = vmatprep.subr.bf16.mxu0 0
        %5549 = vmatpush1.bf16.msra.mxu0 0
        %5550 = vmatprep.subr.bf16.mxu0 0
        %5551 = vmatpush1.bf16.msra.mxu0 0
        %5552 = vmatprep.subr.bf16.mxu0 0
        %5553 = vmatpush1.bf16.msra.mxu0 0
        %5554 = vmatprep.subr.bf16.mxu0 0
        %5555 = vmatpush1.bf16.msra.mxu0 0
        %5556 = vmatprep.subr.bf16.mxu0 0
        %5557 = vmatpush1.bf16.msra.mxu0 0
        %5558 = vmatprep.subr.bf16.mxu0 0
        %5559 = vmatpush1.bf16.msra.mxu0 0
        %5560 = vmatprep.subr.bf16.mxu0 0
        %5561 = vmatpush1.bf16.msra.mxu0 0
        %5562 = vmatprep.subr.bf16.mxu0 0
        %5563 = vmatpush1.bf16.msra.mxu0 0
        %5564 = vmatprep.subr.bf16.mxu0 0
        %5565 = vmatpush1.bf16.msra.mxu0 0
        %5566 = vmatprep.subr.bf16.mxu0 0
        %5567 = vmatpush1.bf16.msra.mxu0 0
        %5568 = vmatprep.subr.bf16.mxu0 0
        %5569 = vmatpush1.bf16.msra.mxu0 0
        %5570 = vmatprep.subr.bf16.mxu0 0
        %5571 = vmatpush1.bf16.msra.mxu0 0
        %5572 = vmatprep.subr.bf16.mxu0 0
        %5573 = vmatpush1.bf16.msra.mxu0 0
        %5574 = vmatprep.subr.bf16.mxu0 0
        %5575 = vmatpush1.bf16.msra.mxu0 0
        %5576 = vmatprep.subr.bf16.mxu0 0
        %5577 = vmatpush1.bf16.msra.mxu0 0
        %5578 = vmatprep.mubr.bf16.mxu0 0
        %5579 = vmatmul.mubr.bf16.gmra.mrb[0].mxu0 %v5544
        %v5580 = vpop.f32.mrb[0].mxu0
        %v5581 = vadd.f32 0.0, %v5580
        %v5582 = vpop.f32.mrb[0].mxu0
        %v5583 = vpop.f32.mrb[0].mxu0
        %v5584 = vadd.f32 0.0, %v5583
        %v5585 = vpop.f32.mrb[0].mxu0
        %5586 = vdwg.mxu0
        %5587 = vrot.lane.b32.xlu0 %v715, 124
        %v5588 = vpop.permute.xlu0 %5587
        %v5591 = vsel %vm490, %v4881, 0
        %5593 = vmatprep.subr.bf16.mxu0 0
        %5594 = vmatpush1.bf16.msra.mxu0 %v5588
        %5595 = vmatprep.subr.bf16.mxu0 0
        %5596 = vmatpush1.bf16.msra.mxu0 0
        %5597 = vmatprep.subr.bf16.mxu0 0
        %5598 = vmatpush1.bf16.msra.mxu0 0
        %5599 = vmatprep.subr.bf16.mxu0 0
        %5600 = vmatpush1.bf16.msra.mxu0 0
        %5601 = vmatprep.subr.bf16.mxu0 0
        %5602 = vmatpush1.bf16.msra.mxu0 0
        %5603 = vmatprep.subr.bf16.mxu0 0
        %5604 = vmatpush1.bf16.msra.mxu0 0
        %5605 = vmatprep.subr.bf16.mxu0 0
        %5606 = vmatpush1.bf16.msra.mxu0 0
        %5607 = vmatprep.subr.bf16.mxu0 0
        %5608 = vmatpush1.bf16.msra.mxu0 0
        %5609 = vmatprep.subr.bf16.mxu0 0
        %5610 = vmatpush1.bf16.msra.mxu0 0
        %5611 = vmatprep.subr.bf16.mxu0 0
        %5612 = vmatpush1.bf16.msra.mxu0 0
        %5613 = vmatprep.subr.bf16.mxu0 0
        %5614 = vmatpush1.bf16.msra.mxu0 0
        %5615 = vmatprep.subr.bf16.mxu0 0
        %5616 = vmatpush1.bf16.msra.mxu0 0
        %5617 = vmatprep.subr.bf16.mxu0 0
        %5618 = vmatpush1.bf16.msra.mxu0 0
        %5619 = vmatprep.subr.bf16.mxu0 0
        %5620 = vmatpush1.bf16.msra.mxu0 0
        %5621 = vmatprep.subr.bf16.mxu0 0
        %5622 = vmatpush1.bf16.msra.mxu0 0
        %5623 = vmatprep.subr.bf16.mxu0 0
        %5624 = vmatpush1.bf16.msra.mxu0 0
        %5625 = vmatprep.mubr.bf16.mxu0 0
        %5626 = vmatmul.mubr.bf16.gmra.mrb[0].mxu0 %v5591
        %v5627 = vpop.f32.mrb[0].mxu0
        %v5628 = vadd.f32 0.0, %v5627
        %v5629 = vpop.f32.mrb[0].mxu0
        %v5630 = vpop.f32.mrb[0].mxu0
        %v5631 = vadd.f32 0.0, %v5630
        %v5632 = vpop.f32.mrb[0].mxu0
        %5633 = vdwg.mxu0
        %v5634 = vstv %s461
        %v5635 = vmul.f32 %v5634, %v4923
        %v5636 = vmul.f32 %v5634, %v4926
        %v5637 = vmul.f32 %v5634, %v4970
        %v5638 = vmul.f32 %v5634, %v4973
        %v5639 = vmul.f32 %v5634, %v5017
        %v5640 = vmul.f32 %v5634, %v5020
        %v5641 = vmul.f32 %v5634, %v5064
        %v5642 = vmul.f32 %v5634, %v5067
        %v5643 = vmul.f32 %v5634, %v5111
        %v5644 = vmul.f32 %v5634, %v5114
        %v5645 = vmul.f32 %v5634, %v5158
        %v5646 = vmul.f32 %v5634, %v5161
        %v5647 = vmul.f32 %v5634, %v5205
        %v5648 = vmul.f32 %v5634, %v5208
        %v5649 = vmul.f32 %v5634, %v5252
        %v5650 = vmul.f32 %v5634, %v5255
        %v5651 = vmul.f32 %v5634, %v5299
        %v5652 = vmul.f32 %v5634, %v5302
        %v5653 = vmul.f32 %v5634, %v5346
        %v5654 = vmul.f32 %v5634, %v5349
        %v5655 = vmul.f32 %v5634, %v5393
        %v5656 = vmul.f32 %v5634, %v5396
        %v5657 = vmul.f32 %v5634, %v5440
        %v5658 = vmul.f32 %v5634, %v5443
        %v5659 = vmul.f32 %v5634, %v5487
        %v5660 = vmul.f32 %v5634, %v5490
        %v5661 = vmul.f32 %v5634, %v5534
        %v5662 = vmul.f32 %v5634, %v5537
        %v5663 = vmul.f32 %v5634, %v5581
        %v5664 = vmul.f32 %v5634, %v5584
        %v5665 = vmul.f32 %v5634, %v5628
        %v5666 = vmul.f32 %v5634, %v5631
        %v5667 = vadd.f32 %v394, %v5635
        %v5668 = vadd.f32 %v395, %v5636
        %v5669 = vadd.f32 %v396, %v5637
        %v5670 = vadd.f32 %v397, %v5638
        %v5671 = vadd.f32 %v398, %v5639
        %v5672 = vadd.f32 %v399, %v5640
        %v5673 = vadd.f32 %v400, %v5641
        %v5674 = vadd.f32 %v401, %v5642
        %v5675 = vadd.f32 %v402, %v5643
        %v5676 = vadd.f32 %v403, %v5644
        %v5677 = vadd.f32 %v404, %v5645
        %v5678 = vadd.f32 %v405, %v5646
        %v5679 = vadd.f32 %v406, %v5647
        %v5680 = vadd.f32 %v407, %v5648
        %v5681 = vadd.f32 %v408, %v5649
        %v5682 = vadd.f32 %v409, %v5650
        %v5683 = vadd.f32 %v410, %v5651
        %v5684 = vadd.f32 %v411, %v5652
        %v5685 = vadd.f32 %v412, %v5653
        %v5686 = vadd.f32 %v413, %v5654
        %v5687 = vadd.f32 %v414, %v5655
        %v5688 = vadd.f32 %v415, %v5656
        %v5689 = vadd.f32 %v416, %v5657
        %v5690 = vadd.f32 %v417, %v5658
        %v5691 = vadd.f32 %v418, %v5659
        %v5692 = vadd.f32 %v419, %v5660
        %v5693 = vadd.f32 %v420, %v5661
        %v5694 = vadd.f32 %v421, %v5662
        %v5695 = vadd.f32 %v422, %v5663
        %v5696 = vadd.f32 %v423, %v5664
        %v5697 = vadd.f32 %v424, %v5665
        %v5698 = vadd.f32 %v425, %v5666
        %5699 = vst.msk [vmem:[%s371] sm:$0xff] %vm490, %v5667
        %5700 = vst.msk [vmem:[%s371 + $0x8] sm:$0xff] %vm490, %v5668
        %5701 = vst.msk [vmem:[%s371 + $0x10] sm:$0xff] %vm490, %v5669
        %5702 = vst.msk [vmem:[%s371 + $0x18] sm:$0xff] %vm490, %v5670
        %5703 = vst.msk [vmem:[%s371 + $0x20] sm:$0xff] %vm490, %v5671
        %5704 = vst.msk [vmem:[%s371 + $0x28] sm:$0xff] %vm490, %v5672
        %5705 = vst.msk [vmem:[%s371 + $0x30] sm:$0xff] %vm490, %v5673
        %5706 = vst.msk [vmem:[%s371 + $0x38] sm:$0xff] %vm490, %v5674
        %5707 = vst.msk [vmem:[%s371 + $0x40] sm:$0xff] %vm490, %v5675
        %5708 = vst.msk [vmem:[%s371 + $0x48] sm:$0xff] %vm490, %v5676
        %5709 = vst.msk [vmem:[%s371 + $0x50] sm:$0xff] %vm490, %v5677
        %5710 = vst.msk [vmem:[%s371 + $0x58] sm:$0xff] %vm490, %v5678
        %5711 = vst.msk [vmem:[%s371 + $0x60] sm:$0xff] %vm490, %v5679
        %5712 = vst.msk [vmem:[%s371 + $0x68] sm:$0xff] %vm490, %v5680
        %5713 = vst.msk [vmem:[%s371 + $0x70] sm:$0xff] %vm490, %v5681
        %5714 = vst.msk [vmem:[%s371 + $0x78] sm:$0xff] %vm490, %v5682
        %5715 = vst.msk [vmem:[%s371 + $0x80] sm:$0xff] %vm490, %v5683
        %5716 = vst.msk [vmem:[%s371 + $0x88] sm:$0xff] %vm490, %v5684
        %5717 = vst.msk [vmem:[%s371 + $0x90] sm:$0xff] %vm490, %v5685
        %5718 = vst.msk [vmem:[%s371 + $0x98] sm:$0xff] %vm490, %v5686
        %5719 = vst.msk [vmem:[%s371 + $0xa0] sm:$0xff] %vm490, %v5687
        %5720 = vst.msk [vmem:[%s371 + $0xa8] sm:$0xff] %vm490, %v5688
        %5721 = vst.msk [vmem:[%s371 + $0xb0] sm:$0xff] %vm490, %v5689
        %5722 = vst.msk [vmem:[%s371 + $0xb8] sm:$0xff] %vm490, %v5690
        %5723 = vst.msk [vmem:[%s371 + $0xc0] sm:$0xff] %vm490, %v5691
        %5724 = vst.msk [vmem:[%s371 + $0xc8] sm:$0xff] %vm490, %v5692
        %5725 = vst.msk [vmem:[%s371 + $0xd0] sm:$0xff] %vm490, %v5693
        %5726 = vst.msk [vmem:[%s371 + $0xd8] sm:$0xff] %vm490, %v5694
        %5727 = vst.msk [vmem:[%s371 + $0xe0] sm:$0xff] %vm490, %v5695
        %5728 = vst.msk [vmem:[%s371 + $0xe8] sm:$0xff] %vm490, %v5696
        %5729 = vst.msk [vmem:[%s371 + $0xf0] sm:$0xff] %vm490, %v5697
        %5730 = vst.msk [vmem:[%s371 + $0xf8] sm:$0xff] %vm490, %v5698
        %5731 = vst.msk [vmem:[%s385] sm:$0xff] %vm490, %v4834
        %5732 = vst.msk [vmem:[%s385 + $0x8] sm:$0xff] %vm490, %v4835
        %5733 = vst.msk [vmem:[%s385 + $0x10] sm:$0xff] %vm490, %v4836
        %5734 = vst.msk [vmem:[%s385 + $0x18] sm:$0xff] %vm490, %v4837
        %5735 = vst.msk [vmem:[%s385 + $0x20] sm:$0xff] %vm490, %v4838
        %5736 = vst.msk [vmem:[%s385 + $0x28] sm:$0xff] %vm490, %v4839
        %5737 = vst.msk [vmem:[%s385 + $0x30] sm:$0xff] %vm490, %v4840
        %5738 = vst.msk [vmem:[%s385 + $0x38] sm:$0xff] %vm490, %v4841
        %5739 = vst.msk [vmem:[%s385 + $0x40] sm:$0xff] %vm490, %v4842
        %5740 = vst.msk [vmem:[%s385 + $0x48] sm:$0xff] %vm490, %v4843
        %5741 = vst.msk [vmem:[%s385 + $0x50] sm:$0xff] %vm490, %v4844
        %5742 = vst.msk [vmem:[%s385 + $0x58] sm:$0xff] %vm490, %v4845
        %5743 = vst.msk [vmem:[%s385 + $0x60] sm:$0xff] %vm490, %v4846
        %5744 = vst.msk [vmem:[%s385 + $0x68] sm:$0xff] %vm490, %v4847
        %5745 = vst.msk [vmem:[%s385 + $0x70] sm:$0xff] %vm490, %v4848
        %5746 = vst.msk [vmem:[%s385 + $0x78] sm:$0xff] %vm490, %v4849
        %5747 = vst.msk [vmem:[%s385 + $0x80] sm:$0xff] %vm490, %v4850
        %5748 = vst.msk [vmem:[%s385 + $0x88] sm:$0xff] %vm490, %v4851
        %5749 = vst.msk [vmem:[%s385 + $0x90] sm:$0xff] %vm490, %v4852
        %5750 = vst.msk [vmem:[%s385 + $0x98] sm:$0xff] %vm490, %v4853
        %5751 = vst.msk [vmem:[%s385 + $0xa0] sm:$0xff] %vm490, %v4854
        %5752 = vst.msk [vmem:[%s385 + $0xa8] sm:$0xff] %vm490, %v4855
        %5753 = vst.msk [vmem:[%s385 + $0xb0] sm:$0xff] %vm490, %v4856
        %5754 = vst.msk [vmem:[%s385 + $0xb8] sm:$0xff] %vm490, %v4857
        %5755 = vst.msk [vmem:[%s385 + $0xc0] sm:$0xff] %vm490, %v4858
        %5756 = vst.msk [vmem:[%s385 + $0xc8] sm:$0xff] %vm490, %v4859
        %5757 = vst.msk [vmem:[%s385 + $0xd0] sm:$0xff] %vm490, %v4860
        %5758 = vst.msk [vmem:[%s385 + $0xd8] sm:$0xff] %vm490, %v4861
        %5759 = vst.msk [vmem:[%s385 + $0xe0] sm:$0xff] %vm490, %v4862
        %5760 = vst.msk [vmem:[%s385 + $0xe8] sm:$0xff] %vm490, %v4863
        %5761 = vst.msk [vmem:[%s385 + $0xf0] sm:$0xff] %vm490, %v4864
        %5762 = vst.msk [vmem:[%s385 + $0xf8] sm:$0xff] %vm490, %v4865
        %v5763 = vlaneseq
        %v5764 = vshrl.u32 %v5763, 7
        %v5765 = vsub.s32 %v2562, %v5764
        %v5766 = vrot.slane %v4677, %v5765
        %v5767 = vlaneseq
        %v5768 = vshrl.u32 %v5767, 7
        %v5769 = vsub.s32 %v2825, %v5768
        %v5770 = vrot.slane %v4682, %v5769
        %v5771 = vsel %vm2830, %v5770, %v5766
        %v5772 = vlaneseq
        %v5773 = vshrl.u32 %v5772, 7
        %v5774 = vsub.s32 %v2562, %v5773
        %v5775 = vrot.slane %v4687, %v5774
        %v5776 = vlaneseq
        %v5777 = vshrl.u32 %v5776, 7
        %v5778 = vsub.s32 %v2825, %v5777
        %v5779 = vrot.slane %v4692, %v5778
        %v5780 = vsel %vm2830, %v5779, %v5775
        %v5781 = vlaneseq
        %v5782 = vshrl.u32 %v5781, 7
        %v5783 = vsub.s32 %v2562, %v5782
        %v5784 = vrot.slane %v4697, %v5783
        %v5785 = vlaneseq
        %v5786 = vshrl.u32 %v5785, 7
        %v5787 = vsub.s32 %v2825, %v5786
        %v5788 = vrot.slane %v4702, %v5787
        %v5789 = vsel %vm2830, %v5788, %v5784
        %v5790 = vlaneseq
        %v5791 = vshrl.u32 %v5790, 7
        %v5792 = vsub.s32 %v2562, %v5791
        %v5793 = vrot.slane %v4707, %v5792
        %v5794 = vlaneseq
        %v5795 = vshrl.u32 %v5794, 7
        %v5796 = vsub.s32 %v2825, %v5795
        %v5797 = vrot.slane %v4712, %v5796
        %v5798 = vsel %vm2830, %v5797, %v5793
        %v5799 = vlaneseq
        %v5800 = vshrl.u32 %v5799, 7
        %v5801 = vsub.s32 %v2562, %v5800
        %v5802 = vrot.slane %v4717, %v5801
        %v5803 = vlaneseq
        %v5804 = vshrl.u32 %v5803, 7
        %v5805 = vsub.s32 %v2825, %v5804
        %v5806 = vrot.slane %v4722, %v5805
        %v5807 = vsel %vm2830, %v5806, %v5802
        %v5808 = vlaneseq
        %v5809 = vshrl.u32 %v5808, 7
        %v5810 = vsub.s32 %v2562, %v5809
        %v5811 = vrot.slane %v4727, %v5810
        %v5812 = vlaneseq
        %v5813 = vshrl.u32 %v5812, 7
        %v5814 = vsub.s32 %v2825, %v5813
        %v5815 = vrot.slane %v4732, %v5814
        %v5816 = vsel %vm2830, %v5815, %v5811
        %v5817 = vlaneseq
        %v5818 = vshrl.u32 %v5817, 7
        %v5819 = vsub.s32 %v2562, %v5818
        %v5820 = vrot.slane %v4737, %v5819
        %v5821 = vlaneseq
        %v5822 = vshrl.u32 %v5821, 7
        %v5823 = vsub.s32 %v2825, %v5822
        %v5824 = vrot.slane %v4742, %v5823
        %v5825 = vsel %vm2830, %v5824, %v5820
        %v5826 = vlaneseq
        %v5827 = vshrl.u32 %v5826, 7
        %v5828 = vsub.s32 %v2562, %v5827
        %v5829 = vrot.slane %v4747, %v5828
        %v5830 = vlaneseq
        %v5831 = vshrl.u32 %v5830, 7
        %v5832 = vsub.s32 %v2825, %v5831
        %v5833 = vrot.slane %v4752, %v5832
        %v5834 = vsel %vm2830, %v5833, %v5829
        %v5835 = vlaneseq
        %v5836 = vshrl.u32 %v5835, 7
        %v5837 = vsub.s32 %v2562, %v5836
        %v5838 = vrot.slane %v4757, %v5837
        %v5839 = vlaneseq
        %v5840 = vshrl.u32 %v5839, 7
        %v5841 = vsub.s32 %v2825, %v5840
        %v5842 = vrot.slane %v4762, %v5841
        %v5843 = vsel %vm2830, %v5842, %v5838
        %v5844 = vlaneseq
        %v5845 = vshrl.u32 %v5844, 7
        %v5846 = vsub.s32 %v2562, %v5845
        %v5847 = vrot.slane %v4767, %v5846
        %v5848 = vlaneseq
        %v5849 = vshrl.u32 %v5848, 7
        %v5850 = vsub.s32 %v2825, %v5849
        %v5851 = vrot.slane %v4772, %v5850
        %v5852 = vsel %vm2830, %v5851, %v5847
        %v5853 = vlaneseq
        %v5854 = vshrl.u32 %v5853, 7
        %v5855 = vsub.s32 %v2562, %v5854
        %v5856 = vrot.slane %v4777, %v5855
        %v5857 = vlaneseq
        %v5858 = vshrl.u32 %v5857, 7
        %v5859 = vsub.s32 %v2825, %v5858
        %v5860 = vrot.slane %v4782, %v5859
        %v5861 = vsel %vm2830, %v5860, %v5856
        %v5862 = vlaneseq
        %v5863 = vshrl.u32 %v5862, 7
        %v5864 = vsub.s32 %v2562, %v5863
        %v5865 = vrot.slane %v4787, %v5864
        %v5866 = vlaneseq
        %v5867 = vshrl.u32 %v5866, 7
        %v5868 = vsub.s32 %v2825, %v5867
        %v5869 = vrot.slane %v4792, %v5868
        %v5870 = vsel %vm2830, %v5869, %v5865
        %v5871 = vlaneseq
        %v5872 = vshrl.u32 %v5871, 7
        %v5873 = vsub.s32 %v2562, %v5872
        %v5874 = vrot.slane %v4797, %v5873
        %v5875 = vlaneseq
        %v5876 = vshrl.u32 %v5875, 7
        %v5877 = vsub.s32 %v2825, %v5876
        %v5878 = vrot.slane %v4802, %v5877
        %v5879 = vsel %vm2830, %v5878, %v5874
        %v5880 = vlaneseq
        %v5881 = vshrl.u32 %v5880, 7
        %v5882 = vsub.s32 %v2562, %v5881
        %v5883 = vrot.slane %v4807, %v5882
        %v5884 = vlaneseq
        %v5885 = vshrl.u32 %v5884, 7
        %v5886 = vsub.s32 %v2825, %v5885
        %v5887 = vrot.slane %v4812, %v5886
        %v5888 = vsel %vm2830, %v5887, %v5883
        %v5889 = vlaneseq
        %v5890 = vshrl.u32 %v5889, 7
        %v5891 = vsub.s32 %v2562, %v5890
        %v5892 = vrot.slane %v4817, %v5891
        %v5893 = vlaneseq
        %v5894 = vshrl.u32 %v5893, 7
        %v5895 = vsub.s32 %v2825, %v5894
        %v5896 = vrot.slane %v4822, %v5895
        %v5897 = vsel %vm2830, %v5896, %v5892
        %v5898 = vlaneseq
        %v5899 = vshrl.u32 %v5898, 7
        %v5900 = vsub.s32 %v2562, %v5899
        %v5901 = vrot.slane %v4827, %v5900
        %v5902 = vlaneseq
        %v5903 = vshrl.u32 %v5902, 7
        %v5904 = vsub.s32 %v2825, %v5903
        %v5905 = vrot.slane %v4832, %v5904
        %v5906 = vsel %vm2830, %v5905, %v5901
        %v5907 = vsel %vm2967, %v5780, %v5771
        %v5908 = vsel %vm2969, %v5789, %v5907
        %v5909 = vsel %vm2971, %v5798, %v5908
        %v5910 = vsel %vm2973, %v5807, %v5909
        %v5911 = vsel %vm2975, %v5816, %v5910
        %v5912 = vsel %vm2977, %v5825, %v5911
        %v5913 = vsel %vm2979, %v5834, %v5912
        %v5914 = vsel %vm2967, %v5852, %v5843
        %v5915 = vsel %vm2969, %v5861, %v5914
        %v5916 = vsel %vm2971, %v5870, %v5915
        %v5917 = vsel %vm2973, %v5879, %v5916
        %v5918 = vsel %vm2975, %v5888, %v5917
        %v5919 = vsel %vm2977, %v5897, %v5918
        %v5920 = vsel %vm2979, %v5906, %v5919
        %5923 = vxpose.xlu0.b32.start [1/16] %v5913, 128
        %5924 = vxpose.xlu0.b32.cont [2/16] %v5920, 128
        %5925 = vxpose.xlu0.b32.cont [3/16] 0.0, 128
        %5926 = vxpose.xlu0.b32.cont [4/16] 0.0, 128
        %5927 = vxpose.xlu0.b32.cont [5/16] 0.0, 128
        %5928 = vxpose.xlu0.b32.cont [6/16] 0.0, 128
        %5929 = vxpose.xlu0.b32.cont [7/16] 0.0, 128
        %5930 = vxpose.xlu0.b32.cont [8/16] 0.0, 128
        %5931 = vxpose.xlu0.b32.cont [9/16] 0.0, 128
        %5932 = vxpose.xlu0.b32.cont [10/16] 0.0, 128
        %5933 = vxpose.xlu0.b32.cont [11/16] 0.0, 128
        %5934 = vxpose.xlu0.b32.cont [12/16] 0.0, 128
        %5935 = vxpose.xlu0.b32.cont [13/16] 0.0, 128
        %5936 = vxpose.xlu0.b32.cont [14/16] 0.0, 128
        %5937 = vxpose.xlu0.b32.cont [15/16] 0.0, 128
        %5938 = vxpose.xlu0.b32.end [16/16] 0.0, 128
        %v5939 = vpop.trf.xlu0
        %v5940 = vpop.trf.xlu0
        %v5941 = vpop.trf.xlu0
        %v5942 = vpop.trf.xlu0
        %v5943 = vpop.trf.xlu0
        %v5944 = vpop.trf.xlu0
        %v5945 = vpop.trf.xlu0
        %v5946 = vpop.trf.xlu0
        %v5947 = vpop.trf.xlu0
        %v5948 = vpop.trf.xlu0
        %v5949 = vpop.trf.xlu0
        %v5950 = vpop.trf.xlu0
        %v5951 = vpop.trf.xlu0
        %v5952 = vpop.trf.xlu0
        %v5953 = vpop.trf.xlu0
        %v5954 = vpop.trf.xlu0
        %v5955 = vlaneseq
        %v5956 = vshrl.u32 %v5955, 7
        %v5957 = vsub.s32 0, %v5956
        %v5958 = vrot.slane %v5939, %v5957
        %5960 = vbcast.lane.b32.xlu0 %v5958, 256
        %v5961 = vpop.permute.xlu0 %5960
        %s5963 = sor.u32 256, 8
        %5964 = vbcast.lane.b32.xlu0 %v5958, %s5963
        %v5965 = vpop.permute.xlu0 %5964
        %v5966 = vlaneseq
        %v5967 = vshrl.u32 %v5966, 7
        %v5968 = vsub.s32 1, %v5967
        %v5969 = vrot.slane %v5939, %v5968
        %5971 = vbcast.lane.b32.xlu0 %v5969, 256
        %v5972 = vpop.permute.xlu0 %5971
        %s5974 = sor.u32 256, 8
        %5975 = vbcast.lane.b32.xlu0 %v5969, %s5974
        %v5976 = vpop.permute.xlu0 %5975
        %v5977 = vlaneseq
        %v5978 = vshrl.u32 %v5977, 7
        %v5979 = vsub.s32 2, %v5978
        %v5980 = vrot.slane %v5939, %v5979
        %5982 = vbcast.lane.b32.xlu0 %v5980, 256
        %v5983 = vpop.permute.xlu0 %5982
        %s5985 = sor.u32 256, 8
        %5986 = vbcast.lane.b32.xlu0 %v5980, %s5985
        %v5987 = vpop.permute.xlu0 %5986
        %v5988 = vlaneseq
        %v5989 = vshrl.u32 %v5988, 7
        %v5990 = vsub.s32 3, %v5989
        %v5991 = vrot.slane %v5939, %v5990
        %5993 = vbcast.lane.b32.xlu0 %v5991, 256
        %v5994 = vpop.permute.xlu0 %5993
        %s5996 = sor.u32 256, 8
        %5997 = vbcast.lane.b32.xlu0 %v5991, %s5996
        %v5998 = vpop.permute.xlu0 %5997
        %v5999 = vlaneseq
        %v6000 = vshrl.u32 %v5999, 7
        %v6001 = vsub.s32 4, %v6000
        %v6002 = vrot.slane %v5939, %v6001
        %6004 = vbcast.lane.b32.xlu0 %v6002, 256
        %v6005 = vpop.permute.xlu0 %6004
        %s6007 = sor.u32 256, 8
        %6008 = vbcast.lane.b32.xlu0 %v6002, %s6007
        %v6009 = vpop.permute.xlu0 %6008
        %v6010 = vlaneseq
        %v6011 = vshrl.u32 %v6010, 7
        %v6012 = vsub.s32 5, %v6011
        %v6013 = vrot.slane %v5939, %v6012
        %6015 = vbcast.lane.b32.xlu0 %v6013, 256
        %v6016 = vpop.permute.xlu0 %6015
        %s6018 = sor.u32 256, 8
        %6019 = vbcast.lane.b32.xlu0 %v6013, %s6018
        %v6020 = vpop.permute.xlu0 %6019
        %v6021 = vlaneseq
        %v6022 = vshrl.u32 %v6021, 7
        %v6023 = vsub.s32 6, %v6022
        %v6024 = vrot.slane %v5939, %v6023
        %6026 = vbcast.lane.b32.xlu0 %v6024, 256
        %v6027 = vpop.permute.xlu0 %6026
        %s6029 = sor.u32 256, 8
        %6030 = vbcast.lane.b32.xlu0 %v6024, %s6029
        %v6031 = vpop.permute.xlu0 %6030
        %v6032 = vlaneseq
        %v6033 = vshrl.u32 %v6032, 7
        %v6034 = vsub.s32 7, %v6033
        %v6035 = vrot.slane %v5939, %v6034
        %6037 = vbcast.lane.b32.xlu0 %v6035, 256
        %v6038 = vpop.permute.xlu0 %6037
        %s6040 = sor.u32 256, 8
        %6041 = vbcast.lane.b32.xlu0 %v6035, %s6040
        %v6042 = vpop.permute.xlu0 %6041
        %v6043 = vlaneseq
        %v6044 = vshrl.u32 %v6043, 7
        %v6045 = vsub.s32 0, %v6044
        %v6046 = vrot.slane %v5940, %v6045
        %6048 = vbcast.lane.b32.xlu0 %v6046, 256
        %v6049 = vpop.permute.xlu0 %6048
        %s6051 = sor.u32 256, 8
        %6052 = vbcast.lane.b32.xlu0 %v6046, %s6051
        %v6053 = vpop.permute.xlu0 %6052
        %v6054 = vlaneseq
        %v6055 = vshrl.u32 %v6054, 7
        %v6056 = vsub.s32 1, %v6055
        %v6057 = vrot.slane %v5940, %v6056
        %6059 = vbcast.lane.b32.xlu0 %v6057, 256
        %v6060 = vpop.permute.xlu0 %6059
        %s6062 = sor.u32 256, 8
        %6063 = vbcast.lane.b32.xlu0 %v6057, %s6062
        %v6064 = vpop.permute.xlu0 %6063
        %v6065 = vlaneseq
        %v6066 = vshrl.u32 %v6065, 7
        %v6067 = vsub.s32 2, %v6066
        %v6068 = vrot.slane %v5940, %v6067
        %6070 = vbcast.lane.b32.xlu0 %v6068, 256
        %v6071 = vpop.permute.xlu0 %6070
        %s6073 = sor.u32 256, 8
        %6074 = vbcast.lane.b32.xlu0 %v6068, %s6073
        %v6075 = vpop.permute.xlu0 %6074
        %v6076 = vlaneseq
        %v6077 = vshrl.u32 %v6076, 7
        %v6078 = vsub.s32 3, %v6077
        %v6079 = vrot.slane %v5940, %v6078
        %6081 = vbcast.lane.b32.xlu0 %v6079, 256
        %v6082 = vpop.permute.xlu0 %6081
        %s6084 = sor.u32 256, 8
        %6085 = vbcast.lane.b32.xlu0 %v6079, %s6084
        %v6086 = vpop.permute.xlu0 %6085
        %v6087 = vlaneseq
        %v6088 = vshrl.u32 %v6087, 7
        %v6089 = vsub.s32 4, %v6088
        %v6090 = vrot.slane %v5940, %v6089
        %6092 = vbcast.lane.b32.xlu0 %v6090, 256
        %v6093 = vpop.permute.xlu0 %6092
        %s6095 = sor.u32 256, 8
        %6096 = vbcast.lane.b32.xlu0 %v6090, %s6095
        %v6097 = vpop.permute.xlu0 %6096
        %v6098 = vlaneseq
        %v6099 = vshrl.u32 %v6098, 7
        %v6100 = vsub.s32 5, %v6099
        %v6101 = vrot.slane %v5940, %v6100
        %6103 = vbcast.lane.b32.xlu0 %v6101, 256
        %v6104 = vpop.permute.xlu0 %6103
        %s6106 = sor.u32 256, 8
        %6107 = vbcast.lane.b32.xlu0 %v6101, %s6106
        %v6108 = vpop.permute.xlu0 %6107
        %v6109 = vlaneseq
        %v6110 = vshrl.u32 %v6109, 7
        %v6111 = vsub.s32 6, %v6110
        %v6112 = vrot.slane %v5940, %v6111
        %6114 = vbcast.lane.b32.xlu0 %v6112, 256
        %v6115 = vpop.permute.xlu0 %6114
        %s6117 = sor.u32 256, 8
        %6118 = vbcast.lane.b32.xlu0 %v6112, %s6117
        %v6119 = vpop.permute.xlu0 %6118
        %v6120 = vlaneseq
        %v6121 = vshrl.u32 %v6120, 7
        %v6122 = vsub.s32 7, %v6121
        %v6123 = vrot.slane %v5940, %v6122
        %6125 = vbcast.lane.b32.xlu0 %v6123, 256
        %v6126 = vpop.permute.xlu0 %6125
        %s6128 = sor.u32 256, 8
        %6129 = vbcast.lane.b32.xlu0 %v6123, %s6128
        %v6130 = vpop.permute.xlu0 %6129
        %v6131 = vmul.f32 %v4017, %v5961
        %v6132 = vmul.f32 %v4019, %v5965
        %v6133 = vmul.f32 %v4021, %v5972
        %v6134 = vmul.f32 %v4023, %v5976
        %v6135 = vmul.f32 %v4025, %v5983
        %v6136 = vmul.f32 %v4027, %v5987
        %v6137 = vmul.f32 %v4029, %v5994
        %v6138 = vmul.f32 %v4031, %v5998
        %v6139 = vmul.f32 %v4033, %v6005
        %v6140 = vmul.f32 %v4035, %v6009
        %v6141 = vmul.f32 %v4037, %v6016
        %v6142 = vmul.f32 %v4039, %v6020
        %v6143 = vmul.f32 %v4041, %v6027
        %v6144 = vmul.f32 %v4043, %v6031
        %v6145 = vmul.f32 %v4045, %v6038
        %v6146 = vmul.f32 %v4047, %v6042
        %v6147 = vmul.f32 %v4049, %v6049
        %v6148 = vmul.f32 %v4051, %v6053
        %v6149 = vmul.f32 %v4053, %v6060
        %v6150 = vmul.f32 %v4055, %v6064
        %v6151 = vmul.f32 %v4057, %v6071
        %v6152 = vmul.f32 %v4059, %v6075
        %v6153 = vmul.f32 %v4061, %v6082
        %v6154 = vmul.f32 %v4063, %v6086
        %v6155 = vmul.f32 %v4065, %v6093
        %v6156 = vmul.f32 %v4067, %v6097
        %v6157 = vmul.f32 %v4069, %v6104
        %v6158 = vmul.f32 %v4071, %v6108
        %v6159 = vmul.f32 %v4073, %v6115
        %v6160 = vmul.f32 %v4075, %v6119
        %v6161 = vmul.f32 %v4077, %v6126
        %v6162 = vmul.f32 %v4079, %v6130
        %v6163 = vpack.c.bf16 %v6132, %v6131
        %v6164 = vpack.c.bf16 %v6134, %v6133
        %v6165 = vpack.c.bf16 %v6136, %v6135
        %v6166 = vpack.c.bf16 %v6138, %v6137
        %v6167 = vpack.c.bf16 %v6140, %v6139
        %v6168 = vpack.c.bf16 %v6142, %v6141
        %v6169 = vpack.c.bf16 %v6144, %v6143
        %v6170 = vpack.c.bf16 %v6146, %v6145
        %v6171 = vpack.c.bf16 %v6148, %v6147
        %v6172 = vpack.c.bf16 %v6150, %v6149
        %v6173 = vpack.c.bf16 %v6152, %v6151
        %v6174 = vpack.c.bf16 %v6154, %v6153
        %v6175 = vpack.c.bf16 %v6156, %v6155
        %v6176 = vpack.c.bf16 %v6158, %v6157
        %v6177 = vpack.c.bf16 %v6160, %v6159
        %v6178 = vpack.c.bf16 %v6162, %v6161
        %6179 = vrot.lane.b32.xlu0 %v941, 124
        %v6180 = vpop.permute.xlu0 %6179
        %v6183 = vsel %vm490, %v6163, 0
        %6185 = vmatprep.subr.bf16.mxu0 0
        %6186 = vmatpush1.bf16.msra.mxu0 %v6180
        %6187 = vmatprep.subr.bf16.mxu0 0
        %6188 = vmatpush1.bf16.msra.mxu0 0
        %6189 = vmatprep.subr.bf16.mxu0 0
        %6190 = vmatpush1.bf16.msra.mxu0 0
        %6191 = vmatprep.subr.bf16.mxu0 0
        %6192 = vmatpush1.bf16.msra.mxu0 0
        %6193 = vmatprep.subr.bf16.mxu0 0
        %6194 = vmatpush1.bf16.msra.mxu0 0
        %6195 = vmatprep.subr.bf16.mxu0 0
        %6196 = vmatpush1.bf16.msra.mxu0 0
        %6197 = vmatprep.subr.bf16.mxu0 0
        %6198 = vmatpush1.bf16.msra.mxu0 0
        %6199 = vmatprep.subr.bf16.mxu0 0
        %6200 = vmatpush1.bf16.msra.mxu0 0
        %6201 = vmatprep.subr.bf16.mxu0 0
        %6202 = vmatpush1.bf16.msra.mxu0 0
        %6203 = vmatprep.subr.bf16.mxu0 0
        %6204 = vmatpush1.bf16.msra.mxu0 0
        %6205 = vmatprep.subr.bf16.mxu0 0
        %6206 = vmatpush1.bf16.msra.mxu0 0
        %6207 = vmatprep.subr.bf16.mxu0 0
        %6208 = vmatpush1.bf16.msra.mxu0 0
        %6209 = vmatprep.subr.bf16.mxu0 0
        %6210 = vmatpush1.bf16.msra.mxu0 0
        %6211 = vmatprep.subr.bf16.mxu0 0
        %6212 = vmatpush1.bf16.msra.mxu0 0
        %6213 = vmatprep.subr.bf16.mxu0 0
        %6214 = vmatpush1.bf16.msra.mxu0 0
        %6215 = vmatprep.subr.bf16.mxu0 0
        %6216 = vmatpush1.bf16.msra.mxu0 0
        %6217 = vmatprep.mubr.bf16.mxu0 0
        %6218 = vmatmul.mubr.bf16.gmra.mrb[0].mxu0 %v6183
        %v6219 = vpop.f32.mrb[0].mxu0
        %v6220 = vadd.f32 0.0, %v6219
        %v6221 = vpop.f32.mrb[0].mxu0
        %v6222 = vpop.f32.mrb[0].mxu0
        %v6223 = vadd.f32 0.0, %v6222
        %v6224 = vpop.f32.mrb[0].mxu0
        %6225 = vdwg.mxu0
        %6226 = vrot.lane.b32.xlu0 %v942, 124
        %v6227 = vpop.permute.xlu0 %6226
        %v6230 = vsel %vm490, %v6164, 0
        %6232 = vmatprep.subr.bf16.mxu0 0
        %6233 = vmatpush1.bf16.msra.mxu0 %v6227
        %6234 = vmatprep.subr.bf16.mxu0 0
        %6235 = vmatpush1.bf16.msra.mxu0 0
        %6236 = vmatprep.subr.bf16.mxu0 0
        %6237 = vmatpush1.bf16.msra.mxu0 0
        %6238 = vmatprep.subr.bf16.mxu0 0
        %6239 = vmatpush1.bf16.msra.mxu0 0
        %6240 = vmatprep.subr.bf16.mxu0 0
        %6241 = vmatpush1.bf16.msra.mxu0 0
        %6242 = vmatprep.subr.bf16.mxu0 0
        %6243 = vmatpush1.bf16.msra.mxu0 0
        %6244 = vmatprep.subr.bf16.mxu0 0
        %6245 = vmatpush1.bf16.msra.mxu0 0
        %6246 = vmatprep.subr.bf16.mxu0 0
        %6247 = vmatpush1.bf16.msra.mxu0 0
        %6248 = vmatprep.subr.bf16.mxu0 0
        %6249 = vmatpush1.bf16.msra.mxu0 0
        %6250 = vmatprep.subr.bf16.mxu0 0
        %6251 = vmatpush1.bf16.msra.mxu0 0
        %6252 = vmatprep.subr.bf16.mxu0 0
        %6253 = vmatpush1.bf16.msra.mxu0 0
        %6254 = vmatprep.subr.bf16.mxu0 0
        %6255 = vmatpush1.bf16.msra.mxu0 0
        %6256 = vmatprep.subr.bf16.mxu0 0
        %6257 = vmatpush1.bf16.msra.mxu0 0
        %6258 = vmatprep.subr.bf16.mxu0 0
        %6259 = vmatpush1.bf16.msra.mxu0 0
        %6260 = vmatprep.subr.bf16.mxu0 0
        %6261 = vmatpush1.bf16.msra.mxu0 0
        %6262 = vmatprep.subr.bf16.mxu0 0
        %6263 = vmatpush1.bf16.msra.mxu0 0
        %6264 = vmatprep.mubr.bf16.mxu0 0
        %6265 = vmatmul.mubr.bf16.gmra.mrb[0].mxu0 %v6230
        %v6266 = vpop.f32.mrb[0].mxu0
        %v6267 = vadd.f32 0.0, %v6266
        %v6268 = vpop.f32.mrb[0].mxu0
        %v6269 = vpop.f32.mrb[0].mxu0
        %v6270 = vadd.f32 0.0, %v6269
        %v6271 = vpop.f32.mrb[0].mxu0
        %6272 = vdwg.mxu0
        %6273 = vrot.lane.b32.xlu0 %v943, 124
        %v6274 = vpop.permute.xlu0 %6273
        %v6277 = vsel %vm490, %v6165, 0
        %6279 = vmatprep.subr.bf16.mxu0 0
        %6280 = vmatpush1.bf16.msra.mxu0 %v6274
        %6281 = vmatprep.subr.bf16.mxu0 0
        %6282 = vmatpush1.bf16.msra.mxu0 0
        %6283 = vmatprep.subr.bf16.mxu0 0
        %6284 = vmatpush1.bf16.msra.mxu0 0
        %6285 = vmatprep.subr.bf16.mxu0 0
        %6286 = vmatpush1.bf16.msra.mxu0 0
        %6287 = vmatprep.subr.bf16.mxu0 0
        %6288 = vmatpush1.bf16.msra.mxu0 0
        %6289 = vmatprep.subr.bf16.mxu0 0
        %6290 = vmatpush1.bf16.msra.mxu0 0
        %6291 = vmatprep.subr.bf16.mxu0 0
        %6292 = vmatpush1.bf16.msra.mxu0 0
        %6293 = vmatprep.subr.bf16.mxu0 0
        %6294 = vmatpush1.bf16.msra.mxu0 0
        %6295 = vmatprep.subr.bf16.mxu0 0
        %6296 = vmatpush1.bf16.msra.mxu0 0
        %6297 = vmatprep.subr.bf16.mxu0 0
        %6298 = vmatpush1.bf16.msra.mxu0 0
        %6299 = vmatprep.subr.bf16.mxu0 0
        %6300 = vmatpush1.bf16.msra.mxu0 0
        %6301 = vmatprep.subr.bf16.mxu0 0
        %6302 = vmatpush1.bf16.msra.mxu0 0
        %6303 = vmatprep.subr.bf16.mxu0 0
        %6304 = vmatpush1.bf16.msra.mxu0 0
        %6305 = vmatprep.subr.bf16.mxu0 0
        %6306 = vmatpush1.bf16.msra.mxu0 0
        %6307 = vmatprep.subr.bf16.mxu0 0
        %6308 = vmatpush1.bf16.msra.mxu0 0
        %6309 = vmatprep.subr.bf16.mxu0 0
        %6310 = vmatpush1.bf16.msra.mxu0 0
        %6311 = vmatprep.mubr.bf16.mxu0 0
        %6312 = vmatmul.mubr.bf16.gmra.mrb[0].mxu0 %v6277
        %v6313 = vpop.f32.mrb[0].mxu0
        %v6314 = vadd.f32 0.0, %v6313
        %v6315 = vpop.f32.mrb[0].mxu0
        %v6316 = vpop.f32.mrb[0].mxu0
        %v6317 = vadd.f32 0.0, %v6316
        %v6318 = vpop.f32.mrb[0].mxu0
        %6319 = vdwg.mxu0
        %6320 = vrot.lane.b32.xlu0 %v944, 124
        %v6321 = vpop.permute.xlu0 %6320
        %v6324 = vsel %vm490, %v6166, 0
        %6326 = vmatprep.subr.bf16.mxu0 0
        %6327 = vmatpush1.bf16.msra.mxu0 %v6321
        %6328 = vmatprep.subr.bf16.mxu0 0
        %6329 = vmatpush1.bf16.msra.mxu0 0
        %6330 = vmatprep.subr.bf16.mxu0 0
        %6331 = vmatpush1.bf16.msra.mxu0 0
        %6332 = vmatprep.subr.bf16.mxu0 0
        %6333 = vmatpush1.bf16.msra.mxu0 0
        %6334 = vmatprep.subr.bf16.mxu0 0
        %6335 = vmatpush1.bf16.msra.mxu0 0
        %6336 = vmatprep.subr.bf16.mxu0 0
        %6337 = vmatpush1.bf16.msra.mxu0 0
        %6338 = vmatprep.subr.bf16.mxu0 0
        %6339 = vmatpush1.bf16.msra.mxu0 0
        %6340 = vmatprep.subr.bf16.mxu0 0
        %6341 = vmatpush1.bf16.msra.mxu0 0
        %6342 = vmatprep.subr.bf16.mxu0 0
        %6343 = vmatpush1.bf16.msra.mxu0 0
        %6344 = vmatprep.subr.bf16.mxu0 0
        %6345 = vmatpush1.bf16.msra.mxu0 0
        %6346 = vmatprep.subr.bf16.mxu0 0
        %6347 = vmatpush1.bf16.msra.mxu0 0
        %6348 = vmatprep.subr.bf16.mxu0 0
        %6349 = vmatpush1.bf16.msra.mxu0 0
        %6350 = vmatprep.subr.bf16.mxu0 0
        %6351 = vmatpush1.bf16.msra.mxu0 0
        %6352 = vmatprep.subr.bf16.mxu0 0
        %6353 = vmatpush1.bf16.msra.mxu0 0
        %6354 = vmatprep.subr.bf16.mxu0 0
        %6355 = vmatpush1.bf16.msra.mxu0 0
        %6356 = vmatprep.subr.bf16.mxu0 0
        %6357 = vmatpush1.bf16.msra.mxu0 0
        %6358 = vmatprep.mubr.bf16.mxu0 0
        %6359 = vmatmul.mubr.bf16.gmra.mrb[0].mxu0 %v6324
        %v6360 = vpop.f32.mrb[0].mxu0
        %v6361 = vadd.f32 0.0, %v6360
        %v6362 = vpop.f32.mrb[0].mxu0
        %v6363 = vpop.f32.mrb[0].mxu0
        %v6364 = vadd.f32 0.0, %v6363
        %v6365 = vpop.f32.mrb[0].mxu0
        %6366 = vdwg.mxu0
        %6367 = vrot.lane.b32.xlu0 %v945, 124
        %v6368 = vpop.permute.xlu0 %6367
        %v6371 = vsel %vm490, %v6167, 0
        %6373 = vmatprep.subr.bf16.mxu0 0
        %6374 = vmatpush1.bf16.msra.mxu0 %v6368
        %6375 = vmatprep.subr.bf16.mxu0 0
        %6376 = vmatpush1.bf16.msra.mxu0 0
        %6377 = vmatprep.subr.bf16.mxu0 0
        %6378 = vmatpush1.bf16.msra.mxu0 0
        %6379 = vmatprep.subr.bf16.mxu0 0
        %6380 = vmatpush1.bf16.msra.mxu0 0
        %6381 = vmatprep.subr.bf16.mxu0 0
        %6382 = vmatpush1.bf16.msra.mxu0 0
        %6383 = vmatprep.subr.bf16.mxu0 0
        %6384 = vmatpush1.bf16.msra.mxu0 0
        %6385 = vmatprep.subr.bf16.mxu0 0
        %6386 = vmatpush1.bf16.msra.mxu0 0
        %6387 = vmatprep.subr.bf16.mxu0 0
        %6388 = vmatpush1.bf16.msra.mxu0 0
        %6389 = vmatprep.subr.bf16.mxu0 0
        %6390 = vmatpush1.bf16.msra.mxu0 0
        %6391 = vmatprep.subr.bf16.mxu0 0
        %6392 = vmatpush1.bf16.msra.mxu0 0
        %6393 = vmatprep.subr.bf16.mxu0 0
        %6394 = vmatpush1.bf16.msra.mxu0 0
        %6395 = vmatprep.subr.bf16.mxu0 0
        %6396 = vmatpush1.bf16.msra.mxu0 0
        %6397 = vmatprep.subr.bf16.mxu0 0
        %6398 = vmatpush1.bf16.msra.mxu0 0
        %6399 = vmatprep.subr.bf16.mxu0 0
        %6400 = vmatpush1.bf16.msra.mxu0 0
        %6401 = vmatprep.subr.bf16.mxu0 0
        %6402 = vmatpush1.bf16.msra.mxu0 0
        %6403 = vmatprep.subr.bf16.mxu0 0
        %6404 = vmatpush1.bf16.msra.mxu0 0
        %6405 = vmatprep.mubr.bf16.mxu0 0
        %6406 = vmatmul.mubr.bf16.gmra.mrb[0].mxu0 %v6371
        %v6407 = vpop.f32.mrb[0].mxu0
        %v6408 = vadd.f32 0.0, %v6407
        %v6409 = vpop.f32.mrb[0].mxu0
        %v6410 = vpop.f32.mrb[0].mxu0
        %v6411 = vadd.f32 0.0, %v6410
        %v6412 = vpop.f32.mrb[0].mxu0
        %6413 = vdwg.mxu0
        %6414 = vrot.lane.b32.xlu0 %v946, 124
        %v6415 = vpop.permute.xlu0 %6414
        %v6418 = vsel %vm490, %v6168, 0
        %6420 = vmatprep.subr.bf16.mxu0 0
        %6421 = vmatpush1.bf16.msra.mxu0 %v6415
        %6422 = vmatprep.subr.bf16.mxu0 0
        %6423 = vmatpush1.bf16.msra.mxu0 0
        %6424 = vmatprep.subr.bf16.mxu0 0
        %6425 = vmatpush1.bf16.msra.mxu0 0
        %6426 = vmatprep.subr.bf16.mxu0 0
        %6427 = vmatpush1.bf16.msra.mxu0 0
        %6428 = vmatprep.subr.bf16.mxu0 0
        %6429 = vmatpush1.bf16.msra.mxu0 0
        %6430 = vmatprep.subr.bf16.mxu0 0
        %6431 = vmatpush1.bf16.msra.mxu0 0
        %6432 = vmatprep.subr.bf16.mxu0 0
        %6433 = vmatpush1.bf16.msra.mxu0 0
        %6434 = vmatprep.subr.bf16.mxu0 0
        %6435 = vmatpush1.bf16.msra.mxu0 0
        %6436 = vmatprep.subr.bf16.mxu0 0
        %6437 = vmatpush1.bf16.msra.mxu0 0
        %6438 = vmatprep.subr.bf16.mxu0 0
        %6439 = vmatpush1.bf16.msra.mxu0 0
        %6440 = vmatprep.subr.bf16.mxu0 0
        %6441 = vmatpush1.bf16.msra.mxu0 0
        %6442 = vmatprep.subr.bf16.mxu0 0
        %6443 = vmatpush1.bf16.msra.mxu0 0
        %6444 = vmatprep.subr.bf16.mxu0 0
        %6445 = vmatpush1.bf16.msra.mxu0 0
        %6446 = vmatprep.subr.bf16.mxu0 0
        %6447 = vmatpush1.bf16.msra.mxu0 0
        %6448 = vmatprep.subr.bf16.mxu0 0
        %6449 = vmatpush1.bf16.msra.mxu0 0
        %6450 = vmatprep.subr.bf16.mxu0 0
        %6451 = vmatpush1.bf16.msra.mxu0 0
        %6452 = vmatprep.mubr.bf16.mxu0 0
        %6453 = vmatmul.mubr.bf16.gmra.mrb[0].mxu0 %v6418
        %v6454 = vpop.f32.mrb[0].mxu0
        %v6455 = vadd.f32 0.0, %v6454
        %v6456 = vpop.f32.mrb[0].mxu0
        %v6457 = vpop.f32.mrb[0].mxu0
        %v6458 = vadd.f32 0.0, %v6457
        %v6459 = vpop.f32.mrb[0].mxu0
        %6460 = vdwg.mxu0
        %6461 = vrot.lane.b32.xlu0 %v947, 124
        %v6462 = vpop.permute.xlu0 %6461
        %v6465 = vsel %vm490, %v6169, 0
        %6467 = vmatprep.subr.bf16.mxu0 0
        %6468 = vmatpush1.bf16.msra.mxu0 %v6462
        %6469 = vmatprep.subr.bf16.mxu0 0
        %6470 = vmatpush1.bf16.msra.mxu0 0
        %6471 = vmatprep.subr.bf16.mxu0 0
        %6472 = vmatpush1.bf16.msra.mxu0 0
        %6473 = vmatprep.subr.bf16.mxu0 0
        %6474 = vmatpush1.bf16.msra.mxu0 0
        %6475 = vmatprep.subr.bf16.mxu0 0
        %6476 = vmatpush1.bf16.msra.mxu0 0
        %6477 = vmatprep.subr.bf16.mxu0 0
        %6478 = vmatpush1.bf16.msra.mxu0 0
        %6479 = vmatprep.subr.bf16.mxu0 0
        %6480 = vmatpush1.bf16.msra.mxu0 0
        %6481 = vmatprep.subr.bf16.mxu0 0
        %6482 = vmatpush1.bf16.msra.mxu0 0
        %6483 = vmatprep.subr.bf16.mxu0 0
        %6484 = vmatpush1.bf16.msra.mxu0 0
        %6485 = vmatprep.subr.bf16.mxu0 0
        %6486 = vmatpush1.bf16.msra.mxu0 0
        %6487 = vmatprep.subr.bf16.mxu0 0
        %6488 = vmatpush1.bf16.msra.mxu0 0
        %6489 = vmatprep.subr.bf16.mxu0 0
        %6490 = vmatpush1.bf16.msra.mxu0 0
        %6491 = vmatprep.subr.bf16.mxu0 0
        %6492 = vmatpush1.bf16.msra.mxu0 0
        %6493 = vmatprep.subr.bf16.mxu0 0
        %6494 = vmatpush1.bf16.msra.mxu0 0
        %6495 = vmatprep.subr.bf16.mxu0 0
        %6496 = vmatpush1.bf16.msra.mxu0 0
        %6497 = vmatprep.subr.bf16.mxu0 0
        %6498 = vmatpush1.bf16.msra.mxu0 0
        %6499 = vmatprep.mubr.bf16.mxu0 0
        %6500 = vmatmul.mubr.bf16.gmra.mrb[0].mxu0 %v6465
        %v6501 = vpop.f32.mrb[0].mxu0
        %v6502 = vadd.f32 0.0, %v6501
        %v6503 = vpop.f32.mrb[0].mxu0
        %v6504 = vpop.f32.mrb[0].mxu0
        %v6505 = vadd.f32 0.0, %v6504
        %v6506 = vpop.f32.mrb[0].mxu0
        %6507 = vdwg.mxu0
        %6508 = vrot.lane.b32.xlu0 %v948, 124
        %v6509 = vpop.permute.xlu0 %6508
        %v6512 = vsel %vm490, %v6170, 0
        %6514 = vmatprep.subr.bf16.mxu0 0
        %6515 = vmatpush1.bf16.msra.mxu0 %v6509
        %6516 = vmatprep.subr.bf16.mxu0 0
        %6517 = vmatpush1.bf16.msra.mxu0 0
        %6518 = vmatprep.subr.bf16.mxu0 0
        %6519 = vmatpush1.bf16.msra.mxu0 0
        %6520 = vmatprep.subr.bf16.mxu0 0
        %6521 = vmatpush1.bf16.msra.mxu0 0
        %6522 = vmatprep.subr.bf16.mxu0 0
        %6523 = vmatpush1.bf16.msra.mxu0 0
        %6524 = vmatprep.subr.bf16.mxu0 0
        %6525 = vmatpush1.bf16.msra.mxu0 0
        %6526 = vmatprep.subr.bf16.mxu0 0
        %6527 = vmatpush1.bf16.msra.mxu0 0
        %6528 = vmatprep.subr.bf16.mxu0 0
        %6529 = vmatpush1.bf16.msra.mxu0 0
        %6530 = vmatprep.subr.bf16.mxu0 0
        %6531 = vmatpush1.bf16.msra.mxu0 0
        %6532 = vmatprep.subr.bf16.mxu0 0
        %6533 = vmatpush1.bf16.msra.mxu0 0
        %6534 = vmatprep.subr.bf16.mxu0 0
        %6535 = vmatpush1.bf16.msra.mxu0 0
        %6536 = vmatprep.subr.bf16.mxu0 0
        %6537 = vmatpush1.bf16.msra.mxu0 0
        %6538 = vmatprep.subr.bf16.mxu0 0
        %6539 = vmatpush1.bf16.msra.mxu0 0
        %6540 = vmatprep.subr.bf16.mxu0 0
        %6541 = vmatpush1.bf16.msra.mxu0 0
        %6542 = vmatprep.subr.bf16.mxu0 0
        %6543 = vmatpush1.bf16.msra.mxu0 0
        %6544 = vmatprep.subr.bf16.mxu0 0
        %6545 = vmatpush1.bf16.msra.mxu0 0
        %6546 = vmatprep.mubr.bf16.mxu0 0
        %6547 = vmatmul.mubr.bf16.gmra.mrb[0].mxu0 %v6512
        %v6548 = vpop.f32.mrb[0].mxu0
        %v6549 = vadd.f32 0.0, %v6548
        %v6550 = vpop.f32.mrb[0].mxu0
        %v6551 = vpop.f32.mrb[0].mxu0
        %v6552 = vadd.f32 0.0, %v6551
        %v6553 = vpop.f32.mrb[0].mxu0
        %6554 = vdwg.mxu0
        %6555 = vrot.lane.b32.xlu0 %v949, 124
        %v6556 = vpop.permute.xlu0 %6555
        %v6559 = vsel %vm490, %v6171, 0
        %6561 = vmatprep.subr.bf16.mxu0 0
        %6562 = vmatpush1.bf16.msra.mxu0 %v6556
        %6563 = vmatprep.subr.bf16.mxu0 0
        %6564 = vmatpush1.bf16.msra.mxu0 0
        %6565 = vmatprep.subr.bf16.mxu0 0
        %6566 = vmatpush1.bf16.msra.mxu0 0
        %6567 = vmatprep.subr.bf16.mxu0 0
        %6568 = vmatpush1.bf16.msra.mxu0 0
        %6569 = vmatprep.subr.bf16.mxu0 0
        %6570 = vmatpush1.bf16.msra.mxu0 0
        %6571 = vmatprep.subr.bf16.mxu0 0
        %6572 = vmatpush1.bf16.msra.mxu0 0
        %6573 = vmatprep.subr.bf16.mxu0 0
        %6574 = vmatpush1.bf16.msra.mxu0 0
        %6575 = vmatprep.subr.bf16.mxu0 0
        %6576 = vmatpush1.bf16.msra.mxu0 0
        %6577 = vmatprep.subr.bf16.mxu0 0
        %6578 = vmatpush1.bf16.msra.mxu0 0
        %6579 = vmatprep.subr.bf16.mxu0 0
        %6580 = vmatpush1.bf16.msra.mxu0 0
        %6581 = vmatprep.subr.bf16.mxu0 0
        %6582 = vmatpush1.bf16.msra.mxu0 0
        %6583 = vmatprep.subr.bf16.mxu0 0
        %6584 = vmatpush1.bf16.msra.mxu0 0
        %6585 = vmatprep.subr.bf16.mxu0 0
        %6586 = vmatpush1.bf16.msra.mxu0 0
        %6587 = vmatprep.subr.bf16.mxu0 0
        %6588 = vmatpush1.bf16.msra.mxu0 0
        %6589 = vmatprep.subr.bf16.mxu0 0
        %6590 = vmatpush1.bf16.msra.mxu0 0
        %6591 = vmatprep.subr.bf16.mxu0 0
        %6592 = vmatpush1.bf16.msra.mxu0 0
        %6593 = vmatprep.mubr.bf16.mxu0 0
        %6594 = vmatmul.mubr.bf16.gmra.mrb[0].mxu0 %v6559
        %v6595 = vpop.f32.mrb[0].mxu0
        %v6596 = vadd.f32 0.0, %v6595
        %v6597 = vpop.f32.mrb[0].mxu0
        %v6598 = vpop.f32.mrb[0].mxu0
        %v6599 = vadd.f32 0.0, %v6598
        %v6600 = vpop.f32.mrb[0].mxu0
        %6601 = vdwg.mxu0
        %6602 = vrot.lane.b32.xlu0 %v950, 124
        %v6603 = vpop.permute.xlu0 %6602
        %v6606 = vsel %vm490, %v6172, 0
        %6608 = vmatprep.subr.bf16.mxu0 0
        %6609 = vmatpush1.bf16.msra.mxu0 %v6603
        %6610 = vmatprep.subr.bf16.mxu0 0
        %6611 = vmatpush1.bf16.msra.mxu0 0
        %6612 = vmatprep.subr.bf16.mxu0 0
        %6613 = vmatpush1.bf16.msra.mxu0 0
        %6614 = vmatprep.subr.bf16.mxu0 0
        %6615 = vmatpush1.bf16.msra.mxu0 0
        %6616 = vmatprep.subr.bf16.mxu0 0
        %6617 = vmatpush1.bf16.msra.mxu0 0
        %6618 = vmatprep.subr.bf16.mxu0 0
        %6619 = vmatpush1.bf16.msra.mxu0 0
        %6620 = vmatprep.subr.bf16.mxu0 0
        %6621 = vmatpush1.bf16.msra.mxu0 0
        %6622 = vmatprep.subr.bf16.mxu0 0
        %6623 = vmatpush1.bf16.msra.mxu0 0
        %6624 = vmatprep.subr.bf16.mxu0 0
        %6625 = vmatpush1.bf16.msra.mxu0 0
        %6626 = vmatprep.subr.bf16.mxu0 0
        %6627 = vmatpush1.bf16.msra.mxu0 0
        %6628 = vmatprep.subr.bf16.mxu0 0
        %6629 = vmatpush1.bf16.msra.mxu0 0
        %6630 = vmatprep.subr.bf16.mxu0 0
        %6631 = vmatpush1.bf16.msra.mxu0 0
        %6632 = vmatprep.subr.bf16.mxu0 0
        %6633 = vmatpush1.bf16.msra.mxu0 0
        %6634 = vmatprep.subr.bf16.mxu0 0
        %6635 = vmatpush1.bf16.msra.mxu0 0
        %6636 = vmatprep.subr.bf16.mxu0 0
        %6637 = vmatpush1.bf16.msra.mxu0 0
        %6638 = vmatprep.subr.bf16.mxu0 0
        %6639 = vmatpush1.bf16.msra.mxu0 0
        %6640 = vmatprep.mubr.bf16.mxu0 0
        %6641 = vmatmul.mubr.bf16.gmra.mrb[0].mxu0 %v6606
        %v6642 = vpop.f32.mrb[0].mxu0
        %v6643 = vadd.f32 0.0, %v6642
        %v6644 = vpop.f32.mrb[0].mxu0
        %v6645 = vpop.f32.mrb[0].mxu0
        %v6646 = vadd.f32 0.0, %v6645
        %v6647 = vpop.f32.mrb[0].mxu0
        %6648 = vdwg.mxu0
        %6649 = vrot.lane.b32.xlu0 %v951, 124
        %v6650 = vpop.permute.xlu0 %6649
        %v6653 = vsel %vm490, %v6173, 0
        %6655 = vmatprep.subr.bf16.mxu0 0
        %6656 = vmatpush1.bf16.msra.mxu0 %v6650
        %6657 = vmatprep.subr.bf16.mxu0 0
        %6658 = vmatpush1.bf16.msra.mxu0 0
        %6659 = vmatprep.subr.bf16.mxu0 0
        %6660 = vmatpush1.bf16.msra.mxu0 0
        %6661 = vmatprep.subr.bf16.mxu0 0
        %6662 = vmatpush1.bf16.msra.mxu0 0
        %6663 = vmatprep.subr.bf16.mxu0 0
        %6664 = vmatpush1.bf16.msra.mxu0 0
        %6665 = vmatprep.subr.bf16.mxu0 0
        %6666 = vmatpush1.bf16.msra.mxu0 0
        %6667 = vmatprep.subr.bf16.mxu0 0
        %6668 = vmatpush1.bf16.msra.mxu0 0
        %6669 = vmatprep.subr.bf16.mxu0 0
        %6670 = vmatpush1.bf16.msra.mxu0 0
        %6671 = vmatprep.subr.bf16.mxu0 0
        %6672 = vmatpush1.bf16.msra.mxu0 0
        %6673 = vmatprep.subr.bf16.mxu0 0
        %6674 = vmatpush1.bf16.msra.mxu0 0
        %6675 = vmatprep.subr.bf16.mxu0 0
        %6676 = vmatpush1.bf16.msra.mxu0 0
        %6677 = vmatprep.subr.bf16.mxu0 0
        %6678 = vmatpush1.bf16.msra.mxu0 0
        %6679 = vmatprep.subr.bf16.mxu0 0
        %6680 = vmatpush1.bf16.msra.mxu0 0
        %6681 = vmatprep.subr.bf16.mxu0 0
        %6682 = vmatpush1.bf16.msra.mxu0 0
        %6683 = vmatprep.subr.bf16.mxu0 0
        %6684 = vmatpush1.bf16.msra.mxu0 0
        %6685 = vmatprep.subr.bf16.mxu0 0
        %6686 = vmatpush1.bf16.msra.mxu0 0
        %6687 = vmatprep.mubr.bf16.mxu0 0
        %6688 = vmatmul.mubr.bf16.gmra.mrb[0].mxu0 %v6653
        %v6689 = vpop.f32.mrb[0].mxu0
        %v6690 = vadd.f32 0.0, %v6689
        %v6691 = vpop.f32.mrb[0].mxu0
        %v6692 = vpop.f32.mrb[0].mxu0
        %v6693 = vadd.f32 0.0, %v6692
        %v6694 = vpop.f32.mrb[0].mxu0
        %6695 = vdwg.mxu0
        %6696 = vrot.lane.b32.xlu0 %v952, 124
        %v6697 = vpop.permute.xlu0 %6696
        %v6700 = vsel %vm490, %v6174, 0
        %6702 = vmatprep.subr.bf16.mxu0 0
        %6703 = vmatpush1.bf16.msra.mxu0 %v6697
        %6704 = vmatprep.subr.bf16.mxu0 0
        %6705 = vmatpush1.bf16.msra.mxu0 0
        %6706 = vmatprep.subr.bf16.mxu0 0
        %6707 = vmatpush1.bf16.msra.mxu0 0
        %6708 = vmatprep.subr.bf16.mxu0 0
        %6709 = vmatpush1.bf16.msra.mxu0 0
        %6710 = vmatprep.subr.bf16.mxu0 0
        %6711 = vmatpush1.bf16.msra.mxu0 0
        %6712 = vmatprep.subr.bf16.mxu0 0
        %6713 = vmatpush1.bf16.msra.mxu0 0
        %6714 = vmatprep.subr.bf16.mxu0 0
        %6715 = vmatpush1.bf16.msra.mxu0 0
        %6716 = vmatprep.subr.bf16.mxu0 0
        %6717 = vmatpush1.bf16.msra.mxu0 0
        %6718 = vmatprep.subr.bf16.mxu0 0
        %6719 = vmatpush1.bf16.msra.mxu0 0
        %6720 = vmatprep.subr.bf16.mxu0 0
        %6721 = vmatpush1.bf16.msra.mxu0 0
        %6722 = vmatprep.subr.bf16.mxu0 0
        %6723 = vmatpush1.bf16.msra.mxu0 0
        %6724 = vmatprep.subr.bf16.mxu0 0
        %6725 = vmatpush1.bf16.msra.mxu0 0
        %6726 = vmatprep.subr.bf16.mxu0 0
        %6727 = vmatpush1.bf16.msra.mxu0 0
        %6728 = vmatprep.subr.bf16.mxu0 0
        %6729 = vmatpush1.bf16.msra.mxu0 0
        %6730 = vmatprep.subr.bf16.mxu0 0
        %6731 = vmatpush1.bf16.msra.mxu0 0
        %6732 = vmatprep.subr.bf16.mxu0 0
        %6733 = vmatpush1.bf16.msra.mxu0 0
        %6734 = vmatprep.mubr.bf16.mxu0 0
        %6735 = vmatmul.mubr.bf16.gmra.mrb[0].mxu0 %v6700
        %v6736 = vpop.f32.mrb[0].mxu0
        %v6737 = vadd.f32 0.0, %v6736
        %v6738 = vpop.f32.mrb[0].mxu0
        %v6739 = vpop.f32.mrb[0].mxu0
        %v6740 = vadd.f32 0.0, %v6739
        %v6741 = vpop.f32.mrb[0].mxu0
        %6742 = vdwg.mxu0
        %6743 = vrot.lane.b32.xlu0 %v953, 124
        %v6744 = vpop.permute.xlu0 %6743
        %v6747 = vsel %vm490, %v6175, 0
        %6749 = vmatprep.subr.bf16.mxu0 0
        %6750 = vmatpush1.bf16.msra.mxu0 %v6744
        %6751 = vmatprep.subr.bf16.mxu0 0
        %6752 = vmatpush1.bf16.msra.mxu0 0
        %6753 = vmatprep.subr.bf16.mxu0 0
        %6754 = vmatpush1.bf16.msra.mxu0 0
        %6755 = vmatprep.subr.bf16.mxu0 0
        %6756 = vmatpush1.bf16.msra.mxu0 0
        %6757 = vmatprep.subr.bf16.mxu0 0
        %6758 = vmatpush1.bf16.msra.mxu0 0
        %6759 = vmatprep.subr.bf16.mxu0 0
        %6760 = vmatpush1.bf16.msra.mxu0 0
        %6761 = vmatprep.subr.bf16.mxu0 0
        %6762 = vmatpush1.bf16.msra.mxu0 0
        %6763 = vmatprep.subr.bf16.mxu0 0
        %6764 = vmatpush1.bf16.msra.mxu0 0
        %6765 = vmatprep.subr.bf16.mxu0 0
        %6766 = vmatpush1.bf16.msra.mxu0 0
        %6767 = vmatprep.subr.bf16.mxu0 0
        %6768 = vmatpush1.bf16.msra.mxu0 0
        %6769 = vmatprep.subr.bf16.mxu0 0
        %6770 = vmatpush1.bf16.msra.mxu0 0
        %6771 = vmatprep.subr.bf16.mxu0 0
        %6772 = vmatpush1.bf16.msra.mxu0 0
        %6773 = vmatprep.subr.bf16.mxu0 0
        %6774 = vmatpush1.bf16.msra.mxu0 0
        %6775 = vmatprep.subr.bf16.mxu0 0
        %6776 = vmatpush1.bf16.msra.mxu0 0
        %6777 = vmatprep.subr.bf16.mxu0 0
        %6778 = vmatpush1.bf16.msra.mxu0 0
        %6779 = vmatprep.subr.bf16.mxu0 0
        %6780 = vmatpush1.bf16.msra.mxu0 0
        %6781 = vmatprep.mubr.bf16.mxu0 0
        %6782 = vmatmul.mubr.bf16.gmra.mrb[0].mxu0 %v6747
        %v6783 = vpop.f32.mrb[0].mxu0
        %v6784 = vadd.f32 0.0, %v6783
        %v6785 = vpop.f32.mrb[0].mxu0
        %v6786 = vpop.f32.mrb[0].mxu0
        %v6787 = vadd.f32 0.0, %v6786
        %v6788 = vpop.f32.mrb[0].mxu0
        %6789 = vdwg.mxu0
        %6790 = vrot.lane.b32.xlu0 %v954, 124
        %v6791 = vpop.permute.xlu0 %6790
        %v6794 = vsel %vm490, %v6176, 0
        %6796 = vmatprep.subr.bf16.mxu0 0
        %6797 = vmatpush1.bf16.msra.mxu0 %v6791
        %6798 = vmatprep.subr.bf16.mxu0 0
        %6799 = vmatpush1.bf16.msra.mxu0 0
        %6800 = vmatprep.subr.bf16.mxu0 0
        %6801 = vmatpush1.bf16.msra.mxu0 0
        %6802 = vmatprep.subr.bf16.mxu0 0
        %6803 = vmatpush1.bf16.msra.mxu0 0
        %6804 = vmatprep.subr.bf16.mxu0 0
        %6805 = vmatpush1.bf16.msra.mxu0 0
        %6806 = vmatprep.subr.bf16.mxu0 0
        %6807 = vmatpush1.bf16.msra.mxu0 0
        %6808 = vmatprep.subr.bf16.mxu0 0
        %6809 = vmatpush1.bf16.msra.mxu0 0
        %6810 = vmatprep.subr.bf16.mxu0 0
        %6811 = vmatpush1.bf16.msra.mxu0 0
        %6812 = vmatprep.subr.bf16.mxu0 0
        %6813 = vmatpush1.bf16.msra.mxu0 0
        %6814 = vmatprep.subr.bf16.mxu0 0
        %6815 = vmatpush1.bf16.msra.mxu0 0
        %6816 = vmatprep.subr.bf16.mxu0 0
        %6817 = vmatpush1.bf16.msra.mxu0 0
        %6818 = vmatprep.subr.bf16.mxu0 0
        %6819 = vmatpush1.bf16.msra.mxu0 0
        %6820 = vmatprep.subr.bf16.mxu0 0
        %6821 = vmatpush1.bf16.msra.mxu0 0
        %6822 = vmatprep.subr.bf16.mxu0 0
        %6823 = vmatpush1.bf16.msra.mxu0 0
        %6824 = vmatprep.subr.bf16.mxu0 0
        %6825 = vmatpush1.bf16.msra.mxu0 0
        %6826 = vmatprep.subr.bf16.mxu0 0
        %6827 = vmatpush1.bf16.msra.mxu0 0
        %6828 = vmatprep.mubr.bf16.mxu0 0
        %6829 = vmatmul.mubr.bf16.gmra.mrb[0].mxu0 %v6794
        %v6830 = vpop.f32.mrb[0].mxu0
        %v6831 = vadd.f32 0.0, %v6830
        %v6832 = vpop.f32.mrb[0].mxu0
        %v6833 = vpop.f32.mrb[0].mxu0
        %v6834 = vadd.f32 0.0, %v6833
        %v6835 = vpop.f32.mrb[0].mxu0
        %6836 = vdwg.mxu0
        %6837 = vrot.lane.b32.xlu0 %v955, 124
        %v6838 = vpop.permute.xlu0 %6837
        %v6841 = vsel %vm490, %v6177, 0
        %6843 = vmatprep.subr.bf16.mxu0 0
        %6844 = vmatpush1.bf16.msra.mxu0 %v6838
        %6845 = vmatprep.subr.bf16.mxu0 0
        %6846 = vmatpush1.bf16.msra.mxu0 0
        %6847 = vmatprep.subr.bf16.mxu0 0
        %6848 = vmatpush1.bf16.msra.mxu0 0
        %6849 = vmatprep.subr.bf16.mxu0 0
        %6850 = vmatpush1.bf16.msra.mxu0 0
        %6851 = vmatprep.subr.bf16.mxu0 0
        %6852 = vmatpush1.bf16.msra.mxu0 0
        %6853 = vmatprep.subr.bf16.mxu0 0
        %6854 = vmatpush1.bf16.msra.mxu0 0
        %6855 = vmatprep.subr.bf16.mxu0 0
        %6856 = vmatpush1.bf16.msra.mxu0 0
        %6857 = vmatprep.subr.bf16.mxu0 0
        %6858 = vmatpush1.bf16.msra.mxu0 0
        %6859 = vmatprep.subr.bf16.mxu0 0
        %6860 = vmatpush1.bf16.msra.mxu0 0
        %6861 = vmatprep.subr.bf16.mxu0 0
        %6862 = vmatpush1.bf16.msra.mxu0 0
        %6863 = vmatprep.subr.bf16.mxu0 0
        %6864 = vmatpush1.bf16.msra.mxu0 0
        %6865 = vmatprep.subr.bf16.mxu0 0
        %6866 = vmatpush1.bf16.msra.mxu0 0
        %6867 = vmatprep.subr.bf16.mxu0 0
        %6868 = vmatpush1.bf16.msra.mxu0 0
        %6869 = vmatprep.subr.bf16.mxu0 0
        %6870 = vmatpush1.bf16.msra.mxu0 0
        %6871 = vmatprep.subr.bf16.mxu0 0
        %6872 = vmatpush1.bf16.msra.mxu0 0
        %6873 = vmatprep.subr.bf16.mxu0 0
        %6874 = vmatpush1.bf16.msra.mxu0 0
        %6875 = vmatprep.mubr.bf16.mxu0 0
        %6876 = vmatmul.mubr.bf16.gmra.mrb[0].mxu0 %v6841
        %v6877 = vpop.f32.mrb[0].mxu0
        %v6878 = vadd.f32 0.0, %v6877
        %v6879 = vpop.f32.mrb[0].mxu0
        %v6880 = vpop.f32.mrb[0].mxu0
        %v6881 = vadd.f32 0.0, %v6880
        %v6882 = vpop.f32.mrb[0].mxu0
        %6883 = vdwg.mxu0
        %6884 = vrot.lane.b32.xlu0 %v956, 124
        %v6885 = vpop.permute.xlu0 %6884
        %v6888 = vsel %vm490, %v6178, 0
        %6890 = vmatprep.subr.bf16.mxu0 0
        %6891 = vmatpush1.bf16.msra.mxu0 %v6885
        %6892 = vmatprep.subr.bf16.mxu0 0
        %6893 = vmatpush1.bf16.msra.mxu0 0
        %6894 = vmatprep.subr.bf16.mxu0 0
        %6895 = vmatpush1.bf16.msra.mxu0 0
        %6896 = vmatprep.subr.bf16.mxu0 0
        %6897 = vmatpush1.bf16.msra.mxu0 0
        %6898 = vmatprep.subr.bf16.mxu0 0
        %6899 = vmatpush1.bf16.msra.mxu0 0
        %6900 = vmatprep.subr.bf16.mxu0 0
        %6901 = vmatpush1.bf16.msra.mxu0 0
        %6902 = vmatprep.subr.bf16.mxu0 0
        %6903 = vmatpush1.bf16.msra.mxu0 0
        %6904 = vmatprep.subr.bf16.mxu0 0
        %6905 = vmatpush1.bf16.msra.mxu0 0
        %6906 = vmatprep.subr.bf16.mxu0 0
        %6907 = vmatpush1.bf16.msra.mxu0 0
        %6908 = vmatprep.subr.bf16.mxu0 0
        %6909 = vmatpush1.bf16.msra.mxu0 0
        %6910 = vmatprep.subr.bf16.mxu0 0
        %6911 = vmatpush1.bf16.msra.mxu0 0
        %6912 = vmatprep.subr.bf16.mxu0 0
        %6913 = vmatpush1.bf16.msra.mxu0 0
        %6914 = vmatprep.subr.bf16.mxu0 0
        %6915 = vmatpush1.bf16.msra.mxu0 0
        %6916 = vmatprep.subr.bf16.mxu0 0
        %6917 = vmatpush1.bf16.msra.mxu0 0
        %6918 = vmatprep.subr.bf16.mxu0 0
        %6919 = vmatpush1.bf16.msra.mxu0 0
        %6920 = vmatprep.subr.bf16.mxu0 0
        %6921 = vmatpush1.bf16.msra.mxu0 0
        %6922 = vmatprep.mubr.bf16.mxu0 0
        %6923 = vmatmul.mubr.bf16.gmra.mrb[0].mxu0 %v6888
        %v6924 = vpop.f32.mrb[0].mxu0
        %v6925 = vadd.f32 0.0, %v6924
        %v6926 = vpop.f32.mrb[0].mxu0
        %v6927 = vpop.f32.mrb[0].mxu0
        %v6928 = vadd.f32 0.0, %v6927
        %v6929 = vpop.f32.mrb[0].mxu0
        %6930 = vdwg.mxu0
        %v6931 = vmul.f32 %v5634, %v6220
        %v6932 = vmul.f32 %v5634, %v6223
        %v6933 = vmul.f32 %v5634, %v6267
        %v6934 = vmul.f32 %v5634, %v6270
        %v6935 = vmul.f32 %v5634, %v6314
        %v6936 = vmul.f32 %v5634, %v6317
        %v6937 = vmul.f32 %v5634, %v6361
        %v6938 = vmul.f32 %v5634, %v6364
        %v6939 = vmul.f32 %v5634, %v6408
        %v6940 = vmul.f32 %v5634, %v6411
        %v6941 = vmul.f32 %v5634, %v6455
        %v6942 = vmul.f32 %v5634, %v6458
        %v6943 = vmul.f32 %v5634, %v6502
        %v6944 = vmul.f32 %v5634, %v6505
        %v6945 = vmul.f32 %v5634, %v6549
        %v6946 = vmul.f32 %v5634, %v6552
        %v6947 = vmul.f32 %v5634, %v6596
        %v6948 = vmul.f32 %v5634, %v6599
        %v6949 = vmul.f32 %v5634, %v6643
        %v6950 = vmul.f32 %v5634, %v6646
        %v6951 = vmul.f32 %v5634, %v6690
        %v6952 = vmul.f32 %v5634, %v6693
        %v6953 = vmul.f32 %v5634, %v6737
        %v6954 = vmul.f32 %v5634, %v6740
        %v6955 = vmul.f32 %v5634, %v6784
        %v6956 = vmul.f32 %v5634, %v6787
        %v6957 = vmul.f32 %v5634, %v6831
        %v6958 = vmul.f32 %v5634, %v6834
        %v6959 = vmul.f32 %v5634, %v6878
        %v6960 = vmul.f32 %v5634, %v6881
        %v6961 = vmul.f32 %v5634, %v6925
        %v6962 = vmul.f32 %v5634, %v6928
        %6963 = vst.msk [vmem:[%s378] sm:$0xff] %vm490, %v6931
        %6964 = vst.msk [vmem:[%s378 + $0x8] sm:$0xff] %vm490, %v6932
        %6965 = vst.msk [vmem:[%s378 + $0x10] sm:$0xff] %vm490, %v6933
        %6966 = vst.msk [vmem:[%s378 + $0x18] sm:$0xff] %vm490, %v6934
        %6967 = vst.msk [vmem:[%s378 + $0x20] sm:$0xff] %vm490, %v6935
        %6968 = vst.msk [vmem:[%s378 + $0x28] sm:$0xff] %vm490, %v6936
        %6969 = vst.msk [vmem:[%s378 + $0x30] sm:$0xff] %vm490, %v6937
        %6970 = vst.msk [vmem:[%s378 + $0x38] sm:$0xff] %vm490, %v6938
        %6971 = vst.msk [vmem:[%s378 + $0x40] sm:$0xff] %vm490, %v6939
        %6972 = vst.msk [vmem:[%s378 + $0x48] sm:$0xff] %vm490, %v6940
        %6973 = vst.msk [vmem:[%s378 + $0x50] sm:$0xff] %vm490, %v6941
        %6974 = vst.msk [vmem:[%s378 + $0x58] sm:$0xff] %vm490, %v6942
        %6975 = vst.msk [vmem:[%s378 + $0x60] sm:$0xff] %vm490, %v6943
        %6976 = vst.msk [vmem:[%s378 + $0x68] sm:$0xff] %vm490, %v6944
        %6977 = vst.msk [vmem:[%s378 + $0x70] sm:$0xff] %vm490, %v6945
        %6978 = vst.msk [vmem:[%s378 + $0x78] sm:$0xff] %vm490, %v6946
        %6979 = vst.msk [vmem:[%s378 + $0x80] sm:$0xff] %vm490, %v6947
        %6980 = vst.msk [vmem:[%s378 + $0x88] sm:$0xff] %vm490, %v6948
        %6981 = vst.msk [vmem:[%s378 + $0x90] sm:$0xff] %vm490, %v6949
        %6982 = vst.msk [vmem:[%s378 + $0x98] sm:$0xff] %vm490, %v6950
        %6983 = vst.msk [vmem:[%s378 + $0xa0] sm:$0xff] %vm490, %v6951
        %6984 = vst.msk [vmem:[%s378 + $0xa8] sm:$0xff] %vm490, %v6952
        %6985 = vst.msk [vmem:[%s378 + $0xb0] sm:$0xff] %vm490, %v6953
        %6986 = vst.msk [vmem:[%s378 + $0xb8] sm:$0xff] %vm490, %v6954
        %6987 = vst.msk [vmem:[%s378 + $0xc0] sm:$0xff] %vm490, %v6955
        %6988 = vst.msk [vmem:[%s378 + $0xc8] sm:$0xff] %vm490, %v6956
        %6989 = vst.msk [vmem:[%s378 + $0xd0] sm:$0xff] %vm490, %v6957
        %6990 = vst.msk [vmem:[%s378 + $0xd8] sm:$0xff] %vm490, %v6958
        %6991 = vst.msk [vmem:[%s378 + $0xe0] sm:$0xff] %vm490, %v6959
        %6992 = vst.msk [vmem:[%s378 + $0xe8] sm:$0xff] %vm490, %v6960
        %6993 = vst.msk [vmem:[%s378 + $0xf0] sm:$0xff] %vm490, %v6961
        %6994 = vst.msk [vmem:[%s378 + $0xf8] sm:$0xff] %vm490, %v6962
        %6995 = vst.msk [vmem:[%s392] sm:$0xff] %vm490, %v6131
        %6996 = vst.msk [vmem:[%s392 + $0x8] sm:$0xff] %vm490, %v6132
        %6997 = vst.msk [vmem:[%s392 + $0x10] sm:$0xff] %vm490, %v6133
        %6998 = vst.msk [vmem:[%s392 + $0x18] sm:$0xff] %vm490, %v6134
        %6999 = vst.msk [vmem:[%s392 + $0x20] sm:$0xff] %vm490, %v6135
        %7000 = vst.msk [vmem:[%s392 + $0x28] sm:$0xff] %vm490, %v6136
        %7001 = vst.msk [vmem:[%s392 + $0x30] sm:$0xff] %vm490, %v6137
        %7002 = vst.msk [vmem:[%s392 + $0x38] sm:$0xff] %vm490, %v6138
        %7003 = vst.msk [vmem:[%s392 + $0x40] sm:$0xff] %vm490, %v6139
        %7004 = vst.msk [vmem:[%s392 + $0x48] sm:$0xff] %vm490, %v6140
        %7005 = vst.msk [vmem:[%s392 + $0x50] sm:$0xff] %vm490, %v6141
        %7006 = vst.msk [vmem:[%s392 + $0x58] sm:$0xff] %vm490, %v6142
        %7007 = vst.msk [vmem:[%s392 + $0x60] sm:$0xff] %vm490, %v6143
        %7008 = vst.msk [vmem:[%s392 + $0x68] sm:$0xff] %vm490, %v6144
        %7009 = vst.msk [vmem:[%s392 + $0x70] sm:$0xff] %vm490, %v6145
        %7010 = vst.msk [vmem:[%s392 + $0x78] sm:$0xff] %vm490, %v6146
        %7011 = vst.msk [vmem:[%s392 + $0x80] sm:$0xff] %vm490, %v6147
        %7012 = vst.msk [vmem:[%s392 + $0x88] sm:$0xff] %vm490, %v6148
        %7013 = vst.msk [vmem:[%s392 + $0x90] sm:$0xff] %vm490, %v6149
        %7014 = vst.msk [vmem:[%s392 + $0x98] sm:$0xff] %vm490, %v6150
        %7015 = vst.msk [vmem:[%s392 + $0xa0] sm:$0xff] %vm490, %v6151
        %7016 = vst.msk [vmem:[%s392 + $0xa8] sm:$0xff] %vm490, %v6152
        %7017 = vst.msk [vmem:[%s392 + $0xb0] sm:$0xff] %vm490, %v6153
        %7018 = vst.msk [vmem:[%s392 + $0xb8] sm:$0xff] %vm490, %v6154
        %7019 = vst.msk [vmem:[%s392 + $0xc0] sm:$0xff] %vm490, %v6155
        %7020 = vst.msk [vmem:[%s392 + $0xc8] sm:$0xff] %vm490, %v6156
        %7021 = vst.msk [vmem:[%s392 + $0xd0] sm:$0xff] %vm490, %v6157
        %7022 = vst.msk [vmem:[%s392 + $0xd8] sm:$0xff] %vm490, %v6158
        %7023 = vst.msk [vmem:[%s392 + $0xe0] sm:$0xff] %vm490, %v6159
        %7024 = vst.msk [vmem:[%s392 + $0xe8] sm:$0xff] %vm490, %v6160
        %7025 = vst.msk [vmem:[%s392 + $0xf0] sm:$0xff] %vm490, %v6161
        %7026 = vst.msk [vmem:[%s392 + $0xf8] sm:$0xff] %vm490, %v6162
        %s7027 = sand.u32 %s159, 1
        %s7028 = scalar_lea.sflag [#allocation5], %s7027
        %s7029 = sand.u32 %s159, 1
        %s7030 = smul.addr %s7029, 256
        %s7031 = scalar_lea.vmem [#allocation8], %s7030
        %s7032 = sand.u32 %s36, 1
        %s7033 = scalar_lea.sflag [#allocation10], %s7032
        %s7034 = sand.u32 %s185, 1
        %s7035 = smul.addr %s7034, 256
        %s7036 = scalar_lea.vmem [#allocation9], %s7035
        %s7037 = sand.u32 %s36, 1
        %s7038 = scalar_lea.sflag [#allocation10], %s7037
        %s7039 = sand.u32 %s211, 1
        %s7040 = smul.addr %s7039, 256
        %s7041 = scalar_lea.vmem [#allocation11], %s7040
        %s7042 = sand.u32 %s237, 1
        %s7043 = scalar_lea.sflag [#allocation13], %s7042
        %s7044 = sand.u32 %s237, 1
        %s7045 = smul.addr %s7044, 256
        %s7046 = scalar_lea.vmem [#allocation12], %s7045
        // Predicated region
        $region49: #{tpu_custom_call.1} parent=39 // pred_check
          %p7047 = pneg %p169
        $region50: #{tpu_custom_call.1} parent=39 // pred_check_branch
          %7049 = sbr.rel (%p7047) target = $region52
        $region51: #{tpu_custom_call.1} parent=39 // pred_region
          %s7051 = ssub.s32 4096, 4096
          %7052 = vsyncadd %s7028, %s7051
          %s7053 = smul.addr %s36, 32
          %s7054 = smul.addr %s7053, 128
          %s7055 = scalar_lea.hbm %s5, %s7054
          %s7056 = sshll.u32 %s7031, 4
          %s7057 = int_to_ptr.vmem [resolvable:$true] %s7056
          %7062 = dma.vmem_to_hbm [thread:$0]  %s7057, 4096, %s7055, %s7028, 128, 128, 8
        $region52: #{tpu_custom_call.1} parent=39 // pred_fallthru
          _
        // Predicated region
        $region53: #{tpu_custom_call.1} parent=39 // pred_check
          %p7063 = pneg %p195
        $region54: #{tpu_custom_call.1} parent=39 // pred_check_branch
          %7065 = sbr.rel (%p7063) target = $region56
        $region55: #{tpu_custom_call.1} parent=39 // pred_region
          %s7067 = ssub.s32 4096, 4096
          %7068 = vsyncadd %s7033, %s7067
          %s7069 = smul.addr %s36, 32
          %s7070 = smul.addr %s7069, 128
          %s7071 = scalar_lea.hbm %s6, %s7070
          %s7072 = sshll.u32 %s7036, 4
          %s7073 = int_to_ptr.vmem [resolvable:$true] %s7072
          %7078 = dma.vmem_to_hbm [thread:$0]  %s7073, 4096, %s7071, %s7033, 128, 128, 8
        $region56: #{tpu_custom_call.1} parent=39 // pred_fallthru
          _
        // Predicated region
        $region57: #{tpu_custom_call.1} parent=39 // pred_check
          %p7079 = pneg %p221
        $region58: #{tpu_custom_call.1} parent=39 // pred_check_branch
          %7081 = sbr.rel (%p7079) target = $region60
        $region59: #{tpu_custom_call.1} parent=39 // pred_region
          %s7083 = ssub.s32 4096, 4096
          %7084 = vsyncadd %s7038, %s7083
          %s7085 = smul.addr %s36, 32
          %s7086 = smul.addr %s7085, 128
          %s7087 = scalar_lea.hbm %s7, %s7086
          %s7088 = sshll.u32 %s7041, 4
          %s7089 = int_to_ptr.vmem [resolvable:$true] %s7088
          %7094 = dma.vmem_to_hbm [thread:$0]  %s7089, 4096, %s7087, %s7038, 128, 128, 8
        $region60: #{tpu_custom_call.1} parent=39 // pred_fallthru
          _
        // Predicated region
        $region61: #{tpu_custom_call.1} parent=39 // pred_check
          %p7095 = pneg %p247
        $region62: #{tpu_custom_call.1} parent=39 // pred_check_branch
          %7097 = sbr.rel (%p7095) target = $region64
        $region63: #{tpu_custom_call.1} parent=39 // pred_region
          %s7099 = ssub.s32 4096, 4096
          %7100 = vsyncadd %s7043, %s7099
          %s7101 = smul.addr %s36, 32
          %s7102 = smul.addr %s7101, 128
          %s7103 = scalar_lea.hbm %s8, %s7102
          %s7104 = sshll.u32 %s7046, 4
          %s7105 = int_to_ptr.vmem [resolvable:$true] %s7104
          %7110 = dma.vmem_to_hbm [thread:$0]  %s7105, 4096, %s7103, %s7043, 128, 128, 8
        $region64: #{tpu_custom_call.1} parent=39 // pred_fallthru
          _
      $region40: #{tpu_custom_call.1} parent=5 // pred_fallthru
        _
      %p7111 = scmp.le.s32.totalorder 2, %s31
      // Predicated region
      $region65: #{tpu_custom_call.1} parent=5 // pred_check
        %p7112 = pneg %p7111
      $region66: #{tpu_custom_call.1} parent=5 // pred_check_branch
        %7114 = sbr.rel (%p7112) target = $region68
      $region67: #{tpu_custom_call.1} parent=5 // pred_region
        %s7115 = ssub.s32 %s31, 2
        // Predicated region
        $region69: #{tpu_custom_call.1} parent=67 // pred_check
          %p7116 = pneg %p175
        $region70: #{tpu_custom_call.1} parent=67 // pred_check_branch
          %7118 = sbr.rel (%p7116) target = $region72
        $region71: #{tpu_custom_call.1} parent=67 // pred_region
          %s7119 = sand.u32 %s160, 1
          %s7120 = scalar_lea.sflag [#allocation5], %s7119
          %s7121 = sand.u32 %s160, 1
          %s7122 = smul.addr %s7121, 256
          %s7123 = scalar_lea.vmem [#allocation8], %s7122
          %7124 = dma.done %s7120, 4096
        $region72: #{tpu_custom_call.1} parent=67 // pred_fallthru
          _
        // Predicated region
        $region73: #{tpu_custom_call.1} parent=67 // pred_check
          %p7125 = pneg %p201
        $region74: #{tpu_custom_call.1} parent=67 // pred_check_branch
          %7127 = sbr.rel (%p7125) target = $region76
        $region75: #{tpu_custom_call.1} parent=67 // pred_region
          %s7128 = sand.u32 %s37, 1
          %s7129 = scalar_lea.sflag [#allocation10], %s7128
          %s7130 = sand.u32 %s186, 1
          %s7131 = smul.addr %s7130, 256
          %s7132 = scalar_lea.vmem [#allocation9], %s7131
          %7133 = dma.done %s7129, 4096
        $region76: #{tpu_custom_call.1} parent=67 // pred_fallthru
          _
        // Predicated region
        $region77: #{tpu_custom_call.1} parent=67 // pred_check
          %p7134 = pneg %p227
        $region78: #{tpu_custom_call.1} parent=67 // pred_check_branch
          %7136 = sbr.rel (%p7134) target = $region80
        $region79: #{tpu_custom_call.1} parent=67 // pred_region
          %s7137 = sand.u32 %s37, 1
          %s7138 = scalar_lea.sflag [#allocation10], %s7137
          %s7139 = sand.u32 %s212, 1
          %s7140 = smul.addr %s7139, 256
          %s7141 = scalar_lea.vmem [#allocation11], %s7140
          %7142 = dma.done %s7138, 4096
        $region80: #{tpu_custom_call.1} parent=67 // pred_fallthru
          _
        // Predicated region
        $region81: #{tpu_custom_call.1} parent=67 // pred_check
          %p7143 = pneg %p253
        $region82: #{tpu_custom_call.1} parent=67 // pred_check_branch
          %7145 = sbr.rel (%p7143) target = $region84
        $region83: #{tpu_custom_call.1} parent=67 // pred_region
          %s7146 = sand.u32 %s238, 1
          %s7147 = scalar_lea.sflag [#allocation13], %s7146
          %s7148 = sand.u32 %s238, 1
          %s7149 = smul.addr %s7148, 256
          %s7150 = scalar_lea.vmem [#allocation12], %s7149
          %7151 = dma.done %s7147, 4096
        $region84: #{tpu_custom_call.1} parent=67 // pred_fallthru
          _
      $region68: #{tpu_custom_call.1} parent=5 // pred_fallthru
        _
    $region6: #{tpu_custom_call.1} parent=1 // loop_footer
      %s35 = sadd.s32 1, %s31
    $region7: #{tpu_custom_call.1} parent=1 // loop_footer_branch
      %30 = sbr.rel target = $region3
    $region8: #{tpu_custom_call.1} parent=1 // loop_exit
      _
    %7152 = vsyncpa [#allocation4], 1
    %s7153 = scalar_lea.sflag [#allocation4], 1
    %7154 = vsyncpa %s7153, 1
    %7155 = vsyncpa [#allocation7], 1
    %s7156 = scalar_lea.sflag [#allocation7], 1
    %7157 = vsyncpa %s7156, 1
    %7158 = vsyncpa [#allocation5], 1
    %s7159 = scalar_lea.sflag [#allocation5], 1
    %7160 = vsyncpa %s7159, 1
    %7161 = vsyncpa [#allocation10], 1
    %s7162 = scalar_lea.sflag [#allocation10], 1
    %7163 = vsyncpa %s7162, 1
    %7164 = vsyncpa [#allocation13], 1
    %s7165 = scalar_lea.sflag [#allocation13], 1
    %7166 = vsyncpa %s7165, 1

</llo_original>
